<compile_context>
chip_gen: v7x
topology: tpu7x:2x2x1
jax: 0.10.0
libtpu: 0.0.40
codegen_flags: <defaults>
</compile_context>

<pallas_src>
import jax
import jax.numpy as jnp
from jax import lax
from jax.experimental import pallas as pl
from jax.experimental.pallas import tpu as pltpu

F32 = jnp.float32


def _round_up(x, m):
    return (x + m - 1) // m * m


def _cparams(*block_nbytes):
    total = int(sum(block_nbytes))
    limit = int(min(max(2 * total + (4 << 20), 16 << 20), 64 << 20))
    return pltpu.CompilerParams(
        dimension_semantics=("parallel",),
        vmem_limit_bytes=limit,
    )


def _sample_spec(shape):
    """Per-sample block of an array shaped (B, *shape); batch dim squeezed."""
    nd = len(shape)
    return pl.BlockSpec((pl.Squeezed(),) + tuple(shape),
                        lambda b: (b,) + (0,) * nd)


def _const_spec(shape):
    """Whole-array block, identical for every grid step (weights / BN params)."""
    nd = len(shape)
    return pl.BlockSpec(tuple(shape), lambda b: (0,) * nd)


def _smem_spec():
    return pl.BlockSpec(memory_space=pltpu.MemorySpace.SMEM)


# ----------------------------------------------------------------------------- kernels
def _stem_kernel(x_ref, w1_ref, s1_ref, b1_ref, w2_ref, s2_ref, b2_ref,
                 wm_ref, sm_ref, bm_ref, a_ref, br_ref, t1_ref):
    # x_ref: (c1, HW); weights (c_, cin); scale/bias (c_, 1)
    a_ref[...] = jax.nn.silu(
        jnp.dot(w1_ref[...], x_ref[...], preferred_element_type=F32)
        * s1_ref[...] + b1_ref[...]).astype(a_ref.dtype)
    br_ref[...] = jax.nn.silu(
        jnp.dot(w2_ref[...], x_ref[...], preferred_element_type=F32)
        * s2_ref[...] + b2_ref[...]).astype(br_ref.dtype)
    # bottleneck.cv1 chained on the just-written output block (re-read the ref
    # instead of keeping the big activation live in vregs).
    t1_ref[...] = jax.nn.silu(
        jnp.dot(wm_ref[...], a_ref[...], preferred_element_type=F32)
        * sm_ref[...] + bm_ref[...]).astype(t1_ref.dtype)


def _make_conv3x3_kernel(h, wp, n_valid):
    """3x3 conv + BN + SiLU on a zero-padded flattened image of padded width wp."""
    def kernel(xp_ref, w9_ref, s_ref, b_ref, o_ref):
        # xp_ref: (Cin, Lp); w9_ref: (9, Cout, Cin); o_ref: (Cout, h*wp)
        acc = None
        for k in range(9):
            dy, dx = divmod(k, 3)
            start = dy * wp + dx
            part = jnp.dot(w9_ref[k], xp_ref[:, start:start + n_valid],
                           preferred_element_type=F32)
            acc = part if acc is None else acc + part
        o_ref[...] = jax.nn.silu(acc * s_ref[...] + b_ref[...]).astype(o_ref.dtype)
    return kernel


def _channel_gate_kernel(x_ref, a1_ref, b1_ref, a2_ref, b2_ref, cg_ref, cp_ref):
    # x_ref: (C, HW); a1: (Ch, C); b1: (Ch, 1); a2: (C, Ch); b2: (C, 1)
    x = x_ref[...]
    p_avg = jnp.mean(x, axis=-1, keepdims=True)        # (C, 1)
    p_max = jnp.max(x, axis=-1, keepdims=True)         # (C, 1)

    def mlp(v):  # shared MLP: Linear -> ReLU -> Linear (with biases)
        hid = jnp.maximum(
            jnp.dot(a1_ref[...], v, preferred_element_type=F32) + b1_ref[...], 0.0)
        return jnp.dot(a2_ref[...], hid, preferred_element_type=F32) + b2_ref[...]

    gate = jax.nn.sigmoid(mlp(p_avg) + mlp(p_max))     # (C, 1)
    cg = x_ref[...] * gate                             # reload ref (avoid long vreg liveness)
    cg_ref[...] = cg.astype(cg_ref.dtype)
    # ChannelPool for the spatial gate: row 0 = max over C, row 1 = mean over C.
    cp_ref[0:1, :] = jnp.max(cg, axis=0, keepdims=True)
    cp_ref[1:2, :] = jnp.mean(cg, axis=0, keepdims=True)


def _make_spatial_gate_kernel(h, w, add_residual):
    def kernel(cp_ref, cg_ref, res_ref, wsp_ref, bn_ref, o_ref):
        # cp_ref: (2, h+6, w+6); cg_ref/res_ref/o_ref: (C, h, w)
        # wsp_ref: SMEM (98,) indexed [ci*49 + dy*7 + dx]; bn_ref: SMEM (2,) = [scale, bias]
        acc = jnp.zeros((h, w), F32)
        for ci in range(2):
            for dy in range(7):
                for dx in range(7):
                    wv = wsp_ref[ci * 49 + dy * 7 + dx]
                    acc = acc + wv * cp_ref[ci, dy:dy + h, dx:dx + w]
        sg = jax.nn.sigmoid(acc * bn_ref[0] + bn_ref[1])       # (h, w)
        val = cg_ref[...] * sg[None, :, :]
        if add_residual:
            val = res_ref[...] + val
        o_ref[...] = val.astype(o_ref.dtype)
    return kernel


def _cv3_kernel(y1_ref, y2_ref, wa_ref, wb_ref, s_ref, b_ref, o_ref):
    # concat([y1, y2], channel) followed by 1x1 conv == Wa@y1 + Wb@y2
    acc = (jnp.dot(wa_ref[...], y1_ref[...], preferred_element_type=F32)
           + jnp.dot(wb_ref[...], y2_ref[...], preferred_element_type=F32))
    o_ref[...] = jax.nn.silu(acc * s_ref[...] + b_ref[...]).astype(o_ref.dtype)


# ----------------------------------------------------------------------------- wrapper
def c3_b_cbam_forward(x, p, shortcut=True):
    """Pallas forward for C3_B_CBAM (n=1), inference-mode (folded BN). x: (B, c1, H, W)."""
    B, c1, H, W = x.shape
    HW = H * W
    c_ = p["w_cv1"].shape[0]
    c2 = p["w_cv3a"].shape[0]
    ch = p["mlp_a1"].shape[0]
    fdt = x.dtype

    assert HW % 128 == 0, "H*W must be a multiple of 128 for lane-dense tiles"
    assert c1 % 8 == 0 and c_ % 8 == 0 and c2 % 8 == 0, "channels must be multiples of 8"

    col = lambda v: v.reshape(-1, 1).astype(F32)
    xf = x.reshape(B, c1, HW)

    # ---- stage 1: C3.cv1, C3.cv2, bottleneck.cv1 (1x1 conv + BN + SiLU), fused ----
    blk = 4 * (c1 * HW + 3 * c_ * HW)
    a, bbr, t1 = pl.pallas_call(
        _stem_kernel,
        out_shape=tuple(jax.ShapeDtypeStruct((B, c_, HW), fdt) for _ in range(3)),
        grid_spec=pltpu.PrefetchScalarGridSpec(
            num_scalar_prefetch=0,
            grid=(B,),
            in_specs=[
                _sample_spec((c1, HW)),
                _const_spec((c_, c1)), _const_spec((c_, 1)), _const_spec((c_, 1)),
                _const_spec((c_, c1)), _const_spec((c_, 1)), _const_spec((c_, 1)),
                _const_spec((c_, c_)), _const_spec((c_, 1)), _const_spec((c_, 1)),
            ],
            out_specs=[_sample_spec((c_, HW)) for _ in range(3)],
        ),
        compiler_params=_cparams(blk),
    )(xf,
      p["w_cv1"], col(p["s_cv1"]), col(p["b_cv1"]),
      p["w_cv2"], col(p["s_cv2"]), col(p["b_cv2"]),
      p["w_m1"], col(p["s_m1"]), col(p["b_m1"]))

    # ---- stage 2: bottleneck.cv2 (3x3 conv + BN + SiLU) on a padded flat image ----
    Hp, Wp = H + 2, W + 2
    n_valid = H * Wp
    Lp = _round_up(max(Hp * Wp, n_valid + 2 * Wp + 2), 128)
    t1p = jnp.pad(t1.reshape(B, c_, H, W), ((0, 0), (0, 0), (1, 1), (1, 1)))
    t1pf = jnp.pad(t1p.reshape(B, c_, Hp * Wp), ((0, 0), (0, 0), (0, Lp - Hp * Wp)))

    blk = 4 * (c_ * Lp + c_ * n_valid + 9 * c_ * c_)
    conv_raw = pl.pallas_call(
        _make_conv3x3_kernel(H, Wp, n_valid),
        out_shape=jax.ShapeDtypeStruct((B, c_, n_valid), fdt),
        grid_spec=pltpu.PrefetchScalarGridSpec(
            num_scalar_prefetch=0,
            grid=(B,),
            in_specs=[
                _sample_spec((c_, Lp)),
                _const_spec((9, c_, c_)),
                _const_spec((c_, 1)), _const_spec((c_, 1)),
            ],
            out_specs=_sample_spec((c_, n_valid)),
        ),
        compiler_params=_cparams(blk),
    )(t1pf, p["w_m2"], col(p["s_m2"]), col(p["b_m2"]))
    # strip the wrap ("garbage") columns produced by the flat-window trick
    t2 = conv_raw.reshape(B, c_, H, Wp)[:, :, :, :W].reshape(B, c_, HW)

    # ---- stage 3: CBAM ChannelGate (avg+max pooled shared MLP) + ChannelPool map ----
    blk = 4 * (2 * c_ * HW + 2 * HW)
    cg, comp = pl.pallas_call(
        _channel_gate_kernel,
        out_shape=(jax.ShapeDtypeStruct((B, c_, HW), fdt),
                   jax.ShapeDtypeStruct((B, 2, HW), F32)),
        grid_spec=pltpu.PrefetchScalarGridSpec(
            num_scalar_prefetch=0,
            grid=(B,),
            in_specs=[
                _sample_spec((c_, HW)),
                _const_spec((ch, c_)), _const_spec((ch, 1)),
                _const_spec((c_, ch)), _const_spec((c_, 1)),
            ],
            out_specs=[_sample_spec((c_, HW)), _sample_spec((2, HW))],
        ),
        compiler_params=_cparams(blk),
    )(t2, p["mlp_a1"], col(p["mlp_b1"]), p["mlp_a2"], col(p["mlp_b2"]))

    # ---- stage 4: CBAM SpatialGate (7x7 conv + BN + sigmoid) + bottleneck residual ----
    comp_pad = jnp.pad(comp.reshape(B, 2, H, W), ((0, 0), (0, 0), (3, 3), (3, 3)))
    cg4 = cg.reshape(B, c_, H, W)
    a4 = a.reshape(B, c_, H, W)
    blk = 4 * (2 * (H + 6) * (W + 6) + 3 * c_ * HW)
    bo = pl.pallas_call(
        _make_spatial_gate_kernel(H, W, add_residual=shortcut),
        out_shape=jax.ShapeDtypeStruct((B, c_, H, W), fdt),
        grid_spec=pltpu.PrefetchScalarGridSpec(
            num_scalar_prefetch=0,
            grid=(B,),
            in_specs=[
                _sample_spec((2, H + 6, W + 6)),
                _sample_spec((c_, H, W)),
                _sample_spec((c_, H, W)),
                _smem_spec(),   # 7x7 conv weights, (98,)
                _smem_spec(),   # folded BN (scale, bias), (2,)
            ],
            out_specs=_sample_spec((c_, H, W)),
        ),
        compiler_params=_cparams(blk),
    )(comp_pad, cg4, a4, p["w_sp"], p["bn_sp"])
    bo = bo.reshape(B, c_, HW)

    # ---- stage 5: C3.cv3 on concat([bottleneck_out, cv2_branch]) (concat fused) ----
    blk = 4 * (2 * c_ * HW + c2 * HW + 2 * c2 * c_)
    out = pl.pallas_call(
        _cv3_kernel,
        out_shape=jax.ShapeDtypeStruct((B, c2, HW), fdt),
        grid_spec=pltpu.PrefetchScalarGridSpec(
            num_scalar_prefetch=0,
            grid=(B,),
            in_specs=[
                _sample_spec((c_, HW)), _sample_spec((c_, HW)),
                _const_spec((c2, c_)), _const_spec((c2, c_)),
                _const_spec((c2, 1)), _const_spec((c2, 1)),
            ],
            out_specs=_sample_spec((c2, HW)),
        ),
        compiler_params=_cparams(blk),
    )(bo, bbr, p["w_cv3a"], p["w_cv3b"], col(p["s_cv3"]), col(p["b_cv3"]))
    return out.reshape(B, c2, H, W)


# ----------------------------------------------------------------------------- params & reference
def make_params(key, c1, c2, e=0.5, r=16):
    c_ = int(c2 * e)
    ch = max(c_ // r, 1)
    ks = jax.random.split(key, 16)

    def w(k, shape, fan_in):
        return (jax.random.normal(k, shape, F32) / jnp.sqrt(fan_in)).astype(F32)

    def bn(k, c):
        k1, k2 = jax.random.split(k)
        scale = 0.5 + jax.random.uniform(k1, (c,), F32)   # folded gamma / sqrt(var + eps)
        bias = 0.1 * jax.random.normal(k2, (c,), F32)     # folded beta - mean * scale
        return scale, bias

    p = {}
    p["w_cv1"] = w(ks[0], (c_, c1), c1); p["s_cv1"], p["b_cv1"] = bn(ks[1], c_)
    p["w_cv2"] = w(ks[2], (c_, c1), c1); p["s_cv2"], p["b_cv2"] = bn(ks[3], c_)
    p["w_m1"] = w(ks[4], (c_, c_), c_);  p["s_m1"], p["b_m1"] = bn(ks[5], c_)
    w_m2_oihw = w(ks[6], (c_, c_, 3, 3), c_ * 9)
    p["w_m2_oihw"] = w_m2_oihw
    p["w_m2"] = jnp.transpose(w_m2_oihw, (2, 3, 0, 1)).reshape(9, c_, c_)  # tap-major
    p["s_m2"], p["b_m2"] = bn(ks[7], c_)
    # CBAM ChannelGate shared MLP (torch nn.Linear layout, biases included)
    p["mlp_a1"] = w(ks[8], (ch, c_), c_)
    p["mlp_b1"] = 0.1 * jax.random.normal(ks[9], (ch,), F32)
    p["mlp_a2"] = w(ks[10], (c_, ch), ch)
    p["mlp_b2"] = 0.1 * jax.random.normal(ks[11], (c_,), F32)
    # CBAM SpatialGate: 7x7 conv (1,2,7,7) + BN(1), folded
    w_sp_oihw = w(ks[12], (1, 2, 7, 7), 2 * 49)
    p["w_sp_oihw"] = w_sp_oihw
    sp_s, sp_b = bn(ks[13], 1)
    p["w_sp"] = w_sp_oihw.reshape(98)                      # index = ci*49 + dy*7 + dx
    p["bn_sp"] = jnp.array([sp_s[0], sp_b[0]], F32)
    # C3.cv3 on 2c_ -> c2, split into the two concat halves
    w_cv3 = w(ks[14], (c2, 2 * c_), 2 * c_)
    p["w_cv3"] = w_cv3
    p["w_cv3a"] = w_cv3[:, :c_]
    p["w_cv3b"] = w_cv3[:, c_:]
    p["s_cv3"], p["b_cv3"] = bn(ks[15], c2)
    return p


def c3_b_cbam_ref(x, p, shortcut=True):
    """Pure-JAX reference (same folded-BN inference semantics)."""
    HI = lax.Precision.HIGHEST

    def pw(xf, wt, s, b):
        y = jnp.einsum("oi,bihw->bohw", wt, xf, precision=HI)
        return jax.nn.silu(y * s[None, :, None, None] + b[None, :, None, None])

    a = pw(x, p["w_cv1"], p["s_cv1"], p["b_cv1"])
    bbr = pw(x, p["w_cv2"], p["s_cv2"], p["b_cv2"])
    t1 = pw(a, p["w_m1"], p["s_m1"], p["b_m1"])
    t2 = lax.conv_general_dilated(t1, p["w_m2_oihw"], (1, 1), ((1, 1), (1, 1)),
                                  dimension_numbers=("NCHW", "OIHW", "NCHW"),
                                  precision=HI)
    t2 = jax.nn.silu(t2 * p["s_m2"][None, :, None, None] + p["b_m2"][None, :, None, None])

    avg = jnp.mean(t2, axis=(2, 3))
    mx = jnp.max(t2, axis=(2, 3))

    def mlp(v):
        h = jnp.maximum(jnp.dot(v, p["mlp_a1"].T, precision=HI) + p["mlp_b1"], 0.0)
        return jnp.dot(h, p["mlp_a2"].T, precision=HI) + p["mlp_b2"]

    gate = jax.nn.sigmoid(mlp(avg) + mlp(mx))
    cg = t2 * gate[:, :, None, None]

    comp = jnp.stack([jnp.max(cg, axis=1), jnp.mean(cg, axis=1)], axis=1)
    sc = lax.conv_general_dilated(comp, p["w_sp_oihw"], (1, 1), ((3, 3), (3, 3)),
                                  dimension_numbers=("NCHW", "OIHW", "NCHW"),
                                  precision=HI)
    sg = jax.nn.sigmoid(sc * p["bn_sp"][0] + p["bn_sp"][1])
    cbam = cg * sg
    bo = a + cbam if shortcut else cbam

    cat = jnp.concatenate([bo, bbr], axis=1)
    return pw(cat, p["w_cv3"], p["s_cv3"], p["b_cv3"])


if __name__ == "__main__":
    B, C1, C2, H, W = 2, 64, 64, 16, 16      # c_=32, CBAM hidden = 32//16 = 2
    key = jax.random.PRNGKey(0)
    kx, kp = jax.random.split(key)
    x = jax.random.normal(kx, (B, C1, H, W), F32)
    p = make_params(kp, C1, C2)

    out = jax.block_until_ready(jax.jit(c3_b_cbam_forward)(x, p))
    ref = c3_b_cbam_ref(x, p)
    assert out.shape == (B, C2, H, W)
    max_err = float(jnp.max(jnp.abs(out - ref)))
    assert jnp.allclose(out, ref, atol=2e-3, rtol=2e-3), f"mismatch vs reference: {max_err}"
    print("KERNEL_OK")
</pallas_src>

<mosaic_0001>
module attributes {stable_mosaic.version = 11 : i64} {
  func.func @_stem_kernel(%arg0: i32, %arg1: memref<1x64x256xf32, #tpu.memory_space<vmem>>, %arg2: memref<32x64xf32, #tpu.memory_space<vmem>>, %arg3: memref<32x1xf32, #tpu.memory_space<vmem>>, %arg4: memref<32x1xf32, #tpu.memory_space<vmem>>, %arg5: memref<32x64xf32, #tpu.memory_space<vmem>>, %arg6: memref<32x1xf32, #tpu.memory_space<vmem>>, %arg7: memref<32x1xf32, #tpu.memory_space<vmem>>, %arg8: memref<32x32xf32, #tpu.memory_space<vmem>>, %arg9: memref<32x1xf32, #tpu.memory_space<vmem>>, %arg10: memref<32x1xf32, #tpu.memory_space<vmem>>, %arg11: memref<1x32x256xf32, #tpu.memory_space<vmem>>, %arg12: memref<1x32x256xf32, #tpu.memory_space<vmem>>, %arg13: memref<1x32x256xf32, #tpu.memory_space<vmem>>) attributes {dimension_semantics = [#tpu.dimension_semantics<parallel>], iteration_bounds = array<i64: 2>, scalar_prefetch = 0 : i64, scratch_operands = 0 : i64, tpu.core_type = #tpu.core_type<tc>, window_params = [{transform_indices = @transform_0, window_bounds = array<i64: 1, 64, 256>}, {pipeline_mode = #tpu.pipeline_mode<synchronous>, transform_indices = @transform_1, window_bounds = array<i64: 32, 64>}, {pipeline_mode = #tpu.pipeline_mode<synchronous>, transform_indices = @transform_2, window_bounds = array<i64: 32, 1>}, {pipeline_mode = #tpu.pipeline_mode<synchronous>, transform_indices = @transform_3, window_bounds = array<i64: 32, 1>}, {pipeline_mode = #tpu.pipeline_mode<synchronous>, transform_indices = @transform_4, window_bounds = array<i64: 32, 64>}, {pipeline_mode = #tpu.pipeline_mode<synchronous>, transform_indices = @transform_5, window_bounds = array<i64: 32, 1>}, {pipeline_mode = #tpu.pipeline_mode<synchronous>, transform_indices = @transform_6, window_bounds = array<i64: 32, 1>}, {pipeline_mode = #tpu.pipeline_mode<synchronous>, transform_indices = @transform_7, window_bounds = array<i64: 32, 32>}, {pipeline_mode = #tpu.pipeline_mode<synchronous>, transform_indices = @transform_8, window_bounds = array<i64: 32, 1>}, {pipeline_mode = #tpu.pipeline_mode<synchronous>, transform_indices = @transform_9, window_bounds = array<i64: 32, 1>}, {transform_indices = @transform_10, window_bounds = array<i64: 1, 32, 256>}, {transform_indices = @transform_11, window_bounds = array<i64: 1, 32, 256>}, {transform_indices = @transform_12, window_bounds = array<i64: 1, 32, 256>}]} {
    %c0 = arith.constant 0 : index
    %c0_0 = arith.constant 0 : index
    %0 = vector.load %arg2[%c0, %c0_0] : memref<32x64xf32, #tpu.memory_space<vmem>>, vector<32x64xf32>
    %c0_1 = arith.constant 0 : index
    %c0_2 = arith.constant 0 : index
    %c0_3 = arith.constant 0 : index
    %1 = vector.load %arg1[%c0_1, %c0_2, %c0_3] : memref<1x64x256xf32, #tpu.memory_space<vmem>>, vector<1x64x256xf32>
    %2 = vector.shape_cast %1 : vector<1x64x256xf32> to vector<64x256xf32>
    %cst = arith.constant dense<0.000000e+00> : vector<32x256xf32>
    %3 = tpu.matmul %0, %2, %cst {dimension_numbers = #tpu.dot_dimension_numbers<[1], [0], [0], [1], [0, 0, 1, 1], [], []>} : vector<32x64xf32>, vector<64x256xf32>, vector<32x256xf32> -> vector<32x256xf32>
    %c0_4 = arith.constant 0 : index
    %c0_5 = arith.constant 0 : index
    %4 = vector.load %arg3[%c0_4, %c0_5] : memref<32x1xf32, #tpu.memory_space<vmem>>, vector<32x1xf32>
    %5 = vector.broadcast %4 : vector<32x1xf32> to vector<32x256xf32>
    %6 = arith.mulf %3, %5 : vector<32x256xf32>
    %c0_6 = arith.constant 0 : index
    %c0_7 = arith.constant 0 : index
    %7 = vector.load %arg4[%c0_6, %c0_7] : memref<32x1xf32, #tpu.memory_space<vmem>>, vector<32x1xf32>
    %8 = vector.broadcast %7 : vector<32x1xf32> to vector<32x256xf32>
    %9 = arith.addf %6, %8 : vector<32x256xf32>
    %10 = arith.negf %9 : vector<32x256xf32>
    %11 = math.exp %10 : vector<32x256xf32>
    %cst_8 = arith.constant 1.000000e+00 : f32
    %12 = vector.broadcast %cst_8 : f32 to vector<32x256xf32>
    %13 = arith.addf %12, %11 : vector<32x256xf32>
    %14 = arith.divf %12, %13 : vector<32x256xf32>
    %15 = arith.mulf %9, %14 : vector<32x256xf32>
    %c0_9 = arith.constant 0 : index
    %c0_10 = arith.constant 0 : index
    %c0_11 = arith.constant 0 : index
    %16 = vector.load %arg11[%c0_9, %c0_10, %c0_11] : memref<1x32x256xf32, #tpu.memory_space<vmem>>, vector<1x32x256xf32>
    %17 = vector.shape_cast %16 : vector<1x32x256xf32> to vector<32x256xf32>
    %18 = vector.shape_cast %15 : vector<32x256xf32> to vector<1x32x256xf32>
    tpu.vector_store %arg11[%c0_9, %c0_10, %c0_11], %18 {strides = array<i32>} : memref<1x32x256xf32, #tpu.memory_space<vmem>>, vector<1x32x256xf32>,
    %c0_12 = arith.constant 0 : index
    %c0_13 = arith.constant 0 : index
    %19 = vector.load %arg5[%c0_12, %c0_13] : memref<32x64xf32, #tpu.memory_space<vmem>>, vector<32x64xf32>
    %c0_14 = arith.constant 0 : index
    %c0_15 = arith.constant 0 : index
    %c0_16 = arith.constant 0 : index
    %20 = vector.load %arg1[%c0_14, %c0_15, %c0_16] : memref<1x64x256xf32, #tpu.memory_space<vmem>>, vector<1x64x256xf32>
    %21 = vector.shape_cast %20 : vector<1x64x256xf32> to vector<64x256xf32>
    %cst_17 = arith.constant dense<0.000000e+00> : vector<32x256xf32>
    %22 = tpu.matmul %19, %21, %cst_17 {dimension_numbers = #tpu.dot_dimension_numbers<[1], [0], [0], [1], [0, 0, 1, 1], [], []>} : vector<32x64xf32>, vector<64x256xf32>, vector<32x256xf32> -> vector<32x256xf32>
    %c0_18 = arith.constant 0 : index
    %c0_19 = arith.constant 0 : index
    %23 = vector.load %arg6[%c0_18, %c0_19] : memref<32x1xf32, #tpu.memory_space<vmem>>, vector<32x1xf32>
    %24 = vector.broadcast %23 : vector<32x1xf32> to vector<32x256xf32>
    %25 = arith.mulf %22, %24 : vector<32x256xf32>
    %c0_20 = arith.constant 0 : index
    %c0_21 = arith.constant 0 : index
    %26 = vector.load %arg7[%c0_20, %c0_21] : memref<32x1xf32, #tpu.memory_space<vmem>>, vector<32x1xf32>
    %27 = vector.broadcast %26 : vector<32x1xf32> to vector<32x256xf32>
    %28 = arith.addf %25, %27 : vector<32x256xf32>
    %29 = arith.negf %28 : vector<32x256xf32>
    %30 = math.exp %29 : vector<32x256xf32>
    %cst_22 = arith.constant 1.000000e+00 : f32
    %31 = vector.broadcast %cst_22 : f32 to vector<32x256xf32>
    %32 = arith.addf %31, %30 : vector<32x256xf32>
    %33 = arith.divf %31, %32 : vector<32x256xf32>
    %34 = arith.mulf %28, %33 : vector<32x256xf32>
    %c0_23 = arith.constant 0 : index
    %c0_24 = arith.constant 0 : index
    %c0_25 = arith.constant 0 : index
    %35 = vector.load %arg12[%c0_23, %c0_24, %c0_25] : memref<1x32x256xf32, #tpu.memory_space<vmem>>, vector<1x32x256xf32>
    %36 = vector.shape_cast %35 : vector<1x32x256xf32> to vector<32x256xf32>
    %37 = vector.shape_cast %34 : vector<32x256xf32> to vector<1x32x256xf32>
    tpu.vector_store %arg12[%c0_23, %c0_24, %c0_25], %37 {strides = array<i32>} : memref<1x32x256xf32, #tpu.memory_space<vmem>>, vector<1x32x256xf32>,
    %c0_26 = arith.constant 0 : index
    %c0_27 = arith.constant 0 : index
    %38 = vector.load %arg8[%c0_26, %c0_27] : memref<32x32xf32, #tpu.memory_space<vmem>>, vector<32x32xf32>
    %c0_28 = arith.constant 0 : index
    %c0_29 = arith.constant 0 : index
    %c0_30 = arith.constant 0 : index
    %39 = vector.load %arg11[%c0_28, %c0_29, %c0_30] : memref<1x32x256xf32, #tpu.memory_space<vmem>>, vector<1x32x256xf32>
    %40 = vector.shape_cast %39 : vector<1x32x256xf32> to vector<32x256xf32>
    %cst_31 = arith.constant dense<0.000000e+00> : vector<32x256xf32>
    %41 = tpu.matmul %38, %40, %cst_31 {dimension_numbers = #tpu.dot_dimension_numbers<[1], [0], [0], [1], [0, 0, 1, 1], [], []>} : vector<32x32xf32>, vector<32x256xf32>, vector<32x256xf32> -> vector<32x256xf32>
    %c0_32 = arith.constant 0 : index
    %c0_33 = arith.constant 0 : index
    %42 = vector.load %arg9[%c0_32, %c0_33] : memref<32x1xf32, #tpu.memory_space<vmem>>, vector<32x1xf32>
    %43 = vector.broadcast %42 : vector<32x1xf32> to vector<32x256xf32>
    %44 = arith.mulf %41, %43 : vector<32x256xf32>
    %c0_34 = arith.constant 0 : index
    %c0_35 = arith.constant 0 : index
    %45 = vector.load %arg10[%c0_34, %c0_35] : memref<32x1xf32, #tpu.memory_space<vmem>>, vector<32x1xf32>
    %46 = vector.broadcast %45 : vector<32x1xf32> to vector<32x256xf32>
    %47 = arith.addf %44, %46 : vector<32x256xf32>
    %48 = arith.negf %47 : vector<32x256xf32>
    %49 = math.exp %48 : vector<32x256xf32>
    %cst_36 = arith.constant 1.000000e+00 : f32
    %50 = vector.broadcast %cst_36 : f32 to vector<32x256xf32>
    %51 = arith.addf %50, %49 : vector<32x256xf32>
    %52 = arith.divf %50, %51 : vector<32x256xf32>
    %53 = arith.mulf %47, %52 : vector<32x256xf32>
    %c0_37 = arith.constant 0 : index
    %c0_38 = arith.constant 0 : index
    %c0_39 = arith.constant 0 : index
    %54 = vector.load %arg13[%c0_37, %c0_38, %c0_39] : memref<1x32x256xf32, #tpu.memory_space<vmem>>, vector<1x32x256xf32>
    %55 = vector.shape_cast %54 : vector<1x32x256xf32> to vector<32x256xf32>
    %56 = vector.shape_cast %53 : vector<32x256xf32> to vector<1x32x256xf32>
    tpu.vector_store %arg13[%c0_37, %c0_38, %c0_39], %56 {strides = array<i32>} : memref<1x32x256xf32, #tpu.memory_space<vmem>>, vector<1x32x256xf32>,
    return
  }
  func.func @transform_0(%arg0: i32) -> (i32, i32, i32) {
    %c0_i32 = arith.constant 0 : i32
    %c0_i32_0 = arith.constant 0 : i32
    %c0_i32_1 = arith.constant 0 : i32
    return %arg0, %c0_i32, %c0_i32_0 : i32, i32, i32
  }
  func.func @transform_1(%arg0: i32) -> (i32, i32) {
    %c0_i32 = arith.constant 0 : i32
    %c0_i32_0 = arith.constant 0 : i32
    %c0_i32_1 = arith.constant 0 : i32
    return %c0_i32, %c0_i32_0 : i32, i32
  }
  func.func @transform_2(%arg0: i32) -> (i32, i32) {
    %c0_i32 = arith.constant 0 : i32
    %c0_i32_0 = arith.constant 0 : i32
    %c0_i32_1 = arith.constant 0 : i32
    return %c0_i32, %c0_i32_0 : i32, i32
  }
  func.func @transform_3(%arg0: i32) -> (i32, i32) {
    %c0_i32 = arith.constant 0 : i32
    %c0_i32_0 = arith.constant 0 : i32
    %c0_i32_1 = arith.constant 0 : i32
    return %c0_i32, %c0_i32_0 : i32, i32
  }
  func.func @transform_4(%arg0: i32) -> (i32, i32) {
    %c0_i32 = arith.constant 0 : i32
    %c0_i32_0 = arith.constant 0 : i32
    %c0_i32_1 = arith.constant 0 : i32
    return %c0_i32, %c0_i32_0 : i32, i32
  }
  func.func @transform_5(%arg0: i32) -> (i32, i32) {
    %c0_i32 = arith.constant 0 : i32
    %c0_i32_0 = arith.constant 0 : i32
    %c0_i32_1 = arith.constant 0 : i32
    return %c0_i32, %c0_i32_0 : i32, i32
  }
  func.func @transform_6(%arg0: i32) -> (i32, i32) {
    %c0_i32 = arith.constant 0 : i32
    %c0_i32_0 = arith.constant 0 : i32
    %c0_i32_1 = arith.constant 0 : i32
    return %c0_i32, %c0_i32_0 : i32, i32
  }
  func.func @transform_7(%arg0: i32) -> (i32, i32) {
    %c0_i32 = arith.constant 0 : i32
    %c0_i32_0 = arith.constant 0 : i32
    %c0_i32_1 = arith.constant 0 : i32
    return %c0_i32, %c0_i32_0 : i32, i32
  }
  func.func @transform_8(%arg0: i32) -> (i32, i32) {
    %c0_i32 = arith.constant 0 : i32
    %c0_i32_0 = arith.constant 0 : i32
    %c0_i32_1 = arith.constant 0 : i32
    return %c0_i32, %c0_i32_0 : i32, i32
  }
  func.func @transform_9(%arg0: i32) -> (i32, i32) {
    %c0_i32 = arith.constant 0 : i32
    %c0_i32_0 = arith.constant 0 : i32
    %c0_i32_1 = arith.constant 0 : i32
    return %c0_i32, %c0_i32_0 : i32, i32
  }
  func.func @transform_10(%arg0: i32) -> (i32, i32, i32) {
    %c0_i32 = arith.constant 0 : i32
    %c0_i32_0 = arith.constant 0 : i32
    %c0_i32_1 = arith.constant 0 : i32
    return %arg0, %c0_i32, %c0_i32_0 : i32, i32, i32
  }
  func.func @transform_11(%arg0: i32) -> (i32, i32, i32) {
    %c0_i32 = arith.constant 0 : i32
    %c0_i32_0 = arith.constant 0 : i32
    %c0_i32_1 = arith.constant 0 : i32
    return %arg0, %c0_i32, %c0_i32_0 : i32, i32, i32
  }
  func.func @transform_12(%arg0: i32) -> (i32, i32, i32) {
    %c0_i32 = arith.constant 0 : i32
    %c0_i32_0 = arith.constant 0 : i32
    %c0_i32_1 = arith.constant 0 : i32
    return %arg0, %c0_i32, %c0_i32_0 : i32, i32, i32
  }
}

module attributes {stable_mosaic.version = 11 : i64} {
  func.func @kernel(%arg0: i32, %arg1: memref<1x32x384xf32, #tpu.memory_space<vmem>>, %arg2: memref<9x32x32xf32, #tpu.memory_space<vmem>>, %arg3: memref<32x1xf32, #tpu.memory_space<vmem>>, %arg4: memref<32x1xf32, #tpu.memory_space<vmem>>, %arg5: memref<1x32x288xf32, #tpu.memory_space<vmem>>) attributes {dimension_semantics = [#tpu.dimension_semantics<parallel>], iteration_bounds = array<i64: 2>, scalar_prefetch = 0 : i64, scratch_operands = 0 : i64, tpu.core_type = #tpu.core_type<tc>, window_params = [{transform_indices = @transform_0, window_bounds = array<i64: 1, 32, 384>}, {pipeline_mode = #tpu.pipeline_mode<synchronous>, transform_indices = @transform_1, window_bounds = array<i64: 9, 32, 32>}, {pipeline_mode = #tpu.pipeline_mode<synchronous>, transform_indices = @transform_2, window_bounds = array<i64: 32, 1>}, {pipeline_mode = #tpu.pipeline_mode<synchronous>, transform_indices = @transform_3, window_bounds = array<i64: 32, 1>}, {transform_indices = @transform_4, window_bounds = array<i64: 1, 32, 288>}]} {
    %c0 = arith.constant 0 : index
    %c0_0 = arith.constant 0 : index
    %c0_1 = arith.constant 0 : index
    %0 = vector.load %arg2[%c0, %c0_0, %c0_1] : memref<9x32x32xf32, #tpu.memory_space<vmem>>, vector<1x32x32xf32>
    %1 = vector.shape_cast %0 : vector<1x32x32xf32> to vector<32x32xf32>
    %c0_2 = arith.constant 0 : index
    %c0_3 = arith.constant 0 : index
    %c0_4 = arith.constant 0 : index
    %2 = vector.load %arg1[%c0_2, %c0_3, %c0_4] : memref<1x32x384xf32, #tpu.memory_space<vmem>>, vector<1x32x288xf32>
    %3 = vector.shape_cast %2 : vector<1x32x288xf32> to vector<32x288xf32>
    %cst = arith.constant dense<0.000000e+00> : vector<32x288xf32>
    %4 = tpu.matmul %1, %3, %cst {dimension_numbers = #tpu.dot_dimension_numbers<[1], [0], [0], [1], [0, 0, 1, 1], [], []>} : vector<32x32xf32>, vector<32x288xf32>, vector<32x288xf32> -> vector<32x288xf32>
    %c1 = arith.constant 1 : index
    %c0_5 = arith.constant 0 : index
    %c0_6 = arith.constant 0 : index
    %5 = vector.load %arg2[%c1, %c0_5, %c0_6] : memref<9x32x32xf32, #tpu.memory_space<vmem>>, vector<1x32x32xf32>
    %6 = vector.shape_cast %5 : vector<1x32x32xf32> to vector<32x32xf32>
    %c0_7 = arith.constant 0 : index
    %c0_8 = arith.constant 0 : index
    %c1_9 = arith.constant 1 : index
    %7 = vector.load %arg1[%c0_7, %c0_8, %c1_9] : memref<1x32x384xf32, #tpu.memory_space<vmem>>, vector<1x32x288xf32>
    %8 = vector.shape_cast %7 : vector<1x32x288xf32> to vector<32x288xf32>
    %cst_10 = arith.constant dense<0.000000e+00> : vector<32x288xf32>
    %9 = tpu.matmul %6, %8, %cst_10 {dimension_numbers = #tpu.dot_dimension_numbers<[1], [0], [0], [1], [0, 0, 1, 1], [], []>} : vector<32x32xf32>, vector<32x288xf32>, vector<32x288xf32> -> vector<32x288xf32>
    %10 = arith.addf %4, %9 : vector<32x288xf32>
    %c2 = arith.constant 2 : index
    %c0_11 = arith.constant 0 : index
    %c0_12 = arith.constant 0 : index
    %11 = vector.load %arg2[%c2, %c0_11, %c0_12] : memref<9x32x32xf32, #tpu.memory_space<vmem>>, vector<1x32x32xf32>
    %12 = vector.shape_cast %11 : vector<1x32x32xf32> to vector<32x32xf32>
    %c0_13 = arith.constant 0 : index
    %c0_14 = arith.constant 0 : index
    %c2_15 = arith.constant 2 : index
    %13 = vector.load %arg1[%c0_13, %c0_14, %c2_15] : memref<1x32x384xf32, #tpu.memory_space<vmem>>, vector<1x32x288xf32>
    %14 = vector.shape_cast %13 : vector<1x32x288xf32> to vector<32x288xf32>
    %cst_16 = arith.constant dense<0.000000e+00> : vector<32x288xf32>
    %15 = tpu.matmul %12, %14, %cst_16 {dimension_numbers = #tpu.dot_dimension_numbers<[1], [0], [0], [1], [0, 0, 1, 1], [], []>} : vector<32x32xf32>, vector<32x288xf32>, vector<32x288xf32> -> vector<32x288xf32>
    %16 = arith.addf %10, %15 : vector<32x288xf32>
    %c3 = arith.constant 3 : index
    %c0_17 = arith.constant 0 : index
    %c0_18 = arith.constant 0 : index
    %17 = vector.load %arg2[%c3, %c0_17, %c0_18] : memref<9x32x32xf32, #tpu.memory_space<vmem>>, vector<1x32x32xf32>
    %18 = vector.shape_cast %17 : vector<1x32x32xf32> to vector<32x32xf32>
    %c0_19 = arith.constant 0 : index
    %c0_20 = arith.constant 0 : index
    %c18 = arith.constant 18 : index
    %19 = vector.load %arg1[%c0_19, %c0_20, %c18] : memref<1x32x384xf32, #tpu.memory_space<vmem>>, vector<1x32x288xf32>
    %20 = vector.shape_cast %19 : vector<1x32x288xf32> to vector<32x288xf32>
    %cst_21 = arith.constant dense<0.000000e+00> : vector<32x288xf32>
    %21 = tpu.matmul %18, %20, %cst_21 {dimension_numbers = #tpu.dot_dimension_numbers<[1], [0], [0], [1], [0, 0, 1, 1], [], []>} : vector<32x32xf32>, vector<32x288xf32>, vector<32x288xf32> -> vector<32x288xf32>
    %22 = arith.addf %16, %21 : vector<32x288xf32>
    %c4 = arith.constant 4 : index
    %c0_22 = arith.constant 0 : index
    %c0_23 = arith.constant 0 : index
    %23 = vector.load %arg2[%c4, %c0_22, %c0_23] : memref<9x32x32xf32, #tpu.memory_space<vmem>>, vector<1x32x32xf32>
    %24 = vector.shape_cast %23 : vector<1x32x32xf32> to vector<32x32xf32>
    %c0_24 = arith.constant 0 : index
    %c0_25 = arith.constant 0 : index
    %c19 = arith.constant 19 : index
    %25 = vector.load %arg1[%c0_24, %c0_25, %c19] : memref<1x32x384xf32, #tpu.memory_space<vmem>>, vector<1x32x288xf32>
    %26 = vector.shape_cast %25 : vector<1x32x288xf32> to vector<32x288xf32>
    %cst_26 = arith.constant dense<0.000000e+00> : vector<32x288xf32>
    %27 = tpu.matmul %24, %26, %cst_26 {dimension_numbers = #tpu.dot_dimension_numbers<[1], [0], [0], [1], [0, 0, 1, 1], [], []>} : vector<32x32xf32>, vector<32x288xf32>, vector<32x288xf32> -> vector<32x288xf32>
    %28 = arith.addf %22, %27 : vector<32x288xf32>
    %c5 = arith.constant 5 : index
    %c0_27 = arith.constant 0 : index
    %c0_28 = arith.constant 0 : index
    %29 = vector.load %arg2[%c5, %c0_27, %c0_28] : memref<9x32x32xf32, #tpu.memory_space<vmem>>, vector<1x32x32xf32>
    %30 = vector.shape_cast %29 : vector<1x32x32xf32> to vector<32x32xf32>
    %c0_29 = arith.constant 0 : index
    %c0_30 = arith.constant 0 : index
    %c20 = arith.constant 20 : index
    %31 = vector.load %arg1[%c0_29, %c0_30, %c20] : memref<1x32x384xf32, #tpu.memory_space<vmem>>, vector<1x32x288xf32>
    %32 = vector.shape_cast %31 : vector<1x32x288xf32> to vector<32x288xf32>
    %cst_31 = arith.constant dense<0.000000e+00> : vector<32x288xf32>
    %33 = tpu.matmul %30, %32, %cst_31 {dimension_numbers = #tpu.dot_dimension_numbers<[1], [0], [0], [1], [0, 0, 1, 1], [], []>} : vector<32x32xf32>, vector<32x288xf32>, vector<32x288xf32> -> vector<32x288xf32>
    %34 = arith.addf %28, %33 : vector<32x288xf32>
    %c6 = arith.constant 6 : index
    %c0_32 = arith.constant 0 : index
    %c0_33 = arith.constant 0 : index
    %35 = vector.load %arg2[%c6, %c0_32, %c0_33] : memref<9x32x32xf32, #tpu.memory_space<vmem>>, vector<1x32x32xf32>
    %36 = vector.shape_cast %35 : vector<1x32x32xf32> to vector<32x32xf32>
    %c0_34 = arith.constant 0 : index
    %c0_35 = arith.constant 0 : index
    %c36 = arith.constant 36 : index
    %37 = vector.load %arg1[%c0_34, %c0_35, %c36] : memref<1x32x384xf32, #tpu.memory_space<vmem>>, vector<1x32x288xf32>
    %38 = vector.shape_cast %37 : vector<1x32x288xf32> to vector<32x288xf32>
    %cst_36 = arith.constant dense<0.000000e+00> : vector<32x288xf32>
    %39 = tpu.matmul %36, %38, %cst_36 {dimension_numbers = #tpu.dot_dimension_numbers<[1], [0], [0], [1], [0, 0, 1, 1], [], []>} : vector<32x32xf32>, vector<32x288xf32>, vector<32x288xf32> -> vector<32x288xf32>
    %40 = arith.addf %34, %39 : vector<32x288xf32>
    %c7 = arith.constant 7 : index
    %c0_37 = arith.constant 0 : index
    %c0_38 = arith.constant 0 : index
    %41 = vector.load %arg2[%c7, %c0_37, %c0_38] : memref<9x32x32xf32, #tpu.memory_space<vmem>>, vector<1x32x32xf32>
    %42 = vector.shape_cast %41 : vector<1x32x32xf32> to vector<32x32xf32>
    %c0_39 = arith.constant 0 : index
    %c0_40 = arith.constant 0 : index
    %c37 = arith.constant 37 : index
    %43 = vector.load %arg1[%c0_39, %c0_40, %c37] : memref<1x32x384xf32, #tpu.memory_space<vmem>>, vector<1x32x288xf32>
    %44 = vector.shape_cast %43 : vector<1x32x288xf32> to vector<32x288xf32>
    %cst_41 = arith.constant dense<0.000000e+00> : vector<32x288xf32>
    %45 = tpu.matmul %42, %44, %cst_41 {dimension_numbers = #tpu.dot_dimension_numbers<[1], [0], [0], [1], [0, 0, 1, 1], [], []>} : vector<32x32xf32>, vector<32x288xf32>, vector<32x288xf32> -> vector<32x288xf32>
    %46 = arith.addf %40, %45 : vector<32x288xf32>
    %c8 = arith.constant 8 : index
    %c0_42 = arith.constant 0 : index
    %c0_43 = arith.constant 0 : index
    %47 = vector.load %arg2[%c8, %c0_42, %c0_43] : memref<9x32x32xf32, #tpu.memory_space<vmem>>, vector<1x32x32xf32>
    %48 = vector.shape_cast %47 : vector<1x32x32xf32> to vector<32x32xf32>
    %c0_44 = arith.constant 0 : index
    %c0_45 = arith.constant 0 : index
    %c38 = arith.constant 38 : index
    %49 = vector.load %arg1[%c0_44, %c0_45, %c38] : memref<1x32x384xf32, #tpu.memory_space<vmem>>, vector<1x32x288xf32>
    %50 = vector.shape_cast %49 : vector<1x32x288xf32> to vector<32x288xf32>
    %cst_46 = arith.constant dense<0.000000e+00> : vector<32x288xf32>
    %51 = tpu.matmul %48, %50, %cst_46 {dimension_numbers = #tpu.dot_dimension_numbers<[1], [0], [0], [1], [0, 0, 1, 1], [], []>} : vector<32x32xf32>, vector<32x288xf32>, vector<32x288xf32> -> vector<32x288xf32>
    %52 = arith.addf %46, %51 : vector<32x288xf32>
    %c0_47 = arith.constant 0 : index
    %c0_48 = arith.constant 0 : index
    %53 = vector.load %arg3[%c0_47, %c0_48] : memref<32x1xf32, #tpu.memory_space<vmem>>, vector<32x1xf32>
    %54 = vector.broadcast %53 : vector<32x1xf32> to vector<32x288xf32>
    %55 = arith.mulf %52, %54 : vector<32x288xf32>
    %c0_49 = arith.constant 0 : index
    %c0_50 = arith.constant 0 : index
    %56 = vector.load %arg4[%c0_49, %c0_50] : memref<32x1xf32, #tpu.memory_space<vmem>>, vector<32x1xf32>
    %57 = vector.broadcast %56 : vector<32x1xf32> to vector<32x288xf32>
    %58 = arith.addf %55, %57 : vector<32x288xf32>
    %59 = arith.negf %58 : vector<32x288xf32>
    %60 = math.exp %59 : vector<32x288xf32>
    %cst_51 = arith.constant 1.000000e+00 : f32
    %61 = vector.broadcast %cst_51 : f32 to vector<32x288xf32>
    %62 = arith.addf %61, %60 : vector<32x288xf32>
    %63 = arith.divf %61, %62 : vector<32x288xf32>
    %64 = arith.mulf %58, %63 : vector<32x288xf32>
    %c0_52 = arith.constant 0 : index
    %c0_53 = arith.constant 0 : index
    %c0_54 = arith.constant 0 : index
    %65 = vector.load %arg5[%c0_52, %c0_53, %c0_54] : memref<1x32x288xf32, #tpu.memory_space<vmem>>, vector<1x32x288xf32>
    %66 = vector.shape_cast %65 : vector<1x32x288xf32> to vector<32x288xf32>
    %67 = vector.shape_cast %64 : vector<32x288xf32> to vector<1x32x288xf32>
    tpu.vector_store %arg5[%c0_52, %c0_53, %c0_54], %67 {strides = array<i32>} : memref<1x32x288xf32, #tpu.memory_space<vmem>>, vector<1x32x288xf32>,
    return
  }
  func.func @transform_0(%arg0: i32) -> (i32, i32, i32) {
    %c0_i32 = arith.constant 0 : i32
    %c0_i32_0 = arith.constant 0 : i32
    %c0_i32_1 = arith.constant 0 : i32
    return %arg0, %c0_i32, %c0_i32_0 : i32, i32, i32
  }
  func.func @transform_1(%arg0: i32) -> (i32, i32, i32) {
    %c0_i32 = arith.constant 0 : i32
    %c0_i32_0 = arith.constant 0 : i32
    %c0_i32_1 = arith.constant 0 : i32
    %c0_i32_2 = arith.constant 0 : i32
    return %c0_i32, %c0_i32_0, %c0_i32_1 : i32, i32, i32
  }
  func.func @transform_2(%arg0: i32) -> (i32, i32) {
    %c0_i32 = arith.constant 0 : i32
    %c0_i32_0 = arith.constant 0 : i32
    %c0_i32_1 = arith.constant 0 : i32
    return %c0_i32, %c0_i32_0 : i32, i32
  }
  func.func @transform_3(%arg0: i32) -> (i32, i32) {
    %c0_i32 = arith.constant 0 : i32
    %c0_i32_0 = arith.constant 0 : i32
    %c0_i32_1 = arith.constant 0 : i32
    return %c0_i32, %c0_i32_0 : i32, i32
  }
  func.func @transform_4(%arg0: i32) -> (i32, i32, i32) {
    %c0_i32 = arith.constant 0 : i32
    %c0_i32_0 = arith.constant 0 : i32
    %c0_i32_1 = arith.constant 0 : i32
    return %arg0, %c0_i32, %c0_i32_0 : i32, i32, i32
  }
}

module attributes {stable_mosaic.version = 11 : i64} {
  func.func @_channel_gate_kernel(%arg0: i32, %arg1: memref<1x32x256xf32, #tpu.memory_space<vmem>>, %arg2: memref<2x32xf32, #tpu.memory_space<vmem>>, %arg3: memref<2x1xf32, #tpu.memory_space<vmem>>, %arg4: memref<32x2xf32, #tpu.memory_space<vmem>>, %arg5: memref<32x1xf32, #tpu.memory_space<vmem>>, %arg6: memref<1x32x256xf32, #tpu.memory_space<vmem>>, %arg7: memref<1x2x256xf32, #tpu.memory_space<vmem>>) attributes {dimension_semantics = [#tpu.dimension_semantics<parallel>], iteration_bounds = array<i64: 2>, scalar_prefetch = 0 : i64, scratch_operands = 0 : i64, tpu.core_type = #tpu.core_type<tc>, window_params = [{transform_indices = @transform_0, window_bounds = array<i64: 1, 32, 256>}, {pipeline_mode = #tpu.pipeline_mode<synchronous>, transform_indices = @transform_1, window_bounds = array<i64: 2, 32>}, {pipeline_mode = #tpu.pipeline_mode<synchronous>, transform_indices = @transform_2, window_bounds = array<i64: 2, 1>}, {pipeline_mode = #tpu.pipeline_mode<synchronous>, transform_indices = @transform_3, window_bounds = array<i64: 32, 2>}, {pipeline_mode = #tpu.pipeline_mode<synchronous>, transform_indices = @transform_4, window_bounds = array<i64: 32, 1>}, {transform_indices = @transform_5, window_bounds = array<i64: 1, 32, 256>}, {transform_indices = @transform_6, window_bounds = array<i64: 1, 2, 256>}]} {
    %c0 = arith.constant 0 : index
    %c0_0 = arith.constant 0 : index
    %c0_1 = arith.constant 0 : index
    %0 = vector.load %arg1[%c0, %c0_0, %c0_1] : memref<1x32x256xf32, #tpu.memory_space<vmem>>, vector<1x32x256xf32>
    %1 = vector.shape_cast %0 : vector<1x32x256xf32> to vector<32x256xf32>
    %cst = arith.constant dense<0.000000e+00> : vector<32xf32>
    %2 = vector.multi_reduction <add>, %1, %cst [1] : vector<32x256xf32> to vector<32xf32>
    %3 = vector.shape_cast %2 : vector<32xf32> to vector<32x1xf32>
    %cst_2 = arith.constant 2.560000e+02 : f32
    %4 = vector.broadcast %cst_2 : f32 to vector<32x1xf32>
    %5 = arith.divf %3, %4 : vector<32x1xf32>
    %cst_3 = arith.constant dense<0xFF800000> : vector<32xf32>
    %6 = vector.multi_reduction <maximumf>, %1, %cst_3 [1] : vector<32x256xf32> to vector<32xf32>
    %7 = vector.shape_cast %6 : vector<32xf32> to vector<32x1xf32>
    %c0_4 = arith.constant 0 : index
    %c0_5 = arith.constant 0 : index
    %8 = vector.load %arg2[%c0_4, %c0_5] : memref<2x32xf32, #tpu.memory_space<vmem>>, vector<2x32xf32>
    %cst_6 = arith.constant dense<0.000000e+00> : vector<2x1xf32>
    %9 = tpu.matmul %8, %5, %cst_6 {dimension_numbers = #tpu.dot_dimension_numbers<[1], [0], [0], [1], [0, 0, 1, 1], [], []>} : vector<2x32xf32>, vector<32x1xf32>, vector<2x1xf32> -> vector<2x1xf32>
    %c0_7 = arith.constant 0 : index
    %c0_8 = arith.constant 0 : index
    %10 = vector.load %arg3[%c0_7, %c0_8] : memref<2x1xf32, #tpu.memory_space<vmem>>, vector<2x1xf32>
    %11 = arith.addf %9, %10 : vector<2x1xf32>
    %cst_9 = arith.constant 0.000000e+00 : f32
    %12 = vector.broadcast %cst_9 : f32 to vector<2x1xf32>
    %13 = arith.maximumf %11, %12 : vector<2x1xf32>
    %c0_10 = arith.constant 0 : index
    %c0_11 = arith.constant 0 : index
    %14 = vector.load %arg4[%c0_10, %c0_11] : memref<32x2xf32, #tpu.memory_space<vmem>>, vector<32x2xf32>
    %cst_12 = arith.constant dense<0.000000e+00> : vector<32x1xf32>
    %15 = tpu.matmul %14, %13, %cst_12 {dimension_numbers = #tpu.dot_dimension_numbers<[1], [0], [0], [1], [0, 0, 1, 1], [], []>} : vector<32x2xf32>, vector<2x1xf32>, vector<32x1xf32> -> vector<32x1xf32>
    %c0_13 = arith.constant 0 : index
    %c0_14 = arith.constant 0 : index
    %16 = vector.load %arg5[%c0_13, %c0_14] : memref<32x1xf32, #tpu.memory_space<vmem>>, vector<32x1xf32>
    %17 = arith.addf %15, %16 : vector<32x1xf32>
    %c0_15 = arith.constant 0 : index
    %c0_16 = arith.constant 0 : index
    %18 = vector.load %arg2[%c0_15, %c0_16] : memref<2x32xf32, #tpu.memory_space<vmem>>, vector<2x32xf32>
    %cst_17 = arith.constant dense<0.000000e+00> : vector<2x1xf32>
    %19 = tpu.matmul %18, %7, %cst_17 {dimension_numbers = #tpu.dot_dimension_numbers<[1], [0], [0], [1], [0, 0, 1, 1], [], []>} : vector<2x32xf32>, vector<32x1xf32>, vector<2x1xf32> -> vector<2x1xf32>
    %c0_18 = arith.constant 0 : index
    %c0_19 = arith.constant 0 : index
    %20 = vector.load %arg3[%c0_18, %c0_19] : memref<2x1xf32, #tpu.memory_space<vmem>>, vector<2x1xf32>
    %21 = arith.addf %19, %20 : vector<2x1xf32>
    %cst_20 = arith.constant 0.000000e+00 : f32
    %22 = vector.broadcast %cst_20 : f32 to vector<2x1xf32>
    %23 = arith.maximumf %21, %22 : vector<2x1xf32>
    %c0_21 = arith.constant 0 : index
    %c0_22 = arith.constant 0 : index
    %24 = vector.load %arg4[%c0_21, %c0_22] : memref<32x2xf32, #tpu.memory_space<vmem>>, vector<32x2xf32>
    %cst_23 = arith.constant dense<0.000000e+00> : vector<32x1xf32>
    %25 = tpu.matmul %24, %23, %cst_23 {dimension_numbers = #tpu.dot_dimension_numbers<[1], [0], [0], [1], [0, 0, 1, 1], [], []>} : vector<32x2xf32>, vector<2x1xf32>, vector<32x1xf32> -> vector<32x1xf32>
    %c0_24 = arith.constant 0 : index
    %c0_25 = arith.constant 0 : index
    %26 = vector.load %arg5[%c0_24, %c0_25] : memref<32x1xf32, #tpu.memory_space<vmem>>, vector<32x1xf32>
    %27 = arith.addf %25, %26 : vector<32x1xf32>
    %28 = arith.addf %17, %27 : vector<32x1xf32>
    %29 = arith.negf %28 : vector<32x1xf32>
    %30 = math.exp %29 : vector<32x1xf32>
    %cst_26 = arith.constant 1.000000e+00 : f32
    %31 = vector.broadcast %cst_26 : f32 to vector<32x1xf32>
    %32 = arith.addf %31, %30 : vector<32x1xf32>
    %33 = arith.divf %31, %32 : vector<32x1xf32>
    %c0_27 = arith.constant 0 : index
    %c0_28 = arith.constant 0 : index
    %c0_29 = arith.constant 0 : index
    %34 = vector.load %arg1[%c0_27, %c0_28, %c0_29] : memref<1x32x256xf32, #tpu.memory_space<vmem>>, vector<1x32x256xf32>
    %35 = vector.shape_cast %34 : vector<1x32x256xf32> to vector<32x256xf32>
    %36 = vector.broadcast %33 : vector<32x1xf32> to vector<32x256xf32>
    %37 = arith.mulf %35, %36 : vector<32x256xf32>
    %c0_30 = arith.constant 0 : index
    %c0_31 = arith.constant 0 : index
    %c0_32 = arith.constant 0 : index
    %38 = vector.load %arg6[%c0_30, %c0_31, %c0_32] : memref<1x32x256xf32, #tpu.memory_space<vmem>>, vector<1x32x256xf32>
    %39 = vector.shape_cast %38 : vector<1x32x256xf32> to vector<32x256xf32>
    %40 = vector.shape_cast %37 : vector<32x256xf32> to vector<1x32x256xf32>
    tpu.vector_store %arg6[%c0_30, %c0_31, %c0_32], %40 {strides = array<i32>} : memref<1x32x256xf32, #tpu.memory_space<vmem>>, vector<1x32x256xf32>,
    %cst_33 = arith.constant dense<0xFF800000> : vector<256xf32>
    %41 = vector.multi_reduction <maximumf>, %37, %cst_33 [0] : vector<32x256xf32> to vector<256xf32>
    %42 = vector.shape_cast %41 : vector<256xf32> to vector<1x256xf32>
    %c0_34 = arith.constant 0 : index
    %c0_35 = arith.constant 0 : index
    %c0_36 = arith.constant 0 : index
    %43 = vector.load %arg7[%c0_34, %c0_35, %c0_36] : memref<1x2x256xf32, #tpu.memory_space<vmem>>, vector<1x1x256xf32>
    %44 = vector.shape_cast %43 : vector<1x1x256xf32> to vector<1x256xf32>
    %45 = vector.shape_cast %42 : vector<1x256xf32> to vector<1x1x256xf32>
    tpu.vector_store %arg7[%c0_34, %c0_35, %c0_36], %45 {strides = array<i32>} : memref<1x2x256xf32, #tpu.memory_space<vmem>>, vector<1x1x256xf32>,
    %cst_37 = arith.constant dense<0.000000e+00> : vector<256xf32>
    %46 = vector.multi_reduction <add>, %37, %cst_37 [0] : vector<32x256xf32> to vector<256xf32>
    %47 = vector.shape_cast %46 : vector<256xf32> to vector<1x256xf32>
    %cst_38 = arith.constant 3.200000e+01 : f32
    %48 = vector.broadcast %cst_38 : f32 to vector<1x256xf32>
    %49 = arith.divf %47, %48 : vector<1x256xf32>
    %c0_39 = arith.constant 0 : index
    %c1 = arith.constant 1 : index
    %c0_40 = arith.constant 0 : index
    %50 = vector.load %arg7[%c0_39, %c1, %c0_40] : memref<1x2x256xf32, #tpu.memory_space<vmem>>, vector<1x1x256xf32>
    %51 = vector.shape_cast %50 : vector<1x1x256xf32> to vector<1x256xf32>
    %52 = vector.shape_cast %49 : vector<1x256xf32> to vector<1x1x256xf32>
    tpu.vector_store %arg7[%c0_39, %c1, %c0_40], %52 {strides = array<i32>} : memref<1x2x256xf32, #tpu.memory_space<vmem>>, vector<1x1x256xf32>,
    return
  }
  func.func @transform_0(%arg0: i32) -> (i32, i32, i32) {
    %c0_i32 = arith.constant 0 : i32
    %c0_i32_0 = arith.constant 0 : i32
    %c0_i32_1 = arith.constant 0 : i32
    return %arg0, %c0_i32, %c0_i32_0 : i32, i32, i32
  }
  func.func @transform_1(%arg0: i32) -> (i32, i32) {
    %c0_i32 = arith.constant 0 : i32
    %c0_i32_0 = arith.constant 0 : i32
    %c0_i32_1 = arith.constant 0 : i32
    return %c0_i32, %c0_i32_0 : i32, i32
  }
  func.func @transform_2(%arg0: i32) -> (i32, i32) {
    %c0_i32 = arith.constant 0 : i32
    %c0_i32_0 = arith.constant 0 : i32
    %c0_i32_1 = arith.constant 0 : i32
    return %c0_i32, %c0_i32_0 : i32, i32
  }
  func.func @transform_3(%arg0: i32) -> (i32, i32) {
    %c0_i32 = arith.constant 0 : i32
    %c0_i32_0 = arith.constant 0 : i32
    %c0_i32_1 = arith.constant 0 : i32
    return %c0_i32, %c0_i32_0 : i32, i32
  }
  func.func @transform_4(%arg0: i32) -> (i32, i32) {
    %c0_i32 = arith.constant 0 : i32
    %c0_i32_0 = arith.constant 0 : i32
    %c0_i32_1 = arith.constant 0 : i32
    return %c0_i32, %c0_i32_0 : i32, i32
  }
  func.func @transform_5(%arg0: i32) -> (i32, i32, i32) {
    %c0_i32 = arith.constant 0 : i32
    %c0_i32_0 = arith.constant 0 : i32
    %c0_i32_1 = arith.constant 0 : i32
    return %arg0, %c0_i32, %c0_i32_0 : i32, i32, i32
  }
  func.func @transform_6(%arg0: i32) -> (i32, i32, i32) {
    %c0_i32 = arith.constant 0 : i32
    %c0_i32_0 = arith.constant 0 : i32
    %c0_i32_1 = arith.constant 0 : i32
    return %arg0, %c0_i32, %c0_i32_0 : i32, i32, i32
  }
}

module attributes {stable_mosaic.version = 11 : i64} {
  func.func @kernel(%arg0: i32, %arg1: memref<1x2x22x22xf32, #tpu.memory_space<vmem>>, %arg2: memref<1x32x16x16xf32, #tpu.memory_space<vmem>>, %arg3: memref<1x32x16x16xf32, #tpu.memory_space<vmem>>, %arg4: memref<98xf32, #tpu.memory_space<smem>>, %arg5: memref<2xf32, #tpu.memory_space<smem>>, %arg6: memref<1x32x16x16xf32, #tpu.memory_space<vmem>>) attributes {dimension_semantics = [#tpu.dimension_semantics<parallel>], iteration_bounds = array<i64: 2>, scalar_prefetch = 0 : i64, scratch_operands = 0 : i64, tpu.core_type = #tpu.core_type<tc>, window_params = [{transform_indices = @transform_0, window_bounds = array<i64: 1, 2, 22, 22>}, {transform_indices = @transform_1, window_bounds = array<i64: 1, 32, 16, 16>}, {transform_indices = @transform_2, window_bounds = array<i64: 1, 32, 16, 16>}, {transform_indices = @transform_3, window_bounds = array<i64: 98>}, {transform_indices = @transform_4, window_bounds = array<i64: 2>}, {transform_indices = @transform_5, window_bounds = array<i64: 1, 32, 16, 16>}]} {
    %cst = arith.constant 0.000000e+00 : f32
    %0 = vector.broadcast %cst : f32 to vector<16x16xf32>
    %c0 = arith.constant 0 : index
    %1 = memref.load %arg4[%c0] : memref<98xf32, #tpu.memory_space<smem>>
    %c0_0 = arith.constant 0 : index
    %c0_1 = arith.constant 0 : index
    %c0_2 = arith.constant 0 : index
    %c0_3 = arith.constant 0 : index
    %2 = vector.load %arg1[%c0_0, %c0_1, %c0_2, %c0_3] : memref<1x2x22x22xf32, #tpu.memory_space<vmem>>, vector<1x1x16x16xf32>
    %3 = vector.shape_cast %2 : vector<1x1x16x16xf32> to vector<16x16xf32>
    %4 = vector.broadcast %1 : f32 to vector<16x16xf32>
    %5 = arith.mulf %4, %3 : vector<16x16xf32>
    %6 = arith.addf %0, %5 : vector<16x16xf32>
    %c1 = arith.constant 1 : index
    %7 = memref.load %arg4[%c1] : memref<98xf32, #tpu.memory_space<smem>>
    %c0_4 = arith.constant 0 : index
    %c0_5 = arith.constant 0 : index
    %c0_6 = arith.constant 0 : index
    %c1_7 = arith.constant 1 : index
    %8 = vector.load %arg1[%c0_4, %c0_5, %c0_6, %c1_7] : memref<1x2x22x22xf32, #tpu.memory_space<vmem>>, vector<1x1x16x16xf32>
    %9 = vector.shape_cast %8 : vector<1x1x16x16xf32> to vector<16x16xf32>
    %10 = vector.broadcast %7 : f32 to vector<16x16xf32>
    %11 = arith.mulf %10, %9 : vector<16x16xf32>
    %12 = arith.addf %6, %11 : vector<16x16xf32>
    %c2 = arith.constant 2 : index
    %13 = memref.load %arg4[%c2] : memref<98xf32, #tpu.memory_space<smem>>
    %c0_8 = arith.constant 0 : index
    %c0_9 = arith.constant 0 : index
    %c0_10 = arith.constant 0 : index
    %c2_11 = arith.constant 2 : index
    %14 = vector.load %arg1[%c0_8, %c0_9, %c0_10, %c2_11] : memref<1x2x22x22xf32, #tpu.memory_space<vmem>>, vector<1x1x16x16xf32>
    %15 = vector.shape_cast %14 : vector<1x1x16x16xf32> to vector<16x16xf32>
    %16 = vector.broadcast %13 : f32 to vector<16x16xf32>
    %17 = arith.mulf %16, %15 : vector<16x16xf32>
    %18 = arith.addf %12, %17 : vector<16x16xf32>
    %c3 = arith.constant 3 : index
    %19 = memref.load %arg4[%c3] : memref<98xf32, #tpu.memory_space<smem>>
    %c0_12 = arith.constant 0 : index
    %c0_13 = arith.constant 0 : index
    %c0_14 = arith.constant 0 : index
    %c3_15 = arith.constant 3 : index
    %20 = vector.load %arg1[%c0_12, %c0_13, %c0_14, %c3_15] : memref<1x2x22x22xf32, #tpu.memory_space<vmem>>, vector<1x1x16x16xf32>
    %21 = vector.shape_cast %20 : vector<1x1x16x16xf32> to vector<16x16xf32>
    %22 = vector.broadcast %19 : f32 to vector<16x16xf32>
    %23 = arith.mulf %22, %21 : vector<16x16xf32>
    %24 = arith.addf %18, %23 : vector<16x16xf32>
    %c4 = arith.constant 4 : index
    %25 = memref.load %arg4[%c4] : memref<98xf32, #tpu.memory_space<smem>>
    %c0_16 = arith.constant 0 : index
    %c0_17 = arith.constant 0 : index
    %c0_18 = arith.constant 0 : index
    %c4_19 = arith.constant 4 : index
    %26 = vector.load %arg1[%c0_16, %c0_17, %c0_18, %c4_19] : memref<1x2x22x22xf32, #tpu.memory_space<vmem>>, vector<1x1x16x16xf32>
    %27 = vector.shape_cast %26 : vector<1x1x16x16xf32> to vector<16x16xf32>
    %28 = vector.broadcast %25 : f32 to vector<16x16xf32>
    %29 = arith.mulf %28, %27 : vector<16x16xf32>
    %30 = arith.addf %24, %29 : vector<16x16xf32>
    %c5 = arith.constant 5 : index
    %31 = memref.load %arg4[%c5] : memref<98xf32, #tpu.memory_space<smem>>
    %c0_20 = arith.constant 0 : index
    %c0_21 = arith.constant 0 : index
    %c0_22 = arith.constant 0 : index
    %c5_23 = arith.constant 5 : index
    %32 = vector.load %arg1[%c0_20, %c0_21, %c0_22, %c5_23] : memref<1x2x22x22xf32, #tpu.memory_space<vmem>>, vector<1x1x16x16xf32>
    %33 = vector.shape_cast %32 : vector<1x1x16x16xf32> to vector<16x16xf32>
    %34 = vector.broadcast %31 : f32 to vector<16x16xf32>
    %35 = arith.mulf %34, %33 : vector<16x16xf32>
    %36 = arith.addf %30, %35 : vector<16x16xf32>
    %c6 = arith.constant 6 : index
    %37 = memref.load %arg4[%c6] : memref<98xf32, #tpu.memory_space<smem>>
    %c0_24 = arith.constant 0 : index
    %c0_25 = arith.constant 0 : index
    %c0_26 = arith.constant 0 : index
    %c6_27 = arith.constant 6 : index
    %38 = vector.load %arg1[%c0_24, %c0_25, %c0_26, %c6_27] : memref<1x2x22x22xf32, #tpu.memory_space<vmem>>, vector<1x1x16x16xf32>
    %39 = vector.shape_cast %38 : vector<1x1x16x16xf32> to vector<16x16xf32>
    %40 = vector.broadcast %37 : f32 to vector<16x16xf32>
    %41 = arith.mulf %40, %39 : vector<16x16xf32>
    %42 = arith.addf %36, %41 : vector<16x16xf32>
    %c7 = arith.constant 7 : index
    %43 = memref.load %arg4[%c7] : memref<98xf32, #tpu.memory_space<smem>>
    %c0_28 = arith.constant 0 : index
    %c0_29 = arith.constant 0 : index
    %c1_30 = arith.constant 1 : index
    %c0_31 = arith.constant 0 : index
    %44 = vector.load %arg1[%c0_28, %c0_29, %c1_30, %c0_31] : memref<1x2x22x22xf32, #tpu.memory_space<vmem>>, vector<1x1x16x16xf32>
    %45 = vector.shape_cast %44 : vector<1x1x16x16xf32> to vector<16x16xf32>
    %46 = vector.broadcast %43 : f32 to vector<16x16xf32>
    %47 = arith.mulf %46, %45 : vector<16x16xf32>
    %48 = arith.addf %42, %47 : vector<16x16xf32>
    %c8 = arith.constant 8 : index
    %49 = memref.load %arg4[%c8] : memref<98xf32, #tpu.memory_space<smem>>
    %c0_32 = arith.constant 0 : index
    %c0_33 = arith.constant 0 : index
    %c1_34 = arith.constant 1 : index
    %c1_35 = arith.constant 1 : index
    %50 = vector.load %arg1[%c0_32, %c0_33, %c1_34, %c1_35] : memref<1x2x22x22xf32, #tpu.memory_space<vmem>>, vector<1x1x16x16xf32>
    %51 = vector.shape_cast %50 : vector<1x1x16x16xf32> to vector<16x16xf32>
    %52 = vector.broadcast %49 : f32 to vector<16x16xf32>
    %53 = arith.mulf %52, %51 : vector<16x16xf32>
    %54 = arith.addf %48, %53 : vector<16x16xf32>
    %c9 = arith.constant 9 : index
    %55 = memref.load %arg4[%c9] : memref<98xf32, #tpu.memory_space<smem>>
    %c0_36 = arith.constant 0 : index
    %c0_37 = arith.constant 0 : index
    %c1_38 = arith.constant 1 : index
    %c2_39 = arith.constant 2 : index
    %56 = vector.load %arg1[%c0_36, %c0_37, %c1_38, %c2_39] : memref<1x2x22x22xf32, #tpu.memory_space<vmem>>, vector<1x1x16x16xf32>
    %57 = vector.shape_cast %56 : vector<1x1x16x16xf32> to vector<16x16xf32>
    %58 = vector.broadcast %55 : f32 to vector<16x16xf32>
    %59 = arith.mulf %58, %57 : vector<16x16xf32>
    %60 = arith.addf %54, %59 : vector<16x16xf32>
    %c10 = arith.constant 10 : index
    %61 = memref.load %arg4[%c10] : memref<98xf32, #tpu.memory_space<smem>>
    %c0_40 = arith.constant 0 : index
    %c0_41 = arith.constant 0 : index
    %c1_42 = arith.constant 1 : index
    %c3_43 = arith.constant 3 : index
    %62 = vector.load %arg1[%c0_40, %c0_41, %c1_42, %c3_43] : memref<1x2x22x22xf32, #tpu.memory_space<vmem>>, vector<1x1x16x16xf32>
    %63 = vector.shape_cast %62 : vector<1x1x16x16xf32> to vector<16x16xf32>
    %64 = vector.broadcast %61 : f32 to vector<16x16xf32>
    %65 = arith.mulf %64, %63 : vector<16x16xf32>
    %66 = arith.addf %60, %65 : vector<16x16xf32>
    %c11 = arith.constant 11 : index
    %67 = memref.load %arg4[%c11] : memref<98xf32, #tpu.memory_space<smem>>
    %c0_44 = arith.constant 0 : index
    %c0_45 = arith.constant 0 : index
    %c1_46 = arith.constant 1 : index
    %c4_47 = arith.constant 4 : index
    %68 = vector.load %arg1[%c0_44, %c0_45, %c1_46, %c4_47] : memref<1x2x22x22xf32, #tpu.memory_space<vmem>>, vector<1x1x16x16xf32>
    %69 = vector.shape_cast %68 : vector<1x1x16x16xf32> to vector<16x16xf32>
    %70 = vector.broadcast %67 : f32 to vector<16x16xf32>
    %71 = arith.mulf %70, %69 : vector<16x16xf32>
    %72 = arith.addf %66, %71 : vector<16x16xf32>
    %c12 = arith.constant 12 : index
    %73 = memref.load %arg4[%c12] : memref<98xf32, #tpu.memory_space<smem>>
    %c0_48 = arith.constant 0 : index
    %c0_49 = arith.constant 0 : index
    %c1_50 = arith.constant 1 : index
    %c5_51 = arith.constant 5 : index
    %74 = vector.load %arg1[%c0_48, %c0_49, %c1_50, %c5_51] : memref<1x2x22x22xf32, #tpu.memory_space<vmem>>, vector<1x1x16x16xf32>
    %75 = vector.shape_cast %74 : vector<1x1x16x16xf32> to vector<16x16xf32>
    %76 = vector.broadcast %73 : f32 to vector<16x16xf32>
    %77 = arith.mulf %76, %75 : vector<16x16xf32>
    %78 = arith.addf %72, %77 : vector<16x16xf32>
    %c13 = arith.constant 13 : index
    %79 = memref.load %arg4[%c13] : memref<98xf32, #tpu.memory_space<smem>>
    %c0_52 = arith.constant 0 : index
    %c0_53 = arith.constant 0 : index
    %c1_54 = arith.constant 1 : index
    %c6_55 = arith.constant 6 : index
    %80 = vector.load %arg1[%c0_52, %c0_53, %c1_54, %c6_55] : memref<1x2x22x22xf32, #tpu.memory_space<vmem>>, vector<1x1x16x16xf32>
    %81 = vector.shape_cast %80 : vector<1x1x16x16xf32> to vector<16x16xf32>
    %82 = vector.broadcast %79 : f32 to vector<16x16xf32>
    %83 = arith.mulf %82, %81 : vector<16x16xf32>
    %84 = arith.addf %78, %83 : vector<16x16xf32>
    %c14 = arith.constant 14 : index
    %85 = memref.load %arg4[%c14] : memref<98xf32, #tpu.memory_space<smem>>
    %c0_56 = arith.constant 0 : index
    %c0_57 = arith.constant 0 : index
    %c2_58 = arith.constant 2 : index
    %c0_59 = arith.constant 0 : index
    %86 = vector.load %arg1[%c0_56, %c0_57, %c2_58, %c0_59] : memref<1x2x22x22xf32, #tpu.memory_space<vmem>>, vector<1x1x16x16xf32>
    %87 = vector.shape_cast %86 : vector<1x1x16x16xf32> to vector<16x16xf32>
    %88 = vector.broadcast %85 : f32 to vector<16x16xf32>
    %89 = arith.mulf %88, %87 : vector<16x16xf32>
    %90 = arith.addf %84, %89 : vector<16x16xf32>
    %c15 = arith.constant 15 : index
    %91 = memref.load %arg4[%c15] : memref<98xf32, #tpu.memory_space<smem>>
    %c0_60 = arith.constant 0 : index
    %c0_61 = arith.constant 0 : index
    %c2_62 = arith.constant 2 : index
    %c1_63 = arith.constant 1 : index
    %92 = vector.load %arg1[%c0_60, %c0_61, %c2_62, %c1_63] : memref<1x2x22x22xf32, #tpu.memory_space<vmem>>, vector<1x1x16x16xf32>
    %93 = vector.shape_cast %92 : vector<1x1x16x16xf32> to vector<16x16xf32>
    %94 = vector.broadcast %91 : f32 to vector<16x16xf32>
    %95 = arith.mulf %94, %93 : vector<16x16xf32>
    %96 = arith.addf %90, %95 : vector<16x16xf32>
    %c16 = arith.constant 16 : index
    %97 = memref.load %arg4[%c16] : memref<98xf32, #tpu.memory_space<smem>>
    %c0_64 = arith.constant 0 : index
    %c0_65 = arith.constant 0 : index
    %c2_66 = arith.constant 2 : index
    %c2_67 = arith.constant 2 : index
    %98 = vector.load %arg1[%c0_64, %c0_65, %c2_66, %c2_67] : memref<1x2x22x22xf32, #tpu.memory_space<vmem>>, vector<1x1x16x16xf32>
    %99 = vector.shape_cast %98 : vector<1x1x16x16xf32> to vector<16x16xf32>
    %100 = vector.broadcast %97 : f32 to vector<16x16xf32>
    %101 = arith.mulf %100, %99 : vector<16x16xf32>
    %102 = arith.addf %96, %101 : vector<16x16xf32>
    %c17 = arith.constant 17 : index
    %103 = memref.load %arg4[%c17] : memref<98xf32, #tpu.memory_space<smem>>
    %c0_68 = arith.constant 0 : index
    %c0_69 = arith.constant 0 : index
    %c2_70 = arith.constant 2 : index
    %c3_71 = arith.constant 3 : index
    %104 = vector.load %arg1[%c0_68, %c0_69, %c2_70, %c3_71] : memref<1x2x22x22xf32, #tpu.memory_space<vmem>>, vector<1x1x16x16xf32>
    %105 = vector.shape_cast %104 : vector<1x1x16x16xf32> to vector<16x16xf32>
    %106 = vector.broadcast %103 : f32 to vector<16x16xf32>
    %107 = arith.mulf %106, %105 : vector<16x16xf32>
    %108 = arith.addf %102, %107 : vector<16x16xf32>
    %c18 = arith.constant 18 : index
    %109 = memref.load %arg4[%c18] : memref<98xf32, #tpu.memory_space<smem>>
    %c0_72 = arith.constant 0 : index
    %c0_73 = arith.constant 0 : index
    %c2_74 = arith.constant 2 : index
    %c4_75 = arith.constant 4 : index
    %110 = vector.load %arg1[%c0_72, %c0_73, %c2_74, %c4_75] : memref<1x2x22x22xf32, #tpu.memory_space<vmem>>, vector<1x1x16x16xf32>
    %111 = vector.shape_cast %110 : vector<1x1x16x16xf32> to vector<16x16xf32>
    %112 = vector.broadcast %109 : f32 to vector<16x16xf32>
    %113 = arith.mulf %112, %111 : vector<16x16xf32>
    %114 = arith.addf %108, %113 : vector<16x16xf32>
    %c19 = arith.constant 19 : index
    %115 = memref.load %arg4[%c19] : memref<98xf32, #tpu.memory_space<smem>>
    %c0_76 = arith.constant 0 : index
    %c0_77 = arith.constant 0 : index
    %c2_78 = arith.constant 2 : index
    %c5_79 = arith.constant 5 : index
    %116 = vector.load %arg1[%c0_76, %c0_77, %c2_78, %c5_79] : memref<1x2x22x22xf32, #tpu.memory_space<vmem>>, vector<1x1x16x16xf32>
    %117 = vector.shape_cast %116 : vector<1x1x16x16xf32> to vector<16x16xf32>
    %118 = vector.broadcast %115 : f32 to vector<16x16xf32>
    %119 = arith.mulf %118, %117 : vector<16x16xf32>
    %120 = arith.addf %114, %119 : vector<16x16xf32>
    %c20 = arith.constant 20 : index
    %121 = memref.load %arg4[%c20] : memref<98xf32, #tpu.memory_space<smem>>
    %c0_80 = arith.constant 0 : index
    %c0_81 = arith.constant 0 : index
    %c2_82 = arith.constant 2 : index
    %c6_83 = arith.constant 6 : index
    %122 = vector.load %arg1[%c0_80, %c0_81, %c2_82, %c6_83] : memref<1x2x22x22xf32, #tpu.memory_space<vmem>>, vector<1x1x16x16xf32>
    %123 = vector.shape_cast %122 : vector<1x1x16x16xf32> to vector<16x16xf32>
    %124 = vector.broadcast %121 : f32 to vector<16x16xf32>
    %125 = arith.mulf %124, %123 : vector<16x16xf32>
    %126 = arith.addf %120, %125 : vector<16x16xf32>
    %c21 = arith.constant 21 : index
    %127 = memref.load %arg4[%c21] : memref<98xf32, #tpu.memory_space<smem>>
    %c0_84 = arith.constant 0 : index
    %c0_85 = arith.constant 0 : index
    %c3_86 = arith.constant 3 : index
    %c0_87 = arith.constant 0 : index
    %128 = vector.load %arg1[%c0_84, %c0_85, %c3_86, %c0_87] : memref<1x2x22x22xf32, #tpu.memory_space<vmem>>, vector<1x1x16x16xf32>
    %129 = vector.shape_cast %128 : vector<1x1x16x16xf32> to vector<16x16xf32>
    %130 = vector.broadcast %127 : f32 to vector<16x16xf32>
    %131 = arith.mulf %130, %129 : vector<16x16xf32>
    %132 = arith.addf %126, %131 : vector<16x16xf32>
    %c22 = arith.constant 22 : index
    %133 = memref.load %arg4[%c22] : memref<98xf32, #tpu.memory_space<smem>>
    %c0_88 = arith.constant 0 : index
    %c0_89 = arith.constant 0 : index
    %c3_90 = arith.constant 3 : index
    %c1_91 = arith.constant 1 : index
    %134 = vector.load %arg1[%c0_88, %c0_89, %c3_90, %c1_91] : memref<1x2x22x22xf32, #tpu.memory_space<vmem>>, vector<1x1x16x16xf32>
    %135 = vector.shape_cast %134 : vector<1x1x16x16xf32> to vector<16x16xf32>
    %136 = vector.broadcast %133 : f32 to vector<16x16xf32>
    %137 = arith.mulf %136, %135 : vector<16x16xf32>
    %138 = arith.addf %132, %137 : vector<16x16xf32>
    %c23 = arith.constant 23 : index
    %139 = memref.load %arg4[%c23] : memref<98xf32, #tpu.memory_space<smem>>
    %c0_92 = arith.constant 0 : index
    %c0_93 = arith.constant 0 : index
    %c3_94 = arith.constant 3 : index
    %c2_95 = arith.constant 2 : index
    %140 = vector.load %arg1[%c0_92, %c0_93, %c3_94, %c2_95] : memref<1x2x22x22xf32, #tpu.memory_space<vmem>>, vector<1x1x16x16xf32>
    %141 = vector.shape_cast %140 : vector<1x1x16x16xf32> to vector<16x16xf32>
    %142 = vector.broadcast %139 : f32 to vector<16x16xf32>
    %143 = arith.mulf %142, %141 : vector<16x16xf32>
    %144 = arith.addf %138, %143 : vector<16x16xf32>
    %c24 = arith.constant 24 : index
    %145 = memref.load %arg4[%c24] : memref<98xf32, #tpu.memory_space<smem>>
    %c0_96 = arith.constant 0 : index
    %c0_97 = arith.constant 0 : index
    %c3_98 = arith.constant 3 : index
    %c3_99 = arith.constant 3 : index
    %146 = vector.load %arg1[%c0_96, %c0_97, %c3_98, %c3_99] : memref<1x2x22x22xf32, #tpu.memory_space<vmem>>, vector<1x1x16x16xf32>
    %147 = vector.shape_cast %146 : vector<1x1x16x16xf32> to vector<16x16xf32>
    %148 = vector.broadcast %145 : f32 to vector<16x16xf32>
    %149 = arith.mulf %148, %147 : vector<16x16xf32>
    %150 = arith.addf %144, %149 : vector<16x16xf32>
    %c25 = arith.constant 25 : index
    %151 = memref.load %arg4[%c25] : memref<98xf32, #tpu.memory_space<smem>>
    %c0_100 = arith.constant 0 : index
    %c0_101 = arith.constant 0 : index
    %c3_102 = arith.constant 3 : index
    %c4_103 = arith.constant 4 : index
    %152 = vector.load %arg1[%c0_100, %c0_101, %c3_102, %c4_103] : memref<1x2x22x22xf32, #tpu.memory_space<vmem>>, vector<1x1x16x16xf32>
    %153 = vector.shape_cast %152 : vector<1x1x16x16xf32> to vector<16x16xf32>
    %154 = vector.broadcast %151 : f32 to vector<16x16xf32>
    %155 = arith.mulf %154, %153 : vector<16x16xf32>
    %156 = arith.addf %150, %155 : vector<16x16xf32>
    %c26 = arith.constant 26 : index
    %157 = memref.load %arg4[%c26] : memref<98xf32, #tpu.memory_space<smem>>
    %c0_104 = arith.constant 0 : index
    %c0_105 = arith.constant 0 : index
    %c3_106 = arith.constant 3 : index
    %c5_107 = arith.constant 5 : index
    %158 = vector.load %arg1[%c0_104, %c0_105, %c3_106, %c5_107] : memref<1x2x22x22xf32, #tpu.memory_space<vmem>>, vector<1x1x16x16xf32>
    %159 = vector.shape_cast %158 : vector<1x1x16x16xf32> to vector<16x16xf32>
    %160 = vector.broadcast %157 : f32 to vector<16x16xf32>
    %161 = arith.mulf %160, %159 : vector<16x16xf32>
    %162 = arith.addf %156, %161 : vector<16x16xf32>
    %c27 = arith.constant 27 : index
    %163 = memref.load %arg4[%c27] : memref<98xf32, #tpu.memory_space<smem>>
    %c0_108 = arith.constant 0 : index
    %c0_109 = arith.constant 0 : index
    %c3_110 = arith.constant 3 : index
    %c6_111 = arith.constant 6 : index
    %164 = vector.load %arg1[%c0_108, %c0_109, %c3_110, %c6_111] : memref<1x2x22x22xf32, #tpu.memory_space<vmem>>, vector<1x1x16x16xf32>
    %165 = vector.shape_cast %164 : vector<1x1x16x16xf32> to vector<16x16xf32>
    %166 = vector.broadcast %163 : f32 to vector<16x16xf32>
    %167 = arith.mulf %166, %165 : vector<16x16xf32>
    %168 = arith.addf %162, %167 : vector<16x16xf32>
    %c28 = arith.constant 28 : index
    %169 = memref.load %arg4[%c28] : memref<98xf32, #tpu.memory_space<smem>>
    %c0_112 = arith.constant 0 : index
    %c0_113 = arith.constant 0 : index
    %c4_114 = arith.constant 4 : index
    %c0_115 = arith.constant 0 : index
    %170 = vector.load %arg1[%c0_112, %c0_113, %c4_114, %c0_115] : memref<1x2x22x22xf32, #tpu.memory_space<vmem>>, vector<1x1x16x16xf32>
    %171 = vector.shape_cast %170 : vector<1x1x16x16xf32> to vector<16x16xf32>
    %172 = vector.broadcast %169 : f32 to vector<16x16xf32>
    %173 = arith.mulf %172, %171 : vector<16x16xf32>
    %174 = arith.addf %168, %173 : vector<16x16xf32>
    %c29 = arith.constant 29 : index
    %175 = memref.load %arg4[%c29] : memref<98xf32, #tpu.memory_space<smem>>
    %c0_116 = arith.constant 0 : index
    %c0_117 = arith.constant 0 : index
    %c4_118 = arith.constant 4 : index
    %c1_119 = arith.constant 1 : index
    %176 = vector.load %arg1[%c0_116, %c0_117, %c4_118, %c1_119] : memref<1x2x22x22xf32, #tpu.memory_space<vmem>>, vector<1x1x16x16xf32>
    %177 = vector.shape_cast %176 : vector<1x1x16x16xf32> to vector<16x16xf32>
    %178 = vector.broadcast %175 : f32 to vector<16x16xf32>
    %179 = arith.mulf %178, %177 : vector<16x16xf32>
    %180 = arith.addf %174, %179 : vector<16x16xf32>
    %c30 = arith.constant 30 : index
    %181 = memref.load %arg4[%c30] : memref<98xf32, #tpu.memory_space<smem>>
    %c0_120 = arith.constant 0 : index
    %c0_121 = arith.constant 0 : index
    %c4_122 = arith.constant 4 : index
    %c2_123 = arith.constant 2 : index
    %182 = vector.load %arg1[%c0_120, %c0_121, %c4_122, %c2_123] : memref<1x2x22x22xf32, #tpu.memory_space<vmem>>, vector<1x1x16x16xf32>
    %183 = vector.shape_cast %182 : vector<1x1x16x16xf32> to vector<16x16xf32>
    %184 = vector.broadcast %181 : f32 to vector<16x16xf32>
    %185 = arith.mulf %184, %183 : vector<16x16xf32>
    %186 = arith.addf %180, %185 : vector<16x16xf32>
    %c31 = arith.constant 31 : index
    %187 = memref.load %arg4[%c31] : memref<98xf32, #tpu.memory_space<smem>>
    %c0_124 = arith.constant 0 : index
    %c0_125 = arith.constant 0 : index
    %c4_126 = arith.constant 4 : index
    %c3_127 = arith.constant 3 : index
    %188 = vector.load %arg1[%c0_124, %c0_125, %c4_126, %c3_127] : memref<1x2x22x22xf32, #tpu.memory_space<vmem>>, vector<1x1x16x16xf32>
    %189 = vector.shape_cast %188 : vector<1x1x16x16xf32> to vector<16x16xf32>
    %190 = vector.broadcast %187 : f32 to vector<16x16xf32>
    %191 = arith.mulf %190, %189 : vector<16x16xf32>
    %192 = arith.addf %186, %191 : vector<16x16xf32>
    %c32 = arith.constant 32 : index
    %193 = memref.load %arg4[%c32] : memref<98xf32, #tpu.memory_space<smem>>
    %c0_128 = arith.constant 0 : index
    %c0_129 = arith.constant 0 : index
    %c4_130 = arith.constant 4 : index
    %c4_131 = arith.constant 4 : index
    %194 = vector.load %arg1[%c0_128, %c0_129, %c4_130, %c4_131] : memref<1x2x22x22xf32, #tpu.memory_space<vmem>>, vector<1x1x16x16xf32>
    %195 = vector.shape_cast %194 : vector<1x1x16x16xf32> to vector<16x16xf32>
    %196 = vector.broadcast %193 : f32 to vector<16x16xf32>
    %197 = arith.mulf %196, %195 : vector<16x16xf32>
    %198 = arith.addf %192, %197 : vector<16x16xf32>
    %c33 = arith.constant 33 : index
    %199 = memref.load %arg4[%c33] : memref<98xf32, #tpu.memory_space<smem>>
    %c0_132 = arith.constant 0 : index
    %c0_133 = arith.constant 0 : index
    %c4_134 = arith.constant 4 : index
    %c5_135 = arith.constant 5 : index
    %200 = vector.load %arg1[%c0_132, %c0_133, %c4_134, %c5_135] : memref<1x2x22x22xf32, #tpu.memory_space<vmem>>, vector<1x1x16x16xf32>
    %201 = vector.shape_cast %200 : vector<1x1x16x16xf32> to vector<16x16xf32>
    %202 = vector.broadcast %199 : f32 to vector<16x16xf32>
    %203 = arith.mulf %202, %201 : vector<16x16xf32>
    %204 = arith.addf %198, %203 : vector<16x16xf32>
    %c34 = arith.constant 34 : index
    %205 = memref.load %arg4[%c34] : memref<98xf32, #tpu.memory_space<smem>>
    %c0_136 = arith.constant 0 : index
    %c0_137 = arith.constant 0 : index
    %c4_138 = arith.constant 4 : index
    %c6_139 = arith.constant 6 : index
    %206 = vector.load %arg1[%c0_136, %c0_137, %c4_138, %c6_139] : memref<1x2x22x22xf32, #tpu.memory_space<vmem>>, vector<1x1x16x16xf32>
    %207 = vector.shape_cast %206 : vector<1x1x16x16xf32> to vector<16x16xf32>
    %208 = vector.broadcast %205 : f32 to vector<16x16xf32>
    %209 = arith.mulf %208, %207 : vector<16x16xf32>
    %210 = arith.addf %204, %209 : vector<16x16xf32>
    %c35 = arith.constant 35 : index
    %211 = memref.load %arg4[%c35] : memref<98xf32, #tpu.memory_space<smem>>
    %c0_140 = arith.constant 0 : index
    %c0_141 = arith.constant 0 : index
    %c5_142 = arith.constant 5 : index
    %c0_143 = arith.constant 0 : index
    %212 = vector.load %arg1[%c0_140, %c0_141, %c5_142, %c0_143] : memref<1x2x22x22xf32, #tpu.memory_space<vmem>>, vector<1x1x16x16xf32>
    %213 = vector.shape_cast %212 : vector<1x1x16x16xf32> to vector<16x16xf32>
    %214 = vector.broadcast %211 : f32 to vector<16x16xf32>
    %215 = arith.mulf %214, %213 : vector<16x16xf32>
    %216 = arith.addf %210, %215 : vector<16x16xf32>
    %c36 = arith.constant 36 : index
    %217 = memref.load %arg4[%c36] : memref<98xf32, #tpu.memory_space<smem>>
    %c0_144 = arith.constant 0 : index
    %c0_145 = arith.constant 0 : index
    %c5_146 = arith.constant 5 : index
    %c1_147 = arith.constant 1 : index
    %218 = vector.load %arg1[%c0_144, %c0_145, %c5_146, %c1_147] : memref<1x2x22x22xf32, #tpu.memory_space<vmem>>, vector<1x1x16x16xf32>
    %219 = vector.shape_cast %218 : vector<1x1x16x16xf32> to vector<16x16xf32>
    %220 = vector.broadcast %217 : f32 to vector<16x16xf32>
    %221 = arith.mulf %220, %219 : vector<16x16xf32>
    %222 = arith.addf %216, %221 : vector<16x16xf32>
    %c37 = arith.constant 37 : index
    %223 = memref.load %arg4[%c37] : memref<98xf32, #tpu.memory_space<smem>>
    %c0_148 = arith.constant 0 : index
    %c0_149 = arith.constant 0 : index
    %c5_150 = arith.constant 5 : index
    %c2_151 = arith.constant 2 : index
    %224 = vector.load %arg1[%c0_148, %c0_149, %c5_150, %c2_151] : memref<1x2x22x22xf32, #tpu.memory_space<vmem>>, vector<1x1x16x16xf32>
    %225 = vector.shape_cast %224 : vector<1x1x16x16xf32> to vector<16x16xf32>
    %226 = vector.broadcast %223 : f32 to vector<16x16xf32>
    %227 = arith.mulf %226, %225 : vector<16x16xf32>
    %228 = arith.addf %222, %227 : vector<16x16xf32>
    %c38 = arith.constant 38 : index
    %229 = memref.load %arg4[%c38] : memref<98xf32, #tpu.memory_space<smem>>
    %c0_152 = arith.constant 0 : index
    %c0_153 = arith.constant 0 : index
    %c5_154 = arith.constant 5 : index
    %c3_155 = arith.constant 3 : index
    %230 = vector.load %arg1[%c0_152, %c0_153, %c5_154, %c3_155] : memref<1x2x22x22xf32, #tpu.memory_space<vmem>>, vector<1x1x16x16xf32>
    %231 = vector.shape_cast %230 : vector<1x1x16x16xf32> to vector<16x16xf32>
    %232 = vector.broadcast %229 : f32 to vector<16x16xf32>
    %233 = arith.mulf %232, %231 : vector<16x16xf32>
    %234 = arith.addf %228, %233 : vector<16x16xf32>
    %c39 = arith.constant 39 : index
    %235 = memref.load %arg4[%c39] : memref<98xf32, #tpu.memory_space<smem>>
    %c0_156 = arith.constant 0 : index
    %c0_157 = arith.constant 0 : index
    %c5_158 = arith.constant 5 : index
    %c4_159 = arith.constant 4 : index
    %236 = vector.load %arg1[%c0_156, %c0_157, %c5_158, %c4_159] : memref<1x2x22x22xf32, #tpu.memory_space<vmem>>, vector<1x1x16x16xf32>
    %237 = vector.shape_cast %236 : vector<1x1x16x16xf32> to vector<16x16xf32>
    %238 = vector.broadcast %235 : f32 to vector<16x16xf32>
    %239 = arith.mulf %238, %237 : vector<16x16xf32>
    %240 = arith.addf %234, %239 : vector<16x16xf32>
    %c40 = arith.constant 40 : index
    %241 = memref.load %arg4[%c40] : memref<98xf32, #tpu.memory_space<smem>>
    %c0_160 = arith.constant 0 : index
    %c0_161 = arith.constant 0 : index
    %c5_162 = arith.constant 5 : index
    %c5_163 = arith.constant 5 : index
    %242 = vector.load %arg1[%c0_160, %c0_161, %c5_162, %c5_163] : memref<1x2x22x22xf32, #tpu.memory_space<vmem>>, vector<1x1x16x16xf32>
    %243 = vector.shape_cast %242 : vector<1x1x16x16xf32> to vector<16x16xf32>
    %244 = vector.broadcast %241 : f32 to vector<16x16xf32>
    %245 = arith.mulf %244, %243 : vector<16x16xf32>
    %246 = arith.addf %240, %245 : vector<16x16xf32>
    %c41 = arith.constant 41 : index
    %247 = memref.load %arg4[%c41] : memref<98xf32, #tpu.memory_space<smem>>
    %c0_164 = arith.constant 0 : index
    %c0_165 = arith.constant 0 : index
    %c5_166 = arith.constant 5 : index
    %c6_167 = arith.constant 6 : index
    %248 = vector.load %arg1[%c0_164, %c0_165, %c5_166, %c6_167] : memref<1x2x22x22xf32, #tpu.memory_space<vmem>>, vector<1x1x16x16xf32>
    %249 = vector.shape_cast %248 : vector<1x1x16x16xf32> to vector<16x16xf32>
    %250 = vector.broadcast %247 : f32 to vector<16x16xf32>
    %251 = arith.mulf %250, %249 : vector<16x16xf32>
    %252 = arith.addf %246, %251 : vector<16x16xf32>
    %c42 = arith.constant 42 : index
    %253 = memref.load %arg4[%c42] : memref<98xf32, #tpu.memory_space<smem>>
    %c0_168 = arith.constant 0 : index
    %c0_169 = arith.constant 0 : index
    %c6_170 = arith.constant 6 : index
    %c0_171 = arith.constant 0 : index
    %254 = vector.load %arg1[%c0_168, %c0_169, %c6_170, %c0_171] : memref<1x2x22x22xf32, #tpu.memory_space<vmem>>, vector<1x1x16x16xf32>
    %255 = vector.shape_cast %254 : vector<1x1x16x16xf32> to vector<16x16xf32>
    %256 = vector.broadcast %253 : f32 to vector<16x16xf32>
    %257 = arith.mulf %256, %255 : vector<16x16xf32>
    %258 = arith.addf %252, %257 : vector<16x16xf32>
    %c43 = arith.constant 43 : index
    %259 = memref.load %arg4[%c43] : memref<98xf32, #tpu.memory_space<smem>>
    %c0_172 = arith.constant 0 : index
    %c0_173 = arith.constant 0 : index
    %c6_174 = arith.constant 6 : index
    %c1_175 = arith.constant 1 : index
    %260 = vector.load %arg1[%c0_172, %c0_173, %c6_174, %c1_175] : memref<1x2x22x22xf32, #tpu.memory_space<vmem>>, vector<1x1x16x16xf32>
    %261 = vector.shape_cast %260 : vector<1x1x16x16xf32> to vector<16x16xf32>
    %262 = vector.broadcast %259 : f32 to vector<16x16xf32>
    %263 = arith.mulf %262, %261 : vector<16x16xf32>
    %264 = arith.addf %258, %263 : vector<16x16xf32>
    %c44 = arith.constant 44 : index
    %265 = memref.load %arg4[%c44] : memref<98xf32, #tpu.memory_space<smem>>
    %c0_176 = arith.constant 0 : index
    %c0_177 = arith.constant 0 : index
    %c6_178 = arith.constant 6 : index
    %c2_179 = arith.constant 2 : index
    %266 = vector.load %arg1[%c0_176, %c0_177, %c6_178, %c2_179] : memref<1x2x22x22xf32, #tpu.memory_space<vmem>>, vector<1x1x16x16xf32>
    %267 = vector.shape_cast %266 : vector<1x1x16x16xf32> to vector<16x16xf32>
    %268 = vector.broadcast %265 : f32 to vector<16x16xf32>
    %269 = arith.mulf %268, %267 : vector<16x16xf32>
    %270 = arith.addf %264, %269 : vector<16x16xf32>
    %c45 = arith.constant 45 : index
    %271 = memref.load %arg4[%c45] : memref<98xf32, #tpu.memory_space<smem>>
    %c0_180 = arith.constant 0 : index
    %c0_181 = arith.constant 0 : index
    %c6_182 = arith.constant 6 : index
    %c3_183 = arith.constant 3 : index
    %272 = vector.load %arg1[%c0_180, %c0_181, %c6_182, %c3_183] : memref<1x2x22x22xf32, #tpu.memory_space<vmem>>, vector<1x1x16x16xf32>
    %273 = vector.shape_cast %272 : vector<1x1x16x16xf32> to vector<16x16xf32>
    %274 = vector.broadcast %271 : f32 to vector<16x16xf32>
    %275 = arith.mulf %274, %273 : vector<16x16xf32>
    %276 = arith.addf %270, %275 : vector<16x16xf32>
    %c46 = arith.constant 46 : index
    %277 = memref.load %arg4[%c46] : memref<98xf32, #tpu.memory_space<smem>>
    %c0_184 = arith.constant 0 : index
    %c0_185 = arith.constant 0 : index
    %c6_186 = arith.constant 6 : index
    %c4_187 = arith.constant 4 : index
    %278 = vector.load %arg1[%c0_184, %c0_185, %c6_186, %c4_187] : memref<1x2x22x22xf32, #tpu.memory_space<vmem>>, vector<1x1x16x16xf32>
    %279 = vector.shape_cast %278 : vector<1x1x16x16xf32> to vector<16x16xf32>
    %280 = vector.broadcast %277 : f32 to vector<16x16xf32>
    %281 = arith.mulf %280, %279 : vector<16x16xf32>
    %282 = arith.addf %276, %281 : vector<16x16xf32>
    %c47 = arith.constant 47 : index
    %283 = memref.load %arg4[%c47] : memref<98xf32, #tpu.memory_space<smem>>
    %c0_188 = arith.constant 0 : index
    %c0_189 = arith.constant 0 : index
    %c6_190 = arith.constant 6 : index
    %c5_191 = arith.constant 5 : index
    %284 = vector.load %arg1[%c0_188, %c0_189, %c6_190, %c5_191] : memref<1x2x22x22xf32, #tpu.memory_space<vmem>>, vector<1x1x16x16xf32>
    %285 = vector.shape_cast %284 : vector<1x1x16x16xf32> to vector<16x16xf32>
    %286 = vector.broadcast %283 : f32 to vector<16x16xf32>
    %287 = arith.mulf %286, %285 : vector<16x16xf32>
    %288 = arith.addf %282, %287 : vector<16x16xf32>
    %c48 = arith.constant 48 : index
    %289 = memref.load %arg4[%c48] : memref<98xf32, #tpu.memory_space<smem>>
    %c0_192 = arith.constant 0 : index
    %c0_193 = arith.constant 0 : index
    %c6_194 = arith.constant 6 : index
    %c6_195 = arith.constant 6 : index
    %290 = vector.load %arg1[%c0_192, %c0_193, %c6_194, %c6_195] : memref<1x2x22x22xf32, #tpu.memory_space<vmem>>, vector<1x1x16x16xf32>
    %291 = vector.shape_cast %290 : vector<1x1x16x16xf32> to vector<16x16xf32>
    %292 = vector.broadcast %289 : f32 to vector<16x16xf32>
    %293 = arith.mulf %292, %291 : vector<16x16xf32>
    %294 = arith.addf %288, %293 : vector<16x16xf32>
    %c49 = arith.constant 49 : index
    %295 = memref.load %arg4[%c49] : memref<98xf32, #tpu.memory_space<smem>>
    %c0_196 = arith.constant 0 : index
    %c1_197 = arith.constant 1 : index
    %c0_198 = arith.constant 0 : index
    %c0_199 = arith.constant 0 : index
    %296 = vector.load %arg1[%c0_196, %c1_197, %c0_198, %c0_199] : memref<1x2x22x22xf32, #tpu.memory_space<vmem>>, vector<1x1x16x16xf32>
    %297 = vector.shape_cast %296 : vector<1x1x16x16xf32> to vector<16x16xf32>
    %298 = vector.broadcast %295 : f32 to vector<16x16xf32>
    %299 = arith.mulf %298, %297 : vector<16x16xf32>
    %300 = arith.addf %294, %299 : vector<16x16xf32>
    %c50 = arith.constant 50 : index
    %301 = memref.load %arg4[%c50] : memref<98xf32, #tpu.memory_space<smem>>
    %c0_200 = arith.constant 0 : index
    %c1_201 = arith.constant 1 : index
    %c0_202 = arith.constant 0 : index
    %c1_203 = arith.constant 1 : index
    %302 = vector.load %arg1[%c0_200, %c1_201, %c0_202, %c1_203] : memref<1x2x22x22xf32, #tpu.memory_space<vmem>>, vector<1x1x16x16xf32>
    %303 = vector.shape_cast %302 : vector<1x1x16x16xf32> to vector<16x16xf32>
    %304 = vector.broadcast %301 : f32 to vector<16x16xf32>
    %305 = arith.mulf %304, %303 : vector<16x16xf32>
    %306 = arith.addf %300, %305 : vector<16x16xf32>
    %c51 = arith.constant 51 : index
    %307 = memref.load %arg4[%c51] : memref<98xf32, #tpu.memory_space<smem>>
    %c0_204 = arith.constant 0 : index
    %c1_205 = arith.constant 1 : index
    %c0_206 = arith.constant 0 : index
    %c2_207 = arith.constant 2 : index
    %308 = vector.load %arg1[%c0_204, %c1_205, %c0_206, %c2_207] : memref<1x2x22x22xf32, #tpu.memory_space<vmem>>, vector<1x1x16x16xf32>
    %309 = vector.shape_cast %308 : vector<1x1x16x16xf32> to vector<16x16xf32>
    %310 = vector.broadcast %307 : f32 to vector<16x16xf32>
    %311 = arith.mulf %310, %309 : vector<16x16xf32>
    %312 = arith.addf %306, %311 : vector<16x16xf32>
    %c52 = arith.constant 52 : index
    %313 = memref.load %arg4[%c52] : memref<98xf32, #tpu.memory_space<smem>>
    %c0_208 = arith.constant 0 : index
    %c1_209 = arith.constant 1 : index
    %c0_210 = arith.constant 0 : index
    %c3_211 = arith.constant 3 : index
    %314 = vector.load %arg1[%c0_208, %c1_209, %c0_210, %c3_211] : memref<1x2x22x22xf32, #tpu.memory_space<vmem>>, vector<1x1x16x16xf32>
    %315 = vector.shape_cast %314 : vector<1x1x16x16xf32> to vector<16x16xf32>
    %316 = vector.broadcast %313 : f32 to vector<16x16xf32>
    %317 = arith.mulf %316, %315 : vector<16x16xf32>
    %318 = arith.addf %312, %317 : vector<16x16xf32>
    %c53 = arith.constant 53 : index
    %319 = memref.load %arg4[%c53] : memref<98xf32, #tpu.memory_space<smem>>
    %c0_212 = arith.constant 0 : index
    %c1_213 = arith.constant 1 : index
    %c0_214 = arith.constant 0 : index
    %c4_215 = arith.constant 4 : index
    %320 = vector.load %arg1[%c0_212, %c1_213, %c0_214, %c4_215] : memref<1x2x22x22xf32, #tpu.memory_space<vmem>>, vector<1x1x16x16xf32>
    %321 = vector.shape_cast %320 : vector<1x1x16x16xf32> to vector<16x16xf32>
    %322 = vector.broadcast %319 : f32 to vector<16x16xf32>
    %323 = arith.mulf %322, %321 : vector<16x16xf32>
    %324 = arith.addf %318, %323 : vector<16x16xf32>
    %c54 = arith.constant 54 : index
    %325 = memref.load %arg4[%c54] : memref<98xf32, #tpu.memory_space<smem>>
    %c0_216 = arith.constant 0 : index
    %c1_217 = arith.constant 1 : index
    %c0_218 = arith.constant 0 : index
    %c5_219 = arith.constant 5 : index
    %326 = vector.load %arg1[%c0_216, %c1_217, %c0_218, %c5_219] : memref<1x2x22x22xf32, #tpu.memory_space<vmem>>, vector<1x1x16x16xf32>
    %327 = vector.shape_cast %326 : vector<1x1x16x16xf32> to vector<16x16xf32>
    %328 = vector.broadcast %325 : f32 to vector<16x16xf32>
    %329 = arith.mulf %328, %327 : vector<16x16xf32>
    %330 = arith.addf %324, %329 : vector<16x16xf32>
    %c55 = arith.constant 55 : index
    %331 = memref.load %arg4[%c55] : memref<98xf32, #tpu.memory_space<smem>>
    %c0_220 = arith.constant 0 : index
    %c1_221 = arith.constant 1 : index
    %c0_222 = arith.constant 0 : index
    %c6_223 = arith.constant 6 : index
    %332 = vector.load %arg1[%c0_220, %c1_221, %c0_222, %c6_223] : memref<1x2x22x22xf32, #tpu.memory_space<vmem>>, vector<1x1x16x16xf32>
    %333 = vector.shape_cast %332 : vector<1x1x16x16xf32> to vector<16x16xf32>
    %334 = vector.broadcast %331 : f32 to vector<16x16xf32>
    %335 = arith.mulf %334, %333 : vector<16x16xf32>
    %336 = arith.addf %330, %335 : vector<16x16xf32>
    %c56 = arith.constant 56 : index
    %337 = memref.load %arg4[%c56] : memref<98xf32, #tpu.memory_space<smem>>
    %c0_224 = arith.constant 0 : index
    %c1_225 = arith.constant 1 : index
    %c1_226 = arith.constant 1 : index
    %c0_227 = arith.constant 0 : index
    %338 = vector.load %arg1[%c0_224, %c1_225, %c1_226, %c0_227] : memref<1x2x22x22xf32, #tpu.memory_space<vmem>>, vector<1x1x16x16xf32>
    %339 = vector.shape_cast %338 : vector<1x1x16x16xf32> to vector<16x16xf32>
    %340 = vector.broadcast %337 : f32 to vector<16x16xf32>
    %341 = arith.mulf %340, %339 : vector<16x16xf32>
    %342 = arith.addf %336, %341 : vector<16x16xf32>
    %c57 = arith.constant 57 : index
    %343 = memref.load %arg4[%c57] : memref<98xf32, #tpu.memory_space<smem>>
    %c0_228 = arith.constant 0 : index
    %c1_229 = arith.constant 1 : index
    %c1_230 = arith.constant 1 : index
    %c1_231 = arith.constant 1 : index
    %344 = vector.load %arg1[%c0_228, %c1_229, %c1_230, %c1_231] : memref<1x2x22x22xf32, #tpu.memory_space<vmem>>, vector<1x1x16x16xf32>
    %345 = vector.shape_cast %344 : vector<1x1x16x16xf32> to vector<16x16xf32>
    %346 = vector.broadcast %343 : f32 to vector<16x16xf32>
    %347 = arith.mulf %346, %345 : vector<16x16xf32>
    %348 = arith.addf %342, %347 : vector<16x16xf32>
    %c58 = arith.constant 58 : index
    %349 = memref.load %arg4[%c58] : memref<98xf32, #tpu.memory_space<smem>>
    %c0_232 = arith.constant 0 : index
    %c1_233 = arith.constant 1 : index
    %c1_234 = arith.constant 1 : index
    %c2_235 = arith.constant 2 : index
    %350 = vector.load %arg1[%c0_232, %c1_233, %c1_234, %c2_235] : memref<1x2x22x22xf32, #tpu.memory_space<vmem>>, vector<1x1x16x16xf32>
    %351 = vector.shape_cast %350 : vector<1x1x16x16xf32> to vector<16x16xf32>
    %352 = vector.broadcast %349 : f32 to vector<16x16xf32>
    %353 = arith.mulf %352, %351 : vector<16x16xf32>
    %354 = arith.addf %348, %353 : vector<16x16xf32>
    %c59 = arith.constant 59 : index
    %355 = memref.load %arg4[%c59] : memref<98xf32, #tpu.memory_space<smem>>
    %c0_236 = arith.constant 0 : index
    %c1_237 = arith.constant 1 : index
    %c1_238 = arith.constant 1 : index
    %c3_239 = arith.constant 3 : index
    %356 = vector.load %arg1[%c0_236, %c1_237, %c1_238, %c3_239] : memref<1x2x22x22xf32, #tpu.memory_space<vmem>>, vector<1x1x16x16xf32>
    %357 = vector.shape_cast %356 : vector<1x1x16x16xf32> to vector<16x16xf32>
    %358 = vector.broadcast %355 : f32 to vector<16x16xf32>
    %359 = arith.mulf %358, %357 : vector<16x16xf32>
    %360 = arith.addf %354, %359 : vector<16x16xf32>
    %c60 = arith.constant 60 : index
    %361 = memref.load %arg4[%c60] : memref<98xf32, #tpu.memory_space<smem>>
    %c0_240 = arith.constant 0 : index
    %c1_241 = arith.constant 1 : index
    %c1_242 = arith.constant 1 : index
    %c4_243 = arith.constant 4 : index
    %362 = vector.load %arg1[%c0_240, %c1_241, %c1_242, %c4_243] : memref<1x2x22x22xf32, #tpu.memory_space<vmem>>, vector<1x1x16x16xf32>
    %363 = vector.shape_cast %362 : vector<1x1x16x16xf32> to vector<16x16xf32>
    %364 = vector.broadcast %361 : f32 to vector<16x16xf32>
    %365 = arith.mulf %364, %363 : vector<16x16xf32>
    %366 = arith.addf %360, %365 : vector<16x16xf32>
    %c61 = arith.constant 61 : index
    %367 = memref.load %arg4[%c61] : memref<98xf32, #tpu.memory_space<smem>>
    %c0_244 = arith.constant 0 : index
    %c1_245 = arith.constant 1 : index
    %c1_246 = arith.constant 1 : index
    %c5_247 = arith.constant 5 : index
    %368 = vector.load %arg1[%c0_244, %c1_245, %c1_246, %c5_247] : memref<1x2x22x22xf32, #tpu.memory_space<vmem>>, vector<1x1x16x16xf32>
    %369 = vector.shape_cast %368 : vector<1x1x16x16xf32> to vector<16x16xf32>
    %370 = vector.broadcast %367 : f32 to vector<16x16xf32>
    %371 = arith.mulf %370, %369 : vector<16x16xf32>
    %372 = arith.addf %366, %371 : vector<16x16xf32>
    %c62 = arith.constant 62 : index
    %373 = memref.load %arg4[%c62] : memref<98xf32, #tpu.memory_space<smem>>
    %c0_248 = arith.constant 0 : index
    %c1_249 = arith.constant 1 : index
    %c1_250 = arith.constant 1 : index
    %c6_251 = arith.constant 6 : index
    %374 = vector.load %arg1[%c0_248, %c1_249, %c1_250, %c6_251] : memref<1x2x22x22xf32, #tpu.memory_space<vmem>>, vector<1x1x16x16xf32>
    %375 = vector.shape_cast %374 : vector<1x1x16x16xf32> to vector<16x16xf32>
    %376 = vector.broadcast %373 : f32 to vector<16x16xf32>
    %377 = arith.mulf %376, %375 : vector<16x16xf32>
    %378 = arith.addf %372, %377 : vector<16x16xf32>
    %c63 = arith.constant 63 : index
    %379 = memref.load %arg4[%c63] : memref<98xf32, #tpu.memory_space<smem>>
    %c0_252 = arith.constant 0 : index
    %c1_253 = arith.constant 1 : index
    %c2_254 = arith.constant 2 : index
    %c0_255 = arith.constant 0 : index
    %380 = vector.load %arg1[%c0_252, %c1_253, %c2_254, %c0_255] : memref<1x2x22x22xf32, #tpu.memory_space<vmem>>, vector<1x1x16x16xf32>
    %381 = vector.shape_cast %380 : vector<1x1x16x16xf32> to vector<16x16xf32>
    %382 = vector.broadcast %379 : f32 to vector<16x16xf32>
    %383 = arith.mulf %382, %381 : vector<16x16xf32>
    %384 = arith.addf %378, %383 : vector<16x16xf32>
    %c64 = arith.constant 64 : index
    %385 = memref.load %arg4[%c64] : memref<98xf32, #tpu.memory_space<smem>>
    %c0_256 = arith.constant 0 : index
    %c1_257 = arith.constant 1 : index
    %c2_258 = arith.constant 2 : index
    %c1_259 = arith.constant 1 : index
    %386 = vector.load %arg1[%c0_256, %c1_257, %c2_258, %c1_259] : memref<1x2x22x22xf32, #tpu.memory_space<vmem>>, vector<1x1x16x16xf32>
    %387 = vector.shape_cast %386 : vector<1x1x16x16xf32> to vector<16x16xf32>
    %388 = vector.broadcast %385 : f32 to vector<16x16xf32>
    %389 = arith.mulf %388, %387 : vector<16x16xf32>
    %390 = arith.addf %384, %389 : vector<16x16xf32>
    %c65 = arith.constant 65 : index
    %391 = memref.load %arg4[%c65] : memref<98xf32, #tpu.memory_space<smem>>
    %c0_260 = arith.constant 0 : index
    %c1_261 = arith.constant 1 : index
    %c2_262 = arith.constant 2 : index
    %c2_263 = arith.constant 2 : index
    %392 = vector.load %arg1[%c0_260, %c1_261, %c2_262, %c2_263] : memref<1x2x22x22xf32, #tpu.memory_space<vmem>>, vector<1x1x16x16xf32>
    %393 = vector.shape_cast %392 : vector<1x1x16x16xf32> to vector<16x16xf32>
    %394 = vector.broadcast %391 : f32 to vector<16x16xf32>
    %395 = arith.mulf %394, %393 : vector<16x16xf32>
    %396 = arith.addf %390, %395 : vector<16x16xf32>
    %c66 = arith.constant 66 : index
    %397 = memref.load %arg4[%c66] : memref<98xf32, #tpu.memory_space<smem>>
    %c0_264 = arith.constant 0 : index
    %c1_265 = arith.constant 1 : index
    %c2_266 = arith.constant 2 : index
    %c3_267 = arith.constant 3 : index
    %398 = vector.load %arg1[%c0_264, %c1_265, %c2_266, %c3_267] : memref<1x2x22x22xf32, #tpu.memory_space<vmem>>, vector<1x1x16x16xf32>
    %399 = vector.shape_cast %398 : vector<1x1x16x16xf32> to vector<16x16xf32>
    %400 = vector.broadcast %397 : f32 to vector<16x16xf32>
    %401 = arith.mulf %400, %399 : vector<16x16xf32>
    %402 = arith.addf %396, %401 : vector<16x16xf32>
    %c67 = arith.constant 67 : index
    %403 = memref.load %arg4[%c67] : memref<98xf32, #tpu.memory_space<smem>>
    %c0_268 = arith.constant 0 : index
    %c1_269 = arith.constant 1 : index
    %c2_270 = arith.constant 2 : index
    %c4_271 = arith.constant 4 : index
    %404 = vector.load %arg1[%c0_268, %c1_269, %c2_270, %c4_271] : memref<1x2x22x22xf32, #tpu.memory_space<vmem>>, vector<1x1x16x16xf32>
    %405 = vector.shape_cast %404 : vector<1x1x16x16xf32> to vector<16x16xf32>
    %406 = vector.broadcast %403 : f32 to vector<16x16xf32>
    %407 = arith.mulf %406, %405 : vector<16x16xf32>
    %408 = arith.addf %402, %407 : vector<16x16xf32>
    %c68 = arith.constant 68 : index
    %409 = memref.load %arg4[%c68] : memref<98xf32, #tpu.memory_space<smem>>
    %c0_272 = arith.constant 0 : index
    %c1_273 = arith.constant 1 : index
    %c2_274 = arith.constant 2 : index
    %c5_275 = arith.constant 5 : index
    %410 = vector.load %arg1[%c0_272, %c1_273, %c2_274, %c5_275] : memref<1x2x22x22xf32, #tpu.memory_space<vmem>>, vector<1x1x16x16xf32>
    %411 = vector.shape_cast %410 : vector<1x1x16x16xf32> to vector<16x16xf32>
    %412 = vector.broadcast %409 : f32 to vector<16x16xf32>
    %413 = arith.mulf %412, %411 : vector<16x16xf32>
    %414 = arith.addf %408, %413 : vector<16x16xf32>
    %c69 = arith.constant 69 : index
    %415 = memref.load %arg4[%c69] : memref<98xf32, #tpu.memory_space<smem>>
    %c0_276 = arith.constant 0 : index
    %c1_277 = arith.constant 1 : index
    %c2_278 = arith.constant 2 : index
    %c6_279 = arith.constant 6 : index
    %416 = vector.load %arg1[%c0_276, %c1_277, %c2_278, %c6_279] : memref<1x2x22x22xf32, #tpu.memory_space<vmem>>, vector<1x1x16x16xf32>
    %417 = vector.shape_cast %416 : vector<1x1x16x16xf32> to vector<16x16xf32>
    %418 = vector.broadcast %415 : f32 to vector<16x16xf32>
    %419 = arith.mulf %418, %417 : vector<16x16xf32>
    %420 = arith.addf %414, %419 : vector<16x16xf32>
    %c70 = arith.constant 70 : index
    %421 = memref.load %arg4[%c70] : memref<98xf32, #tpu.memory_space<smem>>
    %c0_280 = arith.constant 0 : index
    %c1_281 = arith.constant 1 : index
    %c3_282 = arith.constant 3 : index
    %c0_283 = arith.constant 0 : index
    %422 = vector.load %arg1[%c0_280, %c1_281, %c3_282, %c0_283] : memref<1x2x22x22xf32, #tpu.memory_space<vmem>>, vector<1x1x16x16xf32>
    %423 = vector.shape_cast %422 : vector<1x1x16x16xf32> to vector<16x16xf32>
    %424 = vector.broadcast %421 : f32 to vector<16x16xf32>
    %425 = arith.mulf %424, %423 : vector<16x16xf32>
    %426 = arith.addf %420, %425 : vector<16x16xf32>
    %c71 = arith.constant 71 : index
    %427 = memref.load %arg4[%c71] : memref<98xf32, #tpu.memory_space<smem>>
    %c0_284 = arith.constant 0 : index
    %c1_285 = arith.constant 1 : index
    %c3_286 = arith.constant 3 : index
    %c1_287 = arith.constant 1 : index
    %428 = vector.load %arg1[%c0_284, %c1_285, %c3_286, %c1_287] : memref<1x2x22x22xf32, #tpu.memory_space<vmem>>, vector<1x1x16x16xf32>
    %429 = vector.shape_cast %428 : vector<1x1x16x16xf32> to vector<16x16xf32>
    %430 = vector.broadcast %427 : f32 to vector<16x16xf32>
    %431 = arith.mulf %430, %429 : vector<16x16xf32>
    %432 = arith.addf %426, %431 : vector<16x16xf32>
    %c72 = arith.constant 72 : index
    %433 = memref.load %arg4[%c72] : memref<98xf32, #tpu.memory_space<smem>>
    %c0_288 = arith.constant 0 : index
    %c1_289 = arith.constant 1 : index
    %c3_290 = arith.constant 3 : index
    %c2_291 = arith.constant 2 : index
    %434 = vector.load %arg1[%c0_288, %c1_289, %c3_290, %c2_291] : memref<1x2x22x22xf32, #tpu.memory_space<vmem>>, vector<1x1x16x16xf32>
    %435 = vector.shape_cast %434 : vector<1x1x16x16xf32> to vector<16x16xf32>
    %436 = vector.broadcast %433 : f32 to vector<16x16xf32>
    %437 = arith.mulf %436, %435 : vector<16x16xf32>
    %438 = arith.addf %432, %437 : vector<16x16xf32>
    %c73 = arith.constant 73 : index
    %439 = memref.load %arg4[%c73] : memref<98xf32, #tpu.memory_space<smem>>
    %c0_292 = arith.constant 0 : index
    %c1_293 = arith.constant 1 : index
    %c3_294 = arith.constant 3 : index
    %c3_295 = arith.constant 3 : index
    %440 = vector.load %arg1[%c0_292, %c1_293, %c3_294, %c3_295] : memref<1x2x22x22xf32, #tpu.memory_space<vmem>>, vector<1x1x16x16xf32>
    %441 = vector.shape_cast %440 : vector<1x1x16x16xf32> to vector<16x16xf32>
    %442 = vector.broadcast %439 : f32 to vector<16x16xf32>
    %443 = arith.mulf %442, %441 : vector<16x16xf32>
    %444 = arith.addf %438, %443 : vector<16x16xf32>
    %c74 = arith.constant 74 : index
    %445 = memref.load %arg4[%c74] : memref<98xf32, #tpu.memory_space<smem>>
    %c0_296 = arith.constant 0 : index
    %c1_297 = arith.constant 1 : index
    %c3_298 = arith.constant 3 : index
    %c4_299 = arith.constant 4 : index
    %446 = vector.load %arg1[%c0_296, %c1_297, %c3_298, %c4_299] : memref<1x2x22x22xf32, #tpu.memory_space<vmem>>, vector<1x1x16x16xf32>
    %447 = vector.shape_cast %446 : vector<1x1x16x16xf32> to vector<16x16xf32>
    %448 = vector.broadcast %445 : f32 to vector<16x16xf32>
    %449 = arith.mulf %448, %447 : vector<16x16xf32>
    %450 = arith.addf %444, %449 : vector<16x16xf32>
    %c75 = arith.constant 75 : index
    %451 = memref.load %arg4[%c75] : memref<98xf32, #tpu.memory_space<smem>>
    %c0_300 = arith.constant 0 : index
    %c1_301 = arith.constant 1 : index
    %c3_302 = arith.constant 3 : index
    %c5_303 = arith.constant 5 : index
    %452 = vector.load %arg1[%c0_300, %c1_301, %c3_302, %c5_303] : memref<1x2x22x22xf32, #tpu.memory_space<vmem>>, vector<1x1x16x16xf32>
    %453 = vector.shape_cast %452 : vector<1x1x16x16xf32> to vector<16x16xf32>
    %454 = vector.broadcast %451 : f32 to vector<16x16xf32>
    %455 = arith.mulf %454, %453 : vector<16x16xf32>
    %456 = arith.addf %450, %455 : vector<16x16xf32>
    %c76 = arith.constant 76 : index
    %457 = memref.load %arg4[%c76] : memref<98xf32, #tpu.memory_space<smem>>
    %c0_304 = arith.constant 0 : index
    %c1_305 = arith.constant 1 : index
    %c3_306 = arith.constant 3 : index
    %c6_307 = arith.constant 6 : index
    %458 = vector.load %arg1[%c0_304, %c1_305, %c3_306, %c6_307] : memref<1x2x22x22xf32, #tpu.memory_space<vmem>>, vector<1x1x16x16xf32>
    %459 = vector.shape_cast %458 : vector<1x1x16x16xf32> to vector<16x16xf32>
    %460 = vector.broadcast %457 : f32 to vector<16x16xf32>
    %461 = arith.mulf %460, %459 : vector<16x16xf32>
    %462 = arith.addf %456, %461 : vector<16x16xf32>
    %c77 = arith.constant 77 : index
    %463 = memref.load %arg4[%c77] : memref<98xf32, #tpu.memory_space<smem>>
    %c0_308 = arith.constant 0 : index
    %c1_309 = arith.constant 1 : index
    %c4_310 = arith.constant 4 : index
    %c0_311 = arith.constant 0 : index
    %464 = vector.load %arg1[%c0_308, %c1_309, %c4_310, %c0_311] : memref<1x2x22x22xf32, #tpu.memory_space<vmem>>, vector<1x1x16x16xf32>
    %465 = vector.shape_cast %464 : vector<1x1x16x16xf32> to vector<16x16xf32>
    %466 = vector.broadcast %463 : f32 to vector<16x16xf32>
    %467 = arith.mulf %466, %465 : vector<16x16xf32>
    %468 = arith.addf %462, %467 : vector<16x16xf32>
    %c78 = arith.constant 78 : index
    %469 = memref.load %arg4[%c78] : memref<98xf32, #tpu.memory_space<smem>>
    %c0_312 = arith.constant 0 : index
    %c1_313 = arith.constant 1 : index
    %c4_314 = arith.constant 4 : index
    %c1_315 = arith.constant 1 : index
    %470 = vector.load %arg1[%c0_312, %c1_313, %c4_314, %c1_315] : memref<1x2x22x22xf32, #tpu.memory_space<vmem>>, vector<1x1x16x16xf32>
    %471 = vector.shape_cast %470 : vector<1x1x16x16xf32> to vector<16x16xf32>
    %472 = vector.broadcast %469 : f32 to vector<16x16xf32>
    %473 = arith.mulf %472, %471 : vector<16x16xf32>
    %474 = arith.addf %468, %473 : vector<16x16xf32>
    %c79 = arith.constant 79 : index
    %475 = memref.load %arg4[%c79] : memref<98xf32, #tpu.memory_space<smem>>
    %c0_316 = arith.constant 0 : index
    %c1_317 = arith.constant 1 : index
    %c4_318 = arith.constant 4 : index
    %c2_319 = arith.constant 2 : index
    %476 = vector.load %arg1[%c0_316, %c1_317, %c4_318, %c2_319] : memref<1x2x22x22xf32, #tpu.memory_space<vmem>>, vector<1x1x16x16xf32>
    %477 = vector.shape_cast %476 : vector<1x1x16x16xf32> to vector<16x16xf32>
    %478 = vector.broadcast %475 : f32 to vector<16x16xf32>
    %479 = arith.mulf %478, %477 : vector<16x16xf32>
    %480 = arith.addf %474, %479 : vector<16x16xf32>
    %c80 = arith.constant 80 : index
    %481 = memref.load %arg4[%c80] : memref<98xf32, #tpu.memory_space<smem>>
    %c0_320 = arith.constant 0 : index
    %c1_321 = arith.constant 1 : index
    %c4_322 = arith.constant 4 : index
    %c3_323 = arith.constant 3 : index
    %482 = vector.load %arg1[%c0_320, %c1_321, %c4_322, %c3_323] : memref<1x2x22x22xf32, #tpu.memory_space<vmem>>, vector<1x1x16x16xf32>
    %483 = vector.shape_cast %482 : vector<1x1x16x16xf32> to vector<16x16xf32>
    %484 = vector.broadcast %481 : f32 to vector<16x16xf32>
    %485 = arith.mulf %484, %483 : vector<16x16xf32>
    %486 = arith.addf %480, %485 : vector<16x16xf32>
    %c81 = arith.constant 81 : index
    %487 = memref.load %arg4[%c81] : memref<98xf32, #tpu.memory_space<smem>>
    %c0_324 = arith.constant 0 : index
    %c1_325 = arith.constant 1 : index
    %c4_326 = arith.constant 4 : index
    %c4_327 = arith.constant 4 : index
    %488 = vector.load %arg1[%c0_324, %c1_325, %c4_326, %c4_327] : memref<1x2x22x22xf32, #tpu.memory_space<vmem>>, vector<1x1x16x16xf32>
    %489 = vector.shape_cast %488 : vector<1x1x16x16xf32> to vector<16x16xf32>
    %490 = vector.broadcast %487 : f32 to vector<16x16xf32>
    %491 = arith.mulf %490, %489 : vector<16x16xf32>
    %492 = arith.addf %486, %491 : vector<16x16xf32>
    %c82 = arith.constant 82 : index
    %493 = memref.load %arg4[%c82] : memref<98xf32, #tpu.memory_space<smem>>
    %c0_328 = arith.constant 0 : index
    %c1_329 = arith.constant 1 : index
    %c4_330 = arith.constant 4 : index
    %c5_331 = arith.constant 5 : index
    %494 = vector.load %arg1[%c0_328, %c1_329, %c4_330, %c5_331] : memref<1x2x22x22xf32, #tpu.memory_space<vmem>>, vector<1x1x16x16xf32>
    %495 = vector.shape_cast %494 : vector<1x1x16x16xf32> to vector<16x16xf32>
    %496 = vector.broadcast %493 : f32 to vector<16x16xf32>
    %497 = arith.mulf %496, %495 : vector<16x16xf32>
    %498 = arith.addf %492, %497 : vector<16x16xf32>
    %c83 = arith.constant 83 : index
    %499 = memref.load %arg4[%c83] : memref<98xf32, #tpu.memory_space<smem>>
    %c0_332 = arith.constant 0 : index
    %c1_333 = arith.constant 1 : index
    %c4_334 = arith.constant 4 : index
    %c6_335 = arith.constant 6 : index
    %500 = vector.load %arg1[%c0_332, %c1_333, %c4_334, %c6_335] : memref<1x2x22x22xf32, #tpu.memory_space<vmem>>, vector<1x1x16x16xf32>
    %501 = vector.shape_cast %500 : vector<1x1x16x16xf32> to vector<16x16xf32>
    %502 = vector.broadcast %499 : f32 to vector<16x16xf32>
    %503 = arith.mulf %502, %501 : vector<16x16xf32>
    %504 = arith.addf %498, %503 : vector<16x16xf32>
    %c84 = arith.constant 84 : index
    %505 = memref.load %arg4[%c84] : memref<98xf32, #tpu.memory_space<smem>>
    %c0_336 = arith.constant 0 : index
    %c1_337 = arith.constant 1 : index
    %c5_338 = arith.constant 5 : index
    %c0_339 = arith.constant 0 : index
    %506 = vector.load %arg1[%c0_336, %c1_337, %c5_338, %c0_339] : memref<1x2x22x22xf32, #tpu.memory_space<vmem>>, vector<1x1x16x16xf32>
    %507 = vector.shape_cast %506 : vector<1x1x16x16xf32> to vector<16x16xf32>
    %508 = vector.broadcast %505 : f32 to vector<16x16xf32>
    %509 = arith.mulf %508, %507 : vector<16x16xf32>
    %510 = arith.addf %504, %509 : vector<16x16xf32>
    %c85 = arith.constant 85 : index
    %511 = memref.load %arg4[%c85] : memref<98xf32, #tpu.memory_space<smem>>
    %c0_340 = arith.constant 0 : index
    %c1_341 = arith.constant 1 : index
    %c5_342 = arith.constant 5 : index
    %c1_343 = arith.constant 1 : index
    %512 = vector.load %arg1[%c0_340, %c1_341, %c5_342, %c1_343] : memref<1x2x22x22xf32, #tpu.memory_space<vmem>>, vector<1x1x16x16xf32>
    %513 = vector.shape_cast %512 : vector<1x1x16x16xf32> to vector<16x16xf32>
    %514 = vector.broadcast %511 : f32 to vector<16x16xf32>
    %515 = arith.mulf %514, %513 : vector<16x16xf32>
    %516 = arith.addf %510, %515 : vector<16x16xf32>
    %c86 = arith.constant 86 : index
    %517 = memref.load %arg4[%c86] : memref<98xf32, #tpu.memory_space<smem>>
    %c0_344 = arith.constant 0 : index
    %c1_345 = arith.constant 1 : index
    %c5_346 = arith.constant 5 : index
    %c2_347 = arith.constant 2 : index
    %518 = vector.load %arg1[%c0_344, %c1_345, %c5_346, %c2_347] : memref<1x2x22x22xf32, #tpu.memory_space<vmem>>, vector<1x1x16x16xf32>
    %519 = vector.shape_cast %518 : vector<1x1x16x16xf32> to vector<16x16xf32>
    %520 = vector.broadcast %517 : f32 to vector<16x16xf32>
    %521 = arith.mulf %520, %519 : vector<16x16xf32>
    %522 = arith.addf %516, %521 : vector<16x16xf32>
    %c87 = arith.constant 87 : index
    %523 = memref.load %arg4[%c87] : memref<98xf32, #tpu.memory_space<smem>>
    %c0_348 = arith.constant 0 : index
    %c1_349 = arith.constant 1 : index
    %c5_350 = arith.constant 5 : index
    %c3_351 = arith.constant 3 : index
    %524 = vector.load %arg1[%c0_348, %c1_349, %c5_350, %c3_351] : memref<1x2x22x22xf32, #tpu.memory_space<vmem>>, vector<1x1x16x16xf32>
    %525 = vector.shape_cast %524 : vector<1x1x16x16xf32> to vector<16x16xf32>
    %526 = vector.broadcast %523 : f32 to vector<16x16xf32>
    %527 = arith.mulf %526, %525 : vector<16x16xf32>
    %528 = arith.addf %522, %527 : vector<16x16xf32>
    %c88 = arith.constant 88 : index
    %529 = memref.load %arg4[%c88] : memref<98xf32, #tpu.memory_space<smem>>
    %c0_352 = arith.constant 0 : index
    %c1_353 = arith.constant 1 : index
    %c5_354 = arith.constant 5 : index
    %c4_355 = arith.constant 4 : index
    %530 = vector.load %arg1[%c0_352, %c1_353, %c5_354, %c4_355] : memref<1x2x22x22xf32, #tpu.memory_space<vmem>>, vector<1x1x16x16xf32>
    %531 = vector.shape_cast %530 : vector<1x1x16x16xf32> to vector<16x16xf32>
    %532 = vector.broadcast %529 : f32 to vector<16x16xf32>
    %533 = arith.mulf %532, %531 : vector<16x16xf32>
    %534 = arith.addf %528, %533 : vector<16x16xf32>
    %c89 = arith.constant 89 : index
    %535 = memref.load %arg4[%c89] : memref<98xf32, #tpu.memory_space<smem>>
    %c0_356 = arith.constant 0 : index
    %c1_357 = arith.constant 1 : index
    %c5_358 = arith.constant 5 : index
    %c5_359 = arith.constant 5 : index
    %536 = vector.load %arg1[%c0_356, %c1_357, %c5_358, %c5_359] : memref<1x2x22x22xf32, #tpu.memory_space<vmem>>, vector<1x1x16x16xf32>
    %537 = vector.shape_cast %536 : vector<1x1x16x16xf32> to vector<16x16xf32>
    %538 = vector.broadcast %535 : f32 to vector<16x16xf32>
    %539 = arith.mulf %538, %537 : vector<16x16xf32>
    %540 = arith.addf %534, %539 : vector<16x16xf32>
    %c90 = arith.constant 90 : index
    %541 = memref.load %arg4[%c90] : memref<98xf32, #tpu.memory_space<smem>>
    %c0_360 = arith.constant 0 : index
    %c1_361 = arith.constant 1 : index
    %c5_362 = arith.constant 5 : index
    %c6_363 = arith.constant 6 : index
    %542 = vector.load %arg1[%c0_360, %c1_361, %c5_362, %c6_363] : memref<1x2x22x22xf32, #tpu.memory_space<vmem>>, vector<1x1x16x16xf32>
    %543 = vector.shape_cast %542 : vector<1x1x16x16xf32> to vector<16x16xf32>
    %544 = vector.broadcast %541 : f32 to vector<16x16xf32>
    %545 = arith.mulf %544, %543 : vector<16x16xf32>
    %546 = arith.addf %540, %545 : vector<16x16xf32>
    %c91 = arith.constant 91 : index
    %547 = memref.load %arg4[%c91] : memref<98xf32, #tpu.memory_space<smem>>
    %c0_364 = arith.constant 0 : index
    %c1_365 = arith.constant 1 : index
    %c6_366 = arith.constant 6 : index
    %c0_367 = arith.constant 0 : index
    %548 = vector.load %arg1[%c0_364, %c1_365, %c6_366, %c0_367] : memref<1x2x22x22xf32, #tpu.memory_space<vmem>>, vector<1x1x16x16xf32>
    %549 = vector.shape_cast %548 : vector<1x1x16x16xf32> to vector<16x16xf32>
    %550 = vector.broadcast %547 : f32 to vector<16x16xf32>
    %551 = arith.mulf %550, %549 : vector<16x16xf32>
    %552 = arith.addf %546, %551 : vector<16x16xf32>
    %c92 = arith.constant 92 : index
    %553 = memref.load %arg4[%c92] : memref<98xf32, #tpu.memory_space<smem>>
    %c0_368 = arith.constant 0 : index
    %c1_369 = arith.constant 1 : index
    %c6_370 = arith.constant 6 : index
    %c1_371 = arith.constant 1 : index
    %554 = vector.load %arg1[%c0_368, %c1_369, %c6_370, %c1_371] : memref<1x2x22x22xf32, #tpu.memory_space<vmem>>, vector<1x1x16x16xf32>
    %555 = vector.shape_cast %554 : vector<1x1x16x16xf32> to vector<16x16xf32>
    %556 = vector.broadcast %553 : f32 to vector<16x16xf32>
    %557 = arith.mulf %556, %555 : vector<16x16xf32>
    %558 = arith.addf %552, %557 : vector<16x16xf32>
    %c93 = arith.constant 93 : index
    %559 = memref.load %arg4[%c93] : memref<98xf32, #tpu.memory_space<smem>>
    %c0_372 = arith.constant 0 : index
    %c1_373 = arith.constant 1 : index
    %c6_374 = arith.constant 6 : index
    %c2_375 = arith.constant 2 : index
    %560 = vector.load %arg1[%c0_372, %c1_373, %c6_374, %c2_375] : memref<1x2x22x22xf32, #tpu.memory_space<vmem>>, vector<1x1x16x16xf32>
    %561 = vector.shape_cast %560 : vector<1x1x16x16xf32> to vector<16x16xf32>
    %562 = vector.broadcast %559 : f32 to vector<16x16xf32>
    %563 = arith.mulf %562, %561 : vector<16x16xf32>
    %564 = arith.addf %558, %563 : vector<16x16xf32>
    %c94 = arith.constant 94 : index
    %565 = memref.load %arg4[%c94] : memref<98xf32, #tpu.memory_space<smem>>
    %c0_376 = arith.constant 0 : index
    %c1_377 = arith.constant 1 : index
    %c6_378 = arith.constant 6 : index
    %c3_379 = arith.constant 3 : index
    %566 = vector.load %arg1[%c0_376, %c1_377, %c6_378, %c3_379] : memref<1x2x22x22xf32, #tpu.memory_space<vmem>>, vector<1x1x16x16xf32>
    %567 = vector.shape_cast %566 : vector<1x1x16x16xf32> to vector<16x16xf32>
    %568 = vector.broadcast %565 : f32 to vector<16x16xf32>
    %569 = arith.mulf %568, %567 : vector<16x16xf32>
    %570 = arith.addf %564, %569 : vector<16x16xf32>
    %c95 = arith.constant 95 : index
    %571 = memref.load %arg4[%c95] : memref<98xf32, #tpu.memory_space<smem>>
    %c0_380 = arith.constant 0 : index
    %c1_381 = arith.constant 1 : index
    %c6_382 = arith.constant 6 : index
    %c4_383 = arith.constant 4 : index
    %572 = vector.load %arg1[%c0_380, %c1_381, %c6_382, %c4_383] : memref<1x2x22x22xf32, #tpu.memory_space<vmem>>, vector<1x1x16x16xf32>
    %573 = vector.shape_cast %572 : vector<1x1x16x16xf32> to vector<16x16xf32>
    %574 = vector.broadcast %571 : f32 to vector<16x16xf32>
    %575 = arith.mulf %574, %573 : vector<16x16xf32>
    %576 = arith.addf %570, %575 : vector<16x16xf32>
    %c96 = arith.constant 96 : index
    %577 = memref.load %arg4[%c96] : memref<98xf32, #tpu.memory_space<smem>>
    %c0_384 = arith.constant 0 : index
    %c1_385 = arith.constant 1 : index
    %c6_386 = arith.constant 6 : index
    %c5_387 = arith.constant 5 : index
    %578 = vector.load %arg1[%c0_384, %c1_385, %c6_386, %c5_387] : memref<1x2x22x22xf32, #tpu.memory_space<vmem>>, vector<1x1x16x16xf32>
    %579 = vector.shape_cast %578 : vector<1x1x16x16xf32> to vector<16x16xf32>
    %580 = vector.broadcast %577 : f32 to vector<16x16xf32>
    %581 = arith.mulf %580, %579 : vector<16x16xf32>
    %582 = arith.addf %576, %581 : vector<16x16xf32>
    %c97 = arith.constant 97 : index
    %583 = memref.load %arg4[%c97] : memref<98xf32, #tpu.memory_space<smem>>
    %c0_388 = arith.constant 0 : index
    %c1_389 = arith.constant 1 : index
    %c6_390 = arith.constant 6 : index
    %c6_391 = arith.constant 6 : index
    %584 = vector.load %arg1[%c0_388, %c1_389, %c6_390, %c6_391] : memref<1x2x22x22xf32, #tpu.memory_space<vmem>>, vector<1x1x16x16xf32>
    %585 = vector.shape_cast %584 : vector<1x1x16x16xf32> to vector<16x16xf32>
    %586 = vector.broadcast %583 : f32 to vector<16x16xf32>
    %587 = arith.mulf %586, %585 : vector<16x16xf32>
    %588 = arith.addf %582, %587 : vector<16x16xf32>
    %c0_392 = arith.constant 0 : index
    %589 = memref.load %arg5[%c0_392] : memref<2xf32, #tpu.memory_space<smem>>
    %590 = vector.broadcast %589 : f32 to vector<16x16xf32>
    %591 = arith.mulf %588, %590 : vector<16x16xf32>
    %c1_393 = arith.constant 1 : index
    %592 = memref.load %arg5[%c1_393] : memref<2xf32, #tpu.memory_space<smem>>
    %593 = vector.broadcast %592 : f32 to vector<16x16xf32>
    %594 = arith.addf %591, %593 : vector<16x16xf32>
    %595 = arith.negf %594 : vector<16x16xf32>
    %596 = math.exp %595 : vector<16x16xf32>
    %cst_394 = arith.constant 1.000000e+00 : f32
    %597 = vector.broadcast %cst_394 : f32 to vector<16x16xf32>
    %598 = arith.addf %597, %596 : vector<16x16xf32>
    %599 = arith.divf %597, %598 : vector<16x16xf32>
    %c0_395 = arith.constant 0 : index
    %c0_396 = arith.constant 0 : index
    %c0_397 = arith.constant 0 : index
    %c0_398 = arith.constant 0 : index
    %600 = vector.load %arg2[%c0_395, %c0_396, %c0_397, %c0_398] : memref<1x32x16x16xf32, #tpu.memory_space<vmem>>, vector<1x32x16x16xf32>
    %601 = vector.shape_cast %600 : vector<1x32x16x16xf32> to vector<32x16x16xf32>
    %602 = vector.shape_cast %599 : vector<16x16xf32> to vector<1x16x16xf32>
    %603 = vector.broadcast %602 : vector<1x16x16xf32> to vector<32x16x16xf32>
    %604 = arith.mulf %601, %603 : vector<32x16x16xf32>
    %c0_399 = arith.constant 0 : index
    %c0_400 = arith.constant 0 : index
    %c0_401 = arith.constant 0 : index
    %c0_402 = arith.constant 0 : index
    %605 = vector.load %arg3[%c0_399, %c0_400, %c0_401, %c0_402] : memref<1x32x16x16xf32, #tpu.memory_space<vmem>>, vector<1x32x16x16xf32>
    %606 = vector.shape_cast %605 : vector<1x32x16x16xf32> to vector<32x16x16xf32>
    %607 = arith.addf %606, %604 : vector<32x16x16xf32>
    %c0_403 = arith.constant 0 : index
    %c0_404 = arith.constant 0 : index
    %c0_405 = arith.constant 0 : index
    %c0_406 = arith.constant 0 : index
    %608 = vector.load %arg6[%c0_403, %c0_404, %c0_405, %c0_406] : memref<1x32x16x16xf32, #tpu.memory_space<vmem>>, vector<1x32x16x16xf32>
    %609 = vector.shape_cast %608 : vector<1x32x16x16xf32> to vector<32x16x16xf32>
    %610 = vector.shape_cast %607 : vector<32x16x16xf32> to vector<1x32x16x16xf32>
    tpu.vector_store %arg6[%c0_403, %c0_404, %c0_405, %c0_406], %610 {strides = array<i32>} : memref<1x32x16x16xf32, #tpu.memory_space<vmem>>, vector<1x32x16x16xf32>,
    return
  }
  func.func @transform_0(%arg0: i32) -> (i32, i32, i32, i32) {
    %c0_i32 = arith.constant 0 : i32
    %c0_i32_0 = arith.constant 0 : i32
    %c0_i32_1 = arith.constant 0 : i32
    %c0_i32_2 = arith.constant 0 : i32
    return %arg0, %c0_i32, %c0_i32_0, %c0_i32_1 : i32, i32, i32, i32
  }
  func.func @transform_1(%arg0: i32) -> (i32, i32, i32, i32) {
    %c0_i32 = arith.constant 0 : i32
    %c0_i32_0 = arith.constant 0 : i32
    %c0_i32_1 = arith.constant 0 : i32
    %c0_i32_2 = arith.constant 0 : i32
    return %arg0, %c0_i32, %c0_i32_0, %c0_i32_1 : i32, i32, i32, i32
  }
  func.func @transform_2(%arg0: i32) -> (i32, i32, i32, i32) {
    %c0_i32 = arith.constant 0 : i32
    %c0_i32_0 = arith.constant 0 : i32
    %c0_i32_1 = arith.constant 0 : i32
    %c0_i32_2 = arith.constant 0 : i32
    return %arg0, %c0_i32, %c0_i32_0, %c0_i32_1 : i32, i32, i32, i32
  }
  func.func @transform_3(%arg0: i32) -> i32 {
    %c0_i32 = arith.constant 0 : i32
    %c0_i32_0 = arith.constant 0 : i32
    return %c0_i32 : i32
  }
  func.func @transform_4(%arg0: i32) -> i32 {
    %c0_i32 = arith.constant 0 : i32
    %c0_i32_0 = arith.constant 0 : i32
    return %c0_i32 : i32
  }
  func.func @transform_5(%arg0: i32) -> (i32, i32, i32, i32) {
    %c0_i32 = arith.constant 0 : i32
    %c0_i32_0 = arith.constant 0 : i32
    %c0_i32_1 = arith.constant 0 : i32
    %c0_i32_2 = arith.constant 0 : i32
    return %arg0, %c0_i32, %c0_i32_0, %c0_i32_1 : i32, i32, i32, i32
  }
}

module attributes {stable_mosaic.version = 11 : i64} {
  func.func @_cv3_kernel(%arg0: i32, %arg1: memref<1x32x256xf32, #tpu.memory_space<vmem>>, %arg2: memref<1x32x256xf32, #tpu.memory_space<vmem>>, %arg3: memref<64x32xf32, #tpu.memory_space<vmem>>, %arg4: memref<64x32xf32, #tpu.memory_space<vmem>>, %arg5: memref<64x1xf32, #tpu.memory_space<vmem>>, %arg6: memref<64x1xf32, #tpu.memory_space<vmem>>, %arg7: memref<1x64x256xf32, #tpu.memory_space<vmem>>) attributes {dimension_semantics = [#tpu.dimension_semantics<parallel>], iteration_bounds = array<i64: 2>, scalar_prefetch = 0 : i64, scratch_operands = 0 : i64, tpu.core_type = #tpu.core_type<tc>, window_params = [{transform_indices = @transform_0, window_bounds = array<i64: 1, 32, 256>}, {transform_indices = @transform_1, window_bounds = array<i64: 1, 32, 256>}, {pipeline_mode = #tpu.pipeline_mode<synchronous>, transform_indices = @transform_2, window_bounds = array<i64: 64, 32>}, {pipeline_mode = #tpu.pipeline_mode<synchronous>, transform_indices = @transform_3, window_bounds = array<i64: 64, 32>}, {pipeline_mode = #tpu.pipeline_mode<synchronous>, transform_indices = @transform_4, window_bounds = array<i64: 64, 1>}, {pipeline_mode = #tpu.pipeline_mode<synchronous>, transform_indices = @transform_5, window_bounds = array<i64: 64, 1>}, {transform_indices = @transform_6, window_bounds = array<i64: 1, 64, 256>}]} {
    %c0 = arith.constant 0 : index
    %c0_0 = arith.constant 0 : index
    %0 = vector.load %arg3[%c0, %c0_0] : memref<64x32xf32, #tpu.memory_space<vmem>>, vector<64x32xf32>
    %c0_1 = arith.constant 0 : index
    %c0_2 = arith.constant 0 : index
    %c0_3 = arith.constant 0 : index
    %1 = vector.load %arg1[%c0_1, %c0_2, %c0_3] : memref<1x32x256xf32, #tpu.memory_space<vmem>>, vector<1x32x256xf32>
    %2 = vector.shape_cast %1 : vector<1x32x256xf32> to vector<32x256xf32>
    %cst = arith.constant dense<0.000000e+00> : vector<64x256xf32>
    %3 = tpu.matmul %0, %2, %cst {dimension_numbers = #tpu.dot_dimension_numbers<[1], [0], [0], [1], [0, 0, 1, 1], [], []>} : vector<64x32xf32>, vector<32x256xf32>, vector<64x256xf32> -> vector<64x256xf32>
    %c0_4 = arith.constant 0 : index
    %c0_5 = arith.constant 0 : index
    %4 = vector.load %arg4[%c0_4, %c0_5] : memref<64x32xf32, #tpu.memory_space<vmem>>, vector<64x32xf32>
    %c0_6 = arith.constant 0 : index
    %c0_7 = arith.constant 0 : index
    %c0_8 = arith.constant 0 : index
    %5 = vector.load %arg2[%c0_6, %c0_7, %c0_8] : memref<1x32x256xf32, #tpu.memory_space<vmem>>, vector<1x32x256xf32>
    %6 = vector.shape_cast %5 : vector<1x32x256xf32> to vector<32x256xf32>
    %cst_9 = arith.constant dense<0.000000e+00> : vector<64x256xf32>
    %7 = tpu.matmul %4, %6, %cst_9 {dimension_numbers = #tpu.dot_dimension_numbers<[1], [0], [0], [1], [0, 0, 1, 1], [], []>} : vector<64x32xf32>, vector<32x256xf32>, vector<64x256xf32> -> vector<64x256xf32>
    %8 = arith.addf %3, %7 : vector<64x256xf32>
    %c0_10 = arith.constant 0 : index
    %c0_11 = arith.constant 0 : index
    %9 = vector.load %arg5[%c0_10, %c0_11] : memref<64x1xf32, #tpu.memory_space<vmem>>, vector<64x1xf32>
    %10 = vector.broadcast %9 : vector<64x1xf32> to vector<64x256xf32>
    %11 = arith.mulf %8, %10 : vector<64x256xf32>
    %c0_12 = arith.constant 0 : index
    %c0_13 = arith.constant 0 : index
    %12 = vector.load %arg6[%c0_12, %c0_13] : memref<64x1xf32, #tpu.memory_space<vmem>>, vector<64x1xf32>
    %13 = vector.broadcast %12 : vector<64x1xf32> to vector<64x256xf32>
    %14 = arith.addf %11, %13 : vector<64x256xf32>
    %15 = arith.negf %14 : vector<64x256xf32>
    %16 = math.exp %15 : vector<64x256xf32>
    %cst_14 = arith.constant 1.000000e+00 : f32
    %17 = vector.broadcast %cst_14 : f32 to vector<64x256xf32>
    %18 = arith.addf %17, %16 : vector<64x256xf32>
    %19 = arith.divf %17, %18 : vector<64x256xf32>
    %20 = arith.mulf %14, %19 : vector<64x256xf32>
    %c0_15 = arith.constant 0 : index
    %c0_16 = arith.constant 0 : index
    %c0_17 = arith.constant 0 : index
    %21 = vector.load %arg7[%c0_15, %c0_16, %c0_17] : memref<1x64x256xf32, #tpu.memory_space<vmem>>, vector<1x64x256xf32>
    %22 = vector.shape_cast %21 : vector<1x64x256xf32> to vector<64x256xf32>
    %23 = vector.shape_cast %20 : vector<64x256xf32> to vector<1x64x256xf32>
    tpu.vector_store %arg7[%c0_15, %c0_16, %c0_17], %23 {strides = array<i32>} : memref<1x64x256xf32, #tpu.memory_space<vmem>>, vector<1x64x256xf32>,
    return
  }
  func.func @transform_0(%arg0: i32) -> (i32, i32, i32) {
    %c0_i32 = arith.constant 0 : i32
    %c0_i32_0 = arith.constant 0 : i32
    %c0_i32_1 = arith.constant 0 : i32
    return %arg0, %c0_i32, %c0_i32_0 : i32, i32, i32
  }
  func.func @transform_1(%arg0: i32) -> (i32, i32, i32) {
    %c0_i32 = arith.constant 0 : i32
    %c0_i32_0 = arith.constant 0 : i32
    %c0_i32_1 = arith.constant 0 : i32
    return %arg0, %c0_i32, %c0_i32_0 : i32, i32, i32
  }
  func.func @transform_2(%arg0: i32) -> (i32, i32) {
    %c0_i32 = arith.constant 0 : i32
    %c0_i32_0 = arith.constant 0 : i32
    %c0_i32_1 = arith.constant 0 : i32
    return %c0_i32, %c0_i32_0 : i32, i32
  }
  func.func @transform_3(%arg0: i32) -> (i32, i32) {
    %c0_i32 = arith.constant 0 : i32
    %c0_i32_0 = arith.constant 0 : i32
    %c0_i32_1 = arith.constant 0 : i32
    return %c0_i32, %c0_i32_0 : i32, i32
  }
  func.func @transform_4(%arg0: i32) -> (i32, i32) {
    %c0_i32 = arith.constant 0 : i32
    %c0_i32_0 = arith.constant 0 : i32
    %c0_i32_1 = arith.constant 0 : i32
    return %c0_i32, %c0_i32_0 : i32, i32
  }
  func.func @transform_5(%arg0: i32) -> (i32, i32) {
    %c0_i32 = arith.constant 0 : i32
    %c0_i32_0 = arith.constant 0 : i32
    %c0_i32_1 = arith.constant 0 : i32
    return %c0_i32, %c0_i32_0 : i32, i32
  }
  func.func @transform_6(%arg0: i32) -> (i32, i32, i32) {
    %c0_i32 = arith.constant 0 : i32
    %c0_i32_0 = arith.constant 0 : i32
    %c0_i32_1 = arith.constant 0 : i32
    return %arg0, %c0_i32, %c0_i32_0 : i32, i32, i32
  }
}

</mosaic_0001>

<llo_original>
// kernel: c3_b_cbam_forward.5
$region0: #{c3_b_cbam_forward.5}
  #allocation0 [shape = 'u32[]', space=smem, size = 0x4, offset = 0x4, fixed_abs, tag = 'smem constant byte address 0x4 - core index']
  #allocation1 [shape = 'u32[144,128]{1,0:T(1,128)}', space=vmem, size = 0x12000, scoped, tag = 'internal scratch']
  %s0 = inlined_call_operand.vmem [shape: f32[2,64,256], index: 0, kind: input, shape index: {}]
  %s1 = inlined_call_operand.vmem [shape: f32[32,64], index: 1, kind: input, shape index: {}]
  %s2 = inlined_call_operand.vmem [shape: f32[32,1], index: 2, kind: input, shape index: {}]
  %s3 = inlined_call_operand.vmem [shape: f32[32,1], index: 3, kind: input, shape index: {}]
  %s4 = inlined_call_operand.vmem [shape: f32[32,64], index: 4, kind: input, shape index: {}]
  %s5 = inlined_call_operand.vmem [shape: f32[32,1], index: 5, kind: input, shape index: {}]
  %s6 = inlined_call_operand.vmem [shape: f32[32,1], index: 6, kind: input, shape index: {}]
  %s7 = inlined_call_operand.vmem [shape: f32[32,32], index: 7, kind: input, shape index: {}]
  %s8 = inlined_call_operand.vmem [shape: f32[32,1], index: 8, kind: input, shape index: {}]
  %s9 = inlined_call_operand.vmem [shape: f32[32,1], index: 9, kind: input, shape index: {}]
  %s10 = inlined_call_operand.vmem [shape: f32[2,32,256], index: 10, kind: output, shape index: {0}]
  %s11 = inlined_call_operand.vmem [shape: f32[2,32,256], index: 11, kind: output, shape index: {1}]
  %s12 = inlined_call_operand.vmem [shape: f32[2,32,256], index: 12, kind: output, shape index: {2}]
  %13 = xla_tuple %s10, %s11, %s12
  %s14 = sld [smem:[#allocation0]]
  $region89: #{c3_b_cbam_forward.5} parent=0
    _
  %s16 = ssub.s32 1, %s14
  %s17 = scalar_select 0, %s16, %s14
  loop: start=0, step=1, limit=4
  $region2: #{c3_b_cbam_forward.5} parent=0 // loop_pre_header
    _
  $region3: #{c3_b_cbam_forward.5} parent=0 // loop_header
    %s19 = sphi 0, %s23
    %p20 = scmp.ge.s32.totalorder %s19, 4
    %s29 = sphi 0, %s31
    %s32 = sphi 0, %s29
    %s33 = sphi 0, %s32
    %s49 = sphi 0, %s33
    %s53 = sphi 0, %s53
    %s55 = sphi 0, %s53
    %s56 = sphi 0, %s55
    %s70 = sphi 0, %s56
    %s74 = sphi 0, %s74
    %s76 = sphi 0, %s74
    %s77 = sphi 0, %s76
    %s91 = sphi 0, %s77
    %s95 = sphi 0, %s95
    %s97 = sphi 0, %s95
    %s98 = sphi 0, %s97
    %s112 = sphi 0, %s98
    %s116 = sphi 0, %s116
    %s118 = sphi 0, %s116
    %s119 = sphi 0, %s118
    %s133 = sphi 0, %s119
    %s137 = sphi 0, %s137
    %s139 = sphi 0, %s137
    %s140 = sphi 0, %s139
    %s154 = sphi 0, %s140
    %s158 = sphi 0, %s158
    %s160 = sphi 0, %s158
    %s161 = sphi 0, %s160
    %s175 = sphi 0, %s161
    %s179 = sphi 0, %s179
    %s181 = sphi 0, %s179
    %s182 = sphi 0, %s181
    %s196 = sphi 0, %s182
    %s200 = sphi 0, %s200
    %s202 = sphi 0, %s200
    %s203 = sphi 0, %s202
    %s217 = sphi 0, %s203
    %s221 = sphi 0, %s221
    %s223 = sphi 0, %s221
    %s224 = sphi 0, %s223
    %s238 = sphi 0, %s224
    %s244 = sphi 0, %s246
    %s247 = sphi 0, %s244
    %s248 = sphi 0, %s247
    %s264 = sphi 0, %s248
    %s270 = sphi 0, %s272
    %s273 = sphi 0, %s270
    %s274 = sphi 0, %s273
    %s290 = sphi 0, %s274
    %s296 = sphi 0, %s298
    %s299 = sphi 0, %s296
    %s300 = sphi 0, %s299
    %s316 = sphi 0, %s300
  $region4: #{c3_b_cbam_forward.5} parent=0 // loop_header_branch
    %22 = sbr.rel (%p20) target = $region8
  $region5: #{c3_b_cbam_forward.5} parent=0 // loop_body
    %s24 = ssub.s32 %s19, 1
    %s25 = ssub.s32 %s19, 2
    %s26 = sadd.s32 %s19, 1
    %s27 = ssub.s32 %s19, %s26
    %p28 = scmp.eq.s32.totalorder %s27, 0
    %s30 = sadd.s32 %s29, 1
    %s31 = scalar_select %p28, %s29, %s30
    %p34 = pneg %p28
    %p35 = scmp.eq.s32.totalorder %s19, 1
    %p36 = por %p34, %p35
    %p37 = scmp.ne.s32.totalorder %s29, %s32
    %p38 = scmp.eq.s32.totalorder %s19, 0
    %p39 = por %p37, %p38
    %p40 = scmp.ne.s32.totalorder %s29, %s32
    %p41 = scmp.eq.s32.totalorder %s24, 1
    %p42 = por %p40, %p41
    %p43 = scmp.ne.s32.totalorder %s32, %s33
    %p44 = scmp.eq.s32.totalorder %s24, 0
    %p45 = por %p43, %p44
    %p46 = scmp.ne.s32.totalorder %s32, %s33
    %p47 = scmp.eq.s32.totalorder %s25, 1
    %p48 = por %p46, %p47
    %p50 = scmp.ne.s32.totalorder %s33, %s49
    %p51 = scmp.eq.s32.totalorder %s25, 0
    %p52 = por %p50, %p51
    %s54 = sadd.s32 %s53, 1
    %p57 = scmp.eq.s32.totalorder %s19, 1
    %p58 = scmp.ne.s32.totalorder %s53, %s55
    %p59 = scmp.eq.s32.totalorder %s19, 0
    %p60 = por %p58, %p59
    %p61 = scmp.ne.s32.totalorder %s53, %s55
    %p62 = scmp.eq.s32.totalorder %s24, 1
    %p63 = por %p61, %p62
    %p64 = scmp.ne.s32.totalorder %s55, %s56
    %p65 = scmp.eq.s32.totalorder %s24, 0
    %p66 = por %p64, %p65
    %p67 = scmp.ne.s32.totalorder %s55, %s56
    %p68 = scmp.eq.s32.totalorder %s25, 1
    %p69 = por %p67, %p68
    %p71 = scmp.ne.s32.totalorder %s56, %s70
    %p72 = scmp.eq.s32.totalorder %s25, 0
    %p73 = por %p71, %p72
    %s75 = sadd.s32 %s74, 1
    %p78 = scmp.eq.s32.totalorder %s19, 1
    %p79 = scmp.ne.s32.totalorder %s74, %s76
    %p80 = scmp.eq.s32.totalorder %s19, 0
    %p81 = por %p79, %p80
    %p82 = scmp.ne.s32.totalorder %s74, %s76
    %p83 = scmp.eq.s32.totalorder %s24, 1
    %p84 = por %p82, %p83
    %p85 = scmp.ne.s32.totalorder %s76, %s77
    %p86 = scmp.eq.s32.totalorder %s24, 0
    %p87 = por %p85, %p86
    %p88 = scmp.ne.s32.totalorder %s76, %s77
    %p89 = scmp.eq.s32.totalorder %s25, 1
    %p90 = por %p88, %p89
    %p92 = scmp.ne.s32.totalorder %s77, %s91
    %p93 = scmp.eq.s32.totalorder %s25, 0
    %p94 = por %p92, %p93
    %s96 = sadd.s32 %s95, 1
    %p99 = scmp.eq.s32.totalorder %s19, 1
    %p100 = scmp.ne.s32.totalorder %s95, %s97
    %p101 = scmp.eq.s32.totalorder %s19, 0
    %p102 = por %p100, %p101
    %p103 = scmp.ne.s32.totalorder %s95, %s97
    %p104 = scmp.eq.s32.totalorder %s24, 1
    %p105 = por %p103, %p104
    %p106 = scmp.ne.s32.totalorder %s97, %s98
    %p107 = scmp.eq.s32.totalorder %s24, 0
    %p108 = por %p106, %p107
    %p109 = scmp.ne.s32.totalorder %s97, %s98
    %p110 = scmp.eq.s32.totalorder %s25, 1
    %p111 = por %p109, %p110
    %p113 = scmp.ne.s32.totalorder %s98, %s112
    %p114 = scmp.eq.s32.totalorder %s25, 0
    %p115 = por %p113, %p114
    %s117 = sadd.s32 %s116, 1
    %p120 = scmp.eq.s32.totalorder %s19, 1
    %p121 = scmp.ne.s32.totalorder %s116, %s118
    %p122 = scmp.eq.s32.totalorder %s19, 0
    %p123 = por %p121, %p122
    %p124 = scmp.ne.s32.totalorder %s116, %s118
    %p125 = scmp.eq.s32.totalorder %s24, 1
    %p126 = por %p124, %p125
    %p127 = scmp.ne.s32.totalorder %s118, %s119
    %p128 = scmp.eq.s32.totalorder %s24, 0
    %p129 = por %p127, %p128
    %p130 = scmp.ne.s32.totalorder %s118, %s119
    %p131 = scmp.eq.s32.totalorder %s25, 1
    %p132 = por %p130, %p131
    %p134 = scmp.ne.s32.totalorder %s119, %s133
    %p135 = scmp.eq.s32.totalorder %s25, 0
    %p136 = por %p134, %p135
    %s138 = sadd.s32 %s137, 1
    %p141 = scmp.eq.s32.totalorder %s19, 1
    %p142 = scmp.ne.s32.totalorder %s137, %s139
    %p143 = scmp.eq.s32.totalorder %s19, 0
    %p144 = por %p142, %p143
    %p145 = scmp.ne.s32.totalorder %s137, %s139
    %p146 = scmp.eq.s32.totalorder %s24, 1
    %p147 = por %p145, %p146
    %p148 = scmp.ne.s32.totalorder %s139, %s140
    %p149 = scmp.eq.s32.totalorder %s24, 0
    %p150 = por %p148, %p149
    %p151 = scmp.ne.s32.totalorder %s139, %s140
    %p152 = scmp.eq.s32.totalorder %s25, 1
    %p153 = por %p151, %p152
    %p155 = scmp.ne.s32.totalorder %s140, %s154
    %p156 = scmp.eq.s32.totalorder %s25, 0
    %p157 = por %p155, %p156
    %s159 = sadd.s32 %s158, 1
    %p162 = scmp.eq.s32.totalorder %s19, 1
    %p163 = scmp.ne.s32.totalorder %s158, %s160
    %p164 = scmp.eq.s32.totalorder %s19, 0
    %p165 = por %p163, %p164
    %p166 = scmp.ne.s32.totalorder %s158, %s160
    %p167 = scmp.eq.s32.totalorder %s24, 1
    %p168 = por %p166, %p167
    %p169 = scmp.ne.s32.totalorder %s160, %s161
    %p170 = scmp.eq.s32.totalorder %s24, 0
    %p171 = por %p169, %p170
    %p172 = scmp.ne.s32.totalorder %s160, %s161
    %p173 = scmp.eq.s32.totalorder %s25, 1
    %p174 = por %p172, %p173
    %p176 = scmp.ne.s32.totalorder %s161, %s175
    %p177 = scmp.eq.s32.totalorder %s25, 0
    %p178 = por %p176, %p177
    %s180 = sadd.s32 %s179, 1
    %p183 = scmp.eq.s32.totalorder %s19, 1
    %p184 = scmp.ne.s32.totalorder %s179, %s181
    %p185 = scmp.eq.s32.totalorder %s19, 0
    %p186 = por %p184, %p185
    %p187 = scmp.ne.s32.totalorder %s179, %s181
    %p188 = scmp.eq.s32.totalorder %s24, 1
    %p189 = por %p187, %p188
    %p190 = scmp.ne.s32.totalorder %s181, %s182
    %p191 = scmp.eq.s32.totalorder %s24, 0
    %p192 = por %p190, %p191
    %p193 = scmp.ne.s32.totalorder %s181, %s182
    %p194 = scmp.eq.s32.totalorder %s25, 1
    %p195 = por %p193, %p194
    %p197 = scmp.ne.s32.totalorder %s182, %s196
    %p198 = scmp.eq.s32.totalorder %s25, 0
    %p199 = por %p197, %p198
    %s201 = sadd.s32 %s200, 1
    %p204 = scmp.eq.s32.totalorder %s19, 1
    %p205 = scmp.ne.s32.totalorder %s200, %s202
    %p206 = scmp.eq.s32.totalorder %s19, 0
    %p207 = por %p205, %p206
    %p208 = scmp.ne.s32.totalorder %s200, %s202
    %p209 = scmp.eq.s32.totalorder %s24, 1
    %p210 = por %p208, %p209
    %p211 = scmp.ne.s32.totalorder %s202, %s203
    %p212 = scmp.eq.s32.totalorder %s24, 0
    %p213 = por %p211, %p212
    %p214 = scmp.ne.s32.totalorder %s202, %s203
    %p215 = scmp.eq.s32.totalorder %s25, 1
    %p216 = por %p214, %p215
    %p218 = scmp.ne.s32.totalorder %s203, %s217
    %p219 = scmp.eq.s32.totalorder %s25, 0
    %p220 = por %p218, %p219
    %s222 = sadd.s32 %s221, 1
    %p225 = scmp.eq.s32.totalorder %s19, 1
    %p226 = scmp.ne.s32.totalorder %s221, %s223
    %p227 = scmp.eq.s32.totalorder %s19, 0
    %p228 = por %p226, %p227
    %p229 = scmp.ne.s32.totalorder %s221, %s223
    %p230 = scmp.eq.s32.totalorder %s24, 1
    %p231 = por %p229, %p230
    %p232 = scmp.ne.s32.totalorder %s223, %s224
    %p233 = scmp.eq.s32.totalorder %s24, 0
    %p234 = por %p232, %p233
    %p235 = scmp.ne.s32.totalorder %s223, %s224
    %p236 = scmp.eq.s32.totalorder %s25, 1
    %p237 = por %p235, %p236
    %p239 = scmp.ne.s32.totalorder %s224, %s238
    %p240 = scmp.eq.s32.totalorder %s25, 0
    %p241 = por %p239, %p240
    %s242 = ssub.s32 %s19, %s26
    %p243 = scmp.eq.s32.totalorder %s242, 0
    %s245 = sadd.s32 %s244, 1
    %s246 = scalar_select %p243, %s244, %s245
    %p249 = pneg %p243
    %p250 = scmp.eq.s32.totalorder %s19, 1
    %p251 = por %p249, %p250
    %p252 = scmp.ne.s32.totalorder %s244, %s247
    %p253 = scmp.eq.s32.totalorder %s19, 0
    %p254 = por %p252, %p253
    %p255 = scmp.ne.s32.totalorder %s244, %s247
    %p256 = scmp.eq.s32.totalorder %s24, 1
    %p257 = por %p255, %p256
    %p258 = scmp.ne.s32.totalorder %s247, %s248
    %p259 = scmp.eq.s32.totalorder %s24, 0
    %p260 = por %p258, %p259
    %p261 = scmp.ne.s32.totalorder %s247, %s248
    %p262 = scmp.eq.s32.totalorder %s25, 1
    %p263 = por %p261, %p262
    %p265 = scmp.ne.s32.totalorder %s248, %s264
    %p266 = scmp.eq.s32.totalorder %s25, 0
    %p267 = por %p265, %p266
    %s268 = ssub.s32 %s19, %s26
    %p269 = scmp.eq.s32.totalorder %s268, 0
    %s271 = sadd.s32 %s270, 1
    %s272 = scalar_select %p269, %s270, %s271
    %p275 = pneg %p269
    %p276 = scmp.eq.s32.totalorder %s19, 1
    %p277 = por %p275, %p276
    %p278 = scmp.ne.s32.totalorder %s270, %s273
    %p279 = scmp.eq.s32.totalorder %s19, 0
    %p280 = por %p278, %p279
    %p281 = scmp.ne.s32.totalorder %s270, %s273
    %p282 = scmp.eq.s32.totalorder %s24, 1
    %p283 = por %p281, %p282
    %p284 = scmp.ne.s32.totalorder %s273, %s274
    %p285 = scmp.eq.s32.totalorder %s24, 0
    %p286 = por %p284, %p285
    %p287 = scmp.ne.s32.totalorder %s273, %s274
    %p288 = scmp.eq.s32.totalorder %s25, 1
    %p289 = por %p287, %p288
    %p291 = scmp.ne.s32.totalorder %s274, %s290
    %p292 = scmp.eq.s32.totalorder %s25, 0
    %p293 = por %p291, %p292
    %s294 = ssub.s32 %s19, %s26
    %p295 = scmp.eq.s32.totalorder %s294, 0
    %s297 = sadd.s32 %s296, 1
    %s298 = scalar_select %p295, %s296, %s297
    %p301 = pneg %p295
    %p302 = scmp.eq.s32.totalorder %s19, 1
    %p303 = por %p301, %p302
    %p304 = scmp.ne.s32.totalorder %s296, %s299
    %p305 = scmp.eq.s32.totalorder %s19, 0
    %p306 = por %p304, %p305
    %p307 = scmp.ne.s32.totalorder %s296, %s299
    %p308 = scmp.eq.s32.totalorder %s24, 1
    %p309 = por %p307, %p308
    %p310 = scmp.ne.s32.totalorder %s299, %s300
    %p311 = scmp.eq.s32.totalorder %s24, 0
    %p312 = por %p310, %p311
    %p313 = scmp.ne.s32.totalorder %s299, %s300
    %p314 = scmp.eq.s32.totalorder %s25, 1
    %p315 = por %p313, %p314
    %p317 = scmp.ne.s32.totalorder %s300, %s316
    %p318 = scmp.eq.s32.totalorder %s25, 0
    %p319 = por %p317, %p318
    %p320 = scmp.le.s32.totalorder 1, %s19
    %p321 = scmp.lt.s32.totalorder %s19, 3
    %p322 = pnand %p320, %p321
    %p323 = pneg %p322
    // Predicated region
    $region9: #{c3_b_cbam_forward.5} parent=5 // pred_check
      _
    $region10: #{c3_b_cbam_forward.5} parent=5 // pred_check_branch
      %325 = sbr.rel (%p322) target = $region12
    $region11: #{c3_b_cbam_forward.5} parent=5 // pred_region
      %s326 = ssub.s32 %s19, 1
      // Predicated region
      $region13: #{c3_b_cbam_forward.5} parent=11 // pred_check
        %p327 = pneg %p66
      $region14: #{c3_b_cbam_forward.5} parent=11 // pred_check_branch
        %329 = sbr.rel (%p327) target = $region16
      $region15: #{c3_b_cbam_forward.5} parent=11 // pred_region
        _
      $region16: #{c3_b_cbam_forward.5} parent=11 // pred_fallthru
        _
      // Predicated region
      $region17: #{c3_b_cbam_forward.5} parent=11 // pred_check
        %p330 = pneg %p87
      $region18: #{c3_b_cbam_forward.5} parent=11 // pred_check_branch
        %332 = sbr.rel (%p330) target = $region20
      $region19: #{c3_b_cbam_forward.5} parent=11 // pred_region
        _
      $region20: #{c3_b_cbam_forward.5} parent=11 // pred_fallthru
        _
      // Predicated region
      $region21: #{c3_b_cbam_forward.5} parent=11 // pred_check
        %p333 = pneg %p108
      $region22: #{c3_b_cbam_forward.5} parent=11 // pred_check_branch
        %335 = sbr.rel (%p333) target = $region24
      $region23: #{c3_b_cbam_forward.5} parent=11 // pred_region
        _
      $region24: #{c3_b_cbam_forward.5} parent=11 // pred_fallthru
        _
      // Predicated region
      $region25: #{c3_b_cbam_forward.5} parent=11 // pred_check
        %p336 = pneg %p129
      $region26: #{c3_b_cbam_forward.5} parent=11 // pred_check_branch
        %338 = sbr.rel (%p336) target = $region28
      $region27: #{c3_b_cbam_forward.5} parent=11 // pred_region
        _
      $region28: #{c3_b_cbam_forward.5} parent=11 // pred_fallthru
        _
      // Predicated region
      $region29: #{c3_b_cbam_forward.5} parent=11 // pred_check
        %p339 = pneg %p150
      $region30: #{c3_b_cbam_forward.5} parent=11 // pred_check_branch
        %341 = sbr.rel (%p339) target = $region32
      $region31: #{c3_b_cbam_forward.5} parent=11 // pred_region
        _
      $region32: #{c3_b_cbam_forward.5} parent=11 // pred_fallthru
        _
      // Predicated region
      $region33: #{c3_b_cbam_forward.5} parent=11 // pred_check
        %p342 = pneg %p171
      $region34: #{c3_b_cbam_forward.5} parent=11 // pred_check_branch
        %344 = sbr.rel (%p342) target = $region36
      $region35: #{c3_b_cbam_forward.5} parent=11 // pred_region
        _
      $region36: #{c3_b_cbam_forward.5} parent=11 // pred_fallthru
        _
      // Predicated region
      $region37: #{c3_b_cbam_forward.5} parent=11 // pred_check
        %p345 = pneg %p192
      $region38: #{c3_b_cbam_forward.5} parent=11 // pred_check_branch
        %347 = sbr.rel (%p345) target = $region40
      $region39: #{c3_b_cbam_forward.5} parent=11 // pred_region
        _
      $region40: #{c3_b_cbam_forward.5} parent=11 // pred_fallthru
        _
      // Predicated region
      $region41: #{c3_b_cbam_forward.5} parent=11 // pred_check
        %p348 = pneg %p213
      $region42: #{c3_b_cbam_forward.5} parent=11 // pred_check_branch
        %350 = sbr.rel (%p348) target = $region44
      $region43: #{c3_b_cbam_forward.5} parent=11 // pred_region
        _
      $region44: #{c3_b_cbam_forward.5} parent=11 // pred_fallthru
        _
      // Predicated region
      $region45: #{c3_b_cbam_forward.5} parent=11 // pred_check
        %p351 = pneg %p234
      $region46: #{c3_b_cbam_forward.5} parent=11 // pred_check_branch
        %353 = sbr.rel (%p351) target = $region48
      $region47: #{c3_b_cbam_forward.5} parent=11 // pred_region
        _
      $region48: #{c3_b_cbam_forward.5} parent=11 // pred_fallthru
        _
    $region12: #{c3_b_cbam_forward.5} parent=5 // pred_fallthru
      _
    %p354 = scmp.lt.s32.totalorder %s19, 2
    // Predicated region
    $region49: #{c3_b_cbam_forward.5} parent=5 // pred_check
      %p355 = pneg %p354
    $region50: #{c3_b_cbam_forward.5} parent=5 // pred_check_branch
      %357 = sbr.rel (%p355) target = $region52
    $region51: #{c3_b_cbam_forward.5} parent=5 // pred_region
      // Predicated region
      $region53: #{c3_b_cbam_forward.5} parent=51 // pred_check
        %p358 = pneg %p39
      $region54: #{c3_b_cbam_forward.5} parent=51 // pred_check_branch
        %360 = sbr.rel (%p358) target = $region56
      $region55: #{c3_b_cbam_forward.5} parent=51 // pred_region
        %p361 = scmp.lt.s32.totalorder %s19, 1
        %s362 = scalar_select %p361, %s19, 1
        %s363 = smul.addr %s362, 16
        %s364 = smul.addr %s363, 8
        %s365 = scalar_lea.vmem %s0, %s364
      $region56: #{c3_b_cbam_forward.5} parent=51 // pred_fallthru
        _
    $region52: #{c3_b_cbam_forward.5} parent=5 // pred_fallthru
      _
    %p366 = scmp.le.s32.totalorder 1, %s19
    %p367 = scmp.lt.s32.totalorder %s19, 3
    %p368 = pnand %p366, %p367
    %p369 = pneg %p368
    // Predicated region
    $region57: #{c3_b_cbam_forward.5} parent=5 // pred_check
      _
    $region58: #{c3_b_cbam_forward.5} parent=5 // pred_check_branch
      %371 = sbr.rel (%p368) target = $region60
    $region59: #{c3_b_cbam_forward.5} parent=5 // pred_region
      %s372 = ssub.s32 %s19, 1
      %p373 = scmp.lt.s32.totalorder %s24, 1
      %s374 = scalar_select %p373, %s24, 1
      %s375 = smul.addr %s374, 16
      %s376 = smul.addr %s375, 8
      %s377 = scalar_lea.vmem %s0, %s376
      %p378 = pneg %p45
      %p379 = pneg %p42
      %p380 = pneg %p66
      %p381 = pneg %p63
      %p382 = pneg %p87
      %p383 = pneg %p84
      %p384 = pneg %p108
      %p385 = pneg %p105
      %p386 = pneg %p129
      %p387 = pneg %p126
      %p388 = pneg %p150
      %p389 = pneg %p147
      %p390 = pneg %p171
      %p391 = pneg %p168
      %p392 = pneg %p192
      %p393 = pneg %p189
      %p394 = pneg %p213
      %p395 = pneg %p210
      %p396 = pneg %p234
      %p397 = pneg %p231
      %p398 = pneg %p260
      %p399 = pneg %p257
      %p400 = scmp.lt.s32.totalorder %s24, 1
      %s401 = scalar_select %p400, %s24, 1
      %s402 = smul.addr %s401, 8
      %s403 = smul.addr %s402, 8
      %s404 = scalar_lea.vmem %s10, %s403
      %p405 = pneg %p286
      %p406 = pneg %p283
      %p407 = scmp.lt.s32.totalorder %s24, 1
      %s408 = scalar_select %p407, %s24, 1
      %s409 = smul.addr %s408, 8
      %s410 = smul.addr %s409, 8
      %s411 = scalar_lea.vmem %s11, %s410
      %p412 = pneg %p312
      %p413 = pneg %p309
      %p414 = scmp.lt.s32.totalorder %s24, 1
      %s415 = scalar_select %p414, %s24, 1
      %s416 = smul.addr %s415, 8
      %s417 = smul.addr %s416, 8
      %s418 = scalar_lea.vmem %s12, %s417
      %p419 = scmp.lt.s32.totalorder %s24, 1
      %s420 = scalar_select %p419, %s24, 1
      %s421 = smul.addr %s420, 16
      %s422 = smul.addr %s421, 8
      %s423 = scalar_lea.vmem %s0, %s422
      %p424 = scmp.lt.s32.totalorder %s24, 1
      %s425 = scalar_select %p424, %s24, 1
      %s426 = smul.addr %s425, 8
      %s427 = smul.addr %s426, 8
      %s428 = scalar_lea.vmem %s10, %s427
      %p429 = scmp.lt.s32.totalorder %s24, 1
      %s430 = scalar_select %p429, %s24, 1
      %s431 = smul.addr %s430, 8
      %s432 = smul.addr %s431, 8
      %s433 = scalar_lea.vmem %s11, %s432
      %p434 = scmp.lt.s32.totalorder %s24, 1
      %s435 = scalar_select %p434, %s24, 1
      %s436 = smul.addr %s435, 8
      %s437 = smul.addr %s436, 8
      %s438 = scalar_lea.vmem %s12, %s437
      %v439 = vld [vmem:[%s1] sm:$0xff]
      %v440 = vld [vmem:[%s1 + $0x8] sm:$0xff]
      %v441 = vld [vmem:[%s1 + $0x10] sm:$0xff]
      %v442 = vld [vmem:[%s1 + $0x18] sm:$0xff]
      %v443 = vld [vmem:[%s423] sm:$0xff]
      %v444 = vld [vmem:[%s423 + $0x8] sm:$0xff]
      %v445 = vld [vmem:[%s423 + $0x10] sm:$0xff]
      %v446 = vld [vmem:[%s423 + $0x18] sm:$0xff]
      %v447 = vld [vmem:[%s423 + $0x20] sm:$0xff]
      %v448 = vld [vmem:[%s423 + $0x28] sm:$0xff]
      %v449 = vld [vmem:[%s423 + $0x30] sm:$0xff]
      %v450 = vld [vmem:[%s423 + $0x38] sm:$0xff]
      %v451 = vld [vmem:[%s423 + $0x40] sm:$0xff]
      %v452 = vld [vmem:[%s423 + $0x48] sm:$0xff]
      %v453 = vld [vmem:[%s423 + $0x50] sm:$0xff]
      %v454 = vld [vmem:[%s423 + $0x58] sm:$0xff]
      %v455 = vld [vmem:[%s423 + $0x60] sm:$0xff]
      %v456 = vld [vmem:[%s423 + $0x68] sm:$0xff]
      %v457 = vld [vmem:[%s423 + $0x70] sm:$0xff]
      %v458 = vld [vmem:[%s423 + $0x78] sm:$0xff]
      %vm459 = vcmask 523264
      %v461 = vsel %vm459, %v439, 0
      %v464 = vsel %vm459, %v440, 0
      %v467 = vsel %vm459, %v441, 0
      %v470 = vsel %vm459, %v442, 0
      %472 = vmatprep.subr.mxu0 %v444
      %473 = vmatpush1.msra.mxu0 %v443
      %474 = vmatprep.subr.mxu0 %v446
      %475 = vmatpush1.msra.mxu0 %v445
      %476 = vmatprep.subr.mxu0 %v448
      %477 = vmatpush1.msra.mxu0 %v447
      %478 = vmatprep.subr.mxu0 %v450
      %479 = vmatpush1.msra.mxu0 %v449
      %480 = vmatprep.subr.mxu0 %v452
      %481 = vmatpush1.msra.mxu0 %v451
      %482 = vmatprep.subr.mxu0 %v454
      %483 = vmatpush1.msra.mxu0 %v453
      %484 = vmatprep.subr.mxu0 %v456
      %485 = vmatpush1.msra.mxu0 %v455
      %486 = vmatprep.subr.mxu0 %v458
      %487 = vmatpush1.msra.mxu0 %v457
      %488 = vmatprep.subr.mxu0 0.0
      %489 = vmatpush1.msra.mxu0 0.0
      %490 = vmatprep.subr.mxu0 0.0
      %491 = vmatpush1.msra.mxu0 0.0
      %492 = vmatprep.subr.mxu0 0.0
      %493 = vmatpush1.msra.mxu0 0.0
      %494 = vmatprep.subr.mxu0 0.0
      %495 = vmatpush1.msra.mxu0 0.0
      %496 = vmatprep.subr.mxu0 0.0
      %497 = vmatpush1.msra.mxu0 0.0
      %498 = vmatprep.subr.mxu0 0.0
      %499 = vmatpush1.msra.mxu0 0.0
      %500 = vmatprep.subr.mxu0 0.0
      %501 = vmatpush1.msra.mxu0 0.0
      %502 = vmatprep.subr.mxu0 0.0
      %503 = vmatpush1.msra.mxu0 0.0
      %504 = vmatprep.subr.mxu0 0.0
      %505 = vmatpush1.msra.mxu0 0.0
      %506 = vmatprep.subr.mxu0 0.0
      %507 = vmatpush1.msra.mxu0 0.0
      %508 = vmatprep.subr.mxu0 0.0
      %509 = vmatpush1.msra.mxu0 0.0
      %510 = vmatprep.subr.mxu0 0.0
      %511 = vmatpush1.msra.mxu0 0.0
      %512 = vmatprep.subr.mxu0 0.0
      %513 = vmatpush1.msra.mxu0 0.0
      %514 = vmatprep.subr.mxu0 0.0
      %515 = vmatpush1.msra.mxu0 0.0
      %516 = vmatprep.subr.mxu0 0.0
      %517 = vmatpush1.msra.mxu0 0.0
      %518 = vmatprep.subr.mxu0 0.0
      %519 = vmatpush1.msra.mxu0 0.0
      %520 = vmatprep.subr.mxu0 0.0
      %521 = vmatpush1.msra.mxu0 0.0
      %522 = vmatprep.subr.mxu0 0.0
      %523 = vmatpush1.msra.mxu0 0.0
      %524 = vmatprep.subr.mxu0 0.0
      %525 = vmatpush1.msra.mxu0 0.0
      %526 = vmatprep.subr.mxu0 0.0
      %527 = vmatpush1.msra.mxu0 0.0
      %528 = vmatprep.subr.mxu0 0.0
      %529 = vmatpush1.msra.mxu0 0.0
      %530 = vmatprep.subr.mxu0 0.0
      %531 = vmatpush1.msra.mxu0 0.0
      %532 = vmatprep.subr.mxu0 0.0
      %533 = vmatpush1.msra.mxu0 0.0
      %534 = vmatprep.subr.mxu0 0.0
      %535 = vmatpush1.msra.mxu0 0.0
      %536 = vmatprep.mubr.f32.mxu0 0.0
      %537 = vmatmul.mubr.f32.gmra.mrb[0].mxu0 %v461
      %v538 = vpop.f32.mrb[0].mxu0
      %v539 = vadd.f32 0.0, %v538
      %v540 = vpop.f32.mrb[0].mxu0
      %v541 = vadd.f32 0.0, %v540
      %542 = vmatprep.mubr.f32.mxu0 0.0
      %543 = vmatmul.mubr.f32.gmra.mrb[0].mxu0 %v464
      %v544 = vpop.f32.mrb[0].mxu0
      %v545 = vadd.f32 0.0, %v544
      %v546 = vpop.f32.mrb[0].mxu0
      %v547 = vadd.f32 0.0, %v546
      %548 = vmatprep.mubr.f32.mxu0 0.0
      %549 = vmatmul.mubr.f32.gmra.mrb[0].mxu0 %v467
      %v550 = vpop.f32.mrb[0].mxu0
      %v551 = vadd.f32 0.0, %v550
      %v552 = vpop.f32.mrb[0].mxu0
      %v553 = vadd.f32 0.0, %v552
      %554 = vmatprep.mubr.f32.mxu0 0.0
      %555 = vmatmul.mubr.f32.gmra.mrb[0].mxu0 %v470
      %v556 = vpop.f32.mrb[0].mxu0
      %v557 = vadd.f32 0.0, %v556
      %v558 = vpop.f32.mrb[0].mxu0
      %v559 = vadd.f32 0.0, %v558
      %560 = vdwg.mxu0
      %v561 = vld [vmem:[%s2] sm:$0xff]
      %v562 = vld [vmem:[%s2 + $0x8] sm:$0xff]
      %v563 = vld [vmem:[%s2 + $0x10] sm:$0xff]
      %v564 = vld [vmem:[%s2 + $0x18] sm:$0xff]
      %566 = vset.pattern.permute.xlu0 0
      %567 = vperm.xlu0 %566, %v561
      %v568 = vpop.permute.xlu0 %567
      %571 = vset.pattern.permute.xlu0 0
      %572 = vperm.xlu0 %571, %v562
      %v573 = vpop.permute.xlu0 %572
      %576 = vset.pattern.permute.xlu0 0
      %577 = vperm.xlu0 %576, %v563
      %v578 = vpop.permute.xlu0 %577
      %581 = vset.pattern.permute.xlu0 0
      %582 = vperm.xlu0 %581, %v564
      %v583 = vpop.permute.xlu0 %582
      %v585 = vmul.f32 %v539, %v568
      %v586 = vmul.f32 %v541, %v568
      %v587 = vmul.f32 %v545, %v573
      %v588 = vmul.f32 %v547, %v573
      %v589 = vmul.f32 %v551, %v578
      %v590 = vmul.f32 %v553, %v578
      %v591 = vmul.f32 %v557, %v583
      %v592 = vmul.f32 %v559, %v583
      %v593 = vld [vmem:[%s3] sm:$0xff]
      %v594 = vld [vmem:[%s3 + $0x8] sm:$0xff]
      %v595 = vld [vmem:[%s3 + $0x10] sm:$0xff]
      %v596 = vld [vmem:[%s3 + $0x18] sm:$0xff]
      %598 = vset.pattern.permute.xlu0 0
      %599 = vperm.xlu0 %598, %v593
      %v600 = vpop.permute.xlu0 %599
      %603 = vset.pattern.permute.xlu0 0
      %604 = vperm.xlu0 %603, %v594
      %v605 = vpop.permute.xlu0 %604
      %608 = vset.pattern.permute.xlu0 0
      %609 = vperm.xlu0 %608, %v595
      %v610 = vpop.permute.xlu0 %609
      %613 = vset.pattern.permute.xlu0 0
      %614 = vperm.xlu0 %613, %v596
      %v615 = vpop.permute.xlu0 %614
      %v617 = vadd.f32 %v585, %v600
      %v618 = vadd.f32 %v586, %v600
      %v619 = vadd.f32 %v587, %v605
      %v620 = vadd.f32 %v588, %v605
      %v621 = vadd.f32 %v589, %v610
      %v622 = vadd.f32 %v590, %v610
      %v623 = vadd.f32 %v591, %v615
      %v624 = vadd.f32 %v592, %v615
      %v625 = vxor.u32 %v617, 2147483648
      %v626 = vxor.u32 %v618, 2147483648
      %v627 = vxor.u32 %v619, 2147483648
      %v628 = vxor.u32 %v620, 2147483648
      %v629 = vxor.u32 %v621, 2147483648
      %v630 = vxor.u32 %v622, 2147483648
      %v631 = vxor.u32 %v623, 2147483648
      %v632 = vxor.u32 %v624, 2147483648
      %v633 = vmul.f32 %v625, 1.442695
      %v634 = vpow.pop %v633
      %v635 = vmul.f32 %v626, 1.442695
      %v636 = vpow.pop %v635
      %v637 = vmul.f32 %v627, 1.442695
      %v638 = vpow.pop %v637
      %v639 = vmul.f32 %v628, 1.442695
      %v640 = vpow.pop %v639
      %v641 = vmul.f32 %v629, 1.442695
      %v642 = vpow.pop %v641
      %v643 = vmul.f32 %v630, 1.442695
      %v644 = vpow.pop %v643
      %v645 = vmul.f32 %v631, 1.442695
      %v646 = vpow.pop %v645
      %v647 = vmul.f32 %v632, 1.442695
      %v648 = vpow.pop %v647
      %v649 = vadd.f32 %v634, 1.0
      %v650 = vadd.f32 %v636, 1.0
      %v651 = vadd.f32 %v638, 1.0
      %v652 = vadd.f32 %v640, 1.0
      %v653 = vadd.f32 %v642, 1.0
      %v654 = vadd.f32 %v644, 1.0
      %v655 = vadd.f32 %v646, 1.0
      %v656 = vadd.f32 %v648, 1.0
      %v657 = vrcp.pop %v649
      %v658 = vmul.f32 1.0, %v657
      %v659 = vrcp.pop %v650
      %v660 = vmul.f32 1.0, %v659
      %v661 = vrcp.pop %v651
      %v662 = vmul.f32 1.0, %v661
      %v663 = vrcp.pop %v652
      %v664 = vmul.f32 1.0, %v663
      %v665 = vrcp.pop %v653
      %v666 = vmul.f32 1.0, %v665
      %v667 = vrcp.pop %v654
      %v668 = vmul.f32 1.0, %v667
      %v669 = vrcp.pop %v655
      %v670 = vmul.f32 1.0, %v669
      %v671 = vrcp.pop %v656
      %v672 = vmul.f32 1.0, %v671
      %v673 = vmul.f32 %v617, %v658
      %v674 = vmul.f32 %v618, %v660
      %v675 = vmul.f32 %v619, %v662
      %v676 = vmul.f32 %v620, %v664
      %v677 = vmul.f32 %v621, %v666
      %v678 = vmul.f32 %v622, %v668
      %v679 = vmul.f32 %v623, %v670
      %v680 = vmul.f32 %v624, %v672
      %681 = vst [vmem:[%s428] sm:$0xff] %v673
      %682 = vst [vmem:[%s428 + $0x8] sm:$0xff] %v674
      %683 = vst [vmem:[%s428 + $0x10] sm:$0xff] %v675
      %684 = vst [vmem:[%s428 + $0x18] sm:$0xff] %v676
      %685 = vst [vmem:[%s428 + $0x20] sm:$0xff] %v677
      %686 = vst [vmem:[%s428 + $0x28] sm:$0xff] %v678
      %687 = vst [vmem:[%s428 + $0x30] sm:$0xff] %v679
      %688 = vst [vmem:[%s428 + $0x38] sm:$0xff] %v680
      %v689 = vld [vmem:[%s4] sm:$0xff]
      %v690 = vld [vmem:[%s4 + $0x8] sm:$0xff]
      %v691 = vld [vmem:[%s4 + $0x10] sm:$0xff]
      %v692 = vld [vmem:[%s4 + $0x18] sm:$0xff]
      %v693 = vld [vmem:[%s423] sm:$0xff]
      %v694 = vld [vmem:[%s423 + $0x8] sm:$0xff]
      %v695 = vld [vmem:[%s423 + $0x10] sm:$0xff]
      %v696 = vld [vmem:[%s423 + $0x18] sm:$0xff]
      %v697 = vld [vmem:[%s423 + $0x20] sm:$0xff]
      %v698 = vld [vmem:[%s423 + $0x28] sm:$0xff]
      %v699 = vld [vmem:[%s423 + $0x30] sm:$0xff]
      %v700 = vld [vmem:[%s423 + $0x38] sm:$0xff]
      %v701 = vld [vmem:[%s423 + $0x40] sm:$0xff]
      %v702 = vld [vmem:[%s423 + $0x48] sm:$0xff]
      %v703 = vld [vmem:[%s423 + $0x50] sm:$0xff]
      %v704 = vld [vmem:[%s423 + $0x58] sm:$0xff]
      %v705 = vld [vmem:[%s423 + $0x60] sm:$0xff]
      %v706 = vld [vmem:[%s423 + $0x68] sm:$0xff]
      %v707 = vld [vmem:[%s423 + $0x70] sm:$0xff]
      %v708 = vld [vmem:[%s423 + $0x78] sm:$0xff]
      %v710 = vsel %vm459, %v689, 0
      %v713 = vsel %vm459, %v690, 0
      %v716 = vsel %vm459, %v691, 0
      %v719 = vsel %vm459, %v692, 0
      %721 = vmatprep.subr.mxu0 %v694
      %722 = vmatpush1.msra.mxu0 %v693
      %723 = vmatprep.subr.mxu0 %v696
      %724 = vmatpush1.msra.mxu0 %v695
      %725 = vmatprep.subr.mxu0 %v698
      %726 = vmatpush1.msra.mxu0 %v697
      %727 = vmatprep.subr.mxu0 %v700
      %728 = vmatpush1.msra.mxu0 %v699
      %729 = vmatprep.subr.mxu0 %v702
      %730 = vmatpush1.msra.mxu0 %v701
      %731 = vmatprep.subr.mxu0 %v704
      %732 = vmatpush1.msra.mxu0 %v703
      %733 = vmatprep.subr.mxu0 %v706
      %734 = vmatpush1.msra.mxu0 %v705
      %735 = vmatprep.subr.mxu0 %v708
      %736 = vmatpush1.msra.mxu0 %v707
      %737 = vmatprep.subr.mxu0 0.0
      %738 = vmatpush1.msra.mxu0 0.0
      %739 = vmatprep.subr.mxu0 0.0
      %740 = vmatpush1.msra.mxu0 0.0
      %741 = vmatprep.subr.mxu0 0.0
      %742 = vmatpush1.msra.mxu0 0.0
      %743 = vmatprep.subr.mxu0 0.0
      %744 = vmatpush1.msra.mxu0 0.0
      %745 = vmatprep.subr.mxu0 0.0
      %746 = vmatpush1.msra.mxu0 0.0
      %747 = vmatprep.subr.mxu0 0.0
      %748 = vmatpush1.msra.mxu0 0.0
      %749 = vmatprep.subr.mxu0 0.0
      %750 = vmatpush1.msra.mxu0 0.0
      %751 = vmatprep.subr.mxu0 0.0
      %752 = vmatpush1.msra.mxu0 0.0
      %753 = vmatprep.subr.mxu0 0.0
      %754 = vmatpush1.msra.mxu0 0.0
      %755 = vmatprep.subr.mxu0 0.0
      %756 = vmatpush1.msra.mxu0 0.0
      %757 = vmatprep.subr.mxu0 0.0
      %758 = vmatpush1.msra.mxu0 0.0
      %759 = vmatprep.subr.mxu0 0.0
      %760 = vmatpush1.msra.mxu0 0.0
      %761 = vmatprep.subr.mxu0 0.0
      %762 = vmatpush1.msra.mxu0 0.0
      %763 = vmatprep.subr.mxu0 0.0
      %764 = vmatpush1.msra.mxu0 0.0
      %765 = vmatprep.subr.mxu0 0.0
      %766 = vmatpush1.msra.mxu0 0.0
      %767 = vmatprep.subr.mxu0 0.0
      %768 = vmatpush1.msra.mxu0 0.0
      %769 = vmatprep.subr.mxu0 0.0
      %770 = vmatpush1.msra.mxu0 0.0
      %771 = vmatprep.subr.mxu0 0.0
      %772 = vmatpush1.msra.mxu0 0.0
      %773 = vmatprep.subr.mxu0 0.0
      %774 = vmatpush1.msra.mxu0 0.0
      %775 = vmatprep.subr.mxu0 0.0
      %776 = vmatpush1.msra.mxu0 0.0
      %777 = vmatprep.subr.mxu0 0.0
      %778 = vmatpush1.msra.mxu0 0.0
      %779 = vmatprep.subr.mxu0 0.0
      %780 = vmatpush1.msra.mxu0 0.0
      %781 = vmatprep.subr.mxu0 0.0
      %782 = vmatpush1.msra.mxu0 0.0
      %783 = vmatprep.subr.mxu0 0.0
      %784 = vmatpush1.msra.mxu0 0.0
      %785 = vmatprep.mubr.f32.mxu0 0.0
      %786 = vmatmul.mubr.f32.gmra.mrb[0].mxu0 %v710
      %v787 = vpop.f32.mrb[0].mxu0
      %v788 = vadd.f32 0.0, %v787
      %v789 = vpop.f32.mrb[0].mxu0
      %v790 = vadd.f32 0.0, %v789
      %791 = vmatprep.mubr.f32.mxu0 0.0
      %792 = vmatmul.mubr.f32.gmra.mrb[0].mxu0 %v713
      %v793 = vpop.f32.mrb[0].mxu0
      %v794 = vadd.f32 0.0, %v793
      %v795 = vpop.f32.mrb[0].mxu0
      %v796 = vadd.f32 0.0, %v795
      %797 = vmatprep.mubr.f32.mxu0 0.0
      %798 = vmatmul.mubr.f32.gmra.mrb[0].mxu0 %v716
      %v799 = vpop.f32.mrb[0].mxu0
      %v800 = vadd.f32 0.0, %v799
      %v801 = vpop.f32.mrb[0].mxu0
      %v802 = vadd.f32 0.0, %v801
      %803 = vmatprep.mubr.f32.mxu0 0.0
      %804 = vmatmul.mubr.f32.gmra.mrb[0].mxu0 %v719
      %v805 = vpop.f32.mrb[0].mxu0
      %v806 = vadd.f32 0.0, %v805
      %v807 = vpop.f32.mrb[0].mxu0
      %v808 = vadd.f32 0.0, %v807
      %809 = vdwg.mxu0
      %v810 = vld [vmem:[%s5] sm:$0xff]
      %v811 = vld [vmem:[%s5 + $0x8] sm:$0xff]
      %v812 = vld [vmem:[%s5 + $0x10] sm:$0xff]
      %v813 = vld [vmem:[%s5 + $0x18] sm:$0xff]
      %815 = vset.pattern.permute.xlu0 0
      %816 = vperm.xlu0 %815, %v810
      %v817 = vpop.permute.xlu0 %816
      %820 = vset.pattern.permute.xlu0 0
      %821 = vperm.xlu0 %820, %v811
      %v822 = vpop.permute.xlu0 %821
      %825 = vset.pattern.permute.xlu0 0
      %826 = vperm.xlu0 %825, %v812
      %v827 = vpop.permute.xlu0 %826
      %830 = vset.pattern.permute.xlu0 0
      %831 = vperm.xlu0 %830, %v813
      %v832 = vpop.permute.xlu0 %831
      %v834 = vmul.f32 %v788, %v817
      %v835 = vmul.f32 %v790, %v817
      %v836 = vmul.f32 %v794, %v822
      %v837 = vmul.f32 %v796, %v822
      %v838 = vmul.f32 %v800, %v827
      %v839 = vmul.f32 %v802, %v827
      %v840 = vmul.f32 %v806, %v832
      %v841 = vmul.f32 %v808, %v832
      %v842 = vld [vmem:[%s6] sm:$0xff]
      %v843 = vld [vmem:[%s6 + $0x8] sm:$0xff]
      %v844 = vld [vmem:[%s6 + $0x10] sm:$0xff]
      %v845 = vld [vmem:[%s6 + $0x18] sm:$0xff]
      %847 = vset.pattern.permute.xlu0 0
      %848 = vperm.xlu0 %847, %v842
      %v849 = vpop.permute.xlu0 %848
      %852 = vset.pattern.permute.xlu0 0
      %853 = vperm.xlu0 %852, %v843
      %v854 = vpop.permute.xlu0 %853
      %857 = vset.pattern.permute.xlu0 0
      %858 = vperm.xlu0 %857, %v844
      %v859 = vpop.permute.xlu0 %858
      %862 = vset.pattern.permute.xlu0 0
      %863 = vperm.xlu0 %862, %v845
      %v864 = vpop.permute.xlu0 %863
      %v866 = vadd.f32 %v834, %v849
      %v867 = vadd.f32 %v835, %v849
      %v868 = vadd.f32 %v836, %v854
      %v869 = vadd.f32 %v837, %v854
      %v870 = vadd.f32 %v838, %v859
      %v871 = vadd.f32 %v839, %v859
      %v872 = vadd.f32 %v840, %v864
      %v873 = vadd.f32 %v841, %v864
      %v874 = vxor.u32 %v866, 2147483648
      %v875 = vxor.u32 %v867, 2147483648
      %v876 = vxor.u32 %v868, 2147483648
      %v877 = vxor.u32 %v869, 2147483648
      %v878 = vxor.u32 %v870, 2147483648
      %v879 = vxor.u32 %v871, 2147483648
      %v880 = vxor.u32 %v872, 2147483648
      %v881 = vxor.u32 %v873, 2147483648
      %v882 = vmul.f32 %v874, 1.442695
      %v883 = vpow.pop %v882
      %v884 = vmul.f32 %v875, 1.442695
      %v885 = vpow.pop %v884
      %v886 = vmul.f32 %v876, 1.442695
      %v887 = vpow.pop %v886
      %v888 = vmul.f32 %v877, 1.442695
      %v889 = vpow.pop %v888
      %v890 = vmul.f32 %v878, 1.442695
      %v891 = vpow.pop %v890
      %v892 = vmul.f32 %v879, 1.442695
      %v893 = vpow.pop %v892
      %v894 = vmul.f32 %v880, 1.442695
      %v895 = vpow.pop %v894
      %v896 = vmul.f32 %v881, 1.442695
      %v897 = vpow.pop %v896
      %v898 = vadd.f32 %v883, 1.0
      %v899 = vadd.f32 %v885, 1.0
      %v900 = vadd.f32 %v887, 1.0
      %v901 = vadd.f32 %v889, 1.0
      %v902 = vadd.f32 %v891, 1.0
      %v903 = vadd.f32 %v893, 1.0
      %v904 = vadd.f32 %v895, 1.0
      %v905 = vadd.f32 %v897, 1.0
      %v906 = vrcp.pop %v898
      %v907 = vmul.f32 1.0, %v906
      %v908 = vrcp.pop %v899
      %v909 = vmul.f32 1.0, %v908
      %v910 = vrcp.pop %v900
      %v911 = vmul.f32 1.0, %v910
      %v912 = vrcp.pop %v901
      %v913 = vmul.f32 1.0, %v912
      %v914 = vrcp.pop %v902
      %v915 = vmul.f32 1.0, %v914
      %v916 = vrcp.pop %v903
      %v917 = vmul.f32 1.0, %v916
      %v918 = vrcp.pop %v904
      %v919 = vmul.f32 1.0, %v918
      %v920 = vrcp.pop %v905
      %v921 = vmul.f32 1.0, %v920
      %v922 = vmul.f32 %v866, %v907
      %v923 = vmul.f32 %v867, %v909
      %v924 = vmul.f32 %v868, %v911
      %v925 = vmul.f32 %v869, %v913
      %v926 = vmul.f32 %v870, %v915
      %v927 = vmul.f32 %v871, %v917
      %v928 = vmul.f32 %v872, %v919
      %v929 = vmul.f32 %v873, %v921
      %930 = vst [vmem:[%s433] sm:$0xff] %v922
      %931 = vst [vmem:[%s433 + $0x8] sm:$0xff] %v923
      %932 = vst [vmem:[%s433 + $0x10] sm:$0xff] %v924
      %933 = vst [vmem:[%s433 + $0x18] sm:$0xff] %v925
      %934 = vst [vmem:[%s433 + $0x20] sm:$0xff] %v926
      %935 = vst [vmem:[%s433 + $0x28] sm:$0xff] %v927
      %936 = vst [vmem:[%s433 + $0x30] sm:$0xff] %v928
      %937 = vst [vmem:[%s433 + $0x38] sm:$0xff] %v929
      %v938 = vld [vmem:[%s7] sm:$0xff]
      %v939 = vld [vmem:[%s7 + $0x8] sm:$0xff]
      %v940 = vld [vmem:[%s7 + $0x10] sm:$0xff]
      %v941 = vld [vmem:[%s7 + $0x18] sm:$0xff]
      %v942 = vld [vmem:[%s428] sm:$0xff]
      %v943 = vld [vmem:[%s428 + $0x8] sm:$0xff]
      %v944 = vld [vmem:[%s428 + $0x10] sm:$0xff]
      %v945 = vld [vmem:[%s428 + $0x18] sm:$0xff]
      %v946 = vld [vmem:[%s428 + $0x20] sm:$0xff]
      %v947 = vld [vmem:[%s428 + $0x28] sm:$0xff]
      %v948 = vld [vmem:[%s428 + $0x30] sm:$0xff]
      %v949 = vld [vmem:[%s428 + $0x38] sm:$0xff]
      %vm950 = vcmask 261120
      %v952 = vsel %vm950, %v938, 0
      %v955 = vsel %vm950, %v939, 0
      %v958 = vsel %vm950, %v940, 0
      %v961 = vsel %vm950, %v941, 0
      %963 = vmatprep.subr.mxu0 %v943
      %964 = vmatpush1.msra.mxu0 %v942
      %965 = vmatprep.subr.mxu0 %v945
      %966 = vmatpush1.msra.mxu0 %v944
      %967 = vmatprep.subr.mxu0 %v947
      %968 = vmatpush1.msra.mxu0 %v946
      %969 = vmatprep.subr.mxu0 %v949
      %970 = vmatpush1.msra.mxu0 %v948
      %971 = vmatprep.subr.mxu0 0.0
      %972 = vmatpush1.msra.mxu0 0.0
      %973 = vmatprep.subr.mxu0 0.0
      %974 = vmatpush1.msra.mxu0 0.0
      %975 = vmatprep.subr.mxu0 0.0
      %976 = vmatpush1.msra.mxu0 0.0
      %977 = vmatprep.subr.mxu0 0.0
      %978 = vmatpush1.msra.mxu0 0.0
      %979 = vmatprep.subr.mxu0 0.0
      %980 = vmatpush1.msra.mxu0 0.0
      %981 = vmatprep.subr.mxu0 0.0
      %982 = vmatpush1.msra.mxu0 0.0
      %983 = vmatprep.subr.mxu0 0.0
      %984 = vmatpush1.msra.mxu0 0.0
      %985 = vmatprep.subr.mxu0 0.0
      %986 = vmatpush1.msra.mxu0 0.0
      %987 = vmatprep.subr.mxu0 0.0
      %988 = vmatpush1.msra.mxu0 0.0
      %989 = vmatprep.subr.mxu0 0.0
      %990 = vmatpush1.msra.mxu0 0.0
      %991 = vmatprep.subr.mxu0 0.0
      %992 = vmatpush1.msra.mxu0 0.0
      %993 = vmatprep.subr.mxu0 0.0
      %994 = vmatpush1.msra.mxu0 0.0
      %995 = vmatprep.subr.mxu0 0.0
      %996 = vmatpush1.msra.mxu0 0.0
      %997 = vmatprep.subr.mxu0 0.0
      %998 = vmatpush1.msra.mxu0 0.0
      %999 = vmatprep.subr.mxu0 0.0
      %1000 = vmatpush1.msra.mxu0 0.0
      %1001 = vmatprep.subr.mxu0 0.0
      %1002 = vmatpush1.msra.mxu0 0.0
      %1003 = vmatprep.subr.mxu0 0.0
      %1004 = vmatpush1.msra.mxu0 0.0
      %1005 = vmatprep.subr.mxu0 0.0
      %1006 = vmatpush1.msra.mxu0 0.0
      %1007 = vmatprep.subr.mxu0 0.0
      %1008 = vmatpush1.msra.mxu0 0.0
      %1009 = vmatprep.subr.mxu0 0.0
      %1010 = vmatpush1.msra.mxu0 0.0
      %1011 = vmatprep.subr.mxu0 0.0
      %1012 = vmatpush1.msra.mxu0 0.0
      %1013 = vmatprep.subr.mxu0 0.0
      %1014 = vmatpush1.msra.mxu0 0.0
      %1015 = vmatprep.subr.mxu0 0.0
      %1016 = vmatpush1.msra.mxu0 0.0
      %1017 = vmatprep.subr.mxu0 0.0
      %1018 = vmatpush1.msra.mxu0 0.0
      %1019 = vmatprep.subr.mxu0 0.0
      %1020 = vmatpush1.msra.mxu0 0.0
      %1021 = vmatprep.subr.mxu0 0.0
      %1022 = vmatpush1.msra.mxu0 0.0
      %1023 = vmatprep.subr.mxu0 0.0
      %1024 = vmatpush1.msra.mxu0 0.0
      %1025 = vmatprep.subr.mxu0 0.0
      %1026 = vmatpush1.msra.mxu0 0.0
      %1027 = vmatprep.mubr.f32.mxu0 0.0
      %1028 = vmatmul.mubr.f32.gmra.mrb[0].mxu0 %v952
      %v1029 = vpop.f32.mrb[0].mxu0
      %v1030 = vadd.f32 0.0, %v1029
      %v1031 = vpop.f32.mrb[0].mxu0
      %v1032 = vadd.f32 0.0, %v1031
      %1033 = vmatprep.mubr.f32.mxu0 0.0
      %1034 = vmatmul.mubr.f32.gmra.mrb[0].mxu0 %v955
      %v1035 = vpop.f32.mrb[0].mxu0
      %v1036 = vadd.f32 0.0, %v1035
      %v1037 = vpop.f32.mrb[0].mxu0
      %v1038 = vadd.f32 0.0, %v1037
      %1039 = vmatprep.mubr.f32.mxu0 0.0
      %1040 = vmatmul.mubr.f32.gmra.mrb[0].mxu0 %v958
      %v1041 = vpop.f32.mrb[0].mxu0
      %v1042 = vadd.f32 0.0, %v1041
      %v1043 = vpop.f32.mrb[0].mxu0
      %v1044 = vadd.f32 0.0, %v1043
      %1045 = vmatprep.mubr.f32.mxu0 0.0
      %1046 = vmatmul.mubr.f32.gmra.mrb[0].mxu0 %v961
      %v1047 = vpop.f32.mrb[0].mxu0
      %v1048 = vadd.f32 0.0, %v1047
      %v1049 = vpop.f32.mrb[0].mxu0
      %v1050 = vadd.f32 0.0, %v1049
      %1051 = vdwg.mxu0
      %v1052 = vld [vmem:[%s8] sm:$0xff]
      %v1053 = vld [vmem:[%s8 + $0x8] sm:$0xff]
      %v1054 = vld [vmem:[%s8 + $0x10] sm:$0xff]
      %v1055 = vld [vmem:[%s8 + $0x18] sm:$0xff]
      %1057 = vset.pattern.permute.xlu0 0
      %1058 = vperm.xlu0 %1057, %v1052
      %v1059 = vpop.permute.xlu0 %1058
      %1062 = vset.pattern.permute.xlu0 0
      %1063 = vperm.xlu0 %1062, %v1053
      %v1064 = vpop.permute.xlu0 %1063
      %1067 = vset.pattern.permute.xlu0 0
      %1068 = vperm.xlu0 %1067, %v1054
      %v1069 = vpop.permute.xlu0 %1068
      %1072 = vset.pattern.permute.xlu0 0
      %1073 = vperm.xlu0 %1072, %v1055
      %v1074 = vpop.permute.xlu0 %1073
      %v1076 = vmul.f32 %v1030, %v1059
      %v1077 = vmul.f32 %v1032, %v1059
      %v1078 = vmul.f32 %v1036, %v1064
      %v1079 = vmul.f32 %v1038, %v1064
      %v1080 = vmul.f32 %v1042, %v1069
      %v1081 = vmul.f32 %v1044, %v1069
      %v1082 = vmul.f32 %v1048, %v1074
      %v1083 = vmul.f32 %v1050, %v1074
      %v1084 = vld [vmem:[%s9] sm:$0xff]
      %v1085 = vld [vmem:[%s9 + $0x8] sm:$0xff]
      %v1086 = vld [vmem:[%s9 + $0x10] sm:$0xff]
      %v1087 = vld [vmem:[%s9 + $0x18] sm:$0xff]
      %1089 = vset.pattern.permute.xlu0 0
      %1090 = vperm.xlu0 %1089, %v1084
      %v1091 = vpop.permute.xlu0 %1090
      %1094 = vset.pattern.permute.xlu0 0
      %1095 = vperm.xlu0 %1094, %v1085
      %v1096 = vpop.permute.xlu0 %1095
      %1099 = vset.pattern.permute.xlu0 0
      %1100 = vperm.xlu0 %1099, %v1086
      %v1101 = vpop.permute.xlu0 %1100
      %1104 = vset.pattern.permute.xlu0 0
      %1105 = vperm.xlu0 %1104, %v1087
      %v1106 = vpop.permute.xlu0 %1105
      %v1108 = vadd.f32 %v1076, %v1091
      %v1109 = vadd.f32 %v1077, %v1091
      %v1110 = vadd.f32 %v1078, %v1096
      %v1111 = vadd.f32 %v1079, %v1096
      %v1112 = vadd.f32 %v1080, %v1101
      %v1113 = vadd.f32 %v1081, %v1101
      %v1114 = vadd.f32 %v1082, %v1106
      %v1115 = vadd.f32 %v1083, %v1106
      %v1116 = vxor.u32 %v1108, 2147483648
      %v1117 = vxor.u32 %v1109, 2147483648
      %v1118 = vxor.u32 %v1110, 2147483648
      %v1119 = vxor.u32 %v1111, 2147483648
      %v1120 = vxor.u32 %v1112, 2147483648
      %v1121 = vxor.u32 %v1113, 2147483648
      %v1122 = vxor.u32 %v1114, 2147483648
      %v1123 = vxor.u32 %v1115, 2147483648
      %v1124 = vmul.f32 %v1116, 1.442695
      %v1125 = vpow.pop %v1124
      %v1126 = vmul.f32 %v1117, 1.442695
      %v1127 = vpow.pop %v1126
      %v1128 = vmul.f32 %v1118, 1.442695
      %v1129 = vpow.pop %v1128
      %v1130 = vmul.f32 %v1119, 1.442695
      %v1131 = vpow.pop %v1130
      %v1132 = vmul.f32 %v1120, 1.442695
      %v1133 = vpow.pop %v1132
      %v1134 = vmul.f32 %v1121, 1.442695
      %v1135 = vpow.pop %v1134
      %v1136 = vmul.f32 %v1122, 1.442695
      %v1137 = vpow.pop %v1136
      %v1138 = vmul.f32 %v1123, 1.442695
      %v1139 = vpow.pop %v1138
      %v1140 = vadd.f32 %v1125, 1.0
      %v1141 = vadd.f32 %v1127, 1.0
      %v1142 = vadd.f32 %v1129, 1.0
      %v1143 = vadd.f32 %v1131, 1.0
      %v1144 = vadd.f32 %v1133, 1.0
      %v1145 = vadd.f32 %v1135, 1.0
      %v1146 = vadd.f32 %v1137, 1.0
      %v1147 = vadd.f32 %v1139, 1.0
      %v1148 = vrcp.pop %v1140
      %v1149 = vmul.f32 1.0, %v1148
      %v1150 = vrcp.pop %v1141
      %v1151 = vmul.f32 1.0, %v1150
      %v1152 = vrcp.pop %v1142
      %v1153 = vmul.f32 1.0, %v1152
      %v1154 = vrcp.pop %v1143
      %v1155 = vmul.f32 1.0, %v1154
      %v1156 = vrcp.pop %v1144
      %v1157 = vmul.f32 1.0, %v1156
      %v1158 = vrcp.pop %v1145
      %v1159 = vmul.f32 1.0, %v1158
      %v1160 = vrcp.pop %v1146
      %v1161 = vmul.f32 1.0, %v1160
      %v1162 = vrcp.pop %v1147
      %v1163 = vmul.f32 1.0, %v1162
      %v1164 = vmul.f32 %v1108, %v1149
      %v1165 = vmul.f32 %v1109, %v1151
      %v1166 = vmul.f32 %v1110, %v1153
      %v1167 = vmul.f32 %v1111, %v1155
      %v1168 = vmul.f32 %v1112, %v1157
      %v1169 = vmul.f32 %v1113, %v1159
      %v1170 = vmul.f32 %v1114, %v1161
      %v1171 = vmul.f32 %v1115, %v1163
      %1172 = vst [vmem:[%s438] sm:$0xff] %v1164
      %1173 = vst [vmem:[%s438 + $0x8] sm:$0xff] %v1165
      %1174 = vst [vmem:[%s438 + $0x10] sm:$0xff] %v1166
      %1175 = vst [vmem:[%s438 + $0x18] sm:$0xff] %v1167
      %1176 = vst [vmem:[%s438 + $0x20] sm:$0xff] %v1168
      %1177 = vst [vmem:[%s438 + $0x28] sm:$0xff] %v1169
      %1178 = vst [vmem:[%s438 + $0x30] sm:$0xff] %v1170
      %1179 = vst [vmem:[%s438 + $0x38] sm:$0xff] %v1171
      %p1180 = scmp.lt.s32.totalorder %s24, 1
      %s1181 = scalar_select %p1180, %s24, 1
      %s1182 = smul.addr %s1181, 8
      %s1183 = smul.addr %s1182, 8
      %s1184 = scalar_lea.vmem %s10, %s1183
      %p1185 = scmp.lt.s32.totalorder %s24, 1
      %s1186 = scalar_select %p1185, %s24, 1
      %s1187 = smul.addr %s1186, 8
      %s1188 = smul.addr %s1187, 8
      %s1189 = scalar_lea.vmem %s11, %s1188
      %p1190 = scmp.lt.s32.totalorder %s24, 1
      %s1191 = scalar_select %p1190, %s24, 1
      %s1192 = smul.addr %s1191, 8
      %s1193 = smul.addr %s1192, 8
      %s1194 = scalar_lea.vmem %s12, %s1193
      // Predicated region
      $region61: #{c3_b_cbam_forward.5} parent=59 // pred_check
        %p1195 = pneg %p257
      $region62: #{c3_b_cbam_forward.5} parent=59 // pred_check_branch
        %1197 = sbr.rel (%p1195) target = $region64
      $region63: #{c3_b_cbam_forward.5} parent=59 // pred_region
        _
      $region64: #{c3_b_cbam_forward.5} parent=59 // pred_fallthru
        _
      // Predicated region
      $region65: #{c3_b_cbam_forward.5} parent=59 // pred_check
        %p1198 = pneg %p283
      $region66: #{c3_b_cbam_forward.5} parent=59 // pred_check_branch
        %1200 = sbr.rel (%p1198) target = $region68
      $region67: #{c3_b_cbam_forward.5} parent=59 // pred_region
        _
      $region68: #{c3_b_cbam_forward.5} parent=59 // pred_fallthru
        _
      // Predicated region
      $region69: #{c3_b_cbam_forward.5} parent=59 // pred_check
        %p1201 = pneg %p309
      $region70: #{c3_b_cbam_forward.5} parent=59 // pred_check_branch
        %1203 = sbr.rel (%p1201) target = $region72
      $region71: #{c3_b_cbam_forward.5} parent=59 // pred_region
        _
      $region72: #{c3_b_cbam_forward.5} parent=59 // pred_fallthru
        _
    $region60: #{c3_b_cbam_forward.5} parent=5 // pred_fallthru
      _
    %p1204 = scmp.le.s32.totalorder 2, %s19
    // Predicated region
    $region73: #{c3_b_cbam_forward.5} parent=5 // pred_check
      %p1205 = pneg %p1204
    $region74: #{c3_b_cbam_forward.5} parent=5 // pred_check_branch
      %1207 = sbr.rel (%p1205) target = $region76
    $region75: #{c3_b_cbam_forward.5} parent=5 // pred_region
      %s1208 = ssub.s32 %s19, 2
      // Predicated region
      $region77: #{c3_b_cbam_forward.5} parent=75 // pred_check
        %p1209 = pneg %p263
      $region78: #{c3_b_cbam_forward.5} parent=75 // pred_check_branch
        %1211 = sbr.rel (%p1209) target = $region80
      $region79: #{c3_b_cbam_forward.5} parent=75 // pred_region
        %p1212 = scmp.lt.s32.totalorder %s25, 1
        %s1213 = scalar_select %p1212, %s25, 1
        %s1214 = smul.addr %s1213, 8
        %s1215 = smul.addr %s1214, 8
        %s1216 = scalar_lea.vmem %s10, %s1215
      $region80: #{c3_b_cbam_forward.5} parent=75 // pred_fallthru
        _
      // Predicated region
      $region81: #{c3_b_cbam_forward.5} parent=75 // pred_check
        %p1217 = pneg %p289
      $region82: #{c3_b_cbam_forward.5} parent=75 // pred_check_branch
        %1219 = sbr.rel (%p1217) target = $region84
      $region83: #{c3_b_cbam_forward.5} parent=75 // pred_region
        %p1220 = scmp.lt.s32.totalorder %s25, 1
        %s1221 = scalar_select %p1220, %s25, 1
        %s1222 = smul.addr %s1221, 8
        %s1223 = smul.addr %s1222, 8
        %s1224 = scalar_lea.vmem %s11, %s1223
      $region84: #{c3_b_cbam_forward.5} parent=75 // pred_fallthru
        _
      // Predicated region
      $region85: #{c3_b_cbam_forward.5} parent=75 // pred_check
        %p1225 = pneg %p315
      $region86: #{c3_b_cbam_forward.5} parent=75 // pred_check_branch
        %1227 = sbr.rel (%p1225) target = $region88
      $region87: #{c3_b_cbam_forward.5} parent=75 // pred_region
        %p1228 = scmp.lt.s32.totalorder %s25, 1
        %s1229 = scalar_select %p1228, %s25, 1
        %s1230 = smul.addr %s1229, 8
        %s1231 = smul.addr %s1230, 8
        %s1232 = scalar_lea.vmem %s12, %s1231
      $region88: #{c3_b_cbam_forward.5} parent=75 // pred_fallthru
        _
    $region76: #{c3_b_cbam_forward.5} parent=5 // pred_fallthru
      _
  $region6: #{c3_b_cbam_forward.5} parent=0 // loop_footer
    %s23 = sadd.s32 1, %s19
  $region7: #{c3_b_cbam_forward.5} parent=0 // loop_footer_branch
    %18 = sbr.rel target = $region3
  $region8: #{c3_b_cbam_forward.5} parent=0 // loop_exit
    _

// kernel: c3_b_cbam_forward.6
$region0: #{c3_b_cbam_forward.6}
  #allocation0 [shape = 'u32[]', space=smem, size = 0x4, offset = 0x4, fixed_abs, tag = 'smem constant byte address 0x4 - core index']
  #allocation1 [shape = 'u32[144,128]{1,0:T(1,128)}', space=vmem, size = 0x12000, scoped, tag = 'internal scratch']
  %s0 = inlined_call_operand.vmem [shape: f32[2,32,384], index: 0, kind: input, shape index: {}]
  %s1 = inlined_call_operand.vmem [shape: f32[9,32,32], index: 1, kind: input, shape index: {}]
  %s2 = inlined_call_operand.vmem [shape: f32[32,1], index: 2, kind: input, shape index: {}]
  %s3 = inlined_call_operand.vmem [shape: f32[32,1], index: 3, kind: input, shape index: {}]
  %s4 = inlined_call_operand.vmem [shape: f32[2,32,288], index: 4, kind: output, shape index: {}]
  %s5 = sld [smem:[#allocation0]]
  $region49: #{c3_b_cbam_forward.6} parent=0
    _
  %s7 = ssub.s32 1, %s5
  %s8 = scalar_select 0, %s7, %s5
  loop: start=0, step=1, limit=4
  $region2: #{c3_b_cbam_forward.6} parent=0 // loop_pre_header
    _
  $region3: #{c3_b_cbam_forward.6} parent=0 // loop_header
    %s10 = sphi 0, %s14
    %p11 = scmp.ge.s32.totalorder %s10, 4
    %s20 = sphi 0, %s22
    %s23 = sphi 0, %s20
    %s24 = sphi 0, %s23
    %s40 = sphi 0, %s24
    %s44 = sphi 0, %s44
    %s46 = sphi 0, %s44
    %s47 = sphi 0, %s46
    %s61 = sphi 0, %s47
    %s65 = sphi 0, %s65
    %s67 = sphi 0, %s65
    %s68 = sphi 0, %s67
    %s82 = sphi 0, %s68
    %s86 = sphi 0, %s86
    %s88 = sphi 0, %s86
    %s89 = sphi 0, %s88
    %s103 = sphi 0, %s89
    %s109 = sphi 0, %s111
    %s112 = sphi 0, %s109
    %s113 = sphi 0, %s112
    %s129 = sphi 0, %s113
  $region4: #{c3_b_cbam_forward.6} parent=0 // loop_header_branch
    %13 = sbr.rel (%p11) target = $region8
  $region5: #{c3_b_cbam_forward.6} parent=0 // loop_body
    %s15 = ssub.s32 %s10, 1
    %s16 = ssub.s32 %s10, 2
    %s17 = sadd.s32 %s10, 1
    %s18 = ssub.s32 %s10, %s17
    %p19 = scmp.eq.s32.totalorder %s18, 0
    %s21 = sadd.s32 %s20, 1
    %s22 = scalar_select %p19, %s20, %s21
    %p25 = pneg %p19
    %p26 = scmp.eq.s32.totalorder %s10, 1
    %p27 = por %p25, %p26
    %p28 = scmp.ne.s32.totalorder %s20, %s23
    %p29 = scmp.eq.s32.totalorder %s10, 0
    %p30 = por %p28, %p29
    %p31 = scmp.ne.s32.totalorder %s20, %s23
    %p32 = scmp.eq.s32.totalorder %s15, 1
    %p33 = por %p31, %p32
    %p34 = scmp.ne.s32.totalorder %s23, %s24
    %p35 = scmp.eq.s32.totalorder %s15, 0
    %p36 = por %p34, %p35
    %p37 = scmp.ne.s32.totalorder %s23, %s24
    %p38 = scmp.eq.s32.totalorder %s16, 1
    %p39 = por %p37, %p38
    %p41 = scmp.ne.s32.totalorder %s24, %s40
    %p42 = scmp.eq.s32.totalorder %s16, 0
    %p43 = por %p41, %p42
    %s45 = sadd.s32 %s44, 1
    %p48 = scmp.eq.s32.totalorder %s10, 1
    %p49 = scmp.ne.s32.totalorder %s44, %s46
    %p50 = scmp.eq.s32.totalorder %s10, 0
    %p51 = por %p49, %p50
    %p52 = scmp.ne.s32.totalorder %s44, %s46
    %p53 = scmp.eq.s32.totalorder %s15, 1
    %p54 = por %p52, %p53
    %p55 = scmp.ne.s32.totalorder %s46, %s47
    %p56 = scmp.eq.s32.totalorder %s15, 0
    %p57 = por %p55, %p56
    %p58 = scmp.ne.s32.totalorder %s46, %s47
    %p59 = scmp.eq.s32.totalorder %s16, 1
    %p60 = por %p58, %p59
    %p62 = scmp.ne.s32.totalorder %s47, %s61
    %p63 = scmp.eq.s32.totalorder %s16, 0
    %p64 = por %p62, %p63
    %s66 = sadd.s32 %s65, 1
    %p69 = scmp.eq.s32.totalorder %s10, 1
    %p70 = scmp.ne.s32.totalorder %s65, %s67
    %p71 = scmp.eq.s32.totalorder %s10, 0
    %p72 = por %p70, %p71
    %p73 = scmp.ne.s32.totalorder %s65, %s67
    %p74 = scmp.eq.s32.totalorder %s15, 1
    %p75 = por %p73, %p74
    %p76 = scmp.ne.s32.totalorder %s67, %s68
    %p77 = scmp.eq.s32.totalorder %s15, 0
    %p78 = por %p76, %p77
    %p79 = scmp.ne.s32.totalorder %s67, %s68
    %p80 = scmp.eq.s32.totalorder %s16, 1
    %p81 = por %p79, %p80
    %p83 = scmp.ne.s32.totalorder %s68, %s82
    %p84 = scmp.eq.s32.totalorder %s16, 0
    %p85 = por %p83, %p84
    %s87 = sadd.s32 %s86, 1
    %p90 = scmp.eq.s32.totalorder %s10, 1
    %p91 = scmp.ne.s32.totalorder %s86, %s88
    %p92 = scmp.eq.s32.totalorder %s10, 0
    %p93 = por %p91, %p92
    %p94 = scmp.ne.s32.totalorder %s86, %s88
    %p95 = scmp.eq.s32.totalorder %s15, 1
    %p96 = por %p94, %p95
    %p97 = scmp.ne.s32.totalorder %s88, %s89
    %p98 = scmp.eq.s32.totalorder %s15, 0
    %p99 = por %p97, %p98
    %p100 = scmp.ne.s32.totalorder %s88, %s89
    %p101 = scmp.eq.s32.totalorder %s16, 1
    %p102 = por %p100, %p101
    %p104 = scmp.ne.s32.totalorder %s89, %s103
    %p105 = scmp.eq.s32.totalorder %s16, 0
    %p106 = por %p104, %p105
    %s107 = ssub.s32 %s10, %s17
    %p108 = scmp.eq.s32.totalorder %s107, 0
    %s110 = sadd.s32 %s109, 1
    %s111 = scalar_select %p108, %s109, %s110
    %p114 = pneg %p108
    %p115 = scmp.eq.s32.totalorder %s10, 1
    %p116 = por %p114, %p115
    %p117 = scmp.ne.s32.totalorder %s109, %s112
    %p118 = scmp.eq.s32.totalorder %s10, 0
    %p119 = por %p117, %p118
    %p120 = scmp.ne.s32.totalorder %s109, %s112
    %p121 = scmp.eq.s32.totalorder %s15, 1
    %p122 = por %p120, %p121
    %p123 = scmp.ne.s32.totalorder %s112, %s113
    %p124 = scmp.eq.s32.totalorder %s15, 0
    %p125 = por %p123, %p124
    %p126 = scmp.ne.s32.totalorder %s112, %s113
    %p127 = scmp.eq.s32.totalorder %s16, 1
    %p128 = por %p126, %p127
    %p130 = scmp.ne.s32.totalorder %s113, %s129
    %p131 = scmp.eq.s32.totalorder %s16, 0
    %p132 = por %p130, %p131
    %p133 = scmp.le.s32.totalorder 1, %s10
    %p134 = scmp.lt.s32.totalorder %s10, 3
    %p135 = pnand %p133, %p134
    %p136 = pneg %p135
    // Predicated region
    $region9: #{c3_b_cbam_forward.6} parent=5 // pred_check
      _
    $region10: #{c3_b_cbam_forward.6} parent=5 // pred_check_branch
      %138 = sbr.rel (%p135) target = $region12
    $region11: #{c3_b_cbam_forward.6} parent=5 // pred_region
      %s139 = ssub.s32 %s10, 1
      // Predicated region
      $region13: #{c3_b_cbam_forward.6} parent=11 // pred_check
        %p140 = pneg %p57
      $region14: #{c3_b_cbam_forward.6} parent=11 // pred_check_branch
        %142 = sbr.rel (%p140) target = $region16
      $region15: #{c3_b_cbam_forward.6} parent=11 // pred_region
        _
      $region16: #{c3_b_cbam_forward.6} parent=11 // pred_fallthru
        _
      // Predicated region
      $region17: #{c3_b_cbam_forward.6} parent=11 // pred_check
        %p143 = pneg %p78
      $region18: #{c3_b_cbam_forward.6} parent=11 // pred_check_branch
        %145 = sbr.rel (%p143) target = $region20
      $region19: #{c3_b_cbam_forward.6} parent=11 // pred_region
        _
      $region20: #{c3_b_cbam_forward.6} parent=11 // pred_fallthru
        _
      // Predicated region
      $region21: #{c3_b_cbam_forward.6} parent=11 // pred_check
        %p146 = pneg %p99
      $region22: #{c3_b_cbam_forward.6} parent=11 // pred_check_branch
        %148 = sbr.rel (%p146) target = $region24
      $region23: #{c3_b_cbam_forward.6} parent=11 // pred_region
        _
      $region24: #{c3_b_cbam_forward.6} parent=11 // pred_fallthru
        _
    $region12: #{c3_b_cbam_forward.6} parent=5 // pred_fallthru
      _
    %p149 = scmp.lt.s32.totalorder %s10, 2
    // Predicated region
    $region25: #{c3_b_cbam_forward.6} parent=5 // pred_check
      %p150 = pneg %p149
    $region26: #{c3_b_cbam_forward.6} parent=5 // pred_check_branch
      %152 = sbr.rel (%p150) target = $region28
    $region27: #{c3_b_cbam_forward.6} parent=5 // pred_region
      // Predicated region
      $region29: #{c3_b_cbam_forward.6} parent=27 // pred_check
        %p153 = pneg %p30
      $region30: #{c3_b_cbam_forward.6} parent=27 // pred_check_branch
        %155 = sbr.rel (%p153) target = $region32
      $region31: #{c3_b_cbam_forward.6} parent=27 // pred_region
        %p156 = scmp.lt.s32.totalorder %s10, 1
        %s157 = scalar_select %p156, %s10, 1
        %s158 = smul.addr %s157, 12
        %s159 = smul.addr %s158, 8
        %s160 = scalar_lea.vmem %s0, %s159
      $region32: #{c3_b_cbam_forward.6} parent=27 // pred_fallthru
        _
    $region28: #{c3_b_cbam_forward.6} parent=5 // pred_fallthru
      _
    %p161 = scmp.le.s32.totalorder 1, %s10
    %p162 = scmp.lt.s32.totalorder %s10, 3
    %p163 = pnand %p161, %p162
    %p164 = pneg %p163
    // Predicated region
    $region33: #{c3_b_cbam_forward.6} parent=5 // pred_check
      _
    $region34: #{c3_b_cbam_forward.6} parent=5 // pred_check_branch
      %166 = sbr.rel (%p163) target = $region36
    $region35: #{c3_b_cbam_forward.6} parent=5 // pred_region
      %s167 = ssub.s32 %s10, 1
      %p168 = scmp.lt.s32.totalorder %s15, 1
      %s169 = scalar_select %p168, %s15, 1
      %s170 = smul.addr %s169, 12
      %s171 = smul.addr %s170, 8
      %s172 = scalar_lea.vmem %s0, %s171
      %p173 = pneg %p36
      %p174 = pneg %p33
      %p175 = pneg %p57
      %p176 = pneg %p54
      %p177 = pneg %p78
      %p178 = pneg %p75
      %p179 = pneg %p99
      %p180 = pneg %p96
      %p181 = pneg %p125
      %p182 = pneg %p122
      %p183 = scmp.lt.s32.totalorder %s15, 1
      %s184 = scalar_select %p183, %s15, 1
      %s185 = smul.addr %s184, 12
      %s186 = smul.addr %s185, 8
      %s187 = scalar_lea.vmem %s4, %s186
      %p188 = scmp.lt.s32.totalorder %s15, 1
      %s189 = scalar_select %p188, %s15, 1
      %s190 = smul.addr %s189, 12
      %s191 = smul.addr %s190, 8
      %s192 = scalar_lea.vmem %s0, %s191
      %p193 = scmp.lt.s32.totalorder %s15, 1
      %s194 = scalar_select %p193, %s15, 1
      %s195 = smul.addr %s194, 12
      %s196 = smul.addr %s195, 8
      %s197 = scalar_lea.vmem %s4, %s196
      %v198 = vld [vmem:[%s1] sm:$0xff]
      %v199 = vld [vmem:[%s1 + $0x8] sm:$0xff]
      %v200 = vld [vmem:[%s1 + $0x10] sm:$0xff]
      %v201 = vld [vmem:[%s1 + $0x18] sm:$0xff]
      %v202 = vld [vmem:[%s192] sm:$0xff]
      %v203 = vld [vmem:[%s192 + $0x8] sm:$0xff]
      %v204 = vld [vmem:[%s192 + $0x10] sm:$0xff]
      %v205 = vld [vmem:[%s192 + $0x18] sm:$0xff]
      %v206 = vld [vmem:[%s192 + $0x20] sm:$0xff]
      %v207 = vld [vmem:[%s192 + $0x28] sm:$0xff]
      %v208 = vld [vmem:[%s192 + $0x30] sm:$0xff]
      %v209 = vld [vmem:[%s192 + $0x38] sm:$0xff]
      %v210 = vld [vmem:[%s192 + $0x40] sm:$0xff]
      %v211 = vld [vmem:[%s192 + $0x48] sm:$0xff]
      %v212 = vld [vmem:[%s192 + $0x50] sm:$0xff]
      %v213 = vld [vmem:[%s192 + $0x58] sm:$0xff]
      %s214 = scalar_lea.vmem %s1, 32
      %v215 = vld [vmem:[%s214] sm:$0xff]
      %v216 = vld [vmem:[%s214 + $0x8] sm:$0xff]
      %v217 = vld [vmem:[%s214 + $0x10] sm:$0xff]
      %v218 = vld [vmem:[%s214 + $0x18] sm:$0xff]
      %231 = vrot.lane.b32.xlu0 %v202, 127
      %v232 = vpop.permute.xlu0 %231
      %233 = vrot.lane.b32.xlu0 %v203, 127
      %v234 = vpop.permute.xlu0 %233
      %235 = vrot.lane.b32.xlu0 %v204, 127
      %v236 = vpop.permute.xlu0 %235
      %237 = vrot.lane.b32.xlu0 %v205, 127
      %v238 = vpop.permute.xlu0 %237
      %239 = vrot.lane.b32.xlu0 %v206, 127
      %v240 = vpop.permute.xlu0 %239
      %241 = vrot.lane.b32.xlu0 %v207, 127
      %v242 = vpop.permute.xlu0 %241
      %243 = vrot.lane.b32.xlu0 %v208, 127
      %v244 = vpop.permute.xlu0 %243
      %245 = vrot.lane.b32.xlu0 %v209, 127
      %v246 = vpop.permute.xlu0 %245
      %247 = vrot.lane.b32.xlu0 %v210, 127
      %v248 = vpop.permute.xlu0 %247
      %249 = vrot.lane.b32.xlu0 %v211, 127
      %v250 = vpop.permute.xlu0 %249
      %251 = vrot.lane.b32.xlu0 %v212, 127
      %v252 = vpop.permute.xlu0 %251
      %253 = vrot.lane.b32.xlu0 %v213, 127
      %v254 = vpop.permute.xlu0 %253
      %vm255 = vcmask 1039360
      %v256 = vsel %vm255, %v232, %v234
      %v257 = vsel %vm255, %v234, %v236
      %v258 = vsel %vm255, %v238, %v240
      %v259 = vsel %vm255, %v240, %v242
      %v260 = vsel %vm255, %v244, %v246
      %v261 = vsel %vm255, %v246, %v248
      %v262 = vsel %vm255, %v250, %v252
      %v263 = vsel %vm255, %v252, %v254
      %vm276 = vcmask 261120
      %v278 = vsel %vm276, %v215, 0
      %v281 = vsel %vm276, %v216, 0
      %v284 = vsel %vm276, %v217, 0
      %v287 = vsel %vm276, %v218, 0
      %289 = vmatprep.subr.mxu0 %v257
      %290 = vmatpush1.msra.mxu0 %v256
      %291 = vmatprep.subr.mxu0 %v259
      %292 = vmatpush1.msra.mxu0 %v258
      %293 = vmatprep.subr.mxu0 %v261
      %294 = vmatpush1.msra.mxu0 %v260
      %295 = vmatprep.subr.mxu0 %v263
      %296 = vmatpush1.msra.mxu0 %v262
      %297 = vmatprep.subr.mxu0 0.0
      %298 = vmatpush1.msra.mxu0 0.0
      %299 = vmatprep.subr.mxu0 0.0
      %300 = vmatpush1.msra.mxu0 0.0
      %301 = vmatprep.subr.mxu0 0.0
      %302 = vmatpush1.msra.mxu0 0.0
      %303 = vmatprep.subr.mxu0 0.0
      %304 = vmatpush1.msra.mxu0 0.0
      %305 = vmatprep.subr.mxu0 0.0
      %306 = vmatpush1.msra.mxu0 0.0
      %307 = vmatprep.subr.mxu0 0.0
      %308 = vmatpush1.msra.mxu0 0.0
      %309 = vmatprep.subr.mxu0 0.0
      %310 = vmatpush1.msra.mxu0 0.0
      %311 = vmatprep.subr.mxu0 0.0
      %312 = vmatpush1.msra.mxu0 0.0
      %313 = vmatprep.subr.mxu0 0.0
      %314 = vmatpush1.msra.mxu0 0.0
      %315 = vmatprep.subr.mxu0 0.0
      %316 = vmatpush1.msra.mxu0 0.0
      %317 = vmatprep.subr.mxu0 0.0
      %318 = vmatpush1.msra.mxu0 0.0
      %319 = vmatprep.subr.mxu0 0.0
      %320 = vmatpush1.msra.mxu0 0.0
      %321 = vmatprep.subr.mxu0 0.0
      %322 = vmatpush1.msra.mxu0 0.0
      %323 = vmatprep.subr.mxu0 0.0
      %324 = vmatpush1.msra.mxu0 0.0
      %325 = vmatprep.subr.mxu0 0.0
      %326 = vmatpush1.msra.mxu0 0.0
      %327 = vmatprep.subr.mxu0 0.0
      %328 = vmatpush1.msra.mxu0 0.0
      %329 = vmatprep.subr.mxu0 0.0
      %330 = vmatpush1.msra.mxu0 0.0
      %331 = vmatprep.subr.mxu0 0.0
      %332 = vmatpush1.msra.mxu0 0.0
      %333 = vmatprep.subr.mxu0 0.0
      %334 = vmatpush1.msra.mxu0 0.0
      %335 = vmatprep.subr.mxu0 0.0
      %336 = vmatpush1.msra.mxu0 0.0
      %337 = vmatprep.subr.mxu0 0.0
      %338 = vmatpush1.msra.mxu0 0.0
      %339 = vmatprep.subr.mxu0 0.0
      %340 = vmatpush1.msra.mxu0 0.0
      %341 = vmatprep.subr.mxu0 0.0
      %342 = vmatpush1.msra.mxu0 0.0
      %343 = vmatprep.subr.mxu0 0.0
      %344 = vmatpush1.msra.mxu0 0.0
      %345 = vmatprep.subr.mxu0 0.0
      %346 = vmatpush1.msra.mxu0 0.0
      %347 = vmatprep.subr.mxu0 0.0
      %348 = vmatpush1.msra.mxu0 0.0
      %349 = vmatprep.subr.mxu0 0.0
      %350 = vmatpush1.msra.mxu0 0.0
      %351 = vmatprep.subr.mxu0 0.0
      %352 = vmatpush1.msra.mxu0 0.0
      %353 = vmatprep.mubr.f32.mxu0 0.0
      %354 = vmatmul.mubr.f32.gmra.mrb[0].mxu0 %v278
      %v355 = vpop.f32.mrb[0].mxu0
      %v356 = vadd.f32 0.0, %v355
      %v357 = vpop.f32.mrb[0].mxu0
      %v358 = vadd.f32 0.0, %v357
      %359 = vmatprep.mubr.f32.mxu0 0.0
      %360 = vmatmul.mubr.f32.gmra.mrb[0].mxu0 %v281
      %v361 = vpop.f32.mrb[0].mxu0
      %v362 = vadd.f32 0.0, %v361
      %v363 = vpop.f32.mrb[0].mxu0
      %v364 = vadd.f32 0.0, %v363
      %365 = vmatprep.mubr.f32.mxu0 0.0
      %366 = vmatmul.mubr.f32.gmra.mrb[0].mxu0 %v284
      %v367 = vpop.f32.mrb[0].mxu0
      %v368 = vadd.f32 0.0, %v367
      %v369 = vpop.f32.mrb[0].mxu0
      %v370 = vadd.f32 0.0, %v369
      %371 = vmatprep.mubr.f32.mxu0 0.0
      %372 = vmatmul.mubr.f32.gmra.mrb[0].mxu0 %v287
      %v373 = vpop.f32.mrb[0].mxu0
      %v374 = vadd.f32 0.0, %v373
      %v375 = vpop.f32.mrb[0].mxu0
      %v376 = vadd.f32 0.0, %v375
      %377 = vdwg.mxu0
      %378 = vmatprep.subr.mxu0 0.0
      %379 = vmatpush1.msra.mxu0 %v236
      %380 = vmatprep.subr.mxu0 0.0
      %381 = vmatpush1.msra.mxu0 %v242
      %382 = vmatprep.subr.mxu0 0.0
      %383 = vmatpush1.msra.mxu0 %v248
      %384 = vmatprep.subr.mxu0 0.0
      %385 = vmatpush1.msra.mxu0 %v254
      %386 = vmatprep.subr.mxu0 0.0
      %387 = vmatpush1.msra.mxu0 0.0
      %388 = vmatprep.subr.mxu0 0.0
      %389 = vmatpush1.msra.mxu0 0.0
      %390 = vmatprep.subr.mxu0 0.0
      %391 = vmatpush1.msra.mxu0 0.0
      %392 = vmatprep.subr.mxu0 0.0
      %393 = vmatpush1.msra.mxu0 0.0
      %394 = vmatprep.subr.mxu0 0.0
      %395 = vmatpush1.msra.mxu0 0.0
      %396 = vmatprep.subr.mxu0 0.0
      %397 = vmatpush1.msra.mxu0 0.0
      %398 = vmatprep.subr.mxu0 0.0
      %399 = vmatpush1.msra.mxu0 0.0
      %400 = vmatprep.subr.mxu0 0.0
      %401 = vmatpush1.msra.mxu0 0.0
      %402 = vmatprep.subr.mxu0 0.0
      %403 = vmatpush1.msra.mxu0 0.0
      %404 = vmatprep.subr.mxu0 0.0
      %405 = vmatpush1.msra.mxu0 0.0
      %406 = vmatprep.subr.mxu0 0.0
      %407 = vmatpush1.msra.mxu0 0.0
      %408 = vmatprep.subr.mxu0 0.0
      %409 = vmatpush1.msra.mxu0 0.0
      %410 = vmatprep.subr.mxu0 0.0
      %411 = vmatpush1.msra.mxu0 0.0
      %412 = vmatprep.subr.mxu0 0.0
      %413 = vmatpush1.msra.mxu0 0.0
      %414 = vmatprep.subr.mxu0 0.0
      %415 = vmatpush1.msra.mxu0 0.0
      %416 = vmatprep.subr.mxu0 0.0
      %417 = vmatpush1.msra.mxu0 0.0
      %418 = vmatprep.subr.mxu0 0.0
      %419 = vmatpush1.msra.mxu0 0.0
      %420 = vmatprep.subr.mxu0 0.0
      %421 = vmatpush1.msra.mxu0 0.0
      %422 = vmatprep.subr.mxu0 0.0
      %423 = vmatpush1.msra.mxu0 0.0
      %424 = vmatprep.subr.mxu0 0.0
      %425 = vmatpush1.msra.mxu0 0.0
      %426 = vmatprep.subr.mxu0 0.0
      %427 = vmatpush1.msra.mxu0 0.0
      %428 = vmatprep.subr.mxu0 0.0
      %429 = vmatpush1.msra.mxu0 0.0
      %430 = vmatprep.subr.mxu0 0.0
      %431 = vmatpush1.msra.mxu0 0.0
      %432 = vmatprep.subr.mxu0 0.0
      %433 = vmatpush1.msra.mxu0 0.0
      %434 = vmatprep.subr.mxu0 0.0
      %435 = vmatpush1.msra.mxu0 0.0
      %436 = vmatprep.subr.mxu0 0.0
      %437 = vmatpush1.msra.mxu0 0.0
      %438 = vmatprep.subr.mxu0 0.0
      %439 = vmatpush1.msra.mxu0 0.0
      %440 = vmatprep.subr.mxu0 0.0
      %441 = vmatpush1.msra.mxu0 0.0
      %442 = vmatprep.mubr.f32.mxu0 0.0
      %443 = vmatmul.mubr.f32.gmra.mrb[0].mxu0 %v278
      %v444 = vpop.f32.mrb[0].mxu0
      %v445 = vadd.f32 0.0, %v444
      %v446 = vpop.f32.mrb[0].mxu0
      %447 = vmatprep.mubr.f32.mxu0 0.0
      %448 = vmatmul.mubr.f32.gmra.mrb[0].mxu0 %v281
      %v449 = vpop.f32.mrb[0].mxu0
      %v450 = vadd.f32 0.0, %v449
      %v451 = vpop.f32.mrb[0].mxu0
      %452 = vmatprep.mubr.f32.mxu0 0.0
      %453 = vmatmul.mubr.f32.gmra.mrb[0].mxu0 %v284
      %v454 = vpop.f32.mrb[0].mxu0
      %v455 = vadd.f32 0.0, %v454
      %v456 = vpop.f32.mrb[0].mxu0
      %457 = vmatprep.mubr.f32.mxu0 0.0
      %458 = vmatmul.mubr.f32.gmra.mrb[0].mxu0 %v287
      %v459 = vpop.f32.mrb[0].mxu0
      %v460 = vadd.f32 0.0, %v459
      %v461 = vpop.f32.mrb[0].mxu0
      %462 = vdwg.mxu0
      %v464 = vsel %vm276, %v198, 0
      %v467 = vsel %vm276, %v199, 0
      %v470 = vsel %vm276, %v200, 0
      %v473 = vsel %vm276, %v201, 0
      %475 = vmatprep.subr.mxu0 %v203
      %476 = vmatpush1.msra.mxu0 %v202
      %477 = vmatprep.subr.mxu0 %v206
      %478 = vmatpush1.msra.mxu0 %v205
      %479 = vmatprep.subr.mxu0 %v209
      %480 = vmatpush1.msra.mxu0 %v208
      %481 = vmatprep.subr.mxu0 %v212
      %482 = vmatpush1.msra.mxu0 %v211
      %483 = vmatprep.subr.mxu0 0.0
      %484 = vmatpush1.msra.mxu0 0.0
      %485 = vmatprep.subr.mxu0 0.0
      %486 = vmatpush1.msra.mxu0 0.0
      %487 = vmatprep.subr.mxu0 0.0
      %488 = vmatpush1.msra.mxu0 0.0
      %489 = vmatprep.subr.mxu0 0.0
      %490 = vmatpush1.msra.mxu0 0.0
      %491 = vmatprep.subr.mxu0 0.0
      %492 = vmatpush1.msra.mxu0 0.0
      %493 = vmatprep.subr.mxu0 0.0
      %494 = vmatpush1.msra.mxu0 0.0
      %495 = vmatprep.subr.mxu0 0.0
      %496 = vmatpush1.msra.mxu0 0.0
      %497 = vmatprep.subr.mxu0 0.0
      %498 = vmatpush1.msra.mxu0 0.0
      %499 = vmatprep.subr.mxu0 0.0
      %500 = vmatpush1.msra.mxu0 0.0
      %501 = vmatprep.subr.mxu0 0.0
      %502 = vmatpush1.msra.mxu0 0.0
      %503 = vmatprep.subr.mxu0 0.0
      %504 = vmatpush1.msra.mxu0 0.0
      %505 = vmatprep.subr.mxu0 0.0
      %506 = vmatpush1.msra.mxu0 0.0
      %507 = vmatprep.subr.mxu0 0.0
      %508 = vmatpush1.msra.mxu0 0.0
      %509 = vmatprep.subr.mxu0 0.0
      %510 = vmatpush1.msra.mxu0 0.0
      %511 = vmatprep.subr.mxu0 0.0
      %512 = vmatpush1.msra.mxu0 0.0
      %513 = vmatprep.subr.mxu0 0.0
      %514 = vmatpush1.msra.mxu0 0.0
      %515 = vmatprep.subr.mxu0 0.0
      %516 = vmatpush1.msra.mxu0 0.0
      %517 = vmatprep.subr.mxu0 0.0
      %518 = vmatpush1.msra.mxu0 0.0
      %519 = vmatprep.subr.mxu0 0.0
      %520 = vmatpush1.msra.mxu0 0.0
      %521 = vmatprep.subr.mxu0 0.0
      %522 = vmatpush1.msra.mxu0 0.0
      %523 = vmatprep.subr.mxu0 0.0
      %524 = vmatpush1.msra.mxu0 0.0
      %525 = vmatprep.subr.mxu0 0.0
      %526 = vmatpush1.msra.mxu0 0.0
      %527 = vmatprep.subr.mxu0 0.0
      %528 = vmatpush1.msra.mxu0 0.0
      %529 = vmatprep.subr.mxu0 0.0
      %530 = vmatpush1.msra.mxu0 0.0
      %531 = vmatprep.subr.mxu0 0.0
      %532 = vmatpush1.msra.mxu0 0.0
      %533 = vmatprep.subr.mxu0 0.0
      %534 = vmatpush1.msra.mxu0 0.0
      %535 = vmatprep.subr.mxu0 0.0
      %536 = vmatpush1.msra.mxu0 0.0
      %537 = vmatprep.subr.mxu0 0.0
      %538 = vmatpush1.msra.mxu0 0.0
      %539 = vmatprep.mubr.f32.mxu0 0.0
      %540 = vmatmul.mubr.f32.gmra.mrb[0].mxu0 %v464
      %v541 = vpop.f32.mrb[0].mxu0
      %v542 = vadd.f32 %v356, %v541
      %v543 = vpop.f32.mrb[0].mxu0
      %v544 = vadd.f32 %v358, %v543
      %545 = vmatprep.mubr.f32.mxu0 0.0
      %546 = vmatmul.mubr.f32.gmra.mrb[0].mxu0 %v467
      %v547 = vpop.f32.mrb[0].mxu0
      %v548 = vadd.f32 %v362, %v547
      %v549 = vpop.f32.mrb[0].mxu0
      %v550 = vadd.f32 %v364, %v549
      %551 = vmatprep.mubr.f32.mxu0 0.0
      %552 = vmatmul.mubr.f32.gmra.mrb[0].mxu0 %v470
      %v553 = vpop.f32.mrb[0].mxu0
      %v554 = vadd.f32 %v368, %v553
      %v555 = vpop.f32.mrb[0].mxu0
      %v556 = vadd.f32 %v370, %v555
      %557 = vmatprep.mubr.f32.mxu0 0.0
      %558 = vmatmul.mubr.f32.gmra.mrb[0].mxu0 %v473
      %v559 = vpop.f32.mrb[0].mxu0
      %v560 = vadd.f32 %v374, %v559
      %v561 = vpop.f32.mrb[0].mxu0
      %v562 = vadd.f32 %v376, %v561
      %563 = vdwg.mxu0
      %564 = vmatprep.subr.mxu0 0.0
      %565 = vmatpush1.msra.mxu0 %v204
      %566 = vmatprep.subr.mxu0 0.0
      %567 = vmatpush1.msra.mxu0 %v207
      %568 = vmatprep.subr.mxu0 0.0
      %569 = vmatpush1.msra.mxu0 %v210
      %570 = vmatprep.subr.mxu0 0.0
      %571 = vmatpush1.msra.mxu0 %v213
      %572 = vmatprep.subr.mxu0 0.0
      %573 = vmatpush1.msra.mxu0 0.0
      %574 = vmatprep.subr.mxu0 0.0
      %575 = vmatpush1.msra.mxu0 0.0
      %576 = vmatprep.subr.mxu0 0.0
      %577 = vmatpush1.msra.mxu0 0.0
      %578 = vmatprep.subr.mxu0 0.0
      %579 = vmatpush1.msra.mxu0 0.0
      %580 = vmatprep.subr.mxu0 0.0
      %581 = vmatpush1.msra.mxu0 0.0
      %582 = vmatprep.subr.mxu0 0.0
      %583 = vmatpush1.msra.mxu0 0.0
      %584 = vmatprep.subr.mxu0 0.0
      %585 = vmatpush1.msra.mxu0 0.0
      %586 = vmatprep.subr.mxu0 0.0
      %587 = vmatpush1.msra.mxu0 0.0
      %588 = vmatprep.subr.mxu0 0.0
      %589 = vmatpush1.msra.mxu0 0.0
      %590 = vmatprep.subr.mxu0 0.0
      %591 = vmatpush1.msra.mxu0 0.0
      %592 = vmatprep.subr.mxu0 0.0
      %593 = vmatpush1.msra.mxu0 0.0
      %594 = vmatprep.subr.mxu0 0.0
      %595 = vmatpush1.msra.mxu0 0.0
      %596 = vmatprep.subr.mxu0 0.0
      %597 = vmatpush1.msra.mxu0 0.0
      %598 = vmatprep.subr.mxu0 0.0
      %599 = vmatpush1.msra.mxu0 0.0
      %600 = vmatprep.subr.mxu0 0.0
      %601 = vmatpush1.msra.mxu0 0.0
      %602 = vmatprep.subr.mxu0 0.0
      %603 = vmatpush1.msra.mxu0 0.0
      %604 = vmatprep.subr.mxu0 0.0
      %605 = vmatpush1.msra.mxu0 0.0
      %606 = vmatprep.subr.mxu0 0.0
      %607 = vmatpush1.msra.mxu0 0.0
      %608 = vmatprep.subr.mxu0 0.0
      %609 = vmatpush1.msra.mxu0 0.0
      %610 = vmatprep.subr.mxu0 0.0
      %611 = vmatpush1.msra.mxu0 0.0
      %612 = vmatprep.subr.mxu0 0.0
      %613 = vmatpush1.msra.mxu0 0.0
      %614 = vmatprep.subr.mxu0 0.0
      %615 = vmatpush1.msra.mxu0 0.0
      %616 = vmatprep.subr.mxu0 0.0
      %617 = vmatpush1.msra.mxu0 0.0
      %618 = vmatprep.subr.mxu0 0.0
      %619 = vmatpush1.msra.mxu0 0.0
      %620 = vmatprep.subr.mxu0 0.0
      %621 = vmatpush1.msra.mxu0 0.0
      %622 = vmatprep.subr.mxu0 0.0
      %623 = vmatpush1.msra.mxu0 0.0
      %624 = vmatprep.subr.mxu0 0.0
      %625 = vmatpush1.msra.mxu0 0.0
      %626 = vmatprep.subr.mxu0 0.0
      %627 = vmatpush1.msra.mxu0 0.0
      %628 = vmatprep.mubr.f32.mxu0 0.0
      %629 = vmatmul.mubr.f32.gmra.mrb[0].mxu0 %v464
      %v630 = vpop.f32.mrb[0].mxu0
      %v631 = vadd.f32 %v445, %v630
      %v632 = vpop.f32.mrb[0].mxu0
      %633 = vmatprep.mubr.f32.mxu0 0.0
      %634 = vmatmul.mubr.f32.gmra.mrb[0].mxu0 %v467
      %v635 = vpop.f32.mrb[0].mxu0
      %v636 = vadd.f32 %v450, %v635
      %v637 = vpop.f32.mrb[0].mxu0
      %638 = vmatprep.mubr.f32.mxu0 0.0
      %639 = vmatmul.mubr.f32.gmra.mrb[0].mxu0 %v470
      %v640 = vpop.f32.mrb[0].mxu0
      %v641 = vadd.f32 %v455, %v640
      %v642 = vpop.f32.mrb[0].mxu0
      %643 = vmatprep.mubr.f32.mxu0 0.0
      %644 = vmatmul.mubr.f32.gmra.mrb[0].mxu0 %v473
      %v645 = vpop.f32.mrb[0].mxu0
      %v646 = vadd.f32 %v460, %v645
      %v647 = vpop.f32.mrb[0].mxu0
      %648 = vdwg.mxu0
      %s649 = scalar_lea.vmem %s1, 64
      %v650 = vld [vmem:[%s649] sm:$0xff]
      %v651 = vld [vmem:[%s649 + $0x8] sm:$0xff]
      %v652 = vld [vmem:[%s649 + $0x10] sm:$0xff]
      %v653 = vld [vmem:[%s649 + $0x18] sm:$0xff]
      %654 = vrot.lane.b32.xlu0 %v202, 126
      %v655 = vpop.permute.xlu0 %654
      %656 = vrot.lane.b32.xlu0 %v203, 126
      %v657 = vpop.permute.xlu0 %656
      %658 = vrot.lane.b32.xlu0 %v204, 126
      %v659 = vpop.permute.xlu0 %658
      %660 = vrot.lane.b32.xlu0 %v205, 126
      %v661 = vpop.permute.xlu0 %660
      %662 = vrot.lane.b32.xlu0 %v206, 126
      %v663 = vpop.permute.xlu0 %662
      %664 = vrot.lane.b32.xlu0 %v207, 126
      %v665 = vpop.permute.xlu0 %664
      %666 = vrot.lane.b32.xlu0 %v208, 126
      %v667 = vpop.permute.xlu0 %666
      %668 = vrot.lane.b32.xlu0 %v209, 126
      %v669 = vpop.permute.xlu0 %668
      %670 = vrot.lane.b32.xlu0 %v210, 126
      %v671 = vpop.permute.xlu0 %670
      %672 = vrot.lane.b32.xlu0 %v211, 126
      %v673 = vpop.permute.xlu0 %672
      %674 = vrot.lane.b32.xlu0 %v212, 126
      %v675 = vpop.permute.xlu0 %674
      %676 = vrot.lane.b32.xlu0 %v213, 126
      %v677 = vpop.permute.xlu0 %676
      %vm678 = vcmask 1031168
      %v679 = vsel %vm678, %v655, %v657
      %v680 = vsel %vm678, %v657, %v659
      %v681 = vsel %vm678, %v661, %v663
      %v682 = vsel %vm678, %v663, %v665
      %v683 = vsel %vm678, %v667, %v669
      %v684 = vsel %vm678, %v669, %v671
      %v685 = vsel %vm678, %v673, %v675
      %v686 = vsel %vm678, %v675, %v677
      %v700 = vsel %vm276, %v650, 0
      %v703 = vsel %vm276, %v651, 0
      %v706 = vsel %vm276, %v652, 0
      %v709 = vsel %vm276, %v653, 0
      %711 = vmatprep.subr.mxu0 %v680
      %712 = vmatpush1.msra.mxu0 %v679
      %713 = vmatprep.subr.mxu0 %v682
      %714 = vmatpush1.msra.mxu0 %v681
      %715 = vmatprep.subr.mxu0 %v684
      %716 = vmatpush1.msra.mxu0 %v683
      %717 = vmatprep.subr.mxu0 %v686
      %718 = vmatpush1.msra.mxu0 %v685
      %719 = vmatprep.subr.mxu0 0.0
      %720 = vmatpush1.msra.mxu0 0.0
      %721 = vmatprep.subr.mxu0 0.0
      %722 = vmatpush1.msra.mxu0 0.0
      %723 = vmatprep.subr.mxu0 0.0
      %724 = vmatpush1.msra.mxu0 0.0
      %725 = vmatprep.subr.mxu0 0.0
      %726 = vmatpush1.msra.mxu0 0.0
      %727 = vmatprep.subr.mxu0 0.0
      %728 = vmatpush1.msra.mxu0 0.0
      %729 = vmatprep.subr.mxu0 0.0
      %730 = vmatpush1.msra.mxu0 0.0
      %731 = vmatprep.subr.mxu0 0.0
      %732 = vmatpush1.msra.mxu0 0.0
      %733 = vmatprep.subr.mxu0 0.0
      %734 = vmatpush1.msra.mxu0 0.0
      %735 = vmatprep.subr.mxu0 0.0
      %736 = vmatpush1.msra.mxu0 0.0
      %737 = vmatprep.subr.mxu0 0.0
      %738 = vmatpush1.msra.mxu0 0.0
      %739 = vmatprep.subr.mxu0 0.0
      %740 = vmatpush1.msra.mxu0 0.0
      %741 = vmatprep.subr.mxu0 0.0
      %742 = vmatpush1.msra.mxu0 0.0
      %743 = vmatprep.subr.mxu0 0.0
      %744 = vmatpush1.msra.mxu0 0.0
      %745 = vmatprep.subr.mxu0 0.0
      %746 = vmatpush1.msra.mxu0 0.0
      %747 = vmatprep.subr.mxu0 0.0
      %748 = vmatpush1.msra.mxu0 0.0
      %749 = vmatprep.subr.mxu0 0.0
      %750 = vmatpush1.msra.mxu0 0.0
      %751 = vmatprep.subr.mxu0 0.0
      %752 = vmatpush1.msra.mxu0 0.0
      %753 = vmatprep.subr.mxu0 0.0
      %754 = vmatpush1.msra.mxu0 0.0
      %755 = vmatprep.subr.mxu0 0.0
      %756 = vmatpush1.msra.mxu0 0.0
      %757 = vmatprep.subr.mxu0 0.0
      %758 = vmatpush1.msra.mxu0 0.0
      %759 = vmatprep.subr.mxu0 0.0
      %760 = vmatpush1.msra.mxu0 0.0
      %761 = vmatprep.subr.mxu0 0.0
      %762 = vmatpush1.msra.mxu0 0.0
      %763 = vmatprep.subr.mxu0 0.0
      %764 = vmatpush1.msra.mxu0 0.0
      %765 = vmatprep.subr.mxu0 0.0
      %766 = vmatpush1.msra.mxu0 0.0
      %767 = vmatprep.subr.mxu0 0.0
      %768 = vmatpush1.msra.mxu0 0.0
      %769 = vmatprep.subr.mxu0 0.0
      %770 = vmatpush1.msra.mxu0 0.0
      %771 = vmatprep.subr.mxu0 0.0
      %772 = vmatpush1.msra.mxu0 0.0
      %773 = vmatprep.subr.mxu0 0.0
      %774 = vmatpush1.msra.mxu0 0.0
      %775 = vmatprep.mubr.f32.mxu0 0.0
      %776 = vmatmul.mubr.f32.gmra.mrb[0].mxu0 %v700
      %v777 = vpop.f32.mrb[0].mxu0
      %v778 = vadd.f32 0.0, %v777
      %v779 = vpop.f32.mrb[0].mxu0
      %v780 = vadd.f32 0.0, %v779
      %781 = vmatprep.mubr.f32.mxu0 0.0
      %782 = vmatmul.mubr.f32.gmra.mrb[0].mxu0 %v703
      %v783 = vpop.f32.mrb[0].mxu0
      %v784 = vadd.f32 0.0, %v783
      %v785 = vpop.f32.mrb[0].mxu0
      %v786 = vadd.f32 0.0, %v785
      %787 = vmatprep.mubr.f32.mxu0 0.0
      %788 = vmatmul.mubr.f32.gmra.mrb[0].mxu0 %v706
      %v789 = vpop.f32.mrb[0].mxu0
      %v790 = vadd.f32 0.0, %v789
      %v791 = vpop.f32.mrb[0].mxu0
      %v792 = vadd.f32 0.0, %v791
      %793 = vmatprep.mubr.f32.mxu0 0.0
      %794 = vmatmul.mubr.f32.gmra.mrb[0].mxu0 %v709
      %v795 = vpop.f32.mrb[0].mxu0
      %v796 = vadd.f32 0.0, %v795
      %v797 = vpop.f32.mrb[0].mxu0
      %v798 = vadd.f32 0.0, %v797
      %799 = vdwg.mxu0
      %800 = vmatprep.subr.mxu0 0.0
      %801 = vmatpush1.msra.mxu0 %v659
      %802 = vmatprep.subr.mxu0 0.0
      %803 = vmatpush1.msra.mxu0 %v665
      %804 = vmatprep.subr.mxu0 0.0
      %805 = vmatpush1.msra.mxu0 %v671
      %806 = vmatprep.subr.mxu0 0.0
      %807 = vmatpush1.msra.mxu0 %v677
      %808 = vmatprep.subr.mxu0 0.0
      %809 = vmatpush1.msra.mxu0 0.0
      %810 = vmatprep.subr.mxu0 0.0
      %811 = vmatpush1.msra.mxu0 0.0
      %812 = vmatprep.subr.mxu0 0.0
      %813 = vmatpush1.msra.mxu0 0.0
      %814 = vmatprep.subr.mxu0 0.0
      %815 = vmatpush1.msra.mxu0 0.0
      %816 = vmatprep.subr.mxu0 0.0
      %817 = vmatpush1.msra.mxu0 0.0
      %818 = vmatprep.subr.mxu0 0.0
      %819 = vmatpush1.msra.mxu0 0.0
      %820 = vmatprep.subr.mxu0 0.0
      %821 = vmatpush1.msra.mxu0 0.0
      %822 = vmatprep.subr.mxu0 0.0
      %823 = vmatpush1.msra.mxu0 0.0
      %824 = vmatprep.subr.mxu0 0.0
      %825 = vmatpush1.msra.mxu0 0.0
      %826 = vmatprep.subr.mxu0 0.0
      %827 = vmatpush1.msra.mxu0 0.0
      %828 = vmatprep.subr.mxu0 0.0
      %829 = vmatpush1.msra.mxu0 0.0
      %830 = vmatprep.subr.mxu0 0.0
      %831 = vmatpush1.msra.mxu0 0.0
      %832 = vmatprep.subr.mxu0 0.0
      %833 = vmatpush1.msra.mxu0 0.0
      %834 = vmatprep.subr.mxu0 0.0
      %835 = vmatpush1.msra.mxu0 0.0
      %836 = vmatprep.subr.mxu0 0.0
      %837 = vmatpush1.msra.mxu0 0.0
      %838 = vmatprep.subr.mxu0 0.0
      %839 = vmatpush1.msra.mxu0 0.0
      %840 = vmatprep.subr.mxu0 0.0
      %841 = vmatpush1.msra.mxu0 0.0
      %842 = vmatprep.subr.mxu0 0.0
      %843 = vmatpush1.msra.mxu0 0.0
      %844 = vmatprep.subr.mxu0 0.0
      %845 = vmatpush1.msra.mxu0 0.0
      %846 = vmatprep.subr.mxu0 0.0
      %847 = vmatpush1.msra.mxu0 0.0
      %848 = vmatprep.subr.mxu0 0.0
      %849 = vmatpush1.msra.mxu0 0.0
      %850 = vmatprep.subr.mxu0 0.0
      %851 = vmatpush1.msra.mxu0 0.0
      %852 = vmatprep.subr.mxu0 0.0
      %853 = vmatpush1.msra.mxu0 0.0
      %854 = vmatprep.subr.mxu0 0.0
      %855 = vmatpush1.msra.mxu0 0.0
      %856 = vmatprep.subr.mxu0 0.0
      %857 = vmatpush1.msra.mxu0 0.0
      %858 = vmatprep.subr.mxu0 0.0
      %859 = vmatpush1.msra.mxu0 0.0
      %860 = vmatprep.subr.mxu0 0.0
      %861 = vmatpush1.msra.mxu0 0.0
      %862 = vmatprep.subr.mxu0 0.0
      %863 = vmatpush1.msra.mxu0 0.0
      %864 = vmatprep.mubr.f32.mxu0 0.0
      %865 = vmatmul.mubr.f32.gmra.mrb[0].mxu0 %v700
      %v866 = vpop.f32.mrb[0].mxu0
      %v867 = vadd.f32 0.0, %v866
      %v868 = vpop.f32.mrb[0].mxu0
      %869 = vmatprep.mubr.f32.mxu0 0.0
      %870 = vmatmul.mubr.f32.gmra.mrb[0].mxu0 %v703
      %v871 = vpop.f32.mrb[0].mxu0
      %v872 = vadd.f32 0.0, %v871
      %v873 = vpop.f32.mrb[0].mxu0
      %874 = vmatprep.mubr.f32.mxu0 0.0
      %875 = vmatmul.mubr.f32.gmra.mrb[0].mxu0 %v706
      %v876 = vpop.f32.mrb[0].mxu0
      %v877 = vadd.f32 0.0, %v876
      %v878 = vpop.f32.mrb[0].mxu0
      %879 = vmatprep.mubr.f32.mxu0 0.0
      %880 = vmatmul.mubr.f32.gmra.mrb[0].mxu0 %v709
      %v881 = vpop.f32.mrb[0].mxu0
      %v882 = vadd.f32 0.0, %v881
      %v883 = vpop.f32.mrb[0].mxu0
      %884 = vdwg.mxu0
      %v885 = vadd.f32 %v542, %v778
      %v886 = vadd.f32 %v544, %v780
      %v887 = vadd.f32 %v631, %v867
      %v888 = vadd.f32 %v548, %v784
      %v889 = vadd.f32 %v550, %v786
      %v890 = vadd.f32 %v636, %v872
      %v891 = vadd.f32 %v554, %v790
      %v892 = vadd.f32 %v556, %v792
      %v893 = vadd.f32 %v641, %v877
      %v894 = vadd.f32 %v560, %v796
      %v895 = vadd.f32 %v562, %v798
      %v896 = vadd.f32 %v646, %v882
      %s897 = scalar_lea.vmem %s1, 96
      %v898 = vld [vmem:[%s897] sm:$0xff]
      %v899 = vld [vmem:[%s897 + $0x8] sm:$0xff]
      %v900 = vld [vmem:[%s897 + $0x10] sm:$0xff]
      %v901 = vld [vmem:[%s897 + $0x18] sm:$0xff]
      %902 = vrot.lane.b32.xlu0 %v202, 110
      %v903 = vpop.permute.xlu0 %902
      %904 = vrot.lane.b32.xlu0 %v203, 110
      %v905 = vpop.permute.xlu0 %904
      %906 = vrot.lane.b32.xlu0 %v204, 110
      %v907 = vpop.permute.xlu0 %906
      %908 = vrot.lane.b32.xlu0 %v205, 110
      %v909 = vpop.permute.xlu0 %908
      %910 = vrot.lane.b32.xlu0 %v206, 110
      %v911 = vpop.permute.xlu0 %910
      %912 = vrot.lane.b32.xlu0 %v207, 110
      %v913 = vpop.permute.xlu0 %912
      %914 = vrot.lane.b32.xlu0 %v208, 110
      %v915 = vpop.permute.xlu0 %914
      %916 = vrot.lane.b32.xlu0 %v209, 110
      %v917 = vpop.permute.xlu0 %916
      %918 = vrot.lane.b32.xlu0 %v210, 110
      %v919 = vpop.permute.xlu0 %918
      %920 = vrot.lane.b32.xlu0 %v211, 110
      %v921 = vpop.permute.xlu0 %920
      %922 = vrot.lane.b32.xlu0 %v212, 110
      %v923 = vpop.permute.xlu0 %922
      %924 = vrot.lane.b32.xlu0 %v213, 110
      %v925 = vpop.permute.xlu0 %924
      %vm926 = vcmask 900096
      %v927 = vsel %vm926, %v903, %v905
      %v928 = vsel %vm926, %v905, %v907
      %v929 = vsel %vm926, %v909, %v911
      %v930 = vsel %vm926, %v911, %v913
      %v931 = vsel %vm926, %v915, %v917
      %v932 = vsel %vm926, %v917, %v919
      %v933 = vsel %vm926, %v921, %v923
      %v934 = vsel %vm926, %v923, %v925
      %v948 = vsel %vm276, %v898, 0
      %v951 = vsel %vm276, %v899, 0
      %v954 = vsel %vm276, %v900, 0
      %v957 = vsel %vm276, %v901, 0
      %959 = vmatprep.subr.mxu0 %v928
      %960 = vmatpush1.msra.mxu0 %v927
      %961 = vmatprep.subr.mxu0 %v930
      %962 = vmatpush1.msra.mxu0 %v929
      %963 = vmatprep.subr.mxu0 %v932
      %964 = vmatpush1.msra.mxu0 %v931
      %965 = vmatprep.subr.mxu0 %v934
      %966 = vmatpush1.msra.mxu0 %v933
      %967 = vmatprep.subr.mxu0 0.0
      %968 = vmatpush1.msra.mxu0 0.0
      %969 = vmatprep.subr.mxu0 0.0
      %970 = vmatpush1.msra.mxu0 0.0
      %971 = vmatprep.subr.mxu0 0.0
      %972 = vmatpush1.msra.mxu0 0.0
      %973 = vmatprep.subr.mxu0 0.0
      %974 = vmatpush1.msra.mxu0 0.0
      %975 = vmatprep.subr.mxu0 0.0
      %976 = vmatpush1.msra.mxu0 0.0
      %977 = vmatprep.subr.mxu0 0.0
      %978 = vmatpush1.msra.mxu0 0.0
      %979 = vmatprep.subr.mxu0 0.0
      %980 = vmatpush1.msra.mxu0 0.0
      %981 = vmatprep.subr.mxu0 0.0
      %982 = vmatpush1.msra.mxu0 0.0
      %983 = vmatprep.subr.mxu0 0.0
      %984 = vmatpush1.msra.mxu0 0.0
      %985 = vmatprep.subr.mxu0 0.0
      %986 = vmatpush1.msra.mxu0 0.0
      %987 = vmatprep.subr.mxu0 0.0
      %988 = vmatpush1.msra.mxu0 0.0
      %989 = vmatprep.subr.mxu0 0.0
      %990 = vmatpush1.msra.mxu0 0.0
      %991 = vmatprep.subr.mxu0 0.0
      %992 = vmatpush1.msra.mxu0 0.0
      %993 = vmatprep.subr.mxu0 0.0
      %994 = vmatpush1.msra.mxu0 0.0
      %995 = vmatprep.subr.mxu0 0.0
      %996 = vmatpush1.msra.mxu0 0.0
      %997 = vmatprep.subr.mxu0 0.0
      %998 = vmatpush1.msra.mxu0 0.0
      %999 = vmatprep.subr.mxu0 0.0
      %1000 = vmatpush1.msra.mxu0 0.0
      %1001 = vmatprep.subr.mxu0 0.0
      %1002 = vmatpush1.msra.mxu0 0.0
      %1003 = vmatprep.subr.mxu0 0.0
      %1004 = vmatpush1.msra.mxu0 0.0
      %1005 = vmatprep.subr.mxu0 0.0
      %1006 = vmatpush1.msra.mxu0 0.0
      %1007 = vmatprep.subr.mxu0 0.0
      %1008 = vmatpush1.msra.mxu0 0.0
      %1009 = vmatprep.subr.mxu0 0.0
      %1010 = vmatpush1.msra.mxu0 0.0
      %1011 = vmatprep.subr.mxu0 0.0
      %1012 = vmatpush1.msra.mxu0 0.0
      %1013 = vmatprep.subr.mxu0 0.0
      %1014 = vmatpush1.msra.mxu0 0.0
      %1015 = vmatprep.subr.mxu0 0.0
      %1016 = vmatpush1.msra.mxu0 0.0
      %1017 = vmatprep.subr.mxu0 0.0
      %1018 = vmatpush1.msra.mxu0 0.0
      %1019 = vmatprep.subr.mxu0 0.0
      %1020 = vmatpush1.msra.mxu0 0.0
      %1021 = vmatprep.subr.mxu0 0.0
      %1022 = vmatpush1.msra.mxu0 0.0
      %1023 = vmatprep.mubr.f32.mxu0 0.0
      %1024 = vmatmul.mubr.f32.gmra.mrb[0].mxu0 %v948
      %v1025 = vpop.f32.mrb[0].mxu0
      %v1026 = vadd.f32 0.0, %v1025
      %v1027 = vpop.f32.mrb[0].mxu0
      %v1028 = vadd.f32 0.0, %v1027
      %1029 = vmatprep.mubr.f32.mxu0 0.0
      %1030 = vmatmul.mubr.f32.gmra.mrb[0].mxu0 %v951
      %v1031 = vpop.f32.mrb[0].mxu0
      %v1032 = vadd.f32 0.0, %v1031
      %v1033 = vpop.f32.mrb[0].mxu0
      %v1034 = vadd.f32 0.0, %v1033
      %1035 = vmatprep.mubr.f32.mxu0 0.0
      %1036 = vmatmul.mubr.f32.gmra.mrb[0].mxu0 %v954
      %v1037 = vpop.f32.mrb[0].mxu0
      %v1038 = vadd.f32 0.0, %v1037
      %v1039 = vpop.f32.mrb[0].mxu0
      %v1040 = vadd.f32 0.0, %v1039
      %1041 = vmatprep.mubr.f32.mxu0 0.0
      %1042 = vmatmul.mubr.f32.gmra.mrb[0].mxu0 %v957
      %v1043 = vpop.f32.mrb[0].mxu0
      %v1044 = vadd.f32 0.0, %v1043
      %v1045 = vpop.f32.mrb[0].mxu0
      %v1046 = vadd.f32 0.0, %v1045
      %1047 = vdwg.mxu0
      %1048 = vmatprep.subr.mxu0 0.0
      %1049 = vmatpush1.msra.mxu0 %v907
      %1050 = vmatprep.subr.mxu0 0.0
      %1051 = vmatpush1.msra.mxu0 %v913
      %1052 = vmatprep.subr.mxu0 0.0
      %1053 = vmatpush1.msra.mxu0 %v919
      %1054 = vmatprep.subr.mxu0 0.0
      %1055 = vmatpush1.msra.mxu0 %v925
      %1056 = vmatprep.subr.mxu0 0.0
      %1057 = vmatpush1.msra.mxu0 0.0
      %1058 = vmatprep.subr.mxu0 0.0
      %1059 = vmatpush1.msra.mxu0 0.0
      %1060 = vmatprep.subr.mxu0 0.0
      %1061 = vmatpush1.msra.mxu0 0.0
      %1062 = vmatprep.subr.mxu0 0.0
      %1063 = vmatpush1.msra.mxu0 0.0
      %1064 = vmatprep.subr.mxu0 0.0
      %1065 = vmatpush1.msra.mxu0 0.0
      %1066 = vmatprep.subr.mxu0 0.0
      %1067 = vmatpush1.msra.mxu0 0.0
      %1068 = vmatprep.subr.mxu0 0.0
      %1069 = vmatpush1.msra.mxu0 0.0
      %1070 = vmatprep.subr.mxu0 0.0
      %1071 = vmatpush1.msra.mxu0 0.0
      %1072 = vmatprep.subr.mxu0 0.0
      %1073 = vmatpush1.msra.mxu0 0.0
      %1074 = vmatprep.subr.mxu0 0.0
      %1075 = vmatpush1.msra.mxu0 0.0
      %1076 = vmatprep.subr.mxu0 0.0
      %1077 = vmatpush1.msra.mxu0 0.0
      %1078 = vmatprep.subr.mxu0 0.0
      %1079 = vmatpush1.msra.mxu0 0.0
      %1080 = vmatprep.subr.mxu0 0.0
      %1081 = vmatpush1.msra.mxu0 0.0
      %1082 = vmatprep.subr.mxu0 0.0
      %1083 = vmatpush1.msra.mxu0 0.0
      %1084 = vmatprep.subr.mxu0 0.0
      %1085 = vmatpush1.msra.mxu0 0.0
      %1086 = vmatprep.subr.mxu0 0.0
      %1087 = vmatpush1.msra.mxu0 0.0
      %1088 = vmatprep.subr.mxu0 0.0
      %1089 = vmatpush1.msra.mxu0 0.0
      %1090 = vmatprep.subr.mxu0 0.0
      %1091 = vmatpush1.msra.mxu0 0.0
      %1092 = vmatprep.subr.mxu0 0.0
      %1093 = vmatpush1.msra.mxu0 0.0
      %1094 = vmatprep.subr.mxu0 0.0
      %1095 = vmatpush1.msra.mxu0 0.0
      %1096 = vmatprep.subr.mxu0 0.0
      %1097 = vmatpush1.msra.mxu0 0.0
      %1098 = vmatprep.subr.mxu0 0.0
      %1099 = vmatpush1.msra.mxu0 0.0
      %1100 = vmatprep.subr.mxu0 0.0
      %1101 = vmatpush1.msra.mxu0 0.0
      %1102 = vmatprep.subr.mxu0 0.0
      %1103 = vmatpush1.msra.mxu0 0.0
      %1104 = vmatprep.subr.mxu0 0.0
      %1105 = vmatpush1.msra.mxu0 0.0
      %1106 = vmatprep.subr.mxu0 0.0
      %1107 = vmatpush1.msra.mxu0 0.0
      %1108 = vmatprep.subr.mxu0 0.0
      %1109 = vmatpush1.msra.mxu0 0.0
      %1110 = vmatprep.subr.mxu0 0.0
      %1111 = vmatpush1.msra.mxu0 0.0
      %1112 = vmatprep.mubr.f32.mxu0 0.0
      %1113 = vmatmul.mubr.f32.gmra.mrb[0].mxu0 %v948
      %v1114 = vpop.f32.mrb[0].mxu0
      %v1115 = vadd.f32 0.0, %v1114
      %v1116 = vpop.f32.mrb[0].mxu0
      %1117 = vmatprep.mubr.f32.mxu0 0.0
      %1118 = vmatmul.mubr.f32.gmra.mrb[0].mxu0 %v951
      %v1119 = vpop.f32.mrb[0].mxu0
      %v1120 = vadd.f32 0.0, %v1119
      %v1121 = vpop.f32.mrb[0].mxu0
      %1122 = vmatprep.mubr.f32.mxu0 0.0
      %1123 = vmatmul.mubr.f32.gmra.mrb[0].mxu0 %v954
      %v1124 = vpop.f32.mrb[0].mxu0
      %v1125 = vadd.f32 0.0, %v1124
      %v1126 = vpop.f32.mrb[0].mxu0
      %1127 = vmatprep.mubr.f32.mxu0 0.0
      %1128 = vmatmul.mubr.f32.gmra.mrb[0].mxu0 %v957
      %v1129 = vpop.f32.mrb[0].mxu0
      %v1130 = vadd.f32 0.0, %v1129
      %v1131 = vpop.f32.mrb[0].mxu0
      %1132 = vdwg.mxu0
      %v1133 = vadd.f32 %v885, %v1026
      %v1134 = vadd.f32 %v886, %v1028
      %v1135 = vadd.f32 %v887, %v1115
      %v1136 = vadd.f32 %v888, %v1032
      %v1137 = vadd.f32 %v889, %v1034
      %v1138 = vadd.f32 %v890, %v1120
      %v1139 = vadd.f32 %v891, %v1038
      %v1140 = vadd.f32 %v892, %v1040
      %v1141 = vadd.f32 %v893, %v1125
      %v1142 = vadd.f32 %v894, %v1044
      %v1143 = vadd.f32 %v895, %v1046
      %v1144 = vadd.f32 %v896, %v1130
      %s1145 = scalar_lea.vmem %s1, 128
      %v1146 = vld [vmem:[%s1145] sm:$0xff]
      %v1147 = vld [vmem:[%s1145 + $0x8] sm:$0xff]
      %v1148 = vld [vmem:[%s1145 + $0x10] sm:$0xff]
      %v1149 = vld [vmem:[%s1145 + $0x18] sm:$0xff]
      %1150 = vrot.lane.b32.xlu0 %v202, 109
      %v1151 = vpop.permute.xlu0 %1150
      %1152 = vrot.lane.b32.xlu0 %v203, 109
      %v1153 = vpop.permute.xlu0 %1152
      %1154 = vrot.lane.b32.xlu0 %v204, 109
      %v1155 = vpop.permute.xlu0 %1154
      %1156 = vrot.lane.b32.xlu0 %v205, 109
      %v1157 = vpop.permute.xlu0 %1156
      %1158 = vrot.lane.b32.xlu0 %v206, 109
      %v1159 = vpop.permute.xlu0 %1158
      %1160 = vrot.lane.b32.xlu0 %v207, 109
      %v1161 = vpop.permute.xlu0 %1160
      %1162 = vrot.lane.b32.xlu0 %v208, 109
      %v1163 = vpop.permute.xlu0 %1162
      %1164 = vrot.lane.b32.xlu0 %v209, 109
      %v1165 = vpop.permute.xlu0 %1164
      %1166 = vrot.lane.b32.xlu0 %v210, 109
      %v1167 = vpop.permute.xlu0 %1166
      %1168 = vrot.lane.b32.xlu0 %v211, 109
      %v1169 = vpop.permute.xlu0 %1168
      %1170 = vrot.lane.b32.xlu0 %v212, 109
      %v1171 = vpop.permute.xlu0 %1170
      %1172 = vrot.lane.b32.xlu0 %v213, 109
      %v1173 = vpop.permute.xlu0 %1172
      %vm1174 = vcmask 891904
      %v1175 = vsel %vm1174, %v1151, %v1153
      %v1176 = vsel %vm1174, %v1153, %v1155
      %v1177 = vsel %vm1174, %v1157, %v1159
      %v1178 = vsel %vm1174, %v1159, %v1161
      %v1179 = vsel %vm1174, %v1163, %v1165
      %v1180 = vsel %vm1174, %v1165, %v1167
      %v1181 = vsel %vm1174, %v1169, %v1171
      %v1182 = vsel %vm1174, %v1171, %v1173
      %v1196 = vsel %vm276, %v1146, 0
      %v1199 = vsel %vm276, %v1147, 0
      %v1202 = vsel %vm276, %v1148, 0
      %v1205 = vsel %vm276, %v1149, 0
      %1207 = vmatprep.subr.mxu0 %v1176
      %1208 = vmatpush1.msra.mxu0 %v1175
      %1209 = vmatprep.subr.mxu0 %v1178
      %1210 = vmatpush1.msra.mxu0 %v1177
      %1211 = vmatprep.subr.mxu0 %v1180
      %1212 = vmatpush1.msra.mxu0 %v1179
      %1213 = vmatprep.subr.mxu0 %v1182
      %1214 = vmatpush1.msra.mxu0 %v1181
      %1215 = vmatprep.subr.mxu0 0.0
      %1216 = vmatpush1.msra.mxu0 0.0
      %1217 = vmatprep.subr.mxu0 0.0
      %1218 = vmatpush1.msra.mxu0 0.0
      %1219 = vmatprep.subr.mxu0 0.0
      %1220 = vmatpush1.msra.mxu0 0.0
      %1221 = vmatprep.subr.mxu0 0.0
      %1222 = vmatpush1.msra.mxu0 0.0
      %1223 = vmatprep.subr.mxu0 0.0
      %1224 = vmatpush1.msra.mxu0 0.0
      %1225 = vmatprep.subr.mxu0 0.0
      %1226 = vmatpush1.msra.mxu0 0.0
      %1227 = vmatprep.subr.mxu0 0.0
      %1228 = vmatpush1.msra.mxu0 0.0
      %1229 = vmatprep.subr.mxu0 0.0
      %1230 = vmatpush1.msra.mxu0 0.0
      %1231 = vmatprep.subr.mxu0 0.0
      %1232 = vmatpush1.msra.mxu0 0.0
      %1233 = vmatprep.subr.mxu0 0.0
      %1234 = vmatpush1.msra.mxu0 0.0
      %1235 = vmatprep.subr.mxu0 0.0
      %1236 = vmatpush1.msra.mxu0 0.0
      %1237 = vmatprep.subr.mxu0 0.0
      %1238 = vmatpush1.msra.mxu0 0.0
      %1239 = vmatprep.subr.mxu0 0.0
      %1240 = vmatpush1.msra.mxu0 0.0
      %1241 = vmatprep.subr.mxu0 0.0
      %1242 = vmatpush1.msra.mxu0 0.0
      %1243 = vmatprep.subr.mxu0 0.0
      %1244 = vmatpush1.msra.mxu0 0.0
      %1245 = vmatprep.subr.mxu0 0.0
      %1246 = vmatpush1.msra.mxu0 0.0
      %1247 = vmatprep.subr.mxu0 0.0
      %1248 = vmatpush1.msra.mxu0 0.0
      %1249 = vmatprep.subr.mxu0 0.0
      %1250 = vmatpush1.msra.mxu0 0.0
      %1251 = vmatprep.subr.mxu0 0.0
      %1252 = vmatpush1.msra.mxu0 0.0
      %1253 = vmatprep.subr.mxu0 0.0
      %1254 = vmatpush1.msra.mxu0 0.0
      %1255 = vmatprep.subr.mxu0 0.0
      %1256 = vmatpush1.msra.mxu0 0.0
      %1257 = vmatprep.subr.mxu0 0.0
      %1258 = vmatpush1.msra.mxu0 0.0
      %1259 = vmatprep.subr.mxu0 0.0
      %1260 = vmatpush1.msra.mxu0 0.0
      %1261 = vmatprep.subr.mxu0 0.0
      %1262 = vmatpush1.msra.mxu0 0.0
      %1263 = vmatprep.subr.mxu0 0.0
      %1264 = vmatpush1.msra.mxu0 0.0
      %1265 = vmatprep.subr.mxu0 0.0
      %1266 = vmatpush1.msra.mxu0 0.0
      %1267 = vmatprep.subr.mxu0 0.0
      %1268 = vmatpush1.msra.mxu0 0.0
      %1269 = vmatprep.subr.mxu0 0.0
      %1270 = vmatpush1.msra.mxu0 0.0
      %1271 = vmatprep.mubr.f32.mxu0 0.0
      %1272 = vmatmul.mubr.f32.gmra.mrb[0].mxu0 %v1196
      %v1273 = vpop.f32.mrb[0].mxu0
      %v1274 = vadd.f32 0.0, %v1273
      %v1275 = vpop.f32.mrb[0].mxu0
      %v1276 = vadd.f32 0.0, %v1275
      %1277 = vmatprep.mubr.f32.mxu0 0.0
      %1278 = vmatmul.mubr.f32.gmra.mrb[0].mxu0 %v1199
      %v1279 = vpop.f32.mrb[0].mxu0
      %v1280 = vadd.f32 0.0, %v1279
      %v1281 = vpop.f32.mrb[0].mxu0
      %v1282 = vadd.f32 0.0, %v1281
      %1283 = vmatprep.mubr.f32.mxu0 0.0
      %1284 = vmatmul.mubr.f32.gmra.mrb[0].mxu0 %v1202
      %v1285 = vpop.f32.mrb[0].mxu0
      %v1286 = vadd.f32 0.0, %v1285
      %v1287 = vpop.f32.mrb[0].mxu0
      %v1288 = vadd.f32 0.0, %v1287
      %1289 = vmatprep.mubr.f32.mxu0 0.0
      %1290 = vmatmul.mubr.f32.gmra.mrb[0].mxu0 %v1205
      %v1291 = vpop.f32.mrb[0].mxu0
      %v1292 = vadd.f32 0.0, %v1291
      %v1293 = vpop.f32.mrb[0].mxu0
      %v1294 = vadd.f32 0.0, %v1293
      %1295 = vdwg.mxu0
      %1296 = vmatprep.subr.mxu0 0.0
      %1297 = vmatpush1.msra.mxu0 %v1155
      %1298 = vmatprep.subr.mxu0 0.0
      %1299 = vmatpush1.msra.mxu0 %v1161
      %1300 = vmatprep.subr.mxu0 0.0
      %1301 = vmatpush1.msra.mxu0 %v1167
      %1302 = vmatprep.subr.mxu0 0.0
      %1303 = vmatpush1.msra.mxu0 %v1173
      %1304 = vmatprep.subr.mxu0 0.0
      %1305 = vmatpush1.msra.mxu0 0.0
      %1306 = vmatprep.subr.mxu0 0.0
      %1307 = vmatpush1.msra.mxu0 0.0
      %1308 = vmatprep.subr.mxu0 0.0
      %1309 = vmatpush1.msra.mxu0 0.0
      %1310 = vmatprep.subr.mxu0 0.0
      %1311 = vmatpush1.msra.mxu0 0.0
      %1312 = vmatprep.subr.mxu0 0.0
      %1313 = vmatpush1.msra.mxu0 0.0
      %1314 = vmatprep.subr.mxu0 0.0
      %1315 = vmatpush1.msra.mxu0 0.0
      %1316 = vmatprep.subr.mxu0 0.0
      %1317 = vmatpush1.msra.mxu0 0.0
      %1318 = vmatprep.subr.mxu0 0.0
      %1319 = vmatpush1.msra.mxu0 0.0
      %1320 = vmatprep.subr.mxu0 0.0
      %1321 = vmatpush1.msra.mxu0 0.0
      %1322 = vmatprep.subr.mxu0 0.0
      %1323 = vmatpush1.msra.mxu0 0.0
      %1324 = vmatprep.subr.mxu0 0.0
      %1325 = vmatpush1.msra.mxu0 0.0
      %1326 = vmatprep.subr.mxu0 0.0
      %1327 = vmatpush1.msra.mxu0 0.0
      %1328 = vmatprep.subr.mxu0 0.0
      %1329 = vmatpush1.msra.mxu0 0.0
      %1330 = vmatprep.subr.mxu0 0.0
      %1331 = vmatpush1.msra.mxu0 0.0
      %1332 = vmatprep.subr.mxu0 0.0
      %1333 = vmatpush1.msra.mxu0 0.0
      %1334 = vmatprep.subr.mxu0 0.0
      %1335 = vmatpush1.msra.mxu0 0.0
      %1336 = vmatprep.subr.mxu0 0.0
      %1337 = vmatpush1.msra.mxu0 0.0
      %1338 = vmatprep.subr.mxu0 0.0
      %1339 = vmatpush1.msra.mxu0 0.0
      %1340 = vmatprep.subr.mxu0 0.0
      %1341 = vmatpush1.msra.mxu0 0.0
      %1342 = vmatprep.subr.mxu0 0.0
      %1343 = vmatpush1.msra.mxu0 0.0
      %1344 = vmatprep.subr.mxu0 0.0
      %1345 = vmatpush1.msra.mxu0 0.0
      %1346 = vmatprep.subr.mxu0 0.0
      %1347 = vmatpush1.msra.mxu0 0.0
      %1348 = vmatprep.subr.mxu0 0.0
      %1349 = vmatpush1.msra.mxu0 0.0
      %1350 = vmatprep.subr.mxu0 0.0
      %1351 = vmatpush1.msra.mxu0 0.0
      %1352 = vmatprep.subr.mxu0 0.0
      %1353 = vmatpush1.msra.mxu0 0.0
      %1354 = vmatprep.subr.mxu0 0.0
      %1355 = vmatpush1.msra.mxu0 0.0
      %1356 = vmatprep.subr.mxu0 0.0
      %1357 = vmatpush1.msra.mxu0 0.0
      %1358 = vmatprep.subr.mxu0 0.0
      %1359 = vmatpush1.msra.mxu0 0.0
      %1360 = vmatprep.mubr.f32.mxu0 0.0
      %1361 = vmatmul.mubr.f32.gmra.mrb[0].mxu0 %v1196
      %v1362 = vpop.f32.mrb[0].mxu0
      %v1363 = vadd.f32 0.0, %v1362
      %v1364 = vpop.f32.mrb[0].mxu0
      %1365 = vmatprep.mubr.f32.mxu0 0.0
      %1366 = vmatmul.mubr.f32.gmra.mrb[0].mxu0 %v1199
      %v1367 = vpop.f32.mrb[0].mxu0
      %v1368 = vadd.f32 0.0, %v1367
      %v1369 = vpop.f32.mrb[0].mxu0
      %1370 = vmatprep.mubr.f32.mxu0 0.0
      %1371 = vmatmul.mubr.f32.gmra.mrb[0].mxu0 %v1202
      %v1372 = vpop.f32.mrb[0].mxu0
      %v1373 = vadd.f32 0.0, %v1372
      %v1374 = vpop.f32.mrb[0].mxu0
      %1375 = vmatprep.mubr.f32.mxu0 0.0
      %1376 = vmatmul.mubr.f32.gmra.mrb[0].mxu0 %v1205
      %v1377 = vpop.f32.mrb[0].mxu0
      %v1378 = vadd.f32 0.0, %v1377
      %v1379 = vpop.f32.mrb[0].mxu0
      %1380 = vdwg.mxu0
      %v1381 = vadd.f32 %v1133, %v1274
      %v1382 = vadd.f32 %v1134, %v1276
      %v1383 = vadd.f32 %v1135, %v1363
      %v1384 = vadd.f32 %v1136, %v1280
      %v1385 = vadd.f32 %v1137, %v1282
      %v1386 = vadd.f32 %v1138, %v1368
      %v1387 = vadd.f32 %v1139, %v1286
      %v1388 = vadd.f32 %v1140, %v1288
      %v1389 = vadd.f32 %v1141, %v1373
      %v1390 = vadd.f32 %v1142, %v1292
      %v1391 = vadd.f32 %v1143, %v1294
      %v1392 = vadd.f32 %v1144, %v1378
      %s1393 = scalar_lea.vmem %s1, 160
      %v1394 = vld [vmem:[%s1393] sm:$0xff]
      %v1395 = vld [vmem:[%s1393 + $0x8] sm:$0xff]
      %v1396 = vld [vmem:[%s1393 + $0x10] sm:$0xff]
      %v1397 = vld [vmem:[%s1393 + $0x18] sm:$0xff]
      %1398 = vrot.lane.b32.xlu0 %v202, 108
      %v1399 = vpop.permute.xlu0 %1398
      %1400 = vrot.lane.b32.xlu0 %v203, 108
      %v1401 = vpop.permute.xlu0 %1400
      %1402 = vrot.lane.b32.xlu0 %v204, 108
      %v1403 = vpop.permute.xlu0 %1402
      %1404 = vrot.lane.b32.xlu0 %v205, 108
      %v1405 = vpop.permute.xlu0 %1404
      %1406 = vrot.lane.b32.xlu0 %v206, 108
      %v1407 = vpop.permute.xlu0 %1406
      %1408 = vrot.lane.b32.xlu0 %v207, 108
      %v1409 = vpop.permute.xlu0 %1408
      %1410 = vrot.lane.b32.xlu0 %v208, 108
      %v1411 = vpop.permute.xlu0 %1410
      %1412 = vrot.lane.b32.xlu0 %v209, 108
      %v1413 = vpop.permute.xlu0 %1412
      %1414 = vrot.lane.b32.xlu0 %v210, 108
      %v1415 = vpop.permute.xlu0 %1414
      %1416 = vrot.lane.b32.xlu0 %v211, 108
      %v1417 = vpop.permute.xlu0 %1416
      %1418 = vrot.lane.b32.xlu0 %v212, 108
      %v1419 = vpop.permute.xlu0 %1418
      %1420 = vrot.lane.b32.xlu0 %v213, 108
      %v1421 = vpop.permute.xlu0 %1420
      %vm1422 = vcmask 883712
      %v1423 = vsel %vm1422, %v1399, %v1401
      %v1424 = vsel %vm1422, %v1401, %v1403
      %v1425 = vsel %vm1422, %v1405, %v1407
      %v1426 = vsel %vm1422, %v1407, %v1409
      %v1427 = vsel %vm1422, %v1411, %v1413
      %v1428 = vsel %vm1422, %v1413, %v1415
      %v1429 = vsel %vm1422, %v1417, %v1419
      %v1430 = vsel %vm1422, %v1419, %v1421
      %v1444 = vsel %vm276, %v1394, 0
      %v1447 = vsel %vm276, %v1395, 0
      %v1450 = vsel %vm276, %v1396, 0
      %v1453 = vsel %vm276, %v1397, 0
      %1455 = vmatprep.subr.mxu0 %v1424
      %1456 = vmatpush1.msra.mxu0 %v1423
      %1457 = vmatprep.subr.mxu0 %v1426
      %1458 = vmatpush1.msra.mxu0 %v1425
      %1459 = vmatprep.subr.mxu0 %v1428
      %1460 = vmatpush1.msra.mxu0 %v1427
      %1461 = vmatprep.subr.mxu0 %v1430
      %1462 = vmatpush1.msra.mxu0 %v1429
      %1463 = vmatprep.subr.mxu0 0.0
      %1464 = vmatpush1.msra.mxu0 0.0
      %1465 = vmatprep.subr.mxu0 0.0
      %1466 = vmatpush1.msra.mxu0 0.0
      %1467 = vmatprep.subr.mxu0 0.0
      %1468 = vmatpush1.msra.mxu0 0.0
      %1469 = vmatprep.subr.mxu0 0.0
      %1470 = vmatpush1.msra.mxu0 0.0
      %1471 = vmatprep.subr.mxu0 0.0
      %1472 = vmatpush1.msra.mxu0 0.0
      %1473 = vmatprep.subr.mxu0 0.0
      %1474 = vmatpush1.msra.mxu0 0.0
      %1475 = vmatprep.subr.mxu0 0.0
      %1476 = vmatpush1.msra.mxu0 0.0
      %1477 = vmatprep.subr.mxu0 0.0
      %1478 = vmatpush1.msra.mxu0 0.0
      %1479 = vmatprep.subr.mxu0 0.0
      %1480 = vmatpush1.msra.mxu0 0.0
      %1481 = vmatprep.subr.mxu0 0.0
      %1482 = vmatpush1.msra.mxu0 0.0
      %1483 = vmatprep.subr.mxu0 0.0
      %1484 = vmatpush1.msra.mxu0 0.0
      %1485 = vmatprep.subr.mxu0 0.0
      %1486 = vmatpush1.msra.mxu0 0.0
      %1487 = vmatprep.subr.mxu0 0.0
      %1488 = vmatpush1.msra.mxu0 0.0
      %1489 = vmatprep.subr.mxu0 0.0
      %1490 = vmatpush1.msra.mxu0 0.0
      %1491 = vmatprep.subr.mxu0 0.0
      %1492 = vmatpush1.msra.mxu0 0.0
      %1493 = vmatprep.subr.mxu0 0.0
      %1494 = vmatpush1.msra.mxu0 0.0
      %1495 = vmatprep.subr.mxu0 0.0
      %1496 = vmatpush1.msra.mxu0 0.0
      %1497 = vmatprep.subr.mxu0 0.0
      %1498 = vmatpush1.msra.mxu0 0.0
      %1499 = vmatprep.subr.mxu0 0.0
      %1500 = vmatpush1.msra.mxu0 0.0
      %1501 = vmatprep.subr.mxu0 0.0
      %1502 = vmatpush1.msra.mxu0 0.0
      %1503 = vmatprep.subr.mxu0 0.0
      %1504 = vmatpush1.msra.mxu0 0.0
      %1505 = vmatprep.subr.mxu0 0.0
      %1506 = vmatpush1.msra.mxu0 0.0
      %1507 = vmatprep.subr.mxu0 0.0
      %1508 = vmatpush1.msra.mxu0 0.0
      %1509 = vmatprep.subr.mxu0 0.0
      %1510 = vmatpush1.msra.mxu0 0.0
      %1511 = vmatprep.subr.mxu0 0.0
      %1512 = vmatpush1.msra.mxu0 0.0
      %1513 = vmatprep.subr.mxu0 0.0
      %1514 = vmatpush1.msra.mxu0 0.0
      %1515 = vmatprep.subr.mxu0 0.0
      %1516 = vmatpush1.msra.mxu0 0.0
      %1517 = vmatprep.subr.mxu0 0.0
      %1518 = vmatpush1.msra.mxu0 0.0
      %1519 = vmatprep.mubr.f32.mxu0 0.0
      %1520 = vmatmul.mubr.f32.gmra.mrb[0].mxu0 %v1444
      %v1521 = vpop.f32.mrb[0].mxu0
      %v1522 = vadd.f32 0.0, %v1521
      %v1523 = vpop.f32.mrb[0].mxu0
      %v1524 = vadd.f32 0.0, %v1523
      %1525 = vmatprep.mubr.f32.mxu0 0.0
      %1526 = vmatmul.mubr.f32.gmra.mrb[0].mxu0 %v1447
      %v1527 = vpop.f32.mrb[0].mxu0
      %v1528 = vadd.f32 0.0, %v1527
      %v1529 = vpop.f32.mrb[0].mxu0
      %v1530 = vadd.f32 0.0, %v1529
      %1531 = vmatprep.mubr.f32.mxu0 0.0
      %1532 = vmatmul.mubr.f32.gmra.mrb[0].mxu0 %v1450
      %v1533 = vpop.f32.mrb[0].mxu0
      %v1534 = vadd.f32 0.0, %v1533
      %v1535 = vpop.f32.mrb[0].mxu0
      %v1536 = vadd.f32 0.0, %v1535
      %1537 = vmatprep.mubr.f32.mxu0 0.0
      %1538 = vmatmul.mubr.f32.gmra.mrb[0].mxu0 %v1453
      %v1539 = vpop.f32.mrb[0].mxu0
      %v1540 = vadd.f32 0.0, %v1539
      %v1541 = vpop.f32.mrb[0].mxu0
      %v1542 = vadd.f32 0.0, %v1541
      %1543 = vdwg.mxu0
      %1544 = vmatprep.subr.mxu0 0.0
      %1545 = vmatpush1.msra.mxu0 %v1403
      %1546 = vmatprep.subr.mxu0 0.0
      %1547 = vmatpush1.msra.mxu0 %v1409
      %1548 = vmatprep.subr.mxu0 0.0
      %1549 = vmatpush1.msra.mxu0 %v1415
      %1550 = vmatprep.subr.mxu0 0.0
      %1551 = vmatpush1.msra.mxu0 %v1421
      %1552 = vmatprep.subr.mxu0 0.0
      %1553 = vmatpush1.msra.mxu0 0.0
      %1554 = vmatprep.subr.mxu0 0.0
      %1555 = vmatpush1.msra.mxu0 0.0
      %1556 = vmatprep.subr.mxu0 0.0
      %1557 = vmatpush1.msra.mxu0 0.0
      %1558 = vmatprep.subr.mxu0 0.0
      %1559 = vmatpush1.msra.mxu0 0.0
      %1560 = vmatprep.subr.mxu0 0.0
      %1561 = vmatpush1.msra.mxu0 0.0
      %1562 = vmatprep.subr.mxu0 0.0
      %1563 = vmatpush1.msra.mxu0 0.0
      %1564 = vmatprep.subr.mxu0 0.0
      %1565 = vmatpush1.msra.mxu0 0.0
      %1566 = vmatprep.subr.mxu0 0.0
      %1567 = vmatpush1.msra.mxu0 0.0
      %1568 = vmatprep.subr.mxu0 0.0
      %1569 = vmatpush1.msra.mxu0 0.0
      %1570 = vmatprep.subr.mxu0 0.0
      %1571 = vmatpush1.msra.mxu0 0.0
      %1572 = vmatprep.subr.mxu0 0.0
      %1573 = vmatpush1.msra.mxu0 0.0
      %1574 = vmatprep.subr.mxu0 0.0
      %1575 = vmatpush1.msra.mxu0 0.0
      %1576 = vmatprep.subr.mxu0 0.0
      %1577 = vmatpush1.msra.mxu0 0.0
      %1578 = vmatprep.subr.mxu0 0.0
      %1579 = vmatpush1.msra.mxu0 0.0
      %1580 = vmatprep.subr.mxu0 0.0
      %1581 = vmatpush1.msra.mxu0 0.0
      %1582 = vmatprep.subr.mxu0 0.0
      %1583 = vmatpush1.msra.mxu0 0.0
      %1584 = vmatprep.subr.mxu0 0.0
      %1585 = vmatpush1.msra.mxu0 0.0
      %1586 = vmatprep.subr.mxu0 0.0
      %1587 = vmatpush1.msra.mxu0 0.0
      %1588 = vmatprep.subr.mxu0 0.0
      %1589 = vmatpush1.msra.mxu0 0.0
      %1590 = vmatprep.subr.mxu0 0.0
      %1591 = vmatpush1.msra.mxu0 0.0
      %1592 = vmatprep.subr.mxu0 0.0
      %1593 = vmatpush1.msra.mxu0 0.0
      %1594 = vmatprep.subr.mxu0 0.0
      %1595 = vmatpush1.msra.mxu0 0.0
      %1596 = vmatprep.subr.mxu0 0.0
      %1597 = vmatpush1.msra.mxu0 0.0
      %1598 = vmatprep.subr.mxu0 0.0
      %1599 = vmatpush1.msra.mxu0 0.0
      %1600 = vmatprep.subr.mxu0 0.0
      %1601 = vmatpush1.msra.mxu0 0.0
      %1602 = vmatprep.subr.mxu0 0.0
      %1603 = vmatpush1.msra.mxu0 0.0
      %1604 = vmatprep.subr.mxu0 0.0
      %1605 = vmatpush1.msra.mxu0 0.0
      %1606 = vmatprep.subr.mxu0 0.0
      %1607 = vmatpush1.msra.mxu0 0.0
      %1608 = vmatprep.mubr.f32.mxu0 0.0
      %1609 = vmatmul.mubr.f32.gmra.mrb[0].mxu0 %v1444
      %v1610 = vpop.f32.mrb[0].mxu0
      %v1611 = vadd.f32 0.0, %v1610
      %v1612 = vpop.f32.mrb[0].mxu0
      %1613 = vmatprep.mubr.f32.mxu0 0.0
      %1614 = vmatmul.mubr.f32.gmra.mrb[0].mxu0 %v1447
      %v1615 = vpop.f32.mrb[0].mxu0
      %v1616 = vadd.f32 0.0, %v1615
      %v1617 = vpop.f32.mrb[0].mxu0
      %1618 = vmatprep.mubr.f32.mxu0 0.0
      %1619 = vmatmul.mubr.f32.gmra.mrb[0].mxu0 %v1450
      %v1620 = vpop.f32.mrb[0].mxu0
      %v1621 = vadd.f32 0.0, %v1620
      %v1622 = vpop.f32.mrb[0].mxu0
      %1623 = vmatprep.mubr.f32.mxu0 0.0
      %1624 = vmatmul.mubr.f32.gmra.mrb[0].mxu0 %v1453
      %v1625 = vpop.f32.mrb[0].mxu0
      %v1626 = vadd.f32 0.0, %v1625
      %v1627 = vpop.f32.mrb[0].mxu0
      %1628 = vdwg.mxu0
      %v1629 = vadd.f32 %v1381, %v1522
      %v1630 = vadd.f32 %v1382, %v1524
      %v1631 = vadd.f32 %v1383, %v1611
      %v1632 = vadd.f32 %v1384, %v1528
      %v1633 = vadd.f32 %v1385, %v1530
      %v1634 = vadd.f32 %v1386, %v1616
      %v1635 = vadd.f32 %v1387, %v1534
      %v1636 = vadd.f32 %v1388, %v1536
      %v1637 = vadd.f32 %v1389, %v1621
      %v1638 = vadd.f32 %v1390, %v1540
      %v1639 = vadd.f32 %v1391, %v1542
      %v1640 = vadd.f32 %v1392, %v1626
      %s1641 = scalar_lea.vmem %s1, 192
      %v1642 = vld [vmem:[%s1641] sm:$0xff]
      %v1643 = vld [vmem:[%s1641 + $0x8] sm:$0xff]
      %v1644 = vld [vmem:[%s1641 + $0x10] sm:$0xff]
      %v1645 = vld [vmem:[%s1641 + $0x18] sm:$0xff]
      %1646 = vrot.lane.b32.xlu0 %v202, 92
      %v1647 = vpop.permute.xlu0 %1646
      %1648 = vrot.lane.b32.xlu0 %v203, 92
      %v1649 = vpop.permute.xlu0 %1648
      %1650 = vrot.lane.b32.xlu0 %v204, 92
      %v1651 = vpop.permute.xlu0 %1650
      %1652 = vrot.lane.b32.xlu0 %v205, 92
      %v1653 = vpop.permute.xlu0 %1652
      %1654 = vrot.lane.b32.xlu0 %v206, 92
      %v1655 = vpop.permute.xlu0 %1654
      %1656 = vrot.lane.b32.xlu0 %v207, 92
      %v1657 = vpop.permute.xlu0 %1656
      %1658 = vrot.lane.b32.xlu0 %v208, 92
      %v1659 = vpop.permute.xlu0 %1658
      %1660 = vrot.lane.b32.xlu0 %v209, 92
      %v1661 = vpop.permute.xlu0 %1660
      %1662 = vrot.lane.b32.xlu0 %v210, 92
      %v1663 = vpop.permute.xlu0 %1662
      %1664 = vrot.lane.b32.xlu0 %v211, 92
      %v1665 = vpop.permute.xlu0 %1664
      %1666 = vrot.lane.b32.xlu0 %v212, 92
      %v1667 = vpop.permute.xlu0 %1666
      %1668 = vrot.lane.b32.xlu0 %v213, 92
      %v1669 = vpop.permute.xlu0 %1668
      %vm1670 = vcmask 752640
      %v1671 = vsel %vm1670, %v1647, %v1649
      %v1672 = vsel %vm1670, %v1649, %v1651
      %v1673 = vsel %vm1670, %v1653, %v1655
      %v1674 = vsel %vm1670, %v1655, %v1657
      %v1675 = vsel %vm1670, %v1659, %v1661
      %v1676 = vsel %vm1670, %v1661, %v1663
      %v1677 = vsel %vm1670, %v1665, %v1667
      %v1678 = vsel %vm1670, %v1667, %v1669
      %v1692 = vsel %vm276, %v1642, 0
      %v1695 = vsel %vm276, %v1643, 0
      %v1698 = vsel %vm276, %v1644, 0
      %v1701 = vsel %vm276, %v1645, 0
      %1703 = vmatprep.subr.mxu0 %v1672
      %1704 = vmatpush1.msra.mxu0 %v1671
      %1705 = vmatprep.subr.mxu0 %v1674
      %1706 = vmatpush1.msra.mxu0 %v1673
      %1707 = vmatprep.subr.mxu0 %v1676
      %1708 = vmatpush1.msra.mxu0 %v1675
      %1709 = vmatprep.subr.mxu0 %v1678
      %1710 = vmatpush1.msra.mxu0 %v1677
      %1711 = vmatprep.subr.mxu0 0.0
      %1712 = vmatpush1.msra.mxu0 0.0
      %1713 = vmatprep.subr.mxu0 0.0
      %1714 = vmatpush1.msra.mxu0 0.0
      %1715 = vmatprep.subr.mxu0 0.0
      %1716 = vmatpush1.msra.mxu0 0.0
      %1717 = vmatprep.subr.mxu0 0.0
      %1718 = vmatpush1.msra.mxu0 0.0
      %1719 = vmatprep.subr.mxu0 0.0
      %1720 = vmatpush1.msra.mxu0 0.0
      %1721 = vmatprep.subr.mxu0 0.0
      %1722 = vmatpush1.msra.mxu0 0.0
      %1723 = vmatprep.subr.mxu0 0.0
      %1724 = vmatpush1.msra.mxu0 0.0
      %1725 = vmatprep.subr.mxu0 0.0
      %1726 = vmatpush1.msra.mxu0 0.0
      %1727 = vmatprep.subr.mxu0 0.0
      %1728 = vmatpush1.msra.mxu0 0.0
      %1729 = vmatprep.subr.mxu0 0.0
      %1730 = vmatpush1.msra.mxu0 0.0
      %1731 = vmatprep.subr.mxu0 0.0
      %1732 = vmatpush1.msra.mxu0 0.0
      %1733 = vmatprep.subr.mxu0 0.0
      %1734 = vmatpush1.msra.mxu0 0.0
      %1735 = vmatprep.subr.mxu0 0.0
      %1736 = vmatpush1.msra.mxu0 0.0
      %1737 = vmatprep.subr.mxu0 0.0
      %1738 = vmatpush1.msra.mxu0 0.0
      %1739 = vmatprep.subr.mxu0 0.0
      %1740 = vmatpush1.msra.mxu0 0.0
      %1741 = vmatprep.subr.mxu0 0.0
      %1742 = vmatpush1.msra.mxu0 0.0
      %1743 = vmatprep.subr.mxu0 0.0
      %1744 = vmatpush1.msra.mxu0 0.0
      %1745 = vmatprep.subr.mxu0 0.0
      %1746 = vmatpush1.msra.mxu0 0.0
      %1747 = vmatprep.subr.mxu0 0.0
      %1748 = vmatpush1.msra.mxu0 0.0
      %1749 = vmatprep.subr.mxu0 0.0
      %1750 = vmatpush1.msra.mxu0 0.0
      %1751 = vmatprep.subr.mxu0 0.0
      %1752 = vmatpush1.msra.mxu0 0.0
      %1753 = vmatprep.subr.mxu0 0.0
      %1754 = vmatpush1.msra.mxu0 0.0
      %1755 = vmatprep.subr.mxu0 0.0
      %1756 = vmatpush1.msra.mxu0 0.0
      %1757 = vmatprep.subr.mxu0 0.0
      %1758 = vmatpush1.msra.mxu0 0.0
      %1759 = vmatprep.subr.mxu0 0.0
      %1760 = vmatpush1.msra.mxu0 0.0
      %1761 = vmatprep.subr.mxu0 0.0
      %1762 = vmatpush1.msra.mxu0 0.0
      %1763 = vmatprep.subr.mxu0 0.0
      %1764 = vmatpush1.msra.mxu0 0.0
      %1765 = vmatprep.subr.mxu0 0.0
      %1766 = vmatpush1.msra.mxu0 0.0
      %1767 = vmatprep.mubr.f32.mxu0 0.0
      %1768 = vmatmul.mubr.f32.gmra.mrb[0].mxu0 %v1692
      %v1769 = vpop.f32.mrb[0].mxu0
      %v1770 = vadd.f32 0.0, %v1769
      %v1771 = vpop.f32.mrb[0].mxu0
      %v1772 = vadd.f32 0.0, %v1771
      %1773 = vmatprep.mubr.f32.mxu0 0.0
      %1774 = vmatmul.mubr.f32.gmra.mrb[0].mxu0 %v1695
      %v1775 = vpop.f32.mrb[0].mxu0
      %v1776 = vadd.f32 0.0, %v1775
      %v1777 = vpop.f32.mrb[0].mxu0
      %v1778 = vadd.f32 0.0, %v1777
      %1779 = vmatprep.mubr.f32.mxu0 0.0
      %1780 = vmatmul.mubr.f32.gmra.mrb[0].mxu0 %v1698
      %v1781 = vpop.f32.mrb[0].mxu0
      %v1782 = vadd.f32 0.0, %v1781
      %v1783 = vpop.f32.mrb[0].mxu0
      %v1784 = vadd.f32 0.0, %v1783
      %1785 = vmatprep.mubr.f32.mxu0 0.0
      %1786 = vmatmul.mubr.f32.gmra.mrb[0].mxu0 %v1701
      %v1787 = vpop.f32.mrb[0].mxu0
      %v1788 = vadd.f32 0.0, %v1787
      %v1789 = vpop.f32.mrb[0].mxu0
      %v1790 = vadd.f32 0.0, %v1789
      %1791 = vdwg.mxu0
      %1792 = vmatprep.subr.mxu0 0.0
      %1793 = vmatpush1.msra.mxu0 %v1651
      %1794 = vmatprep.subr.mxu0 0.0
      %1795 = vmatpush1.msra.mxu0 %v1657
      %1796 = vmatprep.subr.mxu0 0.0
      %1797 = vmatpush1.msra.mxu0 %v1663
      %1798 = vmatprep.subr.mxu0 0.0
      %1799 = vmatpush1.msra.mxu0 %v1669
      %1800 = vmatprep.subr.mxu0 0.0
      %1801 = vmatpush1.msra.mxu0 0.0
      %1802 = vmatprep.subr.mxu0 0.0
      %1803 = vmatpush1.msra.mxu0 0.0
      %1804 = vmatprep.subr.mxu0 0.0
      %1805 = vmatpush1.msra.mxu0 0.0
      %1806 = vmatprep.subr.mxu0 0.0
      %1807 = vmatpush1.msra.mxu0 0.0
      %1808 = vmatprep.subr.mxu0 0.0
      %1809 = vmatpush1.msra.mxu0 0.0
      %1810 = vmatprep.subr.mxu0 0.0
      %1811 = vmatpush1.msra.mxu0 0.0
      %1812 = vmatprep.subr.mxu0 0.0
      %1813 = vmatpush1.msra.mxu0 0.0
      %1814 = vmatprep.subr.mxu0 0.0
      %1815 = vmatpush1.msra.mxu0 0.0
      %1816 = vmatprep.subr.mxu0 0.0
      %1817 = vmatpush1.msra.mxu0 0.0
      %1818 = vmatprep.subr.mxu0 0.0
      %1819 = vmatpush1.msra.mxu0 0.0
      %1820 = vmatprep.subr.mxu0 0.0
      %1821 = vmatpush1.msra.mxu0 0.0
      %1822 = vmatprep.subr.mxu0 0.0
      %1823 = vmatpush1.msra.mxu0 0.0
      %1824 = vmatprep.subr.mxu0 0.0
      %1825 = vmatpush1.msra.mxu0 0.0
      %1826 = vmatprep.subr.mxu0 0.0
      %1827 = vmatpush1.msra.mxu0 0.0
      %1828 = vmatprep.subr.mxu0 0.0
      %1829 = vmatpush1.msra.mxu0 0.0
      %1830 = vmatprep.subr.mxu0 0.0
      %1831 = vmatpush1.msra.mxu0 0.0
      %1832 = vmatprep.subr.mxu0 0.0
      %1833 = vmatpush1.msra.mxu0 0.0
      %1834 = vmatprep.subr.mxu0 0.0
      %1835 = vmatpush1.msra.mxu0 0.0
      %1836 = vmatprep.subr.mxu0 0.0
      %1837 = vmatpush1.msra.mxu0 0.0
      %1838 = vmatprep.subr.mxu0 0.0
      %1839 = vmatpush1.msra.mxu0 0.0
      %1840 = vmatprep.subr.mxu0 0.0
      %1841 = vmatpush1.msra.mxu0 0.0
      %1842 = vmatprep.subr.mxu0 0.0
      %1843 = vmatpush1.msra.mxu0 0.0
      %1844 = vmatprep.subr.mxu0 0.0
      %1845 = vmatpush1.msra.mxu0 0.0
      %1846 = vmatprep.subr.mxu0 0.0
      %1847 = vmatpush1.msra.mxu0 0.0
      %1848 = vmatprep.subr.mxu0 0.0
      %1849 = vmatpush1.msra.mxu0 0.0
      %1850 = vmatprep.subr.mxu0 0.0
      %1851 = vmatpush1.msra.mxu0 0.0
      %1852 = vmatprep.subr.mxu0 0.0
      %1853 = vmatpush1.msra.mxu0 0.0
      %1854 = vmatprep.subr.mxu0 0.0
      %1855 = vmatpush1.msra.mxu0 0.0
      %1856 = vmatprep.mubr.f32.mxu0 0.0
      %1857 = vmatmul.mubr.f32.gmra.mrb[0].mxu0 %v1692
      %v1858 = vpop.f32.mrb[0].mxu0
      %v1859 = vadd.f32 0.0, %v1858
      %v1860 = vpop.f32.mrb[0].mxu0
      %1861 = vmatprep.mubr.f32.mxu0 0.0
      %1862 = vmatmul.mubr.f32.gmra.mrb[0].mxu0 %v1695
      %v1863 = vpop.f32.mrb[0].mxu0
      %v1864 = vadd.f32 0.0, %v1863
      %v1865 = vpop.f32.mrb[0].mxu0
      %1866 = vmatprep.mubr.f32.mxu0 0.0
      %1867 = vmatmul.mubr.f32.gmra.mrb[0].mxu0 %v1698
      %v1868 = vpop.f32.mrb[0].mxu0
      %v1869 = vadd.f32 0.0, %v1868
      %v1870 = vpop.f32.mrb[0].mxu0
      %1871 = vmatprep.mubr.f32.mxu0 0.0
      %1872 = vmatmul.mubr.f32.gmra.mrb[0].mxu0 %v1701
      %v1873 = vpop.f32.mrb[0].mxu0
      %v1874 = vadd.f32 0.0, %v1873
      %v1875 = vpop.f32.mrb[0].mxu0
      %1876 = vdwg.mxu0
      %v1877 = vadd.f32 %v1629, %v1770
      %v1878 = vadd.f32 %v1630, %v1772
      %v1879 = vadd.f32 %v1631, %v1859
      %v1880 = vadd.f32 %v1632, %v1776
      %v1881 = vadd.f32 %v1633, %v1778
      %v1882 = vadd.f32 %v1634, %v1864
      %v1883 = vadd.f32 %v1635, %v1782
      %v1884 = vadd.f32 %v1636, %v1784
      %v1885 = vadd.f32 %v1637, %v1869
      %v1886 = vadd.f32 %v1638, %v1788
      %v1887 = vadd.f32 %v1639, %v1790
      %v1888 = vadd.f32 %v1640, %v1874
      %s1889 = scalar_lea.vmem %s1, 224
      %v1890 = vld [vmem:[%s1889] sm:$0xff]
      %v1891 = vld [vmem:[%s1889 + $0x8] sm:$0xff]
      %v1892 = vld [vmem:[%s1889 + $0x10] sm:$0xff]
      %v1893 = vld [vmem:[%s1889 + $0x18] sm:$0xff]
      %1894 = vrot.lane.b32.xlu0 %v202, 91
      %v1895 = vpop.permute.xlu0 %1894
      %1896 = vrot.lane.b32.xlu0 %v203, 91
      %v1897 = vpop.permute.xlu0 %1896
      %1898 = vrot.lane.b32.xlu0 %v204, 91
      %v1899 = vpop.permute.xlu0 %1898
      %1900 = vrot.lane.b32.xlu0 %v205, 91
      %v1901 = vpop.permute.xlu0 %1900
      %1902 = vrot.lane.b32.xlu0 %v206, 91
      %v1903 = vpop.permute.xlu0 %1902
      %1904 = vrot.lane.b32.xlu0 %v207, 91
      %v1905 = vpop.permute.xlu0 %1904
      %1906 = vrot.lane.b32.xlu0 %v208, 91
      %v1907 = vpop.permute.xlu0 %1906
      %1908 = vrot.lane.b32.xlu0 %v209, 91
      %v1909 = vpop.permute.xlu0 %1908
      %1910 = vrot.lane.b32.xlu0 %v210, 91
      %v1911 = vpop.permute.xlu0 %1910
      %1912 = vrot.lane.b32.xlu0 %v211, 91
      %v1913 = vpop.permute.xlu0 %1912
      %1914 = vrot.lane.b32.xlu0 %v212, 91
      %v1915 = vpop.permute.xlu0 %1914
      %1916 = vrot.lane.b32.xlu0 %v213, 91
      %v1917 = vpop.permute.xlu0 %1916
      %vm1918 = vcmask 744448
      %v1919 = vsel %vm1918, %v1895, %v1897
      %v1920 = vsel %vm1918, %v1897, %v1899
      %v1921 = vsel %vm1918, %v1901, %v1903
      %v1922 = vsel %vm1918, %v1903, %v1905
      %v1923 = vsel %vm1918, %v1907, %v1909
      %v1924 = vsel %vm1918, %v1909, %v1911
      %v1925 = vsel %vm1918, %v1913, %v1915
      %v1926 = vsel %vm1918, %v1915, %v1917
      %v1940 = vsel %vm276, %v1890, 0
      %v1943 = vsel %vm276, %v1891, 0
      %v1946 = vsel %vm276, %v1892, 0
      %v1949 = vsel %vm276, %v1893, 0
      %1951 = vmatprep.subr.mxu0 %v1920
      %1952 = vmatpush1.msra.mxu0 %v1919
      %1953 = vmatprep.subr.mxu0 %v1922
      %1954 = vmatpush1.msra.mxu0 %v1921
      %1955 = vmatprep.subr.mxu0 %v1924
      %1956 = vmatpush1.msra.mxu0 %v1923
      %1957 = vmatprep.subr.mxu0 %v1926
      %1958 = vmatpush1.msra.mxu0 %v1925
      %1959 = vmatprep.subr.mxu0 0.0
      %1960 = vmatpush1.msra.mxu0 0.0
      %1961 = vmatprep.subr.mxu0 0.0
      %1962 = vmatpush1.msra.mxu0 0.0
      %1963 = vmatprep.subr.mxu0 0.0
      %1964 = vmatpush1.msra.mxu0 0.0
      %1965 = vmatprep.subr.mxu0 0.0
      %1966 = vmatpush1.msra.mxu0 0.0
      %1967 = vmatprep.subr.mxu0 0.0
      %1968 = vmatpush1.msra.mxu0 0.0
      %1969 = vmatprep.subr.mxu0 0.0
      %1970 = vmatpush1.msra.mxu0 0.0
      %1971 = vmatprep.subr.mxu0 0.0
      %1972 = vmatpush1.msra.mxu0 0.0
      %1973 = vmatprep.subr.mxu0 0.0
      %1974 = vmatpush1.msra.mxu0 0.0
      %1975 = vmatprep.subr.mxu0 0.0
      %1976 = vmatpush1.msra.mxu0 0.0
      %1977 = vmatprep.subr.mxu0 0.0
      %1978 = vmatpush1.msra.mxu0 0.0
      %1979 = vmatprep.subr.mxu0 0.0
      %1980 = vmatpush1.msra.mxu0 0.0
      %1981 = vmatprep.subr.mxu0 0.0
      %1982 = vmatpush1.msra.mxu0 0.0
      %1983 = vmatprep.subr.mxu0 0.0
      %1984 = vmatpush1.msra.mxu0 0.0
      %1985 = vmatprep.subr.mxu0 0.0
      %1986 = vmatpush1.msra.mxu0 0.0
      %1987 = vmatprep.subr.mxu0 0.0
      %1988 = vmatpush1.msra.mxu0 0.0
      %1989 = vmatprep.subr.mxu0 0.0
      %1990 = vmatpush1.msra.mxu0 0.0
      %1991 = vmatprep.subr.mxu0 0.0
      %1992 = vmatpush1.msra.mxu0 0.0
      %1993 = vmatprep.subr.mxu0 0.0
      %1994 = vmatpush1.msra.mxu0 0.0
      %1995 = vmatprep.subr.mxu0 0.0
      %1996 = vmatpush1.msra.mxu0 0.0
      %1997 = vmatprep.subr.mxu0 0.0
      %1998 = vmatpush1.msra.mxu0 0.0
      %1999 = vmatprep.subr.mxu0 0.0
      %2000 = vmatpush1.msra.mxu0 0.0
      %2001 = vmatprep.subr.mxu0 0.0
      %2002 = vmatpush1.msra.mxu0 0.0
      %2003 = vmatprep.subr.mxu0 0.0
      %2004 = vmatpush1.msra.mxu0 0.0
      %2005 = vmatprep.subr.mxu0 0.0
      %2006 = vmatpush1.msra.mxu0 0.0
      %2007 = vmatprep.subr.mxu0 0.0
      %2008 = vmatpush1.msra.mxu0 0.0
      %2009 = vmatprep.subr.mxu0 0.0
      %2010 = vmatpush1.msra.mxu0 0.0
      %2011 = vmatprep.subr.mxu0 0.0
      %2012 = vmatpush1.msra.mxu0 0.0
      %2013 = vmatprep.subr.mxu0 0.0
      %2014 = vmatpush1.msra.mxu0 0.0
      %2015 = vmatprep.mubr.f32.mxu0 0.0
      %2016 = vmatmul.mubr.f32.gmra.mrb[0].mxu0 %v1940
      %v2017 = vpop.f32.mrb[0].mxu0
      %v2018 = vadd.f32 0.0, %v2017
      %v2019 = vpop.f32.mrb[0].mxu0
      %v2020 = vadd.f32 0.0, %v2019
      %2021 = vmatprep.mubr.f32.mxu0 0.0
      %2022 = vmatmul.mubr.f32.gmra.mrb[0].mxu0 %v1943
      %v2023 = vpop.f32.mrb[0].mxu0
      %v2024 = vadd.f32 0.0, %v2023
      %v2025 = vpop.f32.mrb[0].mxu0
      %v2026 = vadd.f32 0.0, %v2025
      %2027 = vmatprep.mubr.f32.mxu0 0.0
      %2028 = vmatmul.mubr.f32.gmra.mrb[0].mxu0 %v1946
      %v2029 = vpop.f32.mrb[0].mxu0
      %v2030 = vadd.f32 0.0, %v2029
      %v2031 = vpop.f32.mrb[0].mxu0
      %v2032 = vadd.f32 0.0, %v2031
      %2033 = vmatprep.mubr.f32.mxu0 0.0
      %2034 = vmatmul.mubr.f32.gmra.mrb[0].mxu0 %v1949
      %v2035 = vpop.f32.mrb[0].mxu0
      %v2036 = vadd.f32 0.0, %v2035
      %v2037 = vpop.f32.mrb[0].mxu0
      %v2038 = vadd.f32 0.0, %v2037
      %2039 = vdwg.mxu0
      %2040 = vmatprep.subr.mxu0 0.0
      %2041 = vmatpush1.msra.mxu0 %v1899
      %2042 = vmatprep.subr.mxu0 0.0
      %2043 = vmatpush1.msra.mxu0 %v1905
      %2044 = vmatprep.subr.mxu0 0.0
      %2045 = vmatpush1.msra.mxu0 %v1911
      %2046 = vmatprep.subr.mxu0 0.0
      %2047 = vmatpush1.msra.mxu0 %v1917
      %2048 = vmatprep.subr.mxu0 0.0
      %2049 = vmatpush1.msra.mxu0 0.0
      %2050 = vmatprep.subr.mxu0 0.0
      %2051 = vmatpush1.msra.mxu0 0.0
      %2052 = vmatprep.subr.mxu0 0.0
      %2053 = vmatpush1.msra.mxu0 0.0
      %2054 = vmatprep.subr.mxu0 0.0
      %2055 = vmatpush1.msra.mxu0 0.0
      %2056 = vmatprep.subr.mxu0 0.0
      %2057 = vmatpush1.msra.mxu0 0.0
      %2058 = vmatprep.subr.mxu0 0.0
      %2059 = vmatpush1.msra.mxu0 0.0
      %2060 = vmatprep.subr.mxu0 0.0
      %2061 = vmatpush1.msra.mxu0 0.0
      %2062 = vmatprep.subr.mxu0 0.0
      %2063 = vmatpush1.msra.mxu0 0.0
      %2064 = vmatprep.subr.mxu0 0.0
      %2065 = vmatpush1.msra.mxu0 0.0
      %2066 = vmatprep.subr.mxu0 0.0
      %2067 = vmatpush1.msra.mxu0 0.0
      %2068 = vmatprep.subr.mxu0 0.0
      %2069 = vmatpush1.msra.mxu0 0.0
      %2070 = vmatprep.subr.mxu0 0.0
      %2071 = vmatpush1.msra.mxu0 0.0
      %2072 = vmatprep.subr.mxu0 0.0
      %2073 = vmatpush1.msra.mxu0 0.0
      %2074 = vmatprep.subr.mxu0 0.0
      %2075 = vmatpush1.msra.mxu0 0.0
      %2076 = vmatprep.subr.mxu0 0.0
      %2077 = vmatpush1.msra.mxu0 0.0
      %2078 = vmatprep.subr.mxu0 0.0
      %2079 = vmatpush1.msra.mxu0 0.0
      %2080 = vmatprep.subr.mxu0 0.0
      %2081 = vmatpush1.msra.mxu0 0.0
      %2082 = vmatprep.subr.mxu0 0.0
      %2083 = vmatpush1.msra.mxu0 0.0
      %2084 = vmatprep.subr.mxu0 0.0
      %2085 = vmatpush1.msra.mxu0 0.0
      %2086 = vmatprep.subr.mxu0 0.0
      %2087 = vmatpush1.msra.mxu0 0.0
      %2088 = vmatprep.subr.mxu0 0.0
      %2089 = vmatpush1.msra.mxu0 0.0
      %2090 = vmatprep.subr.mxu0 0.0
      %2091 = vmatpush1.msra.mxu0 0.0
      %2092 = vmatprep.subr.mxu0 0.0
      %2093 = vmatpush1.msra.mxu0 0.0
      %2094 = vmatprep.subr.mxu0 0.0
      %2095 = vmatpush1.msra.mxu0 0.0
      %2096 = vmatprep.subr.mxu0 0.0
      %2097 = vmatpush1.msra.mxu0 0.0
      %2098 = vmatprep.subr.mxu0 0.0
      %2099 = vmatpush1.msra.mxu0 0.0
      %2100 = vmatprep.subr.mxu0 0.0
      %2101 = vmatpush1.msra.mxu0 0.0
      %2102 = vmatprep.subr.mxu0 0.0
      %2103 = vmatpush1.msra.mxu0 0.0
      %2104 = vmatprep.mubr.f32.mxu0 0.0
      %2105 = vmatmul.mubr.f32.gmra.mrb[0].mxu0 %v1940
      %v2106 = vpop.f32.mrb[0].mxu0
      %v2107 = vadd.f32 0.0, %v2106
      %v2108 = vpop.f32.mrb[0].mxu0
      %2109 = vmatprep.mubr.f32.mxu0 0.0
      %2110 = vmatmul.mubr.f32.gmra.mrb[0].mxu0 %v1943
      %v2111 = vpop.f32.mrb[0].mxu0
      %v2112 = vadd.f32 0.0, %v2111
      %v2113 = vpop.f32.mrb[0].mxu0
      %2114 = vmatprep.mubr.f32.mxu0 0.0
      %2115 = vmatmul.mubr.f32.gmra.mrb[0].mxu0 %v1946
      %v2116 = vpop.f32.mrb[0].mxu0
      %v2117 = vadd.f32 0.0, %v2116
      %v2118 = vpop.f32.mrb[0].mxu0
      %2119 = vmatprep.mubr.f32.mxu0 0.0
      %2120 = vmatmul.mubr.f32.gmra.mrb[0].mxu0 %v1949
      %v2121 = vpop.f32.mrb[0].mxu0
      %v2122 = vadd.f32 0.0, %v2121
      %v2123 = vpop.f32.mrb[0].mxu0
      %2124 = vdwg.mxu0
      %v2125 = vadd.f32 %v1877, %v2018
      %v2126 = vadd.f32 %v1878, %v2020
      %v2127 = vadd.f32 %v1879, %v2107
      %v2128 = vadd.f32 %v1880, %v2024
      %v2129 = vadd.f32 %v1881, %v2026
      %v2130 = vadd.f32 %v1882, %v2112
      %v2131 = vadd.f32 %v1883, %v2030
      %v2132 = vadd.f32 %v1884, %v2032
      %v2133 = vadd.f32 %v1885, %v2117
      %v2134 = vadd.f32 %v1886, %v2036
      %v2135 = vadd.f32 %v1887, %v2038
      %v2136 = vadd.f32 %v1888, %v2122
      %s2137 = scalar_lea.vmem %s1, 256
      %v2138 = vld [vmem:[%s2137] sm:$0xff]
      %v2139 = vld [vmem:[%s2137 + $0x8] sm:$0xff]
      %v2140 = vld [vmem:[%s2137 + $0x10] sm:$0xff]
      %v2141 = vld [vmem:[%s2137 + $0x18] sm:$0xff]
      %2142 = vrot.lane.b32.xlu0 %v202, 90
      %v2143 = vpop.permute.xlu0 %2142
      %2144 = vrot.lane.b32.xlu0 %v203, 90
      %v2145 = vpop.permute.xlu0 %2144
      %2146 = vrot.lane.b32.xlu0 %v204, 90
      %v2147 = vpop.permute.xlu0 %2146
      %2148 = vrot.lane.b32.xlu0 %v205, 90
      %v2149 = vpop.permute.xlu0 %2148
      %2150 = vrot.lane.b32.xlu0 %v206, 90
      %v2151 = vpop.permute.xlu0 %2150
      %2152 = vrot.lane.b32.xlu0 %v207, 90
      %v2153 = vpop.permute.xlu0 %2152
      %2154 = vrot.lane.b32.xlu0 %v208, 90
      %v2155 = vpop.permute.xlu0 %2154
      %2156 = vrot.lane.b32.xlu0 %v209, 90
      %v2157 = vpop.permute.xlu0 %2156
      %2158 = vrot.lane.b32.xlu0 %v210, 90
      %v2159 = vpop.permute.xlu0 %2158
      %2160 = vrot.lane.b32.xlu0 %v211, 90
      %v2161 = vpop.permute.xlu0 %2160
      %2162 = vrot.lane.b32.xlu0 %v212, 90
      %v2163 = vpop.permute.xlu0 %2162
      %2164 = vrot.lane.b32.xlu0 %v213, 90
      %v2165 = vpop.permute.xlu0 %2164
      %vm2166 = vcmask 736256
      %v2167 = vsel %vm2166, %v2143, %v2145
      %v2168 = vsel %vm2166, %v2145, %v2147
      %v2169 = vsel %vm2166, %v2149, %v2151
      %v2170 = vsel %vm2166, %v2151, %v2153
      %v2171 = vsel %vm2166, %v2155, %v2157
      %v2172 = vsel %vm2166, %v2157, %v2159
      %v2173 = vsel %vm2166, %v2161, %v2163
      %v2174 = vsel %vm2166, %v2163, %v2165
      %v2188 = vsel %vm276, %v2138, 0
      %v2191 = vsel %vm276, %v2139, 0
      %v2194 = vsel %vm276, %v2140, 0
      %v2197 = vsel %vm276, %v2141, 0
      %2199 = vmatprep.subr.mxu0 %v2168
      %2200 = vmatpush1.msra.mxu0 %v2167
      %2201 = vmatprep.subr.mxu0 %v2170
      %2202 = vmatpush1.msra.mxu0 %v2169
      %2203 = vmatprep.subr.mxu0 %v2172
      %2204 = vmatpush1.msra.mxu0 %v2171
      %2205 = vmatprep.subr.mxu0 %v2174
      %2206 = vmatpush1.msra.mxu0 %v2173
      %2207 = vmatprep.subr.mxu0 0.0
      %2208 = vmatpush1.msra.mxu0 0.0
      %2209 = vmatprep.subr.mxu0 0.0
      %2210 = vmatpush1.msra.mxu0 0.0
      %2211 = vmatprep.subr.mxu0 0.0
      %2212 = vmatpush1.msra.mxu0 0.0
      %2213 = vmatprep.subr.mxu0 0.0
      %2214 = vmatpush1.msra.mxu0 0.0
      %2215 = vmatprep.subr.mxu0 0.0
      %2216 = vmatpush1.msra.mxu0 0.0
      %2217 = vmatprep.subr.mxu0 0.0
      %2218 = vmatpush1.msra.mxu0 0.0
      %2219 = vmatprep.subr.mxu0 0.0
      %2220 = vmatpush1.msra.mxu0 0.0
      %2221 = vmatprep.subr.mxu0 0.0
      %2222 = vmatpush1.msra.mxu0 0.0
      %2223 = vmatprep.subr.mxu0 0.0
      %2224 = vmatpush1.msra.mxu0 0.0
      %2225 = vmatprep.subr.mxu0 0.0
      %2226 = vmatpush1.msra.mxu0 0.0
      %2227 = vmatprep.subr.mxu0 0.0
      %2228 = vmatpush1.msra.mxu0 0.0
      %2229 = vmatprep.subr.mxu0 0.0
      %2230 = vmatpush1.msra.mxu0 0.0
      %2231 = vmatprep.subr.mxu0 0.0
      %2232 = vmatpush1.msra.mxu0 0.0
      %2233 = vmatprep.subr.mxu0 0.0
      %2234 = vmatpush1.msra.mxu0 0.0
      %2235 = vmatprep.subr.mxu0 0.0
      %2236 = vmatpush1.msra.mxu0 0.0
      %2237 = vmatprep.subr.mxu0 0.0
      %2238 = vmatpush1.msra.mxu0 0.0
      %2239 = vmatprep.subr.mxu0 0.0
      %2240 = vmatpush1.msra.mxu0 0.0
      %2241 = vmatprep.subr.mxu0 0.0
      %2242 = vmatpush1.msra.mxu0 0.0
      %2243 = vmatprep.subr.mxu0 0.0
      %2244 = vmatpush1.msra.mxu0 0.0
      %2245 = vmatprep.subr.mxu0 0.0
      %2246 = vmatpush1.msra.mxu0 0.0
      %2247 = vmatprep.subr.mxu0 0.0
      %2248 = vmatpush1.msra.mxu0 0.0
      %2249 = vmatprep.subr.mxu0 0.0
      %2250 = vmatpush1.msra.mxu0 0.0
      %2251 = vmatprep.subr.mxu0 0.0
      %2252 = vmatpush1.msra.mxu0 0.0
      %2253 = vmatprep.subr.mxu0 0.0
      %2254 = vmatpush1.msra.mxu0 0.0
      %2255 = vmatprep.subr.mxu0 0.0
      %2256 = vmatpush1.msra.mxu0 0.0
      %2257 = vmatprep.subr.mxu0 0.0
      %2258 = vmatpush1.msra.mxu0 0.0
      %2259 = vmatprep.subr.mxu0 0.0
      %2260 = vmatpush1.msra.mxu0 0.0
      %2261 = vmatprep.subr.mxu0 0.0
      %2262 = vmatpush1.msra.mxu0 0.0
      %2263 = vmatprep.mubr.f32.mxu0 0.0
      %2264 = vmatmul.mubr.f32.gmra.mrb[0].mxu0 %v2188
      %v2265 = vpop.f32.mrb[0].mxu0
      %v2266 = vadd.f32 0.0, %v2265
      %v2267 = vpop.f32.mrb[0].mxu0
      %v2268 = vadd.f32 0.0, %v2267
      %2269 = vmatprep.mubr.f32.mxu0 0.0
      %2270 = vmatmul.mubr.f32.gmra.mrb[0].mxu0 %v2191
      %v2271 = vpop.f32.mrb[0].mxu0
      %v2272 = vadd.f32 0.0, %v2271
      %v2273 = vpop.f32.mrb[0].mxu0
      %v2274 = vadd.f32 0.0, %v2273
      %2275 = vmatprep.mubr.f32.mxu0 0.0
      %2276 = vmatmul.mubr.f32.gmra.mrb[0].mxu0 %v2194
      %v2277 = vpop.f32.mrb[0].mxu0
      %v2278 = vadd.f32 0.0, %v2277
      %v2279 = vpop.f32.mrb[0].mxu0
      %v2280 = vadd.f32 0.0, %v2279
      %2281 = vmatprep.mubr.f32.mxu0 0.0
      %2282 = vmatmul.mubr.f32.gmra.mrb[0].mxu0 %v2197
      %v2283 = vpop.f32.mrb[0].mxu0
      %v2284 = vadd.f32 0.0, %v2283
      %v2285 = vpop.f32.mrb[0].mxu0
      %v2286 = vadd.f32 0.0, %v2285
      %2287 = vdwg.mxu0
      %2288 = vmatprep.subr.mxu0 0.0
      %2289 = vmatpush1.msra.mxu0 %v2147
      %2290 = vmatprep.subr.mxu0 0.0
      %2291 = vmatpush1.msra.mxu0 %v2153
      %2292 = vmatprep.subr.mxu0 0.0
      %2293 = vmatpush1.msra.mxu0 %v2159
      %2294 = vmatprep.subr.mxu0 0.0
      %2295 = vmatpush1.msra.mxu0 %v2165
      %2296 = vmatprep.subr.mxu0 0.0
      %2297 = vmatpush1.msra.mxu0 0.0
      %2298 = vmatprep.subr.mxu0 0.0
      %2299 = vmatpush1.msra.mxu0 0.0
      %2300 = vmatprep.subr.mxu0 0.0
      %2301 = vmatpush1.msra.mxu0 0.0
      %2302 = vmatprep.subr.mxu0 0.0
      %2303 = vmatpush1.msra.mxu0 0.0
      %2304 = vmatprep.subr.mxu0 0.0
      %2305 = vmatpush1.msra.mxu0 0.0
      %2306 = vmatprep.subr.mxu0 0.0
      %2307 = vmatpush1.msra.mxu0 0.0
      %2308 = vmatprep.subr.mxu0 0.0
      %2309 = vmatpush1.msra.mxu0 0.0
      %2310 = vmatprep.subr.mxu0 0.0
      %2311 = vmatpush1.msra.mxu0 0.0
      %2312 = vmatprep.subr.mxu0 0.0
      %2313 = vmatpush1.msra.mxu0 0.0
      %2314 = vmatprep.subr.mxu0 0.0
      %2315 = vmatpush1.msra.mxu0 0.0
      %2316 = vmatprep.subr.mxu0 0.0
      %2317 = vmatpush1.msra.mxu0 0.0
      %2318 = vmatprep.subr.mxu0 0.0
      %2319 = vmatpush1.msra.mxu0 0.0
      %2320 = vmatprep.subr.mxu0 0.0
      %2321 = vmatpush1.msra.mxu0 0.0
      %2322 = vmatprep.subr.mxu0 0.0
      %2323 = vmatpush1.msra.mxu0 0.0
      %2324 = vmatprep.subr.mxu0 0.0
      %2325 = vmatpush1.msra.mxu0 0.0
      %2326 = vmatprep.subr.mxu0 0.0
      %2327 = vmatpush1.msra.mxu0 0.0
      %2328 = vmatprep.subr.mxu0 0.0
      %2329 = vmatpush1.msra.mxu0 0.0
      %2330 = vmatprep.subr.mxu0 0.0
      %2331 = vmatpush1.msra.mxu0 0.0
      %2332 = vmatprep.subr.mxu0 0.0
      %2333 = vmatpush1.msra.mxu0 0.0
      %2334 = vmatprep.subr.mxu0 0.0
      %2335 = vmatpush1.msra.mxu0 0.0
      %2336 = vmatprep.subr.mxu0 0.0
      %2337 = vmatpush1.msra.mxu0 0.0
      %2338 = vmatprep.subr.mxu0 0.0
      %2339 = vmatpush1.msra.mxu0 0.0
      %2340 = vmatprep.subr.mxu0 0.0
      %2341 = vmatpush1.msra.mxu0 0.0
      %2342 = vmatprep.subr.mxu0 0.0
      %2343 = vmatpush1.msra.mxu0 0.0
      %2344 = vmatprep.subr.mxu0 0.0
      %2345 = vmatpush1.msra.mxu0 0.0
      %2346 = vmatprep.subr.mxu0 0.0
      %2347 = vmatpush1.msra.mxu0 0.0
      %2348 = vmatprep.subr.mxu0 0.0
      %2349 = vmatpush1.msra.mxu0 0.0
      %2350 = vmatprep.subr.mxu0 0.0
      %2351 = vmatpush1.msra.mxu0 0.0
      %2352 = vmatprep.mubr.f32.mxu0 0.0
      %2353 = vmatmul.mubr.f32.gmra.mrb[0].mxu0 %v2188
      %v2354 = vpop.f32.mrb[0].mxu0
      %v2355 = vadd.f32 0.0, %v2354
      %v2356 = vpop.f32.mrb[0].mxu0
      %2357 = vmatprep.mubr.f32.mxu0 0.0
      %2358 = vmatmul.mubr.f32.gmra.mrb[0].mxu0 %v2191
      %v2359 = vpop.f32.mrb[0].mxu0
      %v2360 = vadd.f32 0.0, %v2359
      %v2361 = vpop.f32.mrb[0].mxu0
      %2362 = vmatprep.mubr.f32.mxu0 0.0
      %2363 = vmatmul.mubr.f32.gmra.mrb[0].mxu0 %v2194
      %v2364 = vpop.f32.mrb[0].mxu0
      %v2365 = vadd.f32 0.0, %v2364
      %v2366 = vpop.f32.mrb[0].mxu0
      %2367 = vmatprep.mubr.f32.mxu0 0.0
      %2368 = vmatmul.mubr.f32.gmra.mrb[0].mxu0 %v2197
      %v2369 = vpop.f32.mrb[0].mxu0
      %v2370 = vadd.f32 0.0, %v2369
      %v2371 = vpop.f32.mrb[0].mxu0
      %2372 = vdwg.mxu0
      %v2373 = vadd.f32 %v2125, %v2266
      %v2374 = vadd.f32 %v2126, %v2268
      %v2375 = vadd.f32 %v2127, %v2355
      %v2376 = vadd.f32 %v2128, %v2272
      %v2377 = vadd.f32 %v2129, %v2274
      %v2378 = vadd.f32 %v2130, %v2360
      %v2379 = vadd.f32 %v2131, %v2278
      %v2380 = vadd.f32 %v2132, %v2280
      %v2381 = vadd.f32 %v2133, %v2365
      %v2382 = vadd.f32 %v2134, %v2284
      %v2383 = vadd.f32 %v2135, %v2286
      %v2384 = vadd.f32 %v2136, %v2370
      %v2385 = vld [vmem:[%s2] sm:$0xff]
      %v2386 = vld [vmem:[%s2 + $0x8] sm:$0xff]
      %v2387 = vld [vmem:[%s2 + $0x10] sm:$0xff]
      %v2388 = vld [vmem:[%s2 + $0x18] sm:$0xff]
      %2390 = vset.pattern.permute.xlu0 0
      %2391 = vperm.xlu0 %2390, %v2385
      %v2392 = vpop.permute.xlu0 %2391
      %2395 = vset.pattern.permute.xlu0 0
      %2396 = vperm.xlu0 %2395, %v2386
      %v2397 = vpop.permute.xlu0 %2396
      %2400 = vset.pattern.permute.xlu0 0
      %2401 = vperm.xlu0 %2400, %v2387
      %v2402 = vpop.permute.xlu0 %2401
      %2405 = vset.pattern.permute.xlu0 0
      %2406 = vperm.xlu0 %2405, %v2388
      %v2407 = vpop.permute.xlu0 %2406
      %v2409 = vmul.f32 %v2373, %v2392
      %v2410 = vmul.f32 %v2374, %v2392
      %v2411 = vmul.f32 %v2375, %v2392
      %v2412 = vmul.f32 %v2376, %v2397
      %v2413 = vmul.f32 %v2377, %v2397
      %v2414 = vmul.f32 %v2378, %v2397
      %v2415 = vmul.f32 %v2379, %v2402
      %v2416 = vmul.f32 %v2380, %v2402
      %v2417 = vmul.f32 %v2381, %v2402
      %v2418 = vmul.f32 %v2382, %v2407
      %v2419 = vmul.f32 %v2383, %v2407
      %v2420 = vmul.f32 %v2384, %v2407
      %v2421 = vld [vmem:[%s3] sm:$0xff]
      %v2422 = vld [vmem:[%s3 + $0x8] sm:$0xff]
      %v2423 = vld [vmem:[%s3 + $0x10] sm:$0xff]
      %v2424 = vld [vmem:[%s3 + $0x18] sm:$0xff]
      %2426 = vset.pattern.permute.xlu0 0
      %2427 = vperm.xlu0 %2426, %v2421
      %v2428 = vpop.permute.xlu0 %2427
      %2431 = vset.pattern.permute.xlu0 0
      %2432 = vperm.xlu0 %2431, %v2422
      %v2433 = vpop.permute.xlu0 %2432
      %2436 = vset.pattern.permute.xlu0 0
      %2437 = vperm.xlu0 %2436, %v2423
      %v2438 = vpop.permute.xlu0 %2437
      %2441 = vset.pattern.permute.xlu0 0
      %2442 = vperm.xlu0 %2441, %v2424
      %v2443 = vpop.permute.xlu0 %2442
      %v2445 = vadd.f32 %v2409, %v2428
      %v2446 = vadd.f32 %v2410, %v2428
      %v2447 = vadd.f32 %v2411, %v2428
      %v2448 = vadd.f32 %v2412, %v2433
      %v2449 = vadd.f32 %v2413, %v2433
      %v2450 = vadd.f32 %v2414, %v2433
      %v2451 = vadd.f32 %v2415, %v2438
      %v2452 = vadd.f32 %v2416, %v2438
      %v2453 = vadd.f32 %v2417, %v2438
      %v2454 = vadd.f32 %v2418, %v2443
      %v2455 = vadd.f32 %v2419, %v2443
      %v2456 = vadd.f32 %v2420, %v2443
      %v2457 = vxor.u32 %v2445, 2147483648
      %v2458 = vxor.u32 %v2446, 2147483648
      %v2459 = vxor.u32 %v2447, 2147483648
      %v2460 = vxor.u32 %v2448, 2147483648
      %v2461 = vxor.u32 %v2449, 2147483648
      %v2462 = vxor.u32 %v2450, 2147483648
      %v2463 = vxor.u32 %v2451, 2147483648
      %v2464 = vxor.u32 %v2452, 2147483648
      %v2465 = vxor.u32 %v2453, 2147483648
      %v2466 = vxor.u32 %v2454, 2147483648
      %v2467 = vxor.u32 %v2455, 2147483648
      %v2468 = vxor.u32 %v2456, 2147483648
      %v2469 = vmul.f32 %v2457, 1.442695
      %v2470 = vpow.pop %v2469
      %v2471 = vmul.f32 %v2458, 1.442695
      %v2472 = vpow.pop %v2471
      %v2473 = vmul.f32 %v2459, 1.442695
      %v2474 = vpow.pop %v2473
      %v2475 = vmul.f32 %v2460, 1.442695
      %v2476 = vpow.pop %v2475
      %v2477 = vmul.f32 %v2461, 1.442695
      %v2478 = vpow.pop %v2477
      %v2479 = vmul.f32 %v2462, 1.442695
      %v2480 = vpow.pop %v2479
      %v2481 = vmul.f32 %v2463, 1.442695
      %v2482 = vpow.pop %v2481
      %v2483 = vmul.f32 %v2464, 1.442695
      %v2484 = vpow.pop %v2483
      %v2485 = vmul.f32 %v2465, 1.442695
      %v2486 = vpow.pop %v2485
      %v2487 = vmul.f32 %v2466, 1.442695
      %v2488 = vpow.pop %v2487
      %v2489 = vmul.f32 %v2467, 1.442695
      %v2490 = vpow.pop %v2489
      %v2491 = vmul.f32 %v2468, 1.442695
      %v2492 = vpow.pop %v2491
      %v2493 = vadd.f32 %v2470, 1.0
      %v2494 = vadd.f32 %v2472, 1.0
      %v2495 = vadd.f32 %v2474, 1.0
      %v2496 = vadd.f32 %v2476, 1.0
      %v2497 = vadd.f32 %v2478, 1.0
      %v2498 = vadd.f32 %v2480, 1.0
      %v2499 = vadd.f32 %v2482, 1.0
      %v2500 = vadd.f32 %v2484, 1.0
      %v2501 = vadd.f32 %v2486, 1.0
      %v2502 = vadd.f32 %v2488, 1.0
      %v2503 = vadd.f32 %v2490, 1.0
      %v2504 = vadd.f32 %v2492, 1.0
      %v2505 = vrcp.pop %v2493
      %v2506 = vmul.f32 1.0, %v2505
      %v2507 = vrcp.pop %v2494
      %v2508 = vmul.f32 1.0, %v2507
      %v2509 = vrcp.pop %v2495
      %v2510 = vmul.f32 1.0, %v2509
      %v2511 = vrcp.pop %v2496
      %v2512 = vmul.f32 1.0, %v2511
      %v2513 = vrcp.pop %v2497
      %v2514 = vmul.f32 1.0, %v2513
      %v2515 = vrcp.pop %v2498
      %v2516 = vmul.f32 1.0, %v2515
      %v2517 = vrcp.pop %v2499
      %v2518 = vmul.f32 1.0, %v2517
      %v2519 = vrcp.pop %v2500
      %v2520 = vmul.f32 1.0, %v2519
      %v2521 = vrcp.pop %v2501
      %v2522 = vmul.f32 1.0, %v2521
      %v2523 = vrcp.pop %v2502
      %v2524 = vmul.f32 1.0, %v2523
      %v2525 = vrcp.pop %v2503
      %v2526 = vmul.f32 1.0, %v2525
      %v2527 = vrcp.pop %v2504
      %v2528 = vmul.f32 1.0, %v2527
      %v2529 = vmul.f32 %v2445, %v2506
      %v2530 = vmul.f32 %v2446, %v2508
      %v2531 = vmul.f32 %v2447, %v2510
      %v2532 = vmul.f32 %v2448, %v2512
      %v2533 = vmul.f32 %v2449, %v2514
      %v2534 = vmul.f32 %v2450, %v2516
      %v2535 = vmul.f32 %v2451, %v2518
      %v2536 = vmul.f32 %v2452, %v2520
      %v2537 = vmul.f32 %v2453, %v2522
      %v2538 = vmul.f32 %v2454, %v2524
      %v2539 = vmul.f32 %v2455, %v2526
      %v2540 = vmul.f32 %v2456, %v2528
      %2541 = vst [vmem:[%s197] sm:$0xff] %v2529
      %2542 = vst [vmem:[%s197 + $0x8] sm:$0xff] %v2530
      %2543 = vst.msk [vmem:[%s197 + $0x10] sm:$0xff] %vm276, %v2531
      %2544 = vst [vmem:[%s197 + $0x18] sm:$0xff] %v2532
      %2545 = vst [vmem:[%s197 + $0x20] sm:$0xff] %v2533
      %2546 = vst.msk [vmem:[%s197 + $0x28] sm:$0xff] %vm276, %v2534
      %2547 = vst [vmem:[%s197 + $0x30] sm:$0xff] %v2535
      %2548 = vst [vmem:[%s197 + $0x38] sm:$0xff] %v2536
      %2549 = vst.msk [vmem:[%s197 + $0x40] sm:$0xff] %vm276, %v2537
      %2550 = vst [vmem:[%s197 + $0x48] sm:$0xff] %v2538
      %2551 = vst [vmem:[%s197 + $0x50] sm:$0xff] %v2539
      %2552 = vst.msk [vmem:[%s197 + $0x58] sm:$0xff] %vm276, %v2540
      %p2553 = scmp.lt.s32.totalorder %s15, 1
      %s2554 = scalar_select %p2553, %s15, 1
      %s2555 = smul.addr %s2554, 12
      %s2556 = smul.addr %s2555, 8
      %s2557 = scalar_lea.vmem %s4, %s2556
      // Predicated region
      $region37: #{c3_b_cbam_forward.6} parent=35 // pred_check
        %p2558 = pneg %p122
      $region38: #{c3_b_cbam_forward.6} parent=35 // pred_check_branch
        %2560 = sbr.rel (%p2558) target = $region40
      $region39: #{c3_b_cbam_forward.6} parent=35 // pred_region
        _
      $region40: #{c3_b_cbam_forward.6} parent=35 // pred_fallthru
        _
    $region36: #{c3_b_cbam_forward.6} parent=5 // pred_fallthru
      _
    %p2561 = scmp.le.s32.totalorder 2, %s10
    // Predicated region
    $region41: #{c3_b_cbam_forward.6} parent=5 // pred_check
      %p2562 = pneg %p2561
    $region42: #{c3_b_cbam_forward.6} parent=5 // pred_check_branch
      %2564 = sbr.rel (%p2562) target = $region44
    $region43: #{c3_b_cbam_forward.6} parent=5 // pred_region
      %s2565 = ssub.s32 %s10, 2
      // Predicated region
      $region45: #{c3_b_cbam_forward.6} parent=43 // pred_check
        %p2566 = pneg %p128
      $region46: #{c3_b_cbam_forward.6} parent=43 // pred_check_branch
        %2568 = sbr.rel (%p2566) target = $region48
      $region47: #{c3_b_cbam_forward.6} parent=43 // pred_region
        %p2569 = scmp.lt.s32.totalorder %s16, 1
        %s2570 = scalar_select %p2569, %s16, 1
        %s2571 = smul.addr %s2570, 12
        %s2572 = smul.addr %s2571, 8
        %s2573 = scalar_lea.vmem %s4, %s2572
      $region48: #{c3_b_cbam_forward.6} parent=43 // pred_fallthru
        _
    $region44: #{c3_b_cbam_forward.6} parent=5 // pred_fallthru
      _
  $region6: #{c3_b_cbam_forward.6} parent=0 // loop_footer
    %s14 = sadd.s32 1, %s10
  $region7: #{c3_b_cbam_forward.6} parent=0 // loop_footer_branch
    %9 = sbr.rel target = $region3
  $region8: #{c3_b_cbam_forward.6} parent=0 // loop_exit
    _

// kernel: c3_b_cbam_forward.7
$region0: #{c3_b_cbam_forward.7}
  #allocation0 [shape = 'u32[]', space=smem, size = 0x4, offset = 0x4, fixed_abs, tag = 'smem constant byte address 0x4 - core index']
  #allocation1 [shape = 'u32[144,128]{1,0:T(1,128)}', space=vmem, size = 0x12000, scoped, tag = 'internal scratch']
  %s0 = inlined_call_operand.vmem [shape: f32[2,32,256], index: 0, kind: input, shape index: {}]
  %s1 = inlined_call_operand.vmem [shape: f32[2,32], index: 1, kind: input, shape index: {}]
  %s2 = inlined_call_operand.vmem [shape: f32[2,1], index: 2, kind: input, shape index: {}]
  %s3 = inlined_call_operand.vmem [shape: f32[32,2], index: 3, kind: input, shape index: {}]
  %s4 = inlined_call_operand.vmem [shape: f32[32,1], index: 4, kind: input, shape index: {}]
  %s5 = inlined_call_operand.vmem [shape: f32[2,32,256], index: 5, kind: output, shape index: {0}]
  %s6 = inlined_call_operand.vmem [shape: f32[2,2,256], index: 6, kind: output, shape index: {1}]
  %7 = xla_tuple %s5, %s6
  %s8 = sld [smem:[#allocation0]]
  $region61: #{c3_b_cbam_forward.7} parent=0
    _
  %s10 = ssub.s32 1, %s8
  %s11 = scalar_select 0, %s10, %s8
  loop: start=0, step=1, limit=4
  $region2: #{c3_b_cbam_forward.7} parent=0 // loop_pre_header
    _
  $region3: #{c3_b_cbam_forward.7} parent=0 // loop_header
    %s13 = sphi 0, %s17
    %p14 = scmp.ge.s32.totalorder %s13, 4
    %s23 = sphi 0, %s25
    %s26 = sphi 0, %s23
    %s27 = sphi 0, %s26
    %s43 = sphi 0, %s27
    %s47 = sphi 0, %s47
    %s49 = sphi 0, %s47
    %s50 = sphi 0, %s49
    %s64 = sphi 0, %s50
    %s68 = sphi 0, %s68
    %s70 = sphi 0, %s68
    %s71 = sphi 0, %s70
    %s85 = sphi 0, %s71
    %s89 = sphi 0, %s89
    %s91 = sphi 0, %s89
    %s92 = sphi 0, %s91
    %s106 = sphi 0, %s92
    %s110 = sphi 0, %s110
    %s112 = sphi 0, %s110
    %s113 = sphi 0, %s112
    %s127 = sphi 0, %s113
    %s133 = sphi 0, %s135
    %s136 = sphi 0, %s133
    %s137 = sphi 0, %s136
    %s153 = sphi 0, %s137
    %s159 = sphi 0, %s161
    %s162 = sphi 0, %s159
    %s163 = sphi 0, %s162
    %s179 = sphi 0, %s163
  $region4: #{c3_b_cbam_forward.7} parent=0 // loop_header_branch
    %16 = sbr.rel (%p14) target = $region8
  $region5: #{c3_b_cbam_forward.7} parent=0 // loop_body
    %s18 = ssub.s32 %s13, 1
    %s19 = ssub.s32 %s13, 2
    %s20 = sadd.s32 %s13, 1
    %s21 = ssub.s32 %s13, %s20
    %p22 = scmp.eq.s32.totalorder %s21, 0
    %s24 = sadd.s32 %s23, 1
    %s25 = scalar_select %p22, %s23, %s24
    %p28 = pneg %p22
    %p29 = scmp.eq.s32.totalorder %s13, 1
    %p30 = por %p28, %p29
    %p31 = scmp.ne.s32.totalorder %s23, %s26
    %p32 = scmp.eq.s32.totalorder %s13, 0
    %p33 = por %p31, %p32
    %p34 = scmp.ne.s32.totalorder %s23, %s26
    %p35 = scmp.eq.s32.totalorder %s18, 1
    %p36 = por %p34, %p35
    %p37 = scmp.ne.s32.totalorder %s26, %s27
    %p38 = scmp.eq.s32.totalorder %s18, 0
    %p39 = por %p37, %p38
    %p40 = scmp.ne.s32.totalorder %s26, %s27
    %p41 = scmp.eq.s32.totalorder %s19, 1
    %p42 = por %p40, %p41
    %p44 = scmp.ne.s32.totalorder %s27, %s43
    %p45 = scmp.eq.s32.totalorder %s19, 0
    %p46 = por %p44, %p45
    %s48 = sadd.s32 %s47, 1
    %p51 = scmp.eq.s32.totalorder %s13, 1
    %p52 = scmp.ne.s32.totalorder %s47, %s49
    %p53 = scmp.eq.s32.totalorder %s13, 0
    %p54 = por %p52, %p53
    %p55 = scmp.ne.s32.totalorder %s47, %s49
    %p56 = scmp.eq.s32.totalorder %s18, 1
    %p57 = por %p55, %p56
    %p58 = scmp.ne.s32.totalorder %s49, %s50
    %p59 = scmp.eq.s32.totalorder %s18, 0
    %p60 = por %p58, %p59
    %p61 = scmp.ne.s32.totalorder %s49, %s50
    %p62 = scmp.eq.s32.totalorder %s19, 1
    %p63 = por %p61, %p62
    %p65 = scmp.ne.s32.totalorder %s50, %s64
    %p66 = scmp.eq.s32.totalorder %s19, 0
    %p67 = por %p65, %p66
    %s69 = sadd.s32 %s68, 1
    %p72 = scmp.eq.s32.totalorder %s13, 1
    %p73 = scmp.ne.s32.totalorder %s68, %s70
    %p74 = scmp.eq.s32.totalorder %s13, 0
    %p75 = por %p73, %p74
    %p76 = scmp.ne.s32.totalorder %s68, %s70
    %p77 = scmp.eq.s32.totalorder %s18, 1
    %p78 = por %p76, %p77
    %p79 = scmp.ne.s32.totalorder %s70, %s71
    %p80 = scmp.eq.s32.totalorder %s18, 0
    %p81 = por %p79, %p80
    %p82 = scmp.ne.s32.totalorder %s70, %s71
    %p83 = scmp.eq.s32.totalorder %s19, 1
    %p84 = por %p82, %p83
    %p86 = scmp.ne.s32.totalorder %s71, %s85
    %p87 = scmp.eq.s32.totalorder %s19, 0
    %p88 = por %p86, %p87
    %s90 = sadd.s32 %s89, 1
    %p93 = scmp.eq.s32.totalorder %s13, 1
    %p94 = scmp.ne.s32.totalorder %s89, %s91
    %p95 = scmp.eq.s32.totalorder %s13, 0
    %p96 = por %p94, %p95
    %p97 = scmp.ne.s32.totalorder %s89, %s91
    %p98 = scmp.eq.s32.totalorder %s18, 1
    %p99 = por %p97, %p98
    %p100 = scmp.ne.s32.totalorder %s91, %s92
    %p101 = scmp.eq.s32.totalorder %s18, 0
    %p102 = por %p100, %p101
    %p103 = scmp.ne.s32.totalorder %s91, %s92
    %p104 = scmp.eq.s32.totalorder %s19, 1
    %p105 = por %p103, %p104
    %p107 = scmp.ne.s32.totalorder %s92, %s106
    %p108 = scmp.eq.s32.totalorder %s19, 0
    %p109 = por %p107, %p108
    %s111 = sadd.s32 %s110, 1
    %p114 = scmp.eq.s32.totalorder %s13, 1
    %p115 = scmp.ne.s32.totalorder %s110, %s112
    %p116 = scmp.eq.s32.totalorder %s13, 0
    %p117 = por %p115, %p116
    %p118 = scmp.ne.s32.totalorder %s110, %s112
    %p119 = scmp.eq.s32.totalorder %s18, 1
    %p120 = por %p118, %p119
    %p121 = scmp.ne.s32.totalorder %s112, %s113
    %p122 = scmp.eq.s32.totalorder %s18, 0
    %p123 = por %p121, %p122
    %p124 = scmp.ne.s32.totalorder %s112, %s113
    %p125 = scmp.eq.s32.totalorder %s19, 1
    %p126 = por %p124, %p125
    %p128 = scmp.ne.s32.totalorder %s113, %s127
    %p129 = scmp.eq.s32.totalorder %s19, 0
    %p130 = por %p128, %p129
    %s131 = ssub.s32 %s13, %s20
    %p132 = scmp.eq.s32.totalorder %s131, 0
    %s134 = sadd.s32 %s133, 1
    %s135 = scalar_select %p132, %s133, %s134
    %p138 = pneg %p132
    %p139 = scmp.eq.s32.totalorder %s13, 1
    %p140 = por %p138, %p139
    %p141 = scmp.ne.s32.totalorder %s133, %s136
    %p142 = scmp.eq.s32.totalorder %s13, 0
    %p143 = por %p141, %p142
    %p144 = scmp.ne.s32.totalorder %s133, %s136
    %p145 = scmp.eq.s32.totalorder %s18, 1
    %p146 = por %p144, %p145
    %p147 = scmp.ne.s32.totalorder %s136, %s137
    %p148 = scmp.eq.s32.totalorder %s18, 0
    %p149 = por %p147, %p148
    %p150 = scmp.ne.s32.totalorder %s136, %s137
    %p151 = scmp.eq.s32.totalorder %s19, 1
    %p152 = por %p150, %p151
    %p154 = scmp.ne.s32.totalorder %s137, %s153
    %p155 = scmp.eq.s32.totalorder %s19, 0
    %p156 = por %p154, %p155
    %s157 = ssub.s32 %s13, %s20
    %p158 = scmp.eq.s32.totalorder %s157, 0
    %s160 = sadd.s32 %s159, 1
    %s161 = scalar_select %p158, %s159, %s160
    %p164 = pneg %p158
    %p165 = scmp.eq.s32.totalorder %s13, 1
    %p166 = por %p164, %p165
    %p167 = scmp.ne.s32.totalorder %s159, %s162
    %p168 = scmp.eq.s32.totalorder %s13, 0
    %p169 = por %p167, %p168
    %p170 = scmp.ne.s32.totalorder %s159, %s162
    %p171 = scmp.eq.s32.totalorder %s18, 1
    %p172 = por %p170, %p171
    %p173 = scmp.ne.s32.totalorder %s162, %s163
    %p174 = scmp.eq.s32.totalorder %s18, 0
    %p175 = por %p173, %p174
    %p176 = scmp.ne.s32.totalorder %s162, %s163
    %p177 = scmp.eq.s32.totalorder %s19, 1
    %p178 = por %p176, %p177
    %p180 = scmp.ne.s32.totalorder %s163, %s179
    %p181 = scmp.eq.s32.totalorder %s19, 0
    %p182 = por %p180, %p181
    %p183 = scmp.le.s32.totalorder 1, %s13
    %p184 = scmp.lt.s32.totalorder %s13, 3
    %p185 = pnand %p183, %p184
    %p186 = pneg %p185
    // Predicated region
    $region9: #{c3_b_cbam_forward.7} parent=5 // pred_check
      _
    $region10: #{c3_b_cbam_forward.7} parent=5 // pred_check_branch
      %188 = sbr.rel (%p185) target = $region12
    $region11: #{c3_b_cbam_forward.7} parent=5 // pred_region
      %s189 = ssub.s32 %s13, 1
      // Predicated region
      $region13: #{c3_b_cbam_forward.7} parent=11 // pred_check
        %p190 = pneg %p60
      $region14: #{c3_b_cbam_forward.7} parent=11 // pred_check_branch
        %192 = sbr.rel (%p190) target = $region16
      $region15: #{c3_b_cbam_forward.7} parent=11 // pred_region
        _
      $region16: #{c3_b_cbam_forward.7} parent=11 // pred_fallthru
        _
      // Predicated region
      $region17: #{c3_b_cbam_forward.7} parent=11 // pred_check
        %p193 = pneg %p81
      $region18: #{c3_b_cbam_forward.7} parent=11 // pred_check_branch
        %195 = sbr.rel (%p193) target = $region20
      $region19: #{c3_b_cbam_forward.7} parent=11 // pred_region
        _
      $region20: #{c3_b_cbam_forward.7} parent=11 // pred_fallthru
        _
      // Predicated region
      $region21: #{c3_b_cbam_forward.7} parent=11 // pred_check
        %p196 = pneg %p102
      $region22: #{c3_b_cbam_forward.7} parent=11 // pred_check_branch
        %198 = sbr.rel (%p196) target = $region24
      $region23: #{c3_b_cbam_forward.7} parent=11 // pred_region
        _
      $region24: #{c3_b_cbam_forward.7} parent=11 // pred_fallthru
        _
      // Predicated region
      $region25: #{c3_b_cbam_forward.7} parent=11 // pred_check
        %p199 = pneg %p123
      $region26: #{c3_b_cbam_forward.7} parent=11 // pred_check_branch
        %201 = sbr.rel (%p199) target = $region28
      $region27: #{c3_b_cbam_forward.7} parent=11 // pred_region
        _
      $region28: #{c3_b_cbam_forward.7} parent=11 // pred_fallthru
        _
    $region12: #{c3_b_cbam_forward.7} parent=5 // pred_fallthru
      _
    %p202 = scmp.lt.s32.totalorder %s13, 2
    // Predicated region
    $region29: #{c3_b_cbam_forward.7} parent=5 // pred_check
      %p203 = pneg %p202
    $region30: #{c3_b_cbam_forward.7} parent=5 // pred_check_branch
      %205 = sbr.rel (%p203) target = $region32
    $region31: #{c3_b_cbam_forward.7} parent=5 // pred_region
      // Predicated region
      $region33: #{c3_b_cbam_forward.7} parent=31 // pred_check
        %p206 = pneg %p33
      $region34: #{c3_b_cbam_forward.7} parent=31 // pred_check_branch
        %208 = sbr.rel (%p206) target = $region36
      $region35: #{c3_b_cbam_forward.7} parent=31 // pred_region
        %p209 = scmp.lt.s32.totalorder %s13, 1
        %s210 = scalar_select %p209, %s13, 1
        %s211 = smul.addr %s210, 8
        %s212 = smul.addr %s211, 8
        %s213 = scalar_lea.vmem %s0, %s212
      $region36: #{c3_b_cbam_forward.7} parent=31 // pred_fallthru
        _
    $region32: #{c3_b_cbam_forward.7} parent=5 // pred_fallthru
      _
    %p214 = scmp.le.s32.totalorder 1, %s13
    %p215 = scmp.lt.s32.totalorder %s13, 3
    %p216 = pnand %p214, %p215
    %p217 = pneg %p216
    // Predicated region
    $region37: #{c3_b_cbam_forward.7} parent=5 // pred_check
      _
    $region38: #{c3_b_cbam_forward.7} parent=5 // pred_check_branch
      %219 = sbr.rel (%p216) target = $region40
    $region39: #{c3_b_cbam_forward.7} parent=5 // pred_region
      %s220 = ssub.s32 %s13, 1
      %p221 = scmp.lt.s32.totalorder %s18, 1
      %s222 = scalar_select %p221, %s18, 1
      %s223 = smul.addr %s222, 8
      %s224 = smul.addr %s223, 8
      %s225 = scalar_lea.vmem %s0, %s224
      %p226 = pneg %p39
      %p227 = pneg %p36
      %p228 = pneg %p60
      %p229 = pneg %p57
      %p230 = pneg %p81
      %p231 = pneg %p78
      %p232 = pneg %p102
      %p233 = pneg %p99
      %p234 = pneg %p123
      %p235 = pneg %p120
      %p236 = pneg %p149
      %p237 = pneg %p146
      %p238 = scmp.lt.s32.totalorder %s18, 1
      %s239 = scalar_select %p238, %s18, 1
      %s240 = smul.addr %s239, 8
      %s241 = smul.addr %s240, 8
      %s242 = scalar_lea.vmem %s5, %s241
      %p243 = pneg %p175
      %p244 = pneg %p172
      %p245 = scmp.lt.s32.totalorder %s18, 1
      %s246 = scalar_select %p245, %s18, 1
      %s247 = smul.addr %s246, 2
      %s248 = smul.addr %s247, 2
      %s249 = scalar_lea.vmem %s6, %s248
      %p250 = scmp.lt.s32.totalorder %s18, 1
      %s251 = scalar_select %p250, %s18, 1
      %s252 = smul.addr %s251, 8
      %s253 = smul.addr %s252, 8
      %s254 = scalar_lea.vmem %s0, %s253
      %p255 = scmp.lt.s32.totalorder %s18, 1
      %s256 = scalar_select %p255, %s18, 1
      %s257 = smul.addr %s256, 8
      %s258 = smul.addr %s257, 8
      %s259 = scalar_lea.vmem %s5, %s258
      %p260 = scmp.lt.s32.totalorder %s18, 1
      %s261 = scalar_select %p260, %s18, 1
      %s262 = smul.addr %s261, 2
      %s263 = smul.addr %s262, 2
      %s264 = scalar_lea.vmem %s6, %s263
      %v265 = vld [vmem:[%s254] sm:$0xff]
      %v266 = vld [vmem:[%s254 + $0x8] sm:$0xff]
      %v267 = vld [vmem:[%s254 + $0x10] sm:$0xff]
      %v268 = vld [vmem:[%s254 + $0x18] sm:$0xff]
      %v269 = vld [vmem:[%s254 + $0x20] sm:$0xff]
      %v270 = vld [vmem:[%s254 + $0x28] sm:$0xff]
      %v271 = vld [vmem:[%s254 + $0x30] sm:$0xff]
      %v272 = vld [vmem:[%s254 + $0x38] sm:$0xff]
      %v273 = vadd.f32 %v265, %v266
      %274 = vadd.xlane.f32.xlu0 %v273
      %v275 = vpop.xlane.xlu0 %274
      %v276 = vadd.f32 %v267, %v268
      %277 = vadd.xlane.f32.xlu0 %v276
      %v278 = vpop.xlane.xlu0 %277
      %v279 = vadd.f32 %v269, %v270
      %280 = vadd.xlane.f32.xlu0 %v279
      %v281 = vpop.xlane.xlu0 %280
      %v282 = vadd.f32 %v271, %v272
      %283 = vadd.xlane.f32.xlu0 %v282
      %v284 = vpop.xlane.xlu0 %283
      %v285 = vrcp.pop 256.0
      %v286 = vmul.f32 %v275, %v285
      %v287 = vmul.f32 %v278, %v285
      %v288 = vmul.f32 %v281, %v285
      %v289 = vmul.f32 %v284, %v285
      %v290 = vmax.f32 %v265, %v266
      %291 = vmax.xlane.f32.xlu0 %v290
      %v292 = vpop.xlane.xlu0 %291
      %v293 = vmax.f32 %v267, %v268
      %294 = vmax.xlane.f32.xlu0 %v293
      %v295 = vpop.xlane.xlu0 %294
      %v296 = vmax.f32 %v269, %v270
      %297 = vmax.xlane.f32.xlu0 %v296
      %v298 = vpop.xlane.xlu0 %297
      %v299 = vmax.f32 %v271, %v272
      %300 = vmax.xlane.f32.xlu0 %v299
      %v301 = vpop.xlane.xlu0 %300
      %v302 = vld [vmem:[%s1] sm:$0x3]
      %v303 = vld [vmem:[%s2] sm:$0x3]
      %vm304 = vcmask 261120
      %v306 = vsel %vm304, %v302, 0
      %308 = vmatprep.subr.mxu0 0.0
      %309 = vmatpush1.msra.mxu0 %v286
      %310 = vmatprep.subr.mxu0 0.0
      %311 = vmatpush1.msra.mxu0 %v287
      %312 = vmatprep.subr.mxu0 0.0
      %313 = vmatpush1.msra.mxu0 %v288
      %314 = vmatprep.subr.mxu0 0.0
      %315 = vmatpush1.msra.mxu0 %v289
      %316 = vmatprep.subr.mxu0 0.0
      %317 = vmatpush1.msra.mxu0 0.0
      %318 = vmatprep.subr.mxu0 0.0
      %319 = vmatpush1.msra.mxu0 0.0
      %320 = vmatprep.subr.mxu0 0.0
      %321 = vmatpush1.msra.mxu0 0.0
      %322 = vmatprep.subr.mxu0 0.0
      %323 = vmatpush1.msra.mxu0 0.0
      %324 = vmatprep.subr.mxu0 0.0
      %325 = vmatpush1.msra.mxu0 0.0
      %326 = vmatprep.subr.mxu0 0.0
      %327 = vmatpush1.msra.mxu0 0.0
      %328 = vmatprep.subr.mxu0 0.0
      %329 = vmatpush1.msra.mxu0 0.0
      %330 = vmatprep.subr.mxu0 0.0
      %331 = vmatpush1.msra.mxu0 0.0
      %332 = vmatprep.subr.mxu0 0.0
      %333 = vmatpush1.msra.mxu0 0.0
      %334 = vmatprep.subr.mxu0 0.0
      %335 = vmatpush1.msra.mxu0 0.0
      %336 = vmatprep.subr.mxu0 0.0
      %337 = vmatpush1.msra.mxu0 0.0
      %338 = vmatprep.subr.mxu0 0.0
      %339 = vmatpush1.msra.mxu0 0.0
      %340 = vmatprep.subr.mxu0 0.0
      %341 = vmatpush1.msra.mxu0 0.0
      %342 = vmatprep.subr.mxu0 0.0
      %343 = vmatpush1.msra.mxu0 0.0
      %344 = vmatprep.subr.mxu0 0.0
      %345 = vmatpush1.msra.mxu0 0.0
      %346 = vmatprep.subr.mxu0 0.0
      %347 = vmatpush1.msra.mxu0 0.0
      %348 = vmatprep.subr.mxu0 0.0
      %349 = vmatpush1.msra.mxu0 0.0
      %350 = vmatprep.subr.mxu0 0.0
      %351 = vmatpush1.msra.mxu0 0.0
      %352 = vmatprep.subr.mxu0 0.0
      %353 = vmatpush1.msra.mxu0 0.0
      %354 = vmatprep.subr.mxu0 0.0
      %355 = vmatpush1.msra.mxu0 0.0
      %356 = vmatprep.subr.mxu0 0.0
      %357 = vmatpush1.msra.mxu0 0.0
      %358 = vmatprep.subr.mxu0 0.0
      %359 = vmatpush1.msra.mxu0 0.0
      %360 = vmatprep.subr.mxu0 0.0
      %361 = vmatpush1.msra.mxu0 0.0
      %362 = vmatprep.subr.mxu0 0.0
      %363 = vmatpush1.msra.mxu0 0.0
      %364 = vmatprep.subr.mxu0 0.0
      %365 = vmatpush1.msra.mxu0 0.0
      %366 = vmatprep.subr.mxu0 0.0
      %367 = vmatpush1.msra.mxu0 0.0
      %368 = vmatprep.subr.mxu0 0.0
      %369 = vmatpush1.msra.mxu0 0.0
      %370 = vmatprep.subr.mxu0 0.0
      %371 = vmatpush1.msra.mxu0 0.0
      %372 = vmatprep.mubr.f32.mxu0 0.0
      %373 = vmatmul.mubr.f32.gmra.mrb[0].mxu0 %v306
      %v374 = vpop.f32.mrb[0].mxu0
      %v375 = vadd.f32 %v303, %v374
      %v376 = vpop.f32.mrb[0].mxu0
      %377 = vdwg.mxu0
      %v378 = vmax.f32 %v375, 0.0
      %v379 = vld [vmem:[%s3] sm:$0xff]
      %v380 = vld [vmem:[%s3 + $0x8] sm:$0xff]
      %v381 = vld [vmem:[%s3 + $0x10] sm:$0xff]
      %v382 = vld [vmem:[%s3 + $0x18] sm:$0xff]
      %v383 = vld [vmem:[%s4] sm:$0xff]
      %v384 = vld [vmem:[%s4 + $0x8] sm:$0xff]
      %v385 = vld [vmem:[%s4 + $0x10] sm:$0xff]
      %v386 = vld [vmem:[%s4 + $0x18] sm:$0xff]
      %vm387 = vcmask 15360
      %v389 = vsel %vm387, %v379, 0
      %v392 = vsel %vm387, %v380, 0
      %v395 = vsel %vm387, %v381, 0
      %v398 = vsel %vm387, %v382, 0
      %vm400 = vcmask 1041408
      %v402 = vsel %vm400, %v378, 0
      %404 = vmatprep.subr.mxu0 0.0
      %405 = vmatpush1.msra.mxu0 %v402
      %406 = vmatprep.subr.mxu0 0.0
      %407 = vmatpush1.msra.mxu0 0.0
      %408 = vmatprep.subr.mxu0 0.0
      %409 = vmatpush1.msra.mxu0 0.0
      %410 = vmatprep.subr.mxu0 0.0
      %411 = vmatpush1.msra.mxu0 0.0
      %412 = vmatprep.subr.mxu0 0.0
      %413 = vmatpush1.msra.mxu0 0.0
      %414 = vmatprep.subr.mxu0 0.0
      %415 = vmatpush1.msra.mxu0 0.0
      %416 = vmatprep.subr.mxu0 0.0
      %417 = vmatpush1.msra.mxu0 0.0
      %418 = vmatprep.subr.mxu0 0.0
      %419 = vmatpush1.msra.mxu0 0.0
      %420 = vmatprep.subr.mxu0 0.0
      %421 = vmatpush1.msra.mxu0 0.0
      %422 = vmatprep.subr.mxu0 0.0
      %423 = vmatpush1.msra.mxu0 0.0
      %424 = vmatprep.subr.mxu0 0.0
      %425 = vmatpush1.msra.mxu0 0.0
      %426 = vmatprep.subr.mxu0 0.0
      %427 = vmatpush1.msra.mxu0 0.0
      %428 = vmatprep.subr.mxu0 0.0
      %429 = vmatpush1.msra.mxu0 0.0
      %430 = vmatprep.subr.mxu0 0.0
      %431 = vmatpush1.msra.mxu0 0.0
      %432 = vmatprep.subr.mxu0 0.0
      %433 = vmatpush1.msra.mxu0 0.0
      %434 = vmatprep.subr.mxu0 0.0
      %435 = vmatpush1.msra.mxu0 0.0
      %436 = vmatprep.subr.mxu0 0.0
      %437 = vmatpush1.msra.mxu0 0.0
      %438 = vmatprep.subr.mxu0 0.0
      %439 = vmatpush1.msra.mxu0 0.0
      %440 = vmatprep.subr.mxu0 0.0
      %441 = vmatpush1.msra.mxu0 0.0
      %442 = vmatprep.subr.mxu0 0.0
      %443 = vmatpush1.msra.mxu0 0.0
      %444 = vmatprep.subr.mxu0 0.0
      %445 = vmatpush1.msra.mxu0 0.0
      %446 = vmatprep.subr.mxu0 0.0
      %447 = vmatpush1.msra.mxu0 0.0
      %448 = vmatprep.subr.mxu0 0.0
      %449 = vmatpush1.msra.mxu0 0.0
      %450 = vmatprep.subr.mxu0 0.0
      %451 = vmatpush1.msra.mxu0 0.0
      %452 = vmatprep.subr.mxu0 0.0
      %453 = vmatpush1.msra.mxu0 0.0
      %454 = vmatprep.subr.mxu0 0.0
      %455 = vmatpush1.msra.mxu0 0.0
      %456 = vmatprep.subr.mxu0 0.0
      %457 = vmatpush1.msra.mxu0 0.0
      %458 = vmatprep.subr.mxu0 0.0
      %459 = vmatpush1.msra.mxu0 0.0
      %460 = vmatprep.subr.mxu0 0.0
      %461 = vmatpush1.msra.mxu0 0.0
      %462 = vmatprep.subr.mxu0 0.0
      %463 = vmatpush1.msra.mxu0 0.0
      %464 = vmatprep.subr.mxu0 0.0
      %465 = vmatpush1.msra.mxu0 0.0
      %466 = vmatprep.subr.mxu0 0.0
      %467 = vmatpush1.msra.mxu0 0.0
      %468 = vmatprep.mubr.f32.mxu0 0.0
      %469 = vmatmul.mubr.f32.gmra.mrb[0].mxu0 %v389
      %v470 = vpop.f32.mrb[0].mxu0
      %v471 = vadd.f32 %v383, %v470
      %v472 = vpop.f32.mrb[0].mxu0
      %473 = vmatprep.mubr.f32.mxu0 0.0
      %474 = vmatmul.mubr.f32.gmra.mrb[0].mxu0 %v392
      %v475 = vpop.f32.mrb[0].mxu0
      %v476 = vadd.f32 %v384, %v475
      %v477 = vpop.f32.mrb[0].mxu0
      %478 = vmatprep.mubr.f32.mxu0 0.0
      %479 = vmatmul.mubr.f32.gmra.mrb[0].mxu0 %v395
      %v480 = vpop.f32.mrb[0].mxu0
      %v481 = vadd.f32 %v385, %v480
      %v482 = vpop.f32.mrb[0].mxu0
      %483 = vmatprep.mubr.f32.mxu0 0.0
      %484 = vmatmul.mubr.f32.gmra.mrb[0].mxu0 %v398
      %v485 = vpop.f32.mrb[0].mxu0
      %v486 = vadd.f32 %v386, %v485
      %v487 = vpop.f32.mrb[0].mxu0
      %488 = vdwg.mxu0
      %489 = vmatprep.subr.mxu0 0.0
      %490 = vmatpush1.msra.mxu0 %v292
      %491 = vmatprep.subr.mxu0 0.0
      %492 = vmatpush1.msra.mxu0 %v295
      %493 = vmatprep.subr.mxu0 0.0
      %494 = vmatpush1.msra.mxu0 %v298
      %495 = vmatprep.subr.mxu0 0.0
      %496 = vmatpush1.msra.mxu0 %v301
      %497 = vmatprep.subr.mxu0 0.0
      %498 = vmatpush1.msra.mxu0 0.0
      %499 = vmatprep.subr.mxu0 0.0
      %500 = vmatpush1.msra.mxu0 0.0
      %501 = vmatprep.subr.mxu0 0.0
      %502 = vmatpush1.msra.mxu0 0.0
      %503 = vmatprep.subr.mxu0 0.0
      %504 = vmatpush1.msra.mxu0 0.0
      %505 = vmatprep.subr.mxu0 0.0
      %506 = vmatpush1.msra.mxu0 0.0
      %507 = vmatprep.subr.mxu0 0.0
      %508 = vmatpush1.msra.mxu0 0.0
      %509 = vmatprep.subr.mxu0 0.0
      %510 = vmatpush1.msra.mxu0 0.0
      %511 = vmatprep.subr.mxu0 0.0
      %512 = vmatpush1.msra.mxu0 0.0
      %513 = vmatprep.subr.mxu0 0.0
      %514 = vmatpush1.msra.mxu0 0.0
      %515 = vmatprep.subr.mxu0 0.0
      %516 = vmatpush1.msra.mxu0 0.0
      %517 = vmatprep.subr.mxu0 0.0
      %518 = vmatpush1.msra.mxu0 0.0
      %519 = vmatprep.subr.mxu0 0.0
      %520 = vmatpush1.msra.mxu0 0.0
      %521 = vmatprep.subr.mxu0 0.0
      %522 = vmatpush1.msra.mxu0 0.0
      %523 = vmatprep.subr.mxu0 0.0
      %524 = vmatpush1.msra.mxu0 0.0
      %525 = vmatprep.subr.mxu0 0.0
      %526 = vmatpush1.msra.mxu0 0.0
      %527 = vmatprep.subr.mxu0 0.0
      %528 = vmatpush1.msra.mxu0 0.0
      %529 = vmatprep.subr.mxu0 0.0
      %530 = vmatpush1.msra.mxu0 0.0
      %531 = vmatprep.subr.mxu0 0.0
      %532 = vmatpush1.msra.mxu0 0.0
      %533 = vmatprep.subr.mxu0 0.0
      %534 = vmatpush1.msra.mxu0 0.0
      %535 = vmatprep.subr.mxu0 0.0
      %536 = vmatpush1.msra.mxu0 0.0
      %537 = vmatprep.subr.mxu0 0.0
      %538 = vmatpush1.msra.mxu0 0.0
      %539 = vmatprep.subr.mxu0 0.0
      %540 = vmatpush1.msra.mxu0 0.0
      %541 = vmatprep.subr.mxu0 0.0
      %542 = vmatpush1.msra.mxu0 0.0
      %543 = vmatprep.subr.mxu0 0.0
      %544 = vmatpush1.msra.mxu0 0.0
      %545 = vmatprep.subr.mxu0 0.0
      %546 = vmatpush1.msra.mxu0 0.0
      %547 = vmatprep.subr.mxu0 0.0
      %548 = vmatpush1.msra.mxu0 0.0
      %549 = vmatprep.subr.mxu0 0.0
      %550 = vmatpush1.msra.mxu0 0.0
      %551 = vmatprep.subr.mxu0 0.0
      %552 = vmatpush1.msra.mxu0 0.0
      %553 = vmatprep.mubr.f32.mxu0 0.0
      %554 = vmatmul.mubr.f32.gmra.mrb[0].mxu0 %v306
      %v555 = vpop.f32.mrb[0].mxu0
      %v556 = vadd.f32 %v303, %v555
      %v557 = vpop.f32.mrb[0].mxu0
      %558 = vdwg.mxu0
      %v559 = vmax.f32 %v556, 0.0
      %v561 = vsel %vm400, %v559, 0
      %563 = vmatprep.subr.mxu0 0.0
      %564 = vmatpush1.msra.mxu0 %v561
      %565 = vmatprep.subr.mxu0 0.0
      %566 = vmatpush1.msra.mxu0 0.0
      %567 = vmatprep.subr.mxu0 0.0
      %568 = vmatpush1.msra.mxu0 0.0
      %569 = vmatprep.subr.mxu0 0.0
      %570 = vmatpush1.msra.mxu0 0.0
      %571 = vmatprep.subr.mxu0 0.0
      %572 = vmatpush1.msra.mxu0 0.0
      %573 = vmatprep.subr.mxu0 0.0
      %574 = vmatpush1.msra.mxu0 0.0
      %575 = vmatprep.subr.mxu0 0.0
      %576 = vmatpush1.msra.mxu0 0.0
      %577 = vmatprep.subr.mxu0 0.0
      %578 = vmatpush1.msra.mxu0 0.0
      %579 = vmatprep.subr.mxu0 0.0
      %580 = vmatpush1.msra.mxu0 0.0
      %581 = vmatprep.subr.mxu0 0.0
      %582 = vmatpush1.msra.mxu0 0.0
      %583 = vmatprep.subr.mxu0 0.0
      %584 = vmatpush1.msra.mxu0 0.0
      %585 = vmatprep.subr.mxu0 0.0
      %586 = vmatpush1.msra.mxu0 0.0
      %587 = vmatprep.subr.mxu0 0.0
      %588 = vmatpush1.msra.mxu0 0.0
      %589 = vmatprep.subr.mxu0 0.0
      %590 = vmatpush1.msra.mxu0 0.0
      %591 = vmatprep.subr.mxu0 0.0
      %592 = vmatpush1.msra.mxu0 0.0
      %593 = vmatprep.subr.mxu0 0.0
      %594 = vmatpush1.msra.mxu0 0.0
      %595 = vmatprep.subr.mxu0 0.0
      %596 = vmatpush1.msra.mxu0 0.0
      %597 = vmatprep.subr.mxu0 0.0
      %598 = vmatpush1.msra.mxu0 0.0
      %599 = vmatprep.subr.mxu0 0.0
      %600 = vmatpush1.msra.mxu0 0.0
      %601 = vmatprep.subr.mxu0 0.0
      %602 = vmatpush1.msra.mxu0 0.0
      %603 = vmatprep.subr.mxu0 0.0
      %604 = vmatpush1.msra.mxu0 0.0
      %605 = vmatprep.subr.mxu0 0.0
      %606 = vmatpush1.msra.mxu0 0.0
      %607 = vmatprep.subr.mxu0 0.0
      %608 = vmatpush1.msra.mxu0 0.0
      %609 = vmatprep.subr.mxu0 0.0
      %610 = vmatpush1.msra.mxu0 0.0
      %611 = vmatprep.subr.mxu0 0.0
      %612 = vmatpush1.msra.mxu0 0.0
      %613 = vmatprep.subr.mxu0 0.0
      %614 = vmatpush1.msra.mxu0 0.0
      %615 = vmatprep.subr.mxu0 0.0
      %616 = vmatpush1.msra.mxu0 0.0
      %617 = vmatprep.subr.mxu0 0.0
      %618 = vmatpush1.msra.mxu0 0.0
      %619 = vmatprep.subr.mxu0 0.0
      %620 = vmatpush1.msra.mxu0 0.0
      %621 = vmatprep.subr.mxu0 0.0
      %622 = vmatpush1.msra.mxu0 0.0
      %623 = vmatprep.subr.mxu0 0.0
      %624 = vmatpush1.msra.mxu0 0.0
      %625 = vmatprep.subr.mxu0 0.0
      %626 = vmatpush1.msra.mxu0 0.0
      %627 = vmatprep.mubr.f32.mxu0 0.0
      %628 = vmatmul.mubr.f32.gmra.mrb[0].mxu0 %v389
      %v629 = vpop.f32.mrb[0].mxu0
      %v630 = vadd.f32 %v383, %v629
      %v631 = vpop.f32.mrb[0].mxu0
      %632 = vmatprep.mubr.f32.mxu0 0.0
      %633 = vmatmul.mubr.f32.gmra.mrb[0].mxu0 %v392
      %v634 = vpop.f32.mrb[0].mxu0
      %v635 = vadd.f32 %v384, %v634
      %v636 = vpop.f32.mrb[0].mxu0
      %637 = vmatprep.mubr.f32.mxu0 0.0
      %638 = vmatmul.mubr.f32.gmra.mrb[0].mxu0 %v395
      %v639 = vpop.f32.mrb[0].mxu0
      %v640 = vadd.f32 %v385, %v639
      %v641 = vpop.f32.mrb[0].mxu0
      %642 = vmatprep.mubr.f32.mxu0 0.0
      %643 = vmatmul.mubr.f32.gmra.mrb[0].mxu0 %v398
      %v644 = vpop.f32.mrb[0].mxu0
      %v645 = vadd.f32 %v386, %v644
      %v646 = vpop.f32.mrb[0].mxu0
      %647 = vdwg.mxu0
      %v648 = vadd.f32 %v471, %v630
      %v649 = vadd.f32 %v476, %v635
      %v650 = vadd.f32 %v481, %v640
      %v651 = vadd.f32 %v486, %v645
      %v652 = vxor.u32 %v648, 2147483648
      %v653 = vxor.u32 %v649, 2147483648
      %v654 = vxor.u32 %v650, 2147483648
      %v655 = vxor.u32 %v651, 2147483648
      %v656 = vmul.f32 %v652, 1.442695
      %v657 = vpow.pop %v656
      %v658 = vmul.f32 %v653, 1.442695
      %v659 = vpow.pop %v658
      %v660 = vmul.f32 %v654, 1.442695
      %v661 = vpow.pop %v660
      %v662 = vmul.f32 %v655, 1.442695
      %v663 = vpow.pop %v662
      %v664 = vadd.f32 %v657, 1.0
      %v665 = vadd.f32 %v659, 1.0
      %v666 = vadd.f32 %v661, 1.0
      %v667 = vadd.f32 %v663, 1.0
      %v668 = vrcp.pop %v664
      %v669 = vmul.f32 1.0, %v668
      %v670 = vrcp.pop %v665
      %v671 = vmul.f32 1.0, %v670
      %v672 = vrcp.pop %v666
      %v673 = vmul.f32 1.0, %v672
      %v674 = vrcp.pop %v667
      %v675 = vmul.f32 1.0, %v674
      %677 = vset.pattern.permute.xlu0 0
      %678 = vperm.xlu0 %677, %v669
      %v679 = vpop.permute.xlu0 %678
      %682 = vset.pattern.permute.xlu0 0
      %683 = vperm.xlu0 %682, %v671
      %v684 = vpop.permute.xlu0 %683
      %687 = vset.pattern.permute.xlu0 0
      %688 = vperm.xlu0 %687, %v673
      %v689 = vpop.permute.xlu0 %688
      %692 = vset.pattern.permute.xlu0 0
      %693 = vperm.xlu0 %692, %v675
      %v694 = vpop.permute.xlu0 %693
      %v696 = vmul.f32 %v265, %v679
      %v697 = vmul.f32 %v266, %v679
      %v698 = vmul.f32 %v267, %v684
      %v699 = vmul.f32 %v268, %v684
      %v700 = vmul.f32 %v269, %v689
      %v701 = vmul.f32 %v270, %v689
      %v702 = vmul.f32 %v271, %v694
      %v703 = vmul.f32 %v272, %v694
      %704 = vst [vmem:[%s259] sm:$0xff] %v696
      %705 = vst [vmem:[%s259 + $0x8] sm:$0xff] %v697
      %706 = vst [vmem:[%s259 + $0x10] sm:$0xff] %v698
      %707 = vst [vmem:[%s259 + $0x18] sm:$0xff] %v699
      %708 = vst [vmem:[%s259 + $0x20] sm:$0xff] %v700
      %709 = vst [vmem:[%s259 + $0x28] sm:$0xff] %v701
      %710 = vst [vmem:[%s259 + $0x30] sm:$0xff] %v702
      %711 = vst [vmem:[%s259 + $0x38] sm:$0xff] %v703
      %v712 = vmax.f32 %v696, %v700
      %v713 = vmax.f32 %v698, %v702
      %v714 = vmax.f32 %v712, %v713
      %v715 = vrot.slane %v714, 4
      %v716 = vmax.f32 %v714, %v715
      %v717 = vrot.slane %v716, 2
      %v718 = vmax.f32 %v716, %v717
      %v719 = vrot.slane %v718, 1
      %v720 = vmax.f32 %v718, %v719
      %v721 = vmax.f32 %v697, %v701
      %v722 = vmax.f32 %v699, %v703
      %v723 = vmax.f32 %v721, %v722
      %v724 = vrot.slane %v723, 4
      %v725 = vmax.f32 %v723, %v724
      %v726 = vrot.slane %v725, 2
      %v727 = vmax.f32 %v725, %v726
      %v728 = vrot.slane %v727, 1
      %v729 = vmax.f32 %v727, %v728
      %v732 = vcombine.low %v720, %v729
      %v734 = vunpack.c.l.s4 1966171168
      %v735 = vunpack.c.0.s8 %v734
      %v736 = vlaneseq
      %v737 = vshrl.u32 %v736, 7
      %v738 = vsub.s32 %v735, %v737
      %v739 = vrot.slane %v732, %v738
      %v741 = vunpack.c.l.s4 1966171168
      %v742 = vunpack.c.0.s8 %v741
      %v743 = vlaneseq
      %v744 = vshrl.u32 %v743, 7
      %v745 = vsub.s32 %v742, %v744
      %v746 = vrot.slane %v739, %v745
      %v748 = vlaneseq
      %vm749 = vcmp.ge.s32.totalorder %v748, 0
      %vm750 = vcmp.lt.s32.totalorder %v748, 256
      %vm751 = vmand %vm749, %vm750
      %752 = vst.msk [vmem:[%s264] ss:$2 sm:$0x3] %vm751, %v746
      %v753 = vadd.f32 %v696, %v698
      %v754 = vadd.f32 %v753, %v700
      %v755 = vadd.f32 %v754, %v702
      %v756 = vrot.slane %v755, 4
      %v757 = vadd.f32 %v755, %v756
      %v758 = vrot.slane %v757, 2
      %v759 = vadd.f32 %v757, %v758
      %v760 = vrot.slane %v759, 1
      %v761 = vadd.f32 %v759, %v760
      %v762 = vadd.f32 %v697, %v699
      %v763 = vadd.f32 %v762, %v701
      %v764 = vadd.f32 %v763, %v703
      %v765 = vrot.slane %v764, 4
      %v766 = vadd.f32 %v764, %v765
      %v767 = vrot.slane %v766, 2
      %v768 = vadd.f32 %v766, %v767
      %v769 = vrot.slane %v768, 1
      %v770 = vadd.f32 %v768, %v769
      %v771 = vrcp.pop 32.0
      %v772 = vmul.f32 %v761, %v771
      %v773 = vmul.f32 %v770, %v771
      %v776 = vcombine.low %v772, %v773
      %v778 = vunpack.c.l.s4 1966171168
      %v779 = vunpack.c.0.s8 %v778
      %v780 = vlaneseq
      %v781 = vshrl.u32 %v780, 7
      %v782 = vsub.s32 %v779, %v781
      %v783 = vrot.slane %v776, %v782
      %v785 = vunpack.c.l.s4 1966171168
      %v786 = vunpack.c.0.s8 %v785
      %v787 = vlaneseq
      %v788 = vshrl.u32 %v787, 7
      %v789 = vsub.s32 %v786, %v788
      %v790 = vrot.slane %v783, %v789
      %s792 = scalar_lea.vmem %s264, 1
      %793 = vst.msk [vmem:[%s792] ss:$2 sm:$0x3] %vm751, %v790
      %p794 = scmp.lt.s32.totalorder %s18, 1
      %s795 = scalar_select %p794, %s18, 1
      %s796 = smul.addr %s795, 8
      %s797 = smul.addr %s796, 8
      %s798 = scalar_lea.vmem %s5, %s797
      %p799 = scmp.lt.s32.totalorder %s18, 1
      %s800 = scalar_select %p799, %s18, 1
      %s801 = smul.addr %s800, 2
      %s802 = smul.addr %s801, 2
      %s803 = scalar_lea.vmem %s6, %s802
      // Predicated region
      $region41: #{c3_b_cbam_forward.7} parent=39 // pred_check
        %p804 = pneg %p146
      $region42: #{c3_b_cbam_forward.7} parent=39 // pred_check_branch
        %806 = sbr.rel (%p804) target = $region44
      $region43: #{c3_b_cbam_forward.7} parent=39 // pred_region
        _
      $region44: #{c3_b_cbam_forward.7} parent=39 // pred_fallthru
        _
      // Predicated region
      $region45: #{c3_b_cbam_forward.7} parent=39 // pred_check
        %p807 = pneg %p172
      $region46: #{c3_b_cbam_forward.7} parent=39 // pred_check_branch
        %809 = sbr.rel (%p807) target = $region48
      $region47: #{c3_b_cbam_forward.7} parent=39 // pred_region
        _
      $region48: #{c3_b_cbam_forward.7} parent=39 // pred_fallthru
        _
    $region40: #{c3_b_cbam_forward.7} parent=5 // pred_fallthru
      _
    %p810 = scmp.le.s32.totalorder 2, %s13
    // Predicated region
    $region49: #{c3_b_cbam_forward.7} parent=5 // pred_check
      %p811 = pneg %p810
    $region50: #{c3_b_cbam_forward.7} parent=5 // pred_check_branch
      %813 = sbr.rel (%p811) target = $region52
    $region51: #{c3_b_cbam_forward.7} parent=5 // pred_region
      %s814 = ssub.s32 %s13, 2
      // Predicated region
      $region53: #{c3_b_cbam_forward.7} parent=51 // pred_check
        %p815 = pneg %p152
      $region54: #{c3_b_cbam_forward.7} parent=51 // pred_check_branch
        %817 = sbr.rel (%p815) target = $region56
      $region55: #{c3_b_cbam_forward.7} parent=51 // pred_region
        %p818 = scmp.lt.s32.totalorder %s19, 1
        %s819 = scalar_select %p818, %s19, 1
        %s820 = smul.addr %s819, 8
        %s821 = smul.addr %s820, 8
        %s822 = scalar_lea.vmem %s5, %s821
      $region56: #{c3_b_cbam_forward.7} parent=51 // pred_fallthru
        _
      // Predicated region
      $region57: #{c3_b_cbam_forward.7} parent=51 // pred_check
        %p823 = pneg %p178
      $region58: #{c3_b_cbam_forward.7} parent=51 // pred_check_branch
        %825 = sbr.rel (%p823) target = $region60
      $region59: #{c3_b_cbam_forward.7} parent=51 // pred_region
        %p826 = scmp.lt.s32.totalorder %s19, 1
        %s827 = scalar_select %p826, %s19, 1
        %s828 = smul.addr %s827, 2
        %s829 = smul.addr %s828, 2
        %s830 = scalar_lea.vmem %s6, %s829
      $region60: #{c3_b_cbam_forward.7} parent=51 // pred_fallthru
        _
    $region52: #{c3_b_cbam_forward.7} parent=5 // pred_fallthru
      _
  $region6: #{c3_b_cbam_forward.7} parent=0 // loop_footer
    %s17 = sadd.s32 1, %s13
  $region7: #{c3_b_cbam_forward.7} parent=0 // loop_footer_branch
    %12 = sbr.rel target = $region3
  $region8: #{c3_b_cbam_forward.7} parent=0 // loop_exit
    _

// kernel: c3_b_cbam_forward.9
$region0: #{c3_b_cbam_forward.9}
  #allocation0 [shape = 'u32[]', space=smem, size = 0x4, offset = 0x4, fixed_abs, tag = 'smem constant byte address 0x4 - core index']
  #allocation1 [shape = 'u32[144,128]{1,0:T(1,128)}', space=vmem, size = 0x12000, scoped, tag = 'internal scratch']
  %s0 = inlined_call_operand.vmem [shape: f32[2,32,256], index: 0, kind: input, shape index: {}]
  %s1 = inlined_call_operand.vmem [shape: f32[2,32,256], index: 1, kind: input, shape index: {}]
  %s2 = inlined_call_operand.vmem [shape: f32[64,32], index: 2, kind: input, shape index: {}]
  %s3 = inlined_call_operand.vmem [shape: f32[64,32], index: 3, kind: input, shape index: {}]
  %s4 = inlined_call_operand.vmem [shape: f32[64,1], index: 4, kind: input, shape index: {}]
  %s5 = inlined_call_operand.vmem [shape: f32[64,1], index: 5, kind: input, shape index: {}]
  %s6 = inlined_call_operand.vmem [shape: f32[2,64,256], index: 6, kind: output, shape index: {}]
  %s7 = sld [smem:[#allocation0]]
  $region57: #{c3_b_cbam_forward.9} parent=0
    _
  %s9 = ssub.s32 1, %s7
  %s10 = scalar_select 0, %s9, %s7
  loop: start=0, step=1, limit=4
  $region2: #{c3_b_cbam_forward.9} parent=0 // loop_pre_header
    _
  $region3: #{c3_b_cbam_forward.9} parent=0 // loop_header
    %s12 = sphi 0, %s16
    %p13 = scmp.ge.s32.totalorder %s12, 4
    %s22 = sphi 0, %s24
    %s25 = sphi 0, %s22
    %s26 = sphi 0, %s25
    %s42 = sphi 0, %s26
    %s48 = sphi 0, %s50
    %s51 = sphi 0, %s48
    %s52 = sphi 0, %s51
    %s68 = sphi 0, %s52
    %s72 = sphi 0, %s72
    %s74 = sphi 0, %s72
    %s75 = sphi 0, %s74
    %s89 = sphi 0, %s75
    %s93 = sphi 0, %s93
    %s95 = sphi 0, %s93
    %s96 = sphi 0, %s95
    %s110 = sphi 0, %s96
    %s114 = sphi 0, %s114
    %s116 = sphi 0, %s114
    %s117 = sphi 0, %s116
    %s131 = sphi 0, %s117
    %s135 = sphi 0, %s135
    %s137 = sphi 0, %s135
    %s138 = sphi 0, %s137
    %s152 = sphi 0, %s138
    %s158 = sphi 0, %s160
    %s161 = sphi 0, %s158
    %s162 = sphi 0, %s161
    %s178 = sphi 0, %s162
  $region4: #{c3_b_cbam_forward.9} parent=0 // loop_header_branch
    %15 = sbr.rel (%p13) target = $region8
  $region5: #{c3_b_cbam_forward.9} parent=0 // loop_body
    %s17 = ssub.s32 %s12, 1
    %s18 = ssub.s32 %s12, 2
    %s19 = sadd.s32 %s12, 1
    %s20 = ssub.s32 %s12, %s19
    %p21 = scmp.eq.s32.totalorder %s20, 0
    %s23 = sadd.s32 %s22, 1
    %s24 = scalar_select %p21, %s22, %s23
    %p27 = pneg %p21
    %p28 = scmp.eq.s32.totalorder %s12, 1
    %p29 = por %p27, %p28
    %p30 = scmp.ne.s32.totalorder %s22, %s25
    %p31 = scmp.eq.s32.totalorder %s12, 0
    %p32 = por %p30, %p31
    %p33 = scmp.ne.s32.totalorder %s22, %s25
    %p34 = scmp.eq.s32.totalorder %s17, 1
    %p35 = por %p33, %p34
    %p36 = scmp.ne.s32.totalorder %s25, %s26
    %p37 = scmp.eq.s32.totalorder %s17, 0
    %p38 = por %p36, %p37
    %p39 = scmp.ne.s32.totalorder %s25, %s26
    %p40 = scmp.eq.s32.totalorder %s18, 1
    %p41 = por %p39, %p40
    %p43 = scmp.ne.s32.totalorder %s26, %s42
    %p44 = scmp.eq.s32.totalorder %s18, 0
    %p45 = por %p43, %p44
    %s46 = ssub.s32 %s12, %s19
    %p47 = scmp.eq.s32.totalorder %s46, 0
    %s49 = sadd.s32 %s48, 1
    %s50 = scalar_select %p47, %s48, %s49
    %p53 = pneg %p47
    %p54 = scmp.eq.s32.totalorder %s12, 1
    %p55 = por %p53, %p54
    %p56 = scmp.ne.s32.totalorder %s48, %s51
    %p57 = scmp.eq.s32.totalorder %s12, 0
    %p58 = por %p56, %p57
    %p59 = scmp.ne.s32.totalorder %s48, %s51
    %p60 = scmp.eq.s32.totalorder %s17, 1
    %p61 = por %p59, %p60
    %p62 = scmp.ne.s32.totalorder %s51, %s52
    %p63 = scmp.eq.s32.totalorder %s17, 0
    %p64 = por %p62, %p63
    %p65 = scmp.ne.s32.totalorder %s51, %s52
    %p66 = scmp.eq.s32.totalorder %s18, 1
    %p67 = por %p65, %p66
    %p69 = scmp.ne.s32.totalorder %s52, %s68
    %p70 = scmp.eq.s32.totalorder %s18, 0
    %p71 = por %p69, %p70
    %s73 = sadd.s32 %s72, 1
    %p76 = scmp.eq.s32.totalorder %s12, 1
    %p77 = scmp.ne.s32.totalorder %s72, %s74
    %p78 = scmp.eq.s32.totalorder %s12, 0
    %p79 = por %p77, %p78
    %p80 = scmp.ne.s32.totalorder %s72, %s74
    %p81 = scmp.eq.s32.totalorder %s17, 1
    %p82 = por %p80, %p81
    %p83 = scmp.ne.s32.totalorder %s74, %s75
    %p84 = scmp.eq.s32.totalorder %s17, 0
    %p85 = por %p83, %p84
    %p86 = scmp.ne.s32.totalorder %s74, %s75
    %p87 = scmp.eq.s32.totalorder %s18, 1
    %p88 = por %p86, %p87
    %p90 = scmp.ne.s32.totalorder %s75, %s89
    %p91 = scmp.eq.s32.totalorder %s18, 0
    %p92 = por %p90, %p91
    %s94 = sadd.s32 %s93, 1
    %p97 = scmp.eq.s32.totalorder %s12, 1
    %p98 = scmp.ne.s32.totalorder %s93, %s95
    %p99 = scmp.eq.s32.totalorder %s12, 0
    %p100 = por %p98, %p99
    %p101 = scmp.ne.s32.totalorder %s93, %s95
    %p102 = scmp.eq.s32.totalorder %s17, 1
    %p103 = por %p101, %p102
    %p104 = scmp.ne.s32.totalorder %s95, %s96
    %p105 = scmp.eq.s32.totalorder %s17, 0
    %p106 = por %p104, %p105
    %p107 = scmp.ne.s32.totalorder %s95, %s96
    %p108 = scmp.eq.s32.totalorder %s18, 1
    %p109 = por %p107, %p108
    %p111 = scmp.ne.s32.totalorder %s96, %s110
    %p112 = scmp.eq.s32.totalorder %s18, 0
    %p113 = por %p111, %p112
    %s115 = sadd.s32 %s114, 1
    %p118 = scmp.eq.s32.totalorder %s12, 1
    %p119 = scmp.ne.s32.totalorder %s114, %s116
    %p120 = scmp.eq.s32.totalorder %s12, 0
    %p121 = por %p119, %p120
    %p122 = scmp.ne.s32.totalorder %s114, %s116
    %p123 = scmp.eq.s32.totalorder %s17, 1
    %p124 = por %p122, %p123
    %p125 = scmp.ne.s32.totalorder %s116, %s117
    %p126 = scmp.eq.s32.totalorder %s17, 0
    %p127 = por %p125, %p126
    %p128 = scmp.ne.s32.totalorder %s116, %s117
    %p129 = scmp.eq.s32.totalorder %s18, 1
    %p130 = por %p128, %p129
    %p132 = scmp.ne.s32.totalorder %s117, %s131
    %p133 = scmp.eq.s32.totalorder %s18, 0
    %p134 = por %p132, %p133
    %s136 = sadd.s32 %s135, 1
    %p139 = scmp.eq.s32.totalorder %s12, 1
    %p140 = scmp.ne.s32.totalorder %s135, %s137
    %p141 = scmp.eq.s32.totalorder %s12, 0
    %p142 = por %p140, %p141
    %p143 = scmp.ne.s32.totalorder %s135, %s137
    %p144 = scmp.eq.s32.totalorder %s17, 1
    %p145 = por %p143, %p144
    %p146 = scmp.ne.s32.totalorder %s137, %s138
    %p147 = scmp.eq.s32.totalorder %s17, 0
    %p148 = por %p146, %p147
    %p149 = scmp.ne.s32.totalorder %s137, %s138
    %p150 = scmp.eq.s32.totalorder %s18, 1
    %p151 = por %p149, %p150
    %p153 = scmp.ne.s32.totalorder %s138, %s152
    %p154 = scmp.eq.s32.totalorder %s18, 0
    %p155 = por %p153, %p154
    %s156 = ssub.s32 %s12, %s19
    %p157 = scmp.eq.s32.totalorder %s156, 0
    %s159 = sadd.s32 %s158, 1
    %s160 = scalar_select %p157, %s158, %s159
    %p163 = pneg %p157
    %p164 = scmp.eq.s32.totalorder %s12, 1
    %p165 = por %p163, %p164
    %p166 = scmp.ne.s32.totalorder %s158, %s161
    %p167 = scmp.eq.s32.totalorder %s12, 0
    %p168 = por %p166, %p167
    %p169 = scmp.ne.s32.totalorder %s158, %s161
    %p170 = scmp.eq.s32.totalorder %s17, 1
    %p171 = por %p169, %p170
    %p172 = scmp.ne.s32.totalorder %s161, %s162
    %p173 = scmp.eq.s32.totalorder %s17, 0
    %p174 = por %p172, %p173
    %p175 = scmp.ne.s32.totalorder %s161, %s162
    %p176 = scmp.eq.s32.totalorder %s18, 1
    %p177 = por %p175, %p176
    %p179 = scmp.ne.s32.totalorder %s162, %s178
    %p180 = scmp.eq.s32.totalorder %s18, 0
    %p181 = por %p179, %p180
    %p182 = scmp.le.s32.totalorder 1, %s12
    %p183 = scmp.lt.s32.totalorder %s12, 3
    %p184 = pnand %p182, %p183
    %p185 = pneg %p184
    // Predicated region
    $region9: #{c3_b_cbam_forward.9} parent=5 // pred_check
      _
    $region10: #{c3_b_cbam_forward.9} parent=5 // pred_check_branch
      %187 = sbr.rel (%p184) target = $region12
    $region11: #{c3_b_cbam_forward.9} parent=5 // pred_region
      %s188 = ssub.s32 %s12, 1
      // Predicated region
      $region13: #{c3_b_cbam_forward.9} parent=11 // pred_check
        %p189 = pneg %p85
      $region14: #{c3_b_cbam_forward.9} parent=11 // pred_check_branch
        %191 = sbr.rel (%p189) target = $region16
      $region15: #{c3_b_cbam_forward.9} parent=11 // pred_region
        _
      $region16: #{c3_b_cbam_forward.9} parent=11 // pred_fallthru
        _
      // Predicated region
      $region17: #{c3_b_cbam_forward.9} parent=11 // pred_check
        %p192 = pneg %p106
      $region18: #{c3_b_cbam_forward.9} parent=11 // pred_check_branch
        %194 = sbr.rel (%p192) target = $region20
      $region19: #{c3_b_cbam_forward.9} parent=11 // pred_region
        _
      $region20: #{c3_b_cbam_forward.9} parent=11 // pred_fallthru
        _
      // Predicated region
      $region21: #{c3_b_cbam_forward.9} parent=11 // pred_check
        %p195 = pneg %p127
      $region22: #{c3_b_cbam_forward.9} parent=11 // pred_check_branch
        %197 = sbr.rel (%p195) target = $region24
      $region23: #{c3_b_cbam_forward.9} parent=11 // pred_region
        _
      $region24: #{c3_b_cbam_forward.9} parent=11 // pred_fallthru
        _
      // Predicated region
      $region25: #{c3_b_cbam_forward.9} parent=11 // pred_check
        %p198 = pneg %p148
      $region26: #{c3_b_cbam_forward.9} parent=11 // pred_check_branch
        %200 = sbr.rel (%p198) target = $region28
      $region27: #{c3_b_cbam_forward.9} parent=11 // pred_region
        _
      $region28: #{c3_b_cbam_forward.9} parent=11 // pred_fallthru
        _
    $region12: #{c3_b_cbam_forward.9} parent=5 // pred_fallthru
      _
    %p201 = scmp.lt.s32.totalorder %s12, 2
    // Predicated region
    $region29: #{c3_b_cbam_forward.9} parent=5 // pred_check
      %p202 = pneg %p201
    $region30: #{c3_b_cbam_forward.9} parent=5 // pred_check_branch
      %204 = sbr.rel (%p202) target = $region32
    $region31: #{c3_b_cbam_forward.9} parent=5 // pred_region
      // Predicated region
      $region33: #{c3_b_cbam_forward.9} parent=31 // pred_check
        %p205 = pneg %p32
      $region34: #{c3_b_cbam_forward.9} parent=31 // pred_check_branch
        %207 = sbr.rel (%p205) target = $region36
      $region35: #{c3_b_cbam_forward.9} parent=31 // pred_region
        %p208 = scmp.lt.s32.totalorder %s12, 1
        %s209 = scalar_select %p208, %s12, 1
        %s210 = smul.addr %s209, 8
        %s211 = smul.addr %s210, 8
        %s212 = scalar_lea.vmem %s0, %s211
      $region36: #{c3_b_cbam_forward.9} parent=31 // pred_fallthru
        _
      // Predicated region
      $region37: #{c3_b_cbam_forward.9} parent=31 // pred_check
        %p213 = pneg %p58
      $region38: #{c3_b_cbam_forward.9} parent=31 // pred_check_branch
        %215 = sbr.rel (%p213) target = $region40
      $region39: #{c3_b_cbam_forward.9} parent=31 // pred_region
        %p216 = scmp.lt.s32.totalorder %s12, 1
        %s217 = scalar_select %p216, %s12, 1
        %s218 = smul.addr %s217, 8
        %s219 = smul.addr %s218, 8
        %s220 = scalar_lea.vmem %s1, %s219
      $region40: #{c3_b_cbam_forward.9} parent=31 // pred_fallthru
        _
    $region32: #{c3_b_cbam_forward.9} parent=5 // pred_fallthru
      _
    %p221 = scmp.le.s32.totalorder 1, %s12
    %p222 = scmp.lt.s32.totalorder %s12, 3
    %p223 = pnand %p221, %p222
    %p224 = pneg %p223
    // Predicated region
    $region41: #{c3_b_cbam_forward.9} parent=5 // pred_check
      _
    $region42: #{c3_b_cbam_forward.9} parent=5 // pred_check_branch
      %226 = sbr.rel (%p223) target = $region44
    $region43: #{c3_b_cbam_forward.9} parent=5 // pred_region
      %s227 = ssub.s32 %s12, 1
      %p228 = scmp.lt.s32.totalorder %s17, 1
      %s229 = scalar_select %p228, %s17, 1
      %s230 = smul.addr %s229, 8
      %s231 = smul.addr %s230, 8
      %s232 = scalar_lea.vmem %s0, %s231
      %p233 = pneg %p38
      %p234 = pneg %p35
      %p235 = scmp.lt.s32.totalorder %s17, 1
      %s236 = scalar_select %p235, %s17, 1
      %s237 = smul.addr %s236, 8
      %s238 = smul.addr %s237, 8
      %s239 = scalar_lea.vmem %s1, %s238
      %p240 = pneg %p64
      %p241 = pneg %p61
      %p242 = pneg %p85
      %p243 = pneg %p82
      %p244 = pneg %p106
      %p245 = pneg %p103
      %p246 = pneg %p127
      %p247 = pneg %p124
      %p248 = pneg %p148
      %p249 = pneg %p145
      %p250 = pneg %p174
      %p251 = pneg %p171
      %p252 = scmp.lt.s32.totalorder %s17, 1
      %s253 = scalar_select %p252, %s17, 1
      %s254 = smul.addr %s253, 16
      %s255 = smul.addr %s254, 8
      %s256 = scalar_lea.vmem %s6, %s255
      %p257 = scmp.lt.s32.totalorder %s17, 1
      %s258 = scalar_select %p257, %s17, 1
      %s259 = smul.addr %s258, 8
      %s260 = smul.addr %s259, 8
      %s261 = scalar_lea.vmem %s0, %s260
      %p262 = scmp.lt.s32.totalorder %s17, 1
      %s263 = scalar_select %p262, %s17, 1
      %s264 = smul.addr %s263, 8
      %s265 = smul.addr %s264, 8
      %s266 = scalar_lea.vmem %s1, %s265
      %p267 = scmp.lt.s32.totalorder %s17, 1
      %s268 = scalar_select %p267, %s17, 1
      %s269 = smul.addr %s268, 16
      %s270 = smul.addr %s269, 8
      %s271 = scalar_lea.vmem %s6, %s270
      %v272 = vld [vmem:[%s2] sm:$0xff]
      %v273 = vld [vmem:[%s2 + $0x8] sm:$0xff]
      %v274 = vld [vmem:[%s2 + $0x10] sm:$0xff]
      %v275 = vld [vmem:[%s2 + $0x18] sm:$0xff]
      %v276 = vld [vmem:[%s2 + $0x20] sm:$0xff]
      %v277 = vld [vmem:[%s2 + $0x28] sm:$0xff]
      %v278 = vld [vmem:[%s2 + $0x30] sm:$0xff]
      %v279 = vld [vmem:[%s2 + $0x38] sm:$0xff]
      %v280 = vld [vmem:[%s261] sm:$0xff]
      %v281 = vld [vmem:[%s261 + $0x8] sm:$0xff]
      %v282 = vld [vmem:[%s261 + $0x10] sm:$0xff]
      %v283 = vld [vmem:[%s261 + $0x18] sm:$0xff]
      %v284 = vld [vmem:[%s261 + $0x20] sm:$0xff]
      %v285 = vld [vmem:[%s261 + $0x28] sm:$0xff]
      %v286 = vld [vmem:[%s261 + $0x30] sm:$0xff]
      %v287 = vld [vmem:[%s261 + $0x38] sm:$0xff]
      %v288 = vld [vmem:[%s3] sm:$0xff]
      %v289 = vld [vmem:[%s3 + $0x8] sm:$0xff]
      %v290 = vld [vmem:[%s3 + $0x10] sm:$0xff]
      %v291 = vld [vmem:[%s3 + $0x18] sm:$0xff]
      %v292 = vld [vmem:[%s3 + $0x20] sm:$0xff]
      %v293 = vld [vmem:[%s3 + $0x28] sm:$0xff]
      %v294 = vld [vmem:[%s3 + $0x30] sm:$0xff]
      %v295 = vld [vmem:[%s3 + $0x38] sm:$0xff]
      %v296 = vld [vmem:[%s266] sm:$0xff]
      %v297 = vld [vmem:[%s266 + $0x8] sm:$0xff]
      %v298 = vld [vmem:[%s266 + $0x10] sm:$0xff]
      %v299 = vld [vmem:[%s266 + $0x18] sm:$0xff]
      %v300 = vld [vmem:[%s266 + $0x20] sm:$0xff]
      %v301 = vld [vmem:[%s266 + $0x28] sm:$0xff]
      %v302 = vld [vmem:[%s266 + $0x30] sm:$0xff]
      %v303 = vld [vmem:[%s266 + $0x38] sm:$0xff]
      %vm304 = vcmask 261120
      %v306 = vsel %vm304, %v288, 0
      %v309 = vsel %vm304, %v289, 0
      %v312 = vsel %vm304, %v290, 0
      %v315 = vsel %vm304, %v291, 0
      %v318 = vsel %vm304, %v292, 0
      %v321 = vsel %vm304, %v293, 0
      %v324 = vsel %vm304, %v294, 0
      %v327 = vsel %vm304, %v295, 0
      %329 = vmatprep.subr.mxu0 %v297
      %330 = vmatpush1.msra.mxu0 %v296
      %331 = vmatprep.subr.mxu0 %v299
      %332 = vmatpush1.msra.mxu0 %v298
      %333 = vmatprep.subr.mxu0 %v301
      %334 = vmatpush1.msra.mxu0 %v300
      %335 = vmatprep.subr.mxu0 %v303
      %336 = vmatpush1.msra.mxu0 %v302
      %337 = vmatprep.subr.mxu0 0.0
      %338 = vmatpush1.msra.mxu0 0.0
      %339 = vmatprep.subr.mxu0 0.0
      %340 = vmatpush1.msra.mxu0 0.0
      %341 = vmatprep.subr.mxu0 0.0
      %342 = vmatpush1.msra.mxu0 0.0
      %343 = vmatprep.subr.mxu0 0.0
      %344 = vmatpush1.msra.mxu0 0.0
      %345 = vmatprep.subr.mxu0 0.0
      %346 = vmatpush1.msra.mxu0 0.0
      %347 = vmatprep.subr.mxu0 0.0
      %348 = vmatpush1.msra.mxu0 0.0
      %349 = vmatprep.subr.mxu0 0.0
      %350 = vmatpush1.msra.mxu0 0.0
      %351 = vmatprep.subr.mxu0 0.0
      %352 = vmatpush1.msra.mxu0 0.0
      %353 = vmatprep.subr.mxu0 0.0
      %354 = vmatpush1.msra.mxu0 0.0
      %355 = vmatprep.subr.mxu0 0.0
      %356 = vmatpush1.msra.mxu0 0.0
      %357 = vmatprep.subr.mxu0 0.0
      %358 = vmatpush1.msra.mxu0 0.0
      %359 = vmatprep.subr.mxu0 0.0
      %360 = vmatpush1.msra.mxu0 0.0
      %361 = vmatprep.subr.mxu0 0.0
      %362 = vmatpush1.msra.mxu0 0.0
      %363 = vmatprep.subr.mxu0 0.0
      %364 = vmatpush1.msra.mxu0 0.0
      %365 = vmatprep.subr.mxu0 0.0
      %366 = vmatpush1.msra.mxu0 0.0
      %367 = vmatprep.subr.mxu0 0.0
      %368 = vmatpush1.msra.mxu0 0.0
      %369 = vmatprep.subr.mxu0 0.0
      %370 = vmatpush1.msra.mxu0 0.0
      %371 = vmatprep.subr.mxu0 0.0
      %372 = vmatpush1.msra.mxu0 0.0
      %373 = vmatprep.subr.mxu0 0.0
      %374 = vmatpush1.msra.mxu0 0.0
      %375 = vmatprep.subr.mxu0 0.0
      %376 = vmatpush1.msra.mxu0 0.0
      %377 = vmatprep.subr.mxu0 0.0
      %378 = vmatpush1.msra.mxu0 0.0
      %379 = vmatprep.subr.mxu0 0.0
      %380 = vmatpush1.msra.mxu0 0.0
      %381 = vmatprep.subr.mxu0 0.0
      %382 = vmatpush1.msra.mxu0 0.0
      %383 = vmatprep.subr.mxu0 0.0
      %384 = vmatpush1.msra.mxu0 0.0
      %385 = vmatprep.subr.mxu0 0.0
      %386 = vmatpush1.msra.mxu0 0.0
      %387 = vmatprep.subr.mxu0 0.0
      %388 = vmatpush1.msra.mxu0 0.0
      %389 = vmatprep.subr.mxu0 0.0
      %390 = vmatpush1.msra.mxu0 0.0
      %391 = vmatprep.subr.mxu0 0.0
      %392 = vmatpush1.msra.mxu0 0.0
      %393 = vmatprep.mubr.f32.mxu0 0.0
      %394 = vmatmul.mubr.f32.gmra.mrb[0].mxu0 %v306
      %v395 = vpop.f32.mrb[0].mxu0
      %v396 = vadd.f32 0.0, %v395
      %v397 = vpop.f32.mrb[0].mxu0
      %v398 = vadd.f32 0.0, %v397
      %399 = vmatprep.mubr.f32.mxu0 0.0
      %400 = vmatmul.mubr.f32.gmra.mrb[0].mxu0 %v309
      %v401 = vpop.f32.mrb[0].mxu0
      %v402 = vadd.f32 0.0, %v401
      %v403 = vpop.f32.mrb[0].mxu0
      %v404 = vadd.f32 0.0, %v403
      %405 = vmatprep.mubr.f32.mxu0 0.0
      %406 = vmatmul.mubr.f32.gmra.mrb[0].mxu0 %v312
      %v407 = vpop.f32.mrb[0].mxu0
      %v408 = vadd.f32 0.0, %v407
      %v409 = vpop.f32.mrb[0].mxu0
      %v410 = vadd.f32 0.0, %v409
      %411 = vmatprep.mubr.f32.mxu0 0.0
      %412 = vmatmul.mubr.f32.gmra.mrb[0].mxu0 %v315
      %v413 = vpop.f32.mrb[0].mxu0
      %v414 = vadd.f32 0.0, %v413
      %v415 = vpop.f32.mrb[0].mxu0
      %v416 = vadd.f32 0.0, %v415
      %417 = vmatprep.mubr.f32.mxu0 0.0
      %418 = vmatmul.mubr.f32.gmra.mrb[0].mxu0 %v318
      %v419 = vpop.f32.mrb[0].mxu0
      %v420 = vadd.f32 0.0, %v419
      %v421 = vpop.f32.mrb[0].mxu0
      %v422 = vadd.f32 0.0, %v421
      %423 = vmatprep.mubr.f32.mxu0 0.0
      %424 = vmatmul.mubr.f32.gmra.mrb[0].mxu0 %v321
      %v425 = vpop.f32.mrb[0].mxu0
      %v426 = vadd.f32 0.0, %v425
      %v427 = vpop.f32.mrb[0].mxu0
      %v428 = vadd.f32 0.0, %v427
      %429 = vmatprep.mubr.f32.mxu0 0.0
      %430 = vmatmul.mubr.f32.gmra.mrb[0].mxu0 %v324
      %v431 = vpop.f32.mrb[0].mxu0
      %v432 = vadd.f32 0.0, %v431
      %v433 = vpop.f32.mrb[0].mxu0
      %v434 = vadd.f32 0.0, %v433
      %435 = vmatprep.mubr.f32.mxu0 0.0
      %436 = vmatmul.mubr.f32.gmra.mrb[0].mxu0 %v327
      %v437 = vpop.f32.mrb[0].mxu0
      %v438 = vadd.f32 0.0, %v437
      %v439 = vpop.f32.mrb[0].mxu0
      %v440 = vadd.f32 0.0, %v439
      %441 = vdwg.mxu0
      %v443 = vsel %vm304, %v272, 0
      %v446 = vsel %vm304, %v273, 0
      %v449 = vsel %vm304, %v274, 0
      %v452 = vsel %vm304, %v275, 0
      %v455 = vsel %vm304, %v276, 0
      %v458 = vsel %vm304, %v277, 0
      %v461 = vsel %vm304, %v278, 0
      %v464 = vsel %vm304, %v279, 0
      %466 = vmatprep.subr.mxu0 %v281
      %467 = vmatpush1.msra.mxu0 %v280
      %468 = vmatprep.subr.mxu0 %v283
      %469 = vmatpush1.msra.mxu0 %v282
      %470 = vmatprep.subr.mxu0 %v285
      %471 = vmatpush1.msra.mxu0 %v284
      %472 = vmatprep.subr.mxu0 %v287
      %473 = vmatpush1.msra.mxu0 %v286
      %474 = vmatprep.subr.mxu0 0.0
      %475 = vmatpush1.msra.mxu0 0.0
      %476 = vmatprep.subr.mxu0 0.0
      %477 = vmatpush1.msra.mxu0 0.0
      %478 = vmatprep.subr.mxu0 0.0
      %479 = vmatpush1.msra.mxu0 0.0
      %480 = vmatprep.subr.mxu0 0.0
      %481 = vmatpush1.msra.mxu0 0.0
      %482 = vmatprep.subr.mxu0 0.0
      %483 = vmatpush1.msra.mxu0 0.0
      %484 = vmatprep.subr.mxu0 0.0
      %485 = vmatpush1.msra.mxu0 0.0
      %486 = vmatprep.subr.mxu0 0.0
      %487 = vmatpush1.msra.mxu0 0.0
      %488 = vmatprep.subr.mxu0 0.0
      %489 = vmatpush1.msra.mxu0 0.0
      %490 = vmatprep.subr.mxu0 0.0
      %491 = vmatpush1.msra.mxu0 0.0
      %492 = vmatprep.subr.mxu0 0.0
      %493 = vmatpush1.msra.mxu0 0.0
      %494 = vmatprep.subr.mxu0 0.0
      %495 = vmatpush1.msra.mxu0 0.0
      %496 = vmatprep.subr.mxu0 0.0
      %497 = vmatpush1.msra.mxu0 0.0
      %498 = vmatprep.subr.mxu0 0.0
      %499 = vmatpush1.msra.mxu0 0.0
      %500 = vmatprep.subr.mxu0 0.0
      %501 = vmatpush1.msra.mxu0 0.0
      %502 = vmatprep.subr.mxu0 0.0
      %503 = vmatpush1.msra.mxu0 0.0
      %504 = vmatprep.subr.mxu0 0.0
      %505 = vmatpush1.msra.mxu0 0.0
      %506 = vmatprep.subr.mxu0 0.0
      %507 = vmatpush1.msra.mxu0 0.0
      %508 = vmatprep.subr.mxu0 0.0
      %509 = vmatpush1.msra.mxu0 0.0
      %510 = vmatprep.subr.mxu0 0.0
      %511 = vmatpush1.msra.mxu0 0.0
      %512 = vmatprep.subr.mxu0 0.0
      %513 = vmatpush1.msra.mxu0 0.0
      %514 = vmatprep.subr.mxu0 0.0
      %515 = vmatpush1.msra.mxu0 0.0
      %516 = vmatprep.subr.mxu0 0.0
      %517 = vmatpush1.msra.mxu0 0.0
      %518 = vmatprep.subr.mxu0 0.0
      %519 = vmatpush1.msra.mxu0 0.0
      %520 = vmatprep.subr.mxu0 0.0
      %521 = vmatpush1.msra.mxu0 0.0
      %522 = vmatprep.subr.mxu0 0.0
      %523 = vmatpush1.msra.mxu0 0.0
      %524 = vmatprep.subr.mxu0 0.0
      %525 = vmatpush1.msra.mxu0 0.0
      %526 = vmatprep.subr.mxu0 0.0
      %527 = vmatpush1.msra.mxu0 0.0
      %528 = vmatprep.subr.mxu0 0.0
      %529 = vmatpush1.msra.mxu0 0.0
      %530 = vmatprep.mubr.f32.mxu0 0.0
      %531 = vmatmul.mubr.f32.gmra.mrb[0].mxu0 %v443
      %v532 = vpop.f32.mrb[0].mxu0
      %v533 = vadd.f32 %v396, %v532
      %v534 = vpop.f32.mrb[0].mxu0
      %v535 = vadd.f32 %v398, %v534
      %536 = vmatprep.mubr.f32.mxu0 0.0
      %537 = vmatmul.mubr.f32.gmra.mrb[0].mxu0 %v446
      %v538 = vpop.f32.mrb[0].mxu0
      %v539 = vadd.f32 %v402, %v538
      %v540 = vpop.f32.mrb[0].mxu0
      %v541 = vadd.f32 %v404, %v540
      %542 = vmatprep.mubr.f32.mxu0 0.0
      %543 = vmatmul.mubr.f32.gmra.mrb[0].mxu0 %v449
      %v544 = vpop.f32.mrb[0].mxu0
      %v545 = vadd.f32 %v408, %v544
      %v546 = vpop.f32.mrb[0].mxu0
      %v547 = vadd.f32 %v410, %v546
      %548 = vmatprep.mubr.f32.mxu0 0.0
      %549 = vmatmul.mubr.f32.gmra.mrb[0].mxu0 %v452
      %v550 = vpop.f32.mrb[0].mxu0
      %v551 = vadd.f32 %v414, %v550
      %v552 = vpop.f32.mrb[0].mxu0
      %v553 = vadd.f32 %v416, %v552
      %554 = vmatprep.mubr.f32.mxu0 0.0
      %555 = vmatmul.mubr.f32.gmra.mrb[0].mxu0 %v455
      %v556 = vpop.f32.mrb[0].mxu0
      %v557 = vadd.f32 %v420, %v556
      %v558 = vpop.f32.mrb[0].mxu0
      %v559 = vadd.f32 %v422, %v558
      %560 = vmatprep.mubr.f32.mxu0 0.0
      %561 = vmatmul.mubr.f32.gmra.mrb[0].mxu0 %v458
      %v562 = vpop.f32.mrb[0].mxu0
      %v563 = vadd.f32 %v426, %v562
      %v564 = vpop.f32.mrb[0].mxu0
      %v565 = vadd.f32 %v428, %v564
      %566 = vmatprep.mubr.f32.mxu0 0.0
      %567 = vmatmul.mubr.f32.gmra.mrb[0].mxu0 %v461
      %v568 = vpop.f32.mrb[0].mxu0
      %v569 = vadd.f32 %v432, %v568
      %v570 = vpop.f32.mrb[0].mxu0
      %v571 = vadd.f32 %v434, %v570
      %572 = vmatprep.mubr.f32.mxu0 0.0
      %573 = vmatmul.mubr.f32.gmra.mrb[0].mxu0 %v464
      %v574 = vpop.f32.mrb[0].mxu0
      %v575 = vadd.f32 %v438, %v574
      %v576 = vpop.f32.mrb[0].mxu0
      %v577 = vadd.f32 %v440, %v576
      %578 = vdwg.mxu0
      %v579 = vld [vmem:[%s4] sm:$0xff]
      %v580 = vld [vmem:[%s4 + $0x8] sm:$0xff]
      %v581 = vld [vmem:[%s4 + $0x10] sm:$0xff]
      %v582 = vld [vmem:[%s4 + $0x18] sm:$0xff]
      %v583 = vld [vmem:[%s4 + $0x20] sm:$0xff]
      %v584 = vld [vmem:[%s4 + $0x28] sm:$0xff]
      %v585 = vld [vmem:[%s4 + $0x30] sm:$0xff]
      %v586 = vld [vmem:[%s4 + $0x38] sm:$0xff]
      %588 = vset.pattern.permute.xlu0 0
      %589 = vperm.xlu0 %588, %v579
      %v590 = vpop.permute.xlu0 %589
      %593 = vset.pattern.permute.xlu0 0
      %594 = vperm.xlu0 %593, %v580
      %v595 = vpop.permute.xlu0 %594
      %598 = vset.pattern.permute.xlu0 0
      %599 = vperm.xlu0 %598, %v581
      %v600 = vpop.permute.xlu0 %599
      %603 = vset.pattern.permute.xlu0 0
      %604 = vperm.xlu0 %603, %v582
      %v605 = vpop.permute.xlu0 %604
      %608 = vset.pattern.permute.xlu0 0
      %609 = vperm.xlu0 %608, %v583
      %v610 = vpop.permute.xlu0 %609
      %613 = vset.pattern.permute.xlu0 0
      %614 = vperm.xlu0 %613, %v584
      %v615 = vpop.permute.xlu0 %614
      %618 = vset.pattern.permute.xlu0 0
      %619 = vperm.xlu0 %618, %v585
      %v620 = vpop.permute.xlu0 %619
      %623 = vset.pattern.permute.xlu0 0
      %624 = vperm.xlu0 %623, %v586
      %v625 = vpop.permute.xlu0 %624
      %v627 = vmul.f32 %v533, %v590
      %v628 = vmul.f32 %v535, %v590
      %v629 = vmul.f32 %v539, %v595
      %v630 = vmul.f32 %v541, %v595
      %v631 = vmul.f32 %v545, %v600
      %v632 = vmul.f32 %v547, %v600
      %v633 = vmul.f32 %v551, %v605
      %v634 = vmul.f32 %v553, %v605
      %v635 = vmul.f32 %v557, %v610
      %v636 = vmul.f32 %v559, %v610
      %v637 = vmul.f32 %v563, %v615
      %v638 = vmul.f32 %v565, %v615
      %v639 = vmul.f32 %v569, %v620
      %v640 = vmul.f32 %v571, %v620
      %v641 = vmul.f32 %v575, %v625
      %v642 = vmul.f32 %v577, %v625
      %v643 = vld [vmem:[%s5] sm:$0xff]
      %v644 = vld [vmem:[%s5 + $0x8] sm:$0xff]
      %v645 = vld [vmem:[%s5 + $0x10] sm:$0xff]
      %v646 = vld [vmem:[%s5 + $0x18] sm:$0xff]
      %v647 = vld [vmem:[%s5 + $0x20] sm:$0xff]
      %v648 = vld [vmem:[%s5 + $0x28] sm:$0xff]
      %v649 = vld [vmem:[%s5 + $0x30] sm:$0xff]
      %v650 = vld [vmem:[%s5 + $0x38] sm:$0xff]
      %652 = vset.pattern.permute.xlu0 0
      %653 = vperm.xlu0 %652, %v643
      %v654 = vpop.permute.xlu0 %653
      %657 = vset.pattern.permute.xlu0 0
      %658 = vperm.xlu0 %657, %v644
      %v659 = vpop.permute.xlu0 %658
      %662 = vset.pattern.permute.xlu0 0
      %663 = vperm.xlu0 %662, %v645
      %v664 = vpop.permute.xlu0 %663
      %667 = vset.pattern.permute.xlu0 0
      %668 = vperm.xlu0 %667, %v646
      %v669 = vpop.permute.xlu0 %668
      %672 = vset.pattern.permute.xlu0 0
      %673 = vperm.xlu0 %672, %v647
      %v674 = vpop.permute.xlu0 %673
      %677 = vset.pattern.permute.xlu0 0
      %678 = vperm.xlu0 %677, %v648
      %v679 = vpop.permute.xlu0 %678
      %682 = vset.pattern.permute.xlu0 0
      %683 = vperm.xlu0 %682, %v649
      %v684 = vpop.permute.xlu0 %683
      %687 = vset.pattern.permute.xlu0 0
      %688 = vperm.xlu0 %687, %v650
      %v689 = vpop.permute.xlu0 %688
      %v691 = vadd.f32 %v627, %v654
      %v692 = vadd.f32 %v628, %v654
      %v693 = vadd.f32 %v629, %v659
      %v694 = vadd.f32 %v630, %v659
      %v695 = vadd.f32 %v631, %v664
      %v696 = vadd.f32 %v632, %v664
      %v697 = vadd.f32 %v633, %v669
      %v698 = vadd.f32 %v634, %v669
      %v699 = vadd.f32 %v635, %v674
      %v700 = vadd.f32 %v636, %v674
      %v701 = vadd.f32 %v637, %v679
      %v702 = vadd.f32 %v638, %v679
      %v703 = vadd.f32 %v639, %v684
      %v704 = vadd.f32 %v640, %v684
      %v705 = vadd.f32 %v641, %v689
      %v706 = vadd.f32 %v642, %v689
      %v707 = vxor.u32 %v691, 2147483648
      %v708 = vxor.u32 %v692, 2147483648
      %v709 = vxor.u32 %v693, 2147483648
      %v710 = vxor.u32 %v694, 2147483648
      %v711 = vxor.u32 %v695, 2147483648
      %v712 = vxor.u32 %v696, 2147483648
      %v713 = vxor.u32 %v697, 2147483648
      %v714 = vxor.u32 %v698, 2147483648
      %v715 = vxor.u32 %v699, 2147483648
      %v716 = vxor.u32 %v700, 2147483648
      %v717 = vxor.u32 %v701, 2147483648
      %v718 = vxor.u32 %v702, 2147483648
      %v719 = vxor.u32 %v703, 2147483648
      %v720 = vxor.u32 %v704, 2147483648
      %v721 = vxor.u32 %v705, 2147483648
      %v722 = vxor.u32 %v706, 2147483648
      %v723 = vmul.f32 %v707, 1.442695
      %v724 = vpow.pop %v723
      %v725 = vmul.f32 %v708, 1.442695
      %v726 = vpow.pop %v725
      %v727 = vmul.f32 %v709, 1.442695
      %v728 = vpow.pop %v727
      %v729 = vmul.f32 %v710, 1.442695
      %v730 = vpow.pop %v729
      %v731 = vmul.f32 %v711, 1.442695
      %v732 = vpow.pop %v731
      %v733 = vmul.f32 %v712, 1.442695
      %v734 = vpow.pop %v733
      %v735 = vmul.f32 %v713, 1.442695
      %v736 = vpow.pop %v735
      %v737 = vmul.f32 %v714, 1.442695
      %v738 = vpow.pop %v737
      %v739 = vmul.f32 %v715, 1.442695
      %v740 = vpow.pop %v739
      %v741 = vmul.f32 %v716, 1.442695
      %v742 = vpow.pop %v741
      %v743 = vmul.f32 %v717, 1.442695
      %v744 = vpow.pop %v743
      %v745 = vmul.f32 %v718, 1.442695
      %v746 = vpow.pop %v745
      %v747 = vmul.f32 %v719, 1.442695
      %v748 = vpow.pop %v747
      %v749 = vmul.f32 %v720, 1.442695
      %v750 = vpow.pop %v749
      %v751 = vmul.f32 %v721, 1.442695
      %v752 = vpow.pop %v751
      %v753 = vmul.f32 %v722, 1.442695
      %v754 = vpow.pop %v753
      %v755 = vadd.f32 %v724, 1.0
      %v756 = vadd.f32 %v726, 1.0
      %v757 = vadd.f32 %v728, 1.0
      %v758 = vadd.f32 %v730, 1.0
      %v759 = vadd.f32 %v732, 1.0
      %v760 = vadd.f32 %v734, 1.0
      %v761 = vadd.f32 %v736, 1.0
      %v762 = vadd.f32 %v738, 1.0
      %v763 = vadd.f32 %v740, 1.0
      %v764 = vadd.f32 %v742, 1.0
      %v765 = vadd.f32 %v744, 1.0
      %v766 = vadd.f32 %v746, 1.0
      %v767 = vadd.f32 %v748, 1.0
      %v768 = vadd.f32 %v750, 1.0
      %v769 = vadd.f32 %v752, 1.0
      %v770 = vadd.f32 %v754, 1.0
      %v771 = vrcp.pop %v755
      %v772 = vmul.f32 1.0, %v771
      %v773 = vrcp.pop %v756
      %v774 = vmul.f32 1.0, %v773
      %v775 = vrcp.pop %v757
      %v776 = vmul.f32 1.0, %v775
      %v777 = vrcp.pop %v758
      %v778 = vmul.f32 1.0, %v777
      %v779 = vrcp.pop %v759
      %v780 = vmul.f32 1.0, %v779
      %v781 = vrcp.pop %v760
      %v782 = vmul.f32 1.0, %v781
      %v783 = vrcp.pop %v761
      %v784 = vmul.f32 1.0, %v783
      %v785 = vrcp.pop %v762
      %v786 = vmul.f32 1.0, %v785
      %v787 = vrcp.pop %v763
      %v788 = vmul.f32 1.0, %v787
      %v789 = vrcp.pop %v764
      %v790 = vmul.f32 1.0, %v789
      %v791 = vrcp.pop %v765
      %v792 = vmul.f32 1.0, %v791
      %v793 = vrcp.pop %v766
      %v794 = vmul.f32 1.0, %v793
      %v795 = vrcp.pop %v767
      %v796 = vmul.f32 1.0, %v795
      %v797 = vrcp.pop %v768
      %v798 = vmul.f32 1.0, %v797
      %v799 = vrcp.pop %v769
      %v800 = vmul.f32 1.0, %v799
      %v801 = vrcp.pop %v770
      %v802 = vmul.f32 1.0, %v801
      %v803 = vmul.f32 %v691, %v772
      %v804 = vmul.f32 %v692, %v774
      %v805 = vmul.f32 %v693, %v776
      %v806 = vmul.f32 %v694, %v778
      %v807 = vmul.f32 %v695, %v780
      %v808 = vmul.f32 %v696, %v782
      %v809 = vmul.f32 %v697, %v784
      %v810 = vmul.f32 %v698, %v786
      %v811 = vmul.f32 %v699, %v788
      %v812 = vmul.f32 %v700, %v790
      %v813 = vmul.f32 %v701, %v792
      %v814 = vmul.f32 %v702, %v794
      %v815 = vmul.f32 %v703, %v796
      %v816 = vmul.f32 %v704, %v798
      %v817 = vmul.f32 %v705, %v800
      %v818 = vmul.f32 %v706, %v802
      %819 = vst [vmem:[%s271] sm:$0xff] %v803
      %820 = vst [vmem:[%s271 + $0x8] sm:$0xff] %v804
      %821 = vst [vmem:[%s271 + $0x10] sm:$0xff] %v805
      %822 = vst [vmem:[%s271 + $0x18] sm:$0xff] %v806
      %823 = vst [vmem:[%s271 + $0x20] sm:$0xff] %v807
      %824 = vst [vmem:[%s271 + $0x28] sm:$0xff] %v808
      %825 = vst [vmem:[%s271 + $0x30] sm:$0xff] %v809
      %826 = vst [vmem:[%s271 + $0x38] sm:$0xff] %v810
      %827 = vst [vmem:[%s271 + $0x40] sm:$0xff] %v811
      %828 = vst [vmem:[%s271 + $0x48] sm:$0xff] %v812
      %829 = vst [vmem:[%s271 + $0x50] sm:$0xff] %v813
      %830 = vst [vmem:[%s271 + $0x58] sm:$0xff] %v814
      %831 = vst [vmem:[%s271 + $0x60] sm:$0xff] %v815
      %832 = vst [vmem:[%s271 + $0x68] sm:$0xff] %v816
      %833 = vst [vmem:[%s271 + $0x70] sm:$0xff] %v817
      %834 = vst [vmem:[%s271 + $0x78] sm:$0xff] %v818
      %p835 = scmp.lt.s32.totalorder %s17, 1
      %s836 = scalar_select %p835, %s17, 1
      %s837 = smul.addr %s836, 16
      %s838 = smul.addr %s837, 8
      %s839 = scalar_lea.vmem %s6, %s838
      // Predicated region
      $region45: #{c3_b_cbam_forward.9} parent=43 // pred_check
        %p840 = pneg %p171
      $region46: #{c3_b_cbam_forward.9} parent=43 // pred_check_branch
        %842 = sbr.rel (%p840) target = $region48
      $region47: #{c3_b_cbam_forward.9} parent=43 // pred_region
        _
      $region48: #{c3_b_cbam_forward.9} parent=43 // pred_fallthru
        _
    $region44: #{c3_b_cbam_forward.9} parent=5 // pred_fallthru
      _
    %p843 = scmp.le.s32.totalorder 2, %s12
    // Predicated region
    $region49: #{c3_b_cbam_forward.9} parent=5 // pred_check
      %p844 = pneg %p843
    $region50: #{c3_b_cbam_forward.9} parent=5 // pred_check_branch
      %846 = sbr.rel (%p844) target = $region52
    $region51: #{c3_b_cbam_forward.9} parent=5 // pred_region
      %s847 = ssub.s32 %s12, 2
      // Predicated region
      $region53: #{c3_b_cbam_forward.9} parent=51 // pred_check
        %p848 = pneg %p177
      $region54: #{c3_b_cbam_forward.9} parent=51 // pred_check_branch
        %850 = sbr.rel (%p848) target = $region56
      $region55: #{c3_b_cbam_forward.9} parent=51 // pred_region
        %p851 = scmp.lt.s32.totalorder %s18, 1
        %s852 = scalar_select %p851, %s18, 1
        %s853 = smul.addr %s852, 16
        %s854 = smul.addr %s853, 8
        %s855 = scalar_lea.vmem %s6, %s854
      $region56: #{c3_b_cbam_forward.9} parent=51 // pred_fallthru
        _
    $region52: #{c3_b_cbam_forward.9} parent=5 // pred_fallthru
      _
  $region6: #{c3_b_cbam_forward.9} parent=0 // loop_footer
    %s16 = sadd.s32 1, %s12
  $region7: #{c3_b_cbam_forward.9} parent=0 // loop_footer_branch
    %11 = sbr.rel target = $region3
  $region8: #{c3_b_cbam_forward.9} parent=0 // loop_exit
    _

// kernel: c3_b_cbam_forward.8
$region0: #{c3_b_cbam_forward.8}
  #allocation0 [shape = 'u32[]', space=smem, size = 0x4, offset = 0x4, fixed_abs, tag = 'smem constant byte address 0x4 - core index']
  #allocation1 [shape = 'u32[144,128]{1,0:T(1,128)}', space=vmem, size = 0x12000, scoped, tag = 'internal scratch']
  %s0 = inlined_call_operand.vmem [shape: f32[2,2,22,22], index: 0, kind: input, shape index: {}]
  %s1 = inlined_call_operand.vmem [shape: f32[2,32,16,16], index: 1, kind: input, shape index: {}]
  %s2 = inlined_call_operand.vmem [shape: f32[2,32,16,16], index: 2, kind: input, shape index: {}]
  %s3 = inlined_call_operand.vmem [shape: f32[98], index: 3, kind: input, shape index: {}]
  %s4 = inlined_call_operand.vmem [shape: f32[2], index: 4, kind: input, shape index: {}]
  %s5 = inlined_call_operand.vmem [shape: f32[2,32,16,16], index: 5, kind: output, shape index: {}]
  %s6 = sld [smem:[#allocation0]]
  $region61: #{c3_b_cbam_forward.8} parent=0
    _
  %s8 = ssub.s32 1, %s6
  %s9 = scalar_select 0, %s8, %s6
  $region1: #{c3_b_cbam_forward.8} parent=0
    #allocation2 [shape = 'u8[512]{0}', space=smem, size = 0x200, scoped, tag = 'input window, operand 3, single buffered']
    #allocation3 [shape = 's32[2]{0}', space=sflag, size = 0x8, scoped, tag = 'scoped memory for c3_b_cbam_forward.8']
    #allocation4 [shape = 'u8[512]{0}', space=smem, size = 0x200, scoped, tag = 'input window, operand 4, single buffered']
    #allocation5 [shape = 's32[1]{0}', space=sflag, size = 0x4, scoped, tag = 'scoped memory for c3_b_cbam_forward.8']
    %10 = vsyncpa [#allocation3], 0
    %11 = vsyncpa [#allocation5], 0
    loop: start=0, step=1, limit=4
    $region2: #{c3_b_cbam_forward.8} parent=1 // loop_pre_header
      _
    $region3: #{c3_b_cbam_forward.8} parent=1 // loop_header
      %s13 = sphi 0, %s17
      %p14 = scmp.ge.s32.totalorder %s13, 4
      %s23 = sphi 0, %s25
      %s26 = sphi 0, %s23
      %s27 = sphi 0, %s26
      %s43 = sphi 0, %s27
      %s49 = sphi 0, %s51
      %s52 = sphi 0, %s49
      %s53 = sphi 0, %s52
      %s69 = sphi 0, %s53
      %s75 = sphi 0, %s77
      %s78 = sphi 0, %s75
      %s79 = sphi 0, %s78
      %s95 = sphi 0, %s79
      %s99 = sphi 0, %s99
      %s101 = sphi 0, %s99
      %s102 = sphi 0, %s101
      %s116 = sphi 0, %s102
      %s120 = sphi 0, %s120
      %s122 = sphi 0, %s120
      %s123 = sphi 0, %s122
      %s137 = sphi 0, %s123
      %s143 = sphi 0, %s145
      %s146 = sphi 0, %s143
      %s147 = sphi 0, %s146
      %s163 = sphi 0, %s147
    $region4: #{c3_b_cbam_forward.8} parent=1 // loop_header_branch
      %16 = sbr.rel (%p14) target = $region8
    $region5: #{c3_b_cbam_forward.8} parent=1 // loop_body
      %s18 = ssub.s32 %s13, 1
      %s19 = ssub.s32 %s13, 2
      %s20 = sadd.s32 %s13, 1
      %s21 = ssub.s32 %s13, %s20
      %p22 = scmp.eq.s32.totalorder %s21, 0
      %s24 = sadd.s32 %s23, 1
      %s25 = scalar_select %p22, %s23, %s24
      %p28 = pneg %p22
      %p29 = scmp.eq.s32.totalorder %s13, 1
      %p30 = por %p28, %p29
      %p31 = scmp.ne.s32.totalorder %s23, %s26
      %p32 = scmp.eq.s32.totalorder %s13, 0
      %p33 = por %p31, %p32
      %p34 = scmp.ne.s32.totalorder %s23, %s26
      %p35 = scmp.eq.s32.totalorder %s18, 1
      %p36 = por %p34, %p35
      %p37 = scmp.ne.s32.totalorder %s26, %s27
      %p38 = scmp.eq.s32.totalorder %s18, 0
      %p39 = por %p37, %p38
      %p40 = scmp.ne.s32.totalorder %s26, %s27
      %p41 = scmp.eq.s32.totalorder %s19, 1
      %p42 = por %p40, %p41
      %p44 = scmp.ne.s32.totalorder %s27, %s43
      %p45 = scmp.eq.s32.totalorder %s19, 0
      %p46 = por %p44, %p45
      %s47 = ssub.s32 %s13, %s20
      %p48 = scmp.eq.s32.totalorder %s47, 0
      %s50 = sadd.s32 %s49, 1
      %s51 = scalar_select %p48, %s49, %s50
      %p54 = pneg %p48
      %p55 = scmp.eq.s32.totalorder %s13, 1
      %p56 = por %p54, %p55
      %p57 = scmp.ne.s32.totalorder %s49, %s52
      %p58 = scmp.eq.s32.totalorder %s13, 0
      %p59 = por %p57, %p58
      %p60 = scmp.ne.s32.totalorder %s49, %s52
      %p61 = scmp.eq.s32.totalorder %s18, 1
      %p62 = por %p60, %p61
      %p63 = scmp.ne.s32.totalorder %s52, %s53
      %p64 = scmp.eq.s32.totalorder %s18, 0
      %p65 = por %p63, %p64
      %p66 = scmp.ne.s32.totalorder %s52, %s53
      %p67 = scmp.eq.s32.totalorder %s19, 1
      %p68 = por %p66, %p67
      %p70 = scmp.ne.s32.totalorder %s53, %s69
      %p71 = scmp.eq.s32.totalorder %s19, 0
      %p72 = por %p70, %p71
      %s73 = ssub.s32 %s13, %s20
      %p74 = scmp.eq.s32.totalorder %s73, 0
      %s76 = sadd.s32 %s75, 1
      %s77 = scalar_select %p74, %s75, %s76
      %p80 = pneg %p74
      %p81 = scmp.eq.s32.totalorder %s13, 1
      %p82 = por %p80, %p81
      %p83 = scmp.ne.s32.totalorder %s75, %s78
      %p84 = scmp.eq.s32.totalorder %s13, 0
      %p85 = por %p83, %p84
      %p86 = scmp.ne.s32.totalorder %s75, %s78
      %p87 = scmp.eq.s32.totalorder %s18, 1
      %p88 = por %p86, %p87
      %p89 = scmp.ne.s32.totalorder %s78, %s79
      %p90 = scmp.eq.s32.totalorder %s18, 0
      %p91 = por %p89, %p90
      %p92 = scmp.ne.s32.totalorder %s78, %s79
      %p93 = scmp.eq.s32.totalorder %s19, 1
      %p94 = por %p92, %p93
      %p96 = scmp.ne.s32.totalorder %s79, %s95
      %p97 = scmp.eq.s32.totalorder %s19, 0
      %p98 = por %p96, %p97
      %s100 = sadd.s32 %s99, 1
      %p103 = scmp.eq.s32.totalorder %s13, 1
      %p104 = scmp.ne.s32.totalorder %s99, %s101
      %p105 = scmp.eq.s32.totalorder %s13, 0
      %p106 = por %p104, %p105
      %p107 = scmp.ne.s32.totalorder %s99, %s101
      %p108 = scmp.eq.s32.totalorder %s18, 1
      %p109 = por %p107, %p108
      %p110 = scmp.ne.s32.totalorder %s101, %s102
      %p111 = scmp.eq.s32.totalorder %s18, 0
      %p112 = por %p110, %p111
      %p113 = scmp.ne.s32.totalorder %s101, %s102
      %p114 = scmp.eq.s32.totalorder %s19, 1
      %p115 = por %p113, %p114
      %p117 = scmp.ne.s32.totalorder %s102, %s116
      %p118 = scmp.eq.s32.totalorder %s19, 0
      %p119 = por %p117, %p118
      %s121 = sadd.s32 %s120, 1
      %p124 = scmp.eq.s32.totalorder %s13, 1
      %p125 = scmp.ne.s32.totalorder %s120, %s122
      %p126 = scmp.eq.s32.totalorder %s13, 0
      %p127 = por %p125, %p126
      %p128 = scmp.ne.s32.totalorder %s120, %s122
      %p129 = scmp.eq.s32.totalorder %s18, 1
      %p130 = por %p128, %p129
      %p131 = scmp.ne.s32.totalorder %s122, %s123
      %p132 = scmp.eq.s32.totalorder %s18, 0
      %p133 = por %p131, %p132
      %p134 = scmp.ne.s32.totalorder %s122, %s123
      %p135 = scmp.eq.s32.totalorder %s19, 1
      %p136 = por %p134, %p135
      %p138 = scmp.ne.s32.totalorder %s123, %s137
      %p139 = scmp.eq.s32.totalorder %s19, 0
      %p140 = por %p138, %p139
      %s141 = ssub.s32 %s13, %s20
      %p142 = scmp.eq.s32.totalorder %s141, 0
      %s144 = sadd.s32 %s143, 1
      %s145 = scalar_select %p142, %s143, %s144
      %p148 = pneg %p142
      %p149 = scmp.eq.s32.totalorder %s13, 1
      %p150 = por %p148, %p149
      %p151 = scmp.ne.s32.totalorder %s143, %s146
      %p152 = scmp.eq.s32.totalorder %s13, 0
      %p153 = por %p151, %p152
      %p154 = scmp.ne.s32.totalorder %s143, %s146
      %p155 = scmp.eq.s32.totalorder %s18, 1
      %p156 = por %p154, %p155
      %p157 = scmp.ne.s32.totalorder %s146, %s147
      %p158 = scmp.eq.s32.totalorder %s18, 0
      %p159 = por %p157, %p158
      %p160 = scmp.ne.s32.totalorder %s146, %s147
      %p161 = scmp.eq.s32.totalorder %s19, 1
      %p162 = por %p160, %p161
      %p164 = scmp.ne.s32.totalorder %s147, %s163
      %p165 = scmp.eq.s32.totalorder %s19, 0
      %p166 = por %p164, %p165
      %p167 = scmp.le.s32.totalorder 1, %s13
      %p168 = scmp.lt.s32.totalorder %s13, 3
      %p169 = pnand %p167, %p168
      %p170 = pneg %p169
      // Predicated region
      $region9: #{c3_b_cbam_forward.8} parent=5 // pred_check
        _
      $region10: #{c3_b_cbam_forward.8} parent=5 // pred_check_branch
        %172 = sbr.rel (%p169) target = $region12
      $region11: #{c3_b_cbam_forward.8} parent=5 // pred_region
        %s173 = ssub.s32 %s13, 1
        // Predicated region
        $region13: #{c3_b_cbam_forward.8} parent=11 // pred_check
          %p174 = pneg %p112
        $region14: #{c3_b_cbam_forward.8} parent=11 // pred_check_branch
          %176 = sbr.rel (%p174) target = $region16
        $region15: #{c3_b_cbam_forward.8} parent=11 // pred_region
          %s178 = ssub.s32 16, 16
          %179 = vsyncadd [#allocation3], %s178
          %s181 = sshll.u32 %s3, 4
          %s182 = int_to_ptr.vmem [resolvable:$true] %s181
          %184 = dma.vmem_to_smem %s182, 16, [#allocation2], [#allocation3]
        $region16: #{c3_b_cbam_forward.8} parent=11 // pred_fallthru
          _
        // Predicated region
        $region17: #{c3_b_cbam_forward.8} parent=11 // pred_check
          %p185 = pneg %p133
        $region18: #{c3_b_cbam_forward.8} parent=11 // pred_check_branch
          %187 = sbr.rel (%p185) target = $region20
        $region19: #{c3_b_cbam_forward.8} parent=11 // pred_region
          %s189 = ssub.s32 16, 16
          %190 = vsyncadd [#allocation5], %s189
          %s192 = sshll.u32 %s4, 4
          %s193 = int_to_ptr.vmem [resolvable:$true] %s192
          %195 = dma.vmem_to_smem %s193, 16, [#allocation4], [#allocation5]
        $region20: #{c3_b_cbam_forward.8} parent=11 // pred_fallthru
          _
      $region12: #{c3_b_cbam_forward.8} parent=5 // pred_fallthru
        _
      %p196 = scmp.lt.s32.totalorder %s13, 2
      // Predicated region
      $region21: #{c3_b_cbam_forward.8} parent=5 // pred_check
        %p197 = pneg %p196
      $region22: #{c3_b_cbam_forward.8} parent=5 // pred_check_branch
        %199 = sbr.rel (%p197) target = $region24
      $region23: #{c3_b_cbam_forward.8} parent=5 // pred_region
        // Predicated region
        $region25: #{c3_b_cbam_forward.8} parent=23 // pred_check
          %p200 = pneg %p33
        $region26: #{c3_b_cbam_forward.8} parent=23 // pred_check_branch
          %202 = sbr.rel (%p200) target = $region28
        $region27: #{c3_b_cbam_forward.8} parent=23 // pred_region
          %p203 = scmp.lt.s32.totalorder %s13, 1
          %s204 = scalar_select %p203, %s13, 1
          %s205 = smul.addr %s204, 6
          %s206 = smul.addr %s205, 8
          %s207 = scalar_lea.vmem %s0, %s206
        $region28: #{c3_b_cbam_forward.8} parent=23 // pred_fallthru
          _
        // Predicated region
        $region29: #{c3_b_cbam_forward.8} parent=23 // pred_check
          %p208 = pneg %p59
        $region30: #{c3_b_cbam_forward.8} parent=23 // pred_check_branch
          %210 = sbr.rel (%p208) target = $region32
        $region31: #{c3_b_cbam_forward.8} parent=23 // pred_region
          %p211 = scmp.lt.s32.totalorder %s13, 1
          %s212 = scalar_select %p211, %s13, 1
          %s213 = smul.addr %s212, 64
          %s214 = smul.addr %s213, 8
          %s215 = scalar_lea.vmem %s1, %s214
        $region32: #{c3_b_cbam_forward.8} parent=23 // pred_fallthru
          _
        // Predicated region
        $region33: #{c3_b_cbam_forward.8} parent=23 // pred_check
          %p216 = pneg %p85
        $region34: #{c3_b_cbam_forward.8} parent=23 // pred_check_branch
          %218 = sbr.rel (%p216) target = $region36
        $region35: #{c3_b_cbam_forward.8} parent=23 // pred_region
          %p219 = scmp.lt.s32.totalorder %s13, 1
          %s220 = scalar_select %p219, %s13, 1
          %s221 = smul.addr %s220, 64
          %s222 = smul.addr %s221, 8
          %s223 = scalar_lea.vmem %s2, %s222
        $region36: #{c3_b_cbam_forward.8} parent=23 // pred_fallthru
          _
      $region24: #{c3_b_cbam_forward.8} parent=5 // pred_fallthru
        _
      %p224 = scmp.le.s32.totalorder 1, %s13
      %p225 = scmp.lt.s32.totalorder %s13, 3
      %p226 = pnand %p224, %p225
      %p227 = pneg %p226
      // Predicated region
      $region37: #{c3_b_cbam_forward.8} parent=5 // pred_check
        _
      $region38: #{c3_b_cbam_forward.8} parent=5 // pred_check_branch
        %229 = sbr.rel (%p226) target = $region40
      $region39: #{c3_b_cbam_forward.8} parent=5 // pred_region
        %s230 = ssub.s32 %s13, 1
        // Predicated region
        $region41: #{c3_b_cbam_forward.8} parent=39 // pred_check
          %p231 = pneg %p112
        $region42: #{c3_b_cbam_forward.8} parent=39 // pred_check_branch
          %233 = sbr.rel (%p231) target = $region44
        $region43: #{c3_b_cbam_forward.8} parent=39 // pred_region
          %234 = dma.done [#allocation3], 16
        $region44: #{c3_b_cbam_forward.8} parent=39 // pred_fallthru
          _
        // Predicated region
        $region45: #{c3_b_cbam_forward.8} parent=39 // pred_check
          %p235 = pneg %p133
        $region46: #{c3_b_cbam_forward.8} parent=39 // pred_check_branch
          %237 = sbr.rel (%p235) target = $region48
        $region47: #{c3_b_cbam_forward.8} parent=39 // pred_region
          %238 = dma.done [#allocation5], 16
        $region48: #{c3_b_cbam_forward.8} parent=39 // pred_fallthru
          _
        %239 = sfence
        %p240 = scmp.lt.s32.totalorder %s18, 1
        %s241 = scalar_select %p240, %s18, 1
        %s242 = smul.addr %s241, 6
        %s243 = smul.addr %s242, 8
        %s244 = scalar_lea.vmem %s0, %s243
        %p245 = pneg %p39
        %p246 = pneg %p36
        %p247 = scmp.lt.s32.totalorder %s18, 1
        %s248 = scalar_select %p247, %s18, 1
        %s249 = smul.addr %s248, 64
        %s250 = smul.addr %s249, 8
        %s251 = scalar_lea.vmem %s1, %s250
        %p252 = pneg %p65
        %p253 = pneg %p62
        %p254 = scmp.lt.s32.totalorder %s18, 1
        %s255 = scalar_select %p254, %s18, 1
        %s256 = smul.addr %s255, 64
        %s257 = smul.addr %s256, 8
        %s258 = scalar_lea.vmem %s2, %s257
        %p259 = pneg %p91
        %p260 = pneg %p88
        %p261 = pneg %p112
        %p262 = pneg %p109
        %p263 = pneg %p133
        %p264 = pneg %p130
        %p265 = pneg %p159
        %p266 = pneg %p156
        %p267 = scmp.lt.s32.totalorder %s18, 1
        %s268 = scalar_select %p267, %s18, 1
        %s269 = smul.addr %s268, 64
        %s270 = smul.addr %s269, 8
        %s271 = scalar_lea.vmem %s5, %s270
        %p272 = scmp.lt.s32.totalorder %s18, 1
        %s273 = scalar_select %p272, %s18, 1
        %s274 = smul.addr %s273, 6
        %s275 = smul.addr %s274, 8
        %s276 = scalar_lea.vmem %s0, %s275
        %p277 = scmp.lt.s32.totalorder %s18, 1
        %s278 = scalar_select %p277, %s18, 1
        %s279 = smul.addr %s278, 64
        %s280 = smul.addr %s279, 8
        %s281 = scalar_lea.vmem %s1, %s280
        %p282 = scmp.lt.s32.totalorder %s18, 1
        %s283 = scalar_select %p282, %s18, 1
        %s284 = smul.addr %s283, 64
        %s285 = smul.addr %s284, 8
        %s286 = scalar_lea.vmem %s2, %s285
        %p287 = scmp.lt.s32.totalorder %s18, 1
        %s288 = scalar_select %p287, %s18, 1
        %s289 = smul.addr %s288, 64
        %s290 = smul.addr %s289, 8
        %s291 = scalar_lea.vmem %s5, %s290
        %s292 = sld [smem:[#allocation2]]
        %v293 = vld [vmem:[%s276] sm:$0xff]
        %v294 = vld [vmem:[%s276 + $0x8] sm:$0xff]
        %v295 = vstv %s292
        %v296 = vmul.f32 %v295, %v293
        %v297 = vmul.f32 %v295, %v294
        %v298 = vadd.f32 %v296, 0.0
        %v299 = vadd.f32 %v297, 0.0
        %s300 = sld [smem:[#allocation2 + $0x1]]
        %v301 = vstv %s300
        %v302 = vmul.f32 %v301, %v293
        %v303 = vmul.f32 %v301, %v294
        %306 = vrot.lane.b32.xlu0 %v302, 127
        %v307 = vpop.permute.xlu0 %306
        %308 = vrot.lane.b32.xlu0 %v303, 127
        %v309 = vpop.permute.xlu0 %308
        %v312 = vadd.f32 %v298, %v307
        %v313 = vadd.f32 %v299, %v309
        %s314 = sld [smem:[#allocation2 + $0x2]]
        %v315 = vstv %s314
        %v316 = vmul.f32 %v315, %v293
        %v317 = vmul.f32 %v315, %v294
        %320 = vrot.lane.b32.xlu0 %v316, 126
        %v321 = vpop.permute.xlu0 %320
        %322 = vrot.lane.b32.xlu0 %v317, 126
        %v323 = vpop.permute.xlu0 %322
        %v326 = vadd.f32 %v312, %v321
        %v327 = vadd.f32 %v313, %v323
        %s328 = sld [smem:[#allocation2 + $0x3]]
        %v329 = vstv %s328
        %v330 = vmul.f32 %v329, %v293
        %v331 = vmul.f32 %v329, %v294
        %334 = vrot.lane.b32.xlu0 %v330, 125
        %v335 = vpop.permute.xlu0 %334
        %336 = vrot.lane.b32.xlu0 %v331, 125
        %v337 = vpop.permute.xlu0 %336
        %v340 = vadd.f32 %v326, %v335
        %v341 = vadd.f32 %v327, %v337
        %s342 = sld [smem:[#allocation2 + $0x4]]
        %v343 = vstv %s342
        %v344 = vmul.f32 %v343, %v293
        %v345 = vmul.f32 %v343, %v294
        %348 = vrot.lane.b32.xlu0 %v344, 124
        %v349 = vpop.permute.xlu0 %348
        %350 = vrot.lane.b32.xlu0 %v345, 124
        %v351 = vpop.permute.xlu0 %350
        %v354 = vadd.f32 %v340, %v349
        %v355 = vadd.f32 %v341, %v351
        %s356 = sld [smem:[#allocation2 + $0x5]]
        %v357 = vstv %s356
        %v358 = vmul.f32 %v357, %v293
        %v359 = vmul.f32 %v357, %v294
        %362 = vrot.lane.b32.xlu0 %v358, 123
        %v363 = vpop.permute.xlu0 %362
        %364 = vrot.lane.b32.xlu0 %v359, 123
        %v365 = vpop.permute.xlu0 %364
        %v368 = vadd.f32 %v354, %v363
        %v369 = vadd.f32 %v355, %v365
        %s370 = sld [smem:[#allocation2 + $0x6]]
        %v371 = vstv %s370
        %v372 = vmul.f32 %v371, %v293
        %v373 = vmul.f32 %v371, %v294
        %376 = vrot.lane.b32.xlu0 %v372, 122
        %v377 = vpop.permute.xlu0 %376
        %378 = vrot.lane.b32.xlu0 %v373, 122
        %v379 = vpop.permute.xlu0 %378
        %v382 = vadd.f32 %v368, %v377
        %v383 = vadd.f32 %v369, %v379
        %s384 = sld [smem:[#allocation2 + $0x7]]
        %v385 = vld [vmem:[%s276 + $0x1] sm:$0xff]
        %v386 = vld [vmem:[%s276 + $0x9] sm:$0xff]
        %v387 = vstv %s384
        %v388 = vmul.f32 %v387, %v385
        %v389 = vmul.f32 %v387, %v386
        %v390 = vadd.f32 %v382, %v388
        %v391 = vadd.f32 %v383, %v389
        %s392 = sld [smem:[#allocation2 + $0x8]]
        %v393 = vstv %s392
        %v394 = vmul.f32 %v393, %v385
        %v395 = vmul.f32 %v393, %v386
        %398 = vrot.lane.b32.xlu0 %v394, 127
        %v399 = vpop.permute.xlu0 %398
        %400 = vrot.lane.b32.xlu0 %v395, 127
        %v401 = vpop.permute.xlu0 %400
        %v404 = vadd.f32 %v390, %v399
        %v405 = vadd.f32 %v391, %v401
        %s406 = sld [smem:[#allocation2 + $0x9]]
        %v407 = vstv %s406
        %v408 = vmul.f32 %v407, %v385
        %v409 = vmul.f32 %v407, %v386
        %412 = vrot.lane.b32.xlu0 %v408, 126
        %v413 = vpop.permute.xlu0 %412
        %414 = vrot.lane.b32.xlu0 %v409, 126
        %v415 = vpop.permute.xlu0 %414
        %v418 = vadd.f32 %v404, %v413
        %v419 = vadd.f32 %v405, %v415
        %s420 = sld [smem:[#allocation2 + $0xa]]
        %v421 = vstv %s420
        %v422 = vmul.f32 %v421, %v385
        %v423 = vmul.f32 %v421, %v386
        %426 = vrot.lane.b32.xlu0 %v422, 125
        %v427 = vpop.permute.xlu0 %426
        %428 = vrot.lane.b32.xlu0 %v423, 125
        %v429 = vpop.permute.xlu0 %428
        %v432 = vadd.f32 %v418, %v427
        %v433 = vadd.f32 %v419, %v429
        %s434 = sld [smem:[#allocation2 + $0xb]]
        %v435 = vstv %s434
        %v436 = vmul.f32 %v435, %v385
        %v437 = vmul.f32 %v435, %v386
        %440 = vrot.lane.b32.xlu0 %v436, 124
        %v441 = vpop.permute.xlu0 %440
        %442 = vrot.lane.b32.xlu0 %v437, 124
        %v443 = vpop.permute.xlu0 %442
        %v446 = vadd.f32 %v432, %v441
        %v447 = vadd.f32 %v433, %v443
        %s448 = sld [smem:[#allocation2 + $0xc]]
        %v449 = vstv %s448
        %v450 = vmul.f32 %v449, %v385
        %v451 = vmul.f32 %v449, %v386
        %454 = vrot.lane.b32.xlu0 %v450, 123
        %v455 = vpop.permute.xlu0 %454
        %456 = vrot.lane.b32.xlu0 %v451, 123
        %v457 = vpop.permute.xlu0 %456
        %v460 = vadd.f32 %v446, %v455
        %v461 = vadd.f32 %v447, %v457
        %s462 = sld [smem:[#allocation2 + $0xd]]
        %v463 = vstv %s462
        %v464 = vmul.f32 %v463, %v385
        %v465 = vmul.f32 %v463, %v386
        %468 = vrot.lane.b32.xlu0 %v464, 122
        %v469 = vpop.permute.xlu0 %468
        %470 = vrot.lane.b32.xlu0 %v465, 122
        %v471 = vpop.permute.xlu0 %470
        %v474 = vadd.f32 %v460, %v469
        %v475 = vadd.f32 %v461, %v471
        %s476 = sld [smem:[#allocation2 + $0xe]]
        %v477 = vld [vmem:[%s276 + $0x2] sm:$0xff]
        %v478 = vld [vmem:[%s276 + $0xa] sm:$0xff]
        %v479 = vstv %s476
        %v480 = vmul.f32 %v479, %v477
        %v481 = vmul.f32 %v479, %v478
        %v482 = vadd.f32 %v474, %v480
        %v483 = vadd.f32 %v475, %v481
        %s484 = sld [smem:[#allocation2 + $0xf]]
        %v485 = vstv %s484
        %v486 = vmul.f32 %v485, %v477
        %v487 = vmul.f32 %v485, %v478
        %490 = vrot.lane.b32.xlu0 %v486, 127
        %v491 = vpop.permute.xlu0 %490
        %492 = vrot.lane.b32.xlu0 %v487, 127
        %v493 = vpop.permute.xlu0 %492
        %v496 = vadd.f32 %v482, %v491
        %v497 = vadd.f32 %v483, %v493
        %s498 = sld [smem:[#allocation2 + $0x10]]
        %v499 = vstv %s498
        %v500 = vmul.f32 %v499, %v477
        %v501 = vmul.f32 %v499, %v478
        %504 = vrot.lane.b32.xlu0 %v500, 126
        %v505 = vpop.permute.xlu0 %504
        %506 = vrot.lane.b32.xlu0 %v501, 126
        %v507 = vpop.permute.xlu0 %506
        %v510 = vadd.f32 %v496, %v505
        %v511 = vadd.f32 %v497, %v507
        %s512 = sld [smem:[#allocation2 + $0x11]]
        %v513 = vstv %s512
        %v514 = vmul.f32 %v513, %v477
        %v515 = vmul.f32 %v513, %v478
        %518 = vrot.lane.b32.xlu0 %v514, 125
        %v519 = vpop.permute.xlu0 %518
        %520 = vrot.lane.b32.xlu0 %v515, 125
        %v521 = vpop.permute.xlu0 %520
        %v524 = vadd.f32 %v510, %v519
        %v525 = vadd.f32 %v511, %v521
        %s526 = sld [smem:[#allocation2 + $0x12]]
        %v527 = vstv %s526
        %v528 = vmul.f32 %v527, %v477
        %v529 = vmul.f32 %v527, %v478
        %532 = vrot.lane.b32.xlu0 %v528, 124
        %v533 = vpop.permute.xlu0 %532
        %534 = vrot.lane.b32.xlu0 %v529, 124
        %v535 = vpop.permute.xlu0 %534
        %v538 = vadd.f32 %v524, %v533
        %v539 = vadd.f32 %v525, %v535
        %s540 = sld [smem:[#allocation2 + $0x13]]
        %v541 = vstv %s540
        %v542 = vmul.f32 %v541, %v477
        %v543 = vmul.f32 %v541, %v478
        %546 = vrot.lane.b32.xlu0 %v542, 123
        %v547 = vpop.permute.xlu0 %546
        %548 = vrot.lane.b32.xlu0 %v543, 123
        %v549 = vpop.permute.xlu0 %548
        %v552 = vadd.f32 %v538, %v547
        %v553 = vadd.f32 %v539, %v549
        %s554 = sld [smem:[#allocation2 + $0x14]]
        %v555 = vstv %s554
        %v556 = vmul.f32 %v555, %v477
        %v557 = vmul.f32 %v555, %v478
        %560 = vrot.lane.b32.xlu0 %v556, 122
        %v561 = vpop.permute.xlu0 %560
        %562 = vrot.lane.b32.xlu0 %v557, 122
        %v563 = vpop.permute.xlu0 %562
        %v566 = vadd.f32 %v552, %v561
        %v567 = vadd.f32 %v553, %v563
        %s568 = sld [smem:[#allocation2 + $0x15]]
        %v569 = vld [vmem:[%s276 + $0x3] sm:$0xff]
        %v570 = vld [vmem:[%s276 + $0xb] sm:$0xff]
        %v571 = vstv %s568
        %v572 = vmul.f32 %v571, %v569
        %v573 = vmul.f32 %v571, %v570
        %v574 = vadd.f32 %v566, %v572
        %v575 = vadd.f32 %v567, %v573
        %s576 = sld [smem:[#allocation2 + $0x16]]
        %v577 = vstv %s576
        %v578 = vmul.f32 %v577, %v569
        %v579 = vmul.f32 %v577, %v570
        %582 = vrot.lane.b32.xlu0 %v578, 127
        %v583 = vpop.permute.xlu0 %582
        %584 = vrot.lane.b32.xlu0 %v579, 127
        %v585 = vpop.permute.xlu0 %584
        %v588 = vadd.f32 %v574, %v583
        %v589 = vadd.f32 %v575, %v585
        %s590 = sld [smem:[#allocation2 + $0x17]]
        %v591 = vstv %s590
        %v592 = vmul.f32 %v591, %v569
        %v593 = vmul.f32 %v591, %v570
        %596 = vrot.lane.b32.xlu0 %v592, 126
        %v597 = vpop.permute.xlu0 %596
        %598 = vrot.lane.b32.xlu0 %v593, 126
        %v599 = vpop.permute.xlu0 %598
        %v602 = vadd.f32 %v588, %v597
        %v603 = vadd.f32 %v589, %v599
        %s604 = sld [smem:[#allocation2 + $0x18]]
        %v605 = vstv %s604
        %v606 = vmul.f32 %v605, %v569
        %v607 = vmul.f32 %v605, %v570
        %610 = vrot.lane.b32.xlu0 %v606, 125
        %v611 = vpop.permute.xlu0 %610
        %612 = vrot.lane.b32.xlu0 %v607, 125
        %v613 = vpop.permute.xlu0 %612
        %v616 = vadd.f32 %v602, %v611
        %v617 = vadd.f32 %v603, %v613
        %s618 = sld [smem:[#allocation2 + $0x19]]
        %v619 = vstv %s618
        %v620 = vmul.f32 %v619, %v569
        %v621 = vmul.f32 %v619, %v570
        %624 = vrot.lane.b32.xlu0 %v620, 124
        %v625 = vpop.permute.xlu0 %624
        %626 = vrot.lane.b32.xlu0 %v621, 124
        %v627 = vpop.permute.xlu0 %626
        %v630 = vadd.f32 %v616, %v625
        %v631 = vadd.f32 %v617, %v627
        %s632 = sld [smem:[#allocation2 + $0x1a]]
        %v633 = vstv %s632
        %v634 = vmul.f32 %v633, %v569
        %v635 = vmul.f32 %v633, %v570
        %638 = vrot.lane.b32.xlu0 %v634, 123
        %v639 = vpop.permute.xlu0 %638
        %640 = vrot.lane.b32.xlu0 %v635, 123
        %v641 = vpop.permute.xlu0 %640
        %v644 = vadd.f32 %v630, %v639
        %v645 = vadd.f32 %v631, %v641
        %s646 = sld [smem:[#allocation2 + $0x1b]]
        %v647 = vstv %s646
        %v648 = vmul.f32 %v647, %v569
        %v649 = vmul.f32 %v647, %v570
        %652 = vrot.lane.b32.xlu0 %v648, 122
        %v653 = vpop.permute.xlu0 %652
        %654 = vrot.lane.b32.xlu0 %v649, 122
        %v655 = vpop.permute.xlu0 %654
        %v658 = vadd.f32 %v644, %v653
        %v659 = vadd.f32 %v645, %v655
        %s660 = sld [smem:[#allocation2 + $0x1c]]
        %v661 = vld [vmem:[%s276 + $0x4] sm:$0xff]
        %v662 = vld [vmem:[%s276 + $0xc] sm:$0xff]
        %v663 = vstv %s660
        %v664 = vmul.f32 %v663, %v661
        %v665 = vmul.f32 %v663, %v662
        %v666 = vadd.f32 %v658, %v664
        %v667 = vadd.f32 %v659, %v665
        %s668 = sld [smem:[#allocation2 + $0x1d]]
        %v669 = vstv %s668
        %v670 = vmul.f32 %v669, %v661
        %v671 = vmul.f32 %v669, %v662
        %674 = vrot.lane.b32.xlu0 %v670, 127
        %v675 = vpop.permute.xlu0 %674
        %676 = vrot.lane.b32.xlu0 %v671, 127
        %v677 = vpop.permute.xlu0 %676
        %v680 = vadd.f32 %v666, %v675
        %v681 = vadd.f32 %v667, %v677
        %s682 = sld [smem:[#allocation2 + $0x1e]]
        %v683 = vstv %s682
        %v684 = vmul.f32 %v683, %v661
        %v685 = vmul.f32 %v683, %v662
        %688 = vrot.lane.b32.xlu0 %v684, 126
        %v689 = vpop.permute.xlu0 %688
        %690 = vrot.lane.b32.xlu0 %v685, 126
        %v691 = vpop.permute.xlu0 %690
        %v694 = vadd.f32 %v680, %v689
        %v695 = vadd.f32 %v681, %v691
        %s696 = sld [smem:[#allocation2 + $0x1f]]
        %v697 = vstv %s696
        %v698 = vmul.f32 %v697, %v661
        %v699 = vmul.f32 %v697, %v662
        %702 = vrot.lane.b32.xlu0 %v698, 125
        %v703 = vpop.permute.xlu0 %702
        %704 = vrot.lane.b32.xlu0 %v699, 125
        %v705 = vpop.permute.xlu0 %704
        %v708 = vadd.f32 %v694, %v703
        %v709 = vadd.f32 %v695, %v705
        %s710 = sld [smem:[#allocation2 + $0x20]]
        %v711 = vstv %s710
        %v712 = vmul.f32 %v711, %v661
        %v713 = vmul.f32 %v711, %v662
        %716 = vrot.lane.b32.xlu0 %v712, 124
        %v717 = vpop.permute.xlu0 %716
        %718 = vrot.lane.b32.xlu0 %v713, 124
        %v719 = vpop.permute.xlu0 %718
        %v722 = vadd.f32 %v708, %v717
        %v723 = vadd.f32 %v709, %v719
        %s724 = sld [smem:[#allocation2 + $0x21]]
        %v725 = vstv %s724
        %v726 = vmul.f32 %v725, %v661
        %v727 = vmul.f32 %v725, %v662
        %730 = vrot.lane.b32.xlu0 %v726, 123
        %v731 = vpop.permute.xlu0 %730
        %732 = vrot.lane.b32.xlu0 %v727, 123
        %v733 = vpop.permute.xlu0 %732
        %v736 = vadd.f32 %v722, %v731
        %v737 = vadd.f32 %v723, %v733
        %s738 = sld [smem:[#allocation2 + $0x22]]
        %v739 = vstv %s738
        %v740 = vmul.f32 %v739, %v661
        %v741 = vmul.f32 %v739, %v662
        %744 = vrot.lane.b32.xlu0 %v740, 122
        %v745 = vpop.permute.xlu0 %744
        %746 = vrot.lane.b32.xlu0 %v741, 122
        %v747 = vpop.permute.xlu0 %746
        %v750 = vadd.f32 %v736, %v745
        %v751 = vadd.f32 %v737, %v747
        %s752 = sld [smem:[#allocation2 + $0x23]]
        %v753 = vld [vmem:[%s276 + $0x5] sm:$0xff]
        %v754 = vld [vmem:[%s276 + $0xd] sm:$0xff]
        %v755 = vstv %s752
        %v756 = vmul.f32 %v755, %v753
        %v757 = vmul.f32 %v755, %v754
        %v758 = vadd.f32 %v750, %v756
        %v759 = vadd.f32 %v751, %v757
        %s760 = sld [smem:[#allocation2 + $0x24]]
        %v761 = vstv %s760
        %v762 = vmul.f32 %v761, %v753
        %v763 = vmul.f32 %v761, %v754
        %766 = vrot.lane.b32.xlu0 %v762, 127
        %v767 = vpop.permute.xlu0 %766
        %768 = vrot.lane.b32.xlu0 %v763, 127
        %v769 = vpop.permute.xlu0 %768
        %v772 = vadd.f32 %v758, %v767
        %v773 = vadd.f32 %v759, %v769
        %s774 = sld [smem:[#allocation2 + $0x25]]
        %v775 = vstv %s774
        %v776 = vmul.f32 %v775, %v753
        %v777 = vmul.f32 %v775, %v754
        %780 = vrot.lane.b32.xlu0 %v776, 126
        %v781 = vpop.permute.xlu0 %780
        %782 = vrot.lane.b32.xlu0 %v777, 126
        %v783 = vpop.permute.xlu0 %782
        %v786 = vadd.f32 %v772, %v781
        %v787 = vadd.f32 %v773, %v783
        %s788 = sld [smem:[#allocation2 + $0x26]]
        %v789 = vstv %s788
        %v790 = vmul.f32 %v789, %v753
        %v791 = vmul.f32 %v789, %v754
        %794 = vrot.lane.b32.xlu0 %v790, 125
        %v795 = vpop.permute.xlu0 %794
        %796 = vrot.lane.b32.xlu0 %v791, 125
        %v797 = vpop.permute.xlu0 %796
        %v800 = vadd.f32 %v786, %v795
        %v801 = vadd.f32 %v787, %v797
        %s802 = sld [smem:[#allocation2 + $0x27]]
        %v803 = vstv %s802
        %v804 = vmul.f32 %v803, %v753
        %v805 = vmul.f32 %v803, %v754
        %808 = vrot.lane.b32.xlu0 %v804, 124
        %v809 = vpop.permute.xlu0 %808
        %810 = vrot.lane.b32.xlu0 %v805, 124
        %v811 = vpop.permute.xlu0 %810
        %v814 = vadd.f32 %v800, %v809
        %v815 = vadd.f32 %v801, %v811
        %s816 = sld [smem:[#allocation2 + $0x28]]
        %v817 = vstv %s816
        %v818 = vmul.f32 %v817, %v753
        %v819 = vmul.f32 %v817, %v754
        %822 = vrot.lane.b32.xlu0 %v818, 123
        %v823 = vpop.permute.xlu0 %822
        %824 = vrot.lane.b32.xlu0 %v819, 123
        %v825 = vpop.permute.xlu0 %824
        %v828 = vadd.f32 %v814, %v823
        %v829 = vadd.f32 %v815, %v825
        %s830 = sld [smem:[#allocation2 + $0x29]]
        %v831 = vstv %s830
        %v832 = vmul.f32 %v831, %v753
        %v833 = vmul.f32 %v831, %v754
        %836 = vrot.lane.b32.xlu0 %v832, 122
        %v837 = vpop.permute.xlu0 %836
        %838 = vrot.lane.b32.xlu0 %v833, 122
        %v839 = vpop.permute.xlu0 %838
        %v842 = vadd.f32 %v828, %v837
        %v843 = vadd.f32 %v829, %v839
        %s844 = sld [smem:[#allocation2 + $0x2a]]
        %v845 = vld [vmem:[%s276 + $0x6] sm:$0xff]
        %v846 = vld [vmem:[%s276 + $0xe] sm:$0xff]
        %v847 = vstv %s844
        %v848 = vmul.f32 %v847, %v845
        %v849 = vmul.f32 %v847, %v846
        %v850 = vadd.f32 %v842, %v848
        %v851 = vadd.f32 %v843, %v849
        %s852 = sld [smem:[#allocation2 + $0x2b]]
        %v853 = vstv %s852
        %v854 = vmul.f32 %v853, %v845
        %v855 = vmul.f32 %v853, %v846
        %858 = vrot.lane.b32.xlu0 %v854, 127
        %v859 = vpop.permute.xlu0 %858
        %860 = vrot.lane.b32.xlu0 %v855, 127
        %v861 = vpop.permute.xlu0 %860
        %v864 = vadd.f32 %v850, %v859
        %v865 = vadd.f32 %v851, %v861
        %s866 = sld [smem:[#allocation2 + $0x2c]]
        %v867 = vstv %s866
        %v868 = vmul.f32 %v867, %v845
        %v869 = vmul.f32 %v867, %v846
        %872 = vrot.lane.b32.xlu0 %v868, 126
        %v873 = vpop.permute.xlu0 %872
        %874 = vrot.lane.b32.xlu0 %v869, 126
        %v875 = vpop.permute.xlu0 %874
        %v878 = vadd.f32 %v864, %v873
        %v879 = vadd.f32 %v865, %v875
        %s880 = sld [smem:[#allocation2 + $0x2d]]
        %v881 = vstv %s880
        %v882 = vmul.f32 %v881, %v845
        %v883 = vmul.f32 %v881, %v846
        %886 = vrot.lane.b32.xlu0 %v882, 125
        %v887 = vpop.permute.xlu0 %886
        %888 = vrot.lane.b32.xlu0 %v883, 125
        %v889 = vpop.permute.xlu0 %888
        %v892 = vadd.f32 %v878, %v887
        %v893 = vadd.f32 %v879, %v889
        %s894 = sld [smem:[#allocation2 + $0x2e]]
        %v895 = vstv %s894
        %v896 = vmul.f32 %v895, %v845
        %v897 = vmul.f32 %v895, %v846
        %900 = vrot.lane.b32.xlu0 %v896, 124
        %v901 = vpop.permute.xlu0 %900
        %902 = vrot.lane.b32.xlu0 %v897, 124
        %v903 = vpop.permute.xlu0 %902
        %v906 = vadd.f32 %v892, %v901
        %v907 = vadd.f32 %v893, %v903
        %s908 = sld [smem:[#allocation2 + $0x2f]]
        %v909 = vstv %s908
        %v910 = vmul.f32 %v909, %v845
        %v911 = vmul.f32 %v909, %v846
        %914 = vrot.lane.b32.xlu0 %v910, 123
        %v915 = vpop.permute.xlu0 %914
        %916 = vrot.lane.b32.xlu0 %v911, 123
        %v917 = vpop.permute.xlu0 %916
        %v920 = vadd.f32 %v906, %v915
        %v921 = vadd.f32 %v907, %v917
        %s922 = sld [smem:[#allocation2 + $0x30]]
        %v923 = vstv %s922
        %v924 = vmul.f32 %v923, %v845
        %v925 = vmul.f32 %v923, %v846
        %928 = vrot.lane.b32.xlu0 %v924, 122
        %v929 = vpop.permute.xlu0 %928
        %930 = vrot.lane.b32.xlu0 %v925, 122
        %v931 = vpop.permute.xlu0 %930
        %v934 = vadd.f32 %v920, %v929
        %v935 = vadd.f32 %v921, %v931
        %s936 = sld [smem:[#allocation2 + $0x31]]
        %s937 = scalar_lea.vmem %s276, 24
        %v938 = vld [vmem:[%s937] sm:$0xff]
        %v939 = vld [vmem:[%s937 + $0x8] sm:$0xff]
        %v940 = vstv %s936
        %v941 = vmul.f32 %v940, %v938
        %v942 = vmul.f32 %v940, %v939
        %v943 = vadd.f32 %v934, %v941
        %v944 = vadd.f32 %v935, %v942
        %s945 = sld [smem:[#allocation2 + $0x32]]
        %v946 = vstv %s945
        %v947 = vmul.f32 %v946, %v938
        %v948 = vmul.f32 %v946, %v939
        %951 = vrot.lane.b32.xlu0 %v947, 127
        %v952 = vpop.permute.xlu0 %951
        %953 = vrot.lane.b32.xlu0 %v948, 127
        %v954 = vpop.permute.xlu0 %953
        %v957 = vadd.f32 %v943, %v952
        %v958 = vadd.f32 %v944, %v954
        %s959 = sld [smem:[#allocation2 + $0x33]]
        %v960 = vstv %s959
        %v961 = vmul.f32 %v960, %v938
        %v962 = vmul.f32 %v960, %v939
        %965 = vrot.lane.b32.xlu0 %v961, 126
        %v966 = vpop.permute.xlu0 %965
        %967 = vrot.lane.b32.xlu0 %v962, 126
        %v968 = vpop.permute.xlu0 %967
        %v971 = vadd.f32 %v957, %v966
        %v972 = vadd.f32 %v958, %v968
        %s973 = sld [smem:[#allocation2 + $0x34]]
        %v974 = vstv %s973
        %v975 = vmul.f32 %v974, %v938
        %v976 = vmul.f32 %v974, %v939
        %979 = vrot.lane.b32.xlu0 %v975, 125
        %v980 = vpop.permute.xlu0 %979
        %981 = vrot.lane.b32.xlu0 %v976, 125
        %v982 = vpop.permute.xlu0 %981
        %v985 = vadd.f32 %v971, %v980
        %v986 = vadd.f32 %v972, %v982
        %s987 = sld [smem:[#allocation2 + $0x35]]
        %v988 = vstv %s987
        %v989 = vmul.f32 %v988, %v938
        %v990 = vmul.f32 %v988, %v939
        %993 = vrot.lane.b32.xlu0 %v989, 124
        %v994 = vpop.permute.xlu0 %993
        %995 = vrot.lane.b32.xlu0 %v990, 124
        %v996 = vpop.permute.xlu0 %995
        %v999 = vadd.f32 %v985, %v994
        %v1000 = vadd.f32 %v986, %v996
        %s1001 = sld [smem:[#allocation2 + $0x36]]
        %v1002 = vstv %s1001
        %v1003 = vmul.f32 %v1002, %v938
        %v1004 = vmul.f32 %v1002, %v939
        %1007 = vrot.lane.b32.xlu0 %v1003, 123
        %v1008 = vpop.permute.xlu0 %1007
        %1009 = vrot.lane.b32.xlu0 %v1004, 123
        %v1010 = vpop.permute.xlu0 %1009
        %v1013 = vadd.f32 %v999, %v1008
        %v1014 = vadd.f32 %v1000, %v1010
        %s1015 = sld [smem:[#allocation2 + $0x37]]
        %v1016 = vstv %s1015
        %v1017 = vmul.f32 %v1016, %v938
        %v1018 = vmul.f32 %v1016, %v939
        %1021 = vrot.lane.b32.xlu0 %v1017, 122
        %v1022 = vpop.permute.xlu0 %1021
        %1023 = vrot.lane.b32.xlu0 %v1018, 122
        %v1024 = vpop.permute.xlu0 %1023
        %v1027 = vadd.f32 %v1013, %v1022
        %v1028 = vadd.f32 %v1014, %v1024
        %s1029 = sld [smem:[#allocation2 + $0x38]]
        %v1030 = vld [vmem:[%s937 + $0x1] sm:$0xff]
        %v1031 = vld [vmem:[%s937 + $0x9] sm:$0xff]
        %v1032 = vstv %s1029
        %v1033 = vmul.f32 %v1032, %v1030
        %v1034 = vmul.f32 %v1032, %v1031
        %v1035 = vadd.f32 %v1027, %v1033
        %v1036 = vadd.f32 %v1028, %v1034
        %s1037 = sld [smem:[#allocation2 + $0x39]]
        %v1038 = vstv %s1037
        %v1039 = vmul.f32 %v1038, %v1030
        %v1040 = vmul.f32 %v1038, %v1031
        %1043 = vrot.lane.b32.xlu0 %v1039, 127
        %v1044 = vpop.permute.xlu0 %1043
        %1045 = vrot.lane.b32.xlu0 %v1040, 127
        %v1046 = vpop.permute.xlu0 %1045
        %v1049 = vadd.f32 %v1035, %v1044
        %v1050 = vadd.f32 %v1036, %v1046
        %s1051 = sld [smem:[#allocation2 + $0x3a]]
        %v1052 = vstv %s1051
        %v1053 = vmul.f32 %v1052, %v1030
        %v1054 = vmul.f32 %v1052, %v1031
        %1057 = vrot.lane.b32.xlu0 %v1053, 126
        %v1058 = vpop.permute.xlu0 %1057
        %1059 = vrot.lane.b32.xlu0 %v1054, 126
        %v1060 = vpop.permute.xlu0 %1059
        %v1063 = vadd.f32 %v1049, %v1058
        %v1064 = vadd.f32 %v1050, %v1060
        %s1065 = sld [smem:[#allocation2 + $0x3b]]
        %v1066 = vstv %s1065
        %v1067 = vmul.f32 %v1066, %v1030
        %v1068 = vmul.f32 %v1066, %v1031
        %1071 = vrot.lane.b32.xlu0 %v1067, 125
        %v1072 = vpop.permute.xlu0 %1071
        %1073 = vrot.lane.b32.xlu0 %v1068, 125
        %v1074 = vpop.permute.xlu0 %1073
        %v1077 = vadd.f32 %v1063, %v1072
        %v1078 = vadd.f32 %v1064, %v1074
        %s1079 = sld [smem:[#allocation2 + $0x3c]]
        %v1080 = vstv %s1079
        %v1081 = vmul.f32 %v1080, %v1030
        %v1082 = vmul.f32 %v1080, %v1031
        %1085 = vrot.lane.b32.xlu0 %v1081, 124
        %v1086 = vpop.permute.xlu0 %1085
        %1087 = vrot.lane.b32.xlu0 %v1082, 124
        %v1088 = vpop.permute.xlu0 %1087
        %v1091 = vadd.f32 %v1077, %v1086
        %v1092 = vadd.f32 %v1078, %v1088
        %s1093 = sld [smem:[#allocation2 + $0x3d]]
        %v1094 = vstv %s1093
        %v1095 = vmul.f32 %v1094, %v1030
        %v1096 = vmul.f32 %v1094, %v1031
        %1099 = vrot.lane.b32.xlu0 %v1095, 123
        %v1100 = vpop.permute.xlu0 %1099
        %1101 = vrot.lane.b32.xlu0 %v1096, 123
        %v1102 = vpop.permute.xlu0 %1101
        %v1105 = vadd.f32 %v1091, %v1100
        %v1106 = vadd.f32 %v1092, %v1102
        %s1107 = sld [smem:[#allocation2 + $0x3e]]
        %v1108 = vstv %s1107
        %v1109 = vmul.f32 %v1108, %v1030
        %v1110 = vmul.f32 %v1108, %v1031
        %1113 = vrot.lane.b32.xlu0 %v1109, 122
        %v1114 = vpop.permute.xlu0 %1113
        %1115 = vrot.lane.b32.xlu0 %v1110, 122
        %v1116 = vpop.permute.xlu0 %1115
        %v1119 = vadd.f32 %v1105, %v1114
        %v1120 = vadd.f32 %v1106, %v1116
        %s1121 = sld [smem:[#allocation2 + $0x3f]]
        %v1122 = vld [vmem:[%s937 + $0x2] sm:$0xff]
        %v1123 = vld [vmem:[%s937 + $0xa] sm:$0xff]
        %v1124 = vstv %s1121
        %v1125 = vmul.f32 %v1124, %v1122
        %v1126 = vmul.f32 %v1124, %v1123
        %v1127 = vadd.f32 %v1119, %v1125
        %v1128 = vadd.f32 %v1120, %v1126
        %s1129 = sld [smem:[#allocation2 + $0x40]]
        %v1130 = vstv %s1129
        %v1131 = vmul.f32 %v1130, %v1122
        %v1132 = vmul.f32 %v1130, %v1123
        %1135 = vrot.lane.b32.xlu0 %v1131, 127
        %v1136 = vpop.permute.xlu0 %1135
        %1137 = vrot.lane.b32.xlu0 %v1132, 127
        %v1138 = vpop.permute.xlu0 %1137
        %v1141 = vadd.f32 %v1127, %v1136
        %v1142 = vadd.f32 %v1128, %v1138
        %s1143 = sld [smem:[#allocation2 + $0x41]]
        %v1144 = vstv %s1143
        %v1145 = vmul.f32 %v1144, %v1122
        %v1146 = vmul.f32 %v1144, %v1123
        %1149 = vrot.lane.b32.xlu0 %v1145, 126
        %v1150 = vpop.permute.xlu0 %1149
        %1151 = vrot.lane.b32.xlu0 %v1146, 126
        %v1152 = vpop.permute.xlu0 %1151
        %v1155 = vadd.f32 %v1141, %v1150
        %v1156 = vadd.f32 %v1142, %v1152
        %s1157 = sld [smem:[#allocation2 + $0x42]]
        %v1158 = vstv %s1157
        %v1159 = vmul.f32 %v1158, %v1122
        %v1160 = vmul.f32 %v1158, %v1123
        %1163 = vrot.lane.b32.xlu0 %v1159, 125
        %v1164 = vpop.permute.xlu0 %1163
        %1165 = vrot.lane.b32.xlu0 %v1160, 125
        %v1166 = vpop.permute.xlu0 %1165
        %v1169 = vadd.f32 %v1155, %v1164
        %v1170 = vadd.f32 %v1156, %v1166
        %s1171 = sld [smem:[#allocation2 + $0x43]]
        %v1172 = vstv %s1171
        %v1173 = vmul.f32 %v1172, %v1122
        %v1174 = vmul.f32 %v1172, %v1123
        %1177 = vrot.lane.b32.xlu0 %v1173, 124
        %v1178 = vpop.permute.xlu0 %1177
        %1179 = vrot.lane.b32.xlu0 %v1174, 124
        %v1180 = vpop.permute.xlu0 %1179
        %v1183 = vadd.f32 %v1169, %v1178
        %v1184 = vadd.f32 %v1170, %v1180
        %s1185 = sld [smem:[#allocation2 + $0x44]]
        %v1186 = vstv %s1185
        %v1187 = vmul.f32 %v1186, %v1122
        %v1188 = vmul.f32 %v1186, %v1123
        %1191 = vrot.lane.b32.xlu0 %v1187, 123
        %v1192 = vpop.permute.xlu0 %1191
        %1193 = vrot.lane.b32.xlu0 %v1188, 123
        %v1194 = vpop.permute.xlu0 %1193
        %v1197 = vadd.f32 %v1183, %v1192
        %v1198 = vadd.f32 %v1184, %v1194
        %s1199 = sld [smem:[#allocation2 + $0x45]]
        %v1200 = vstv %s1199
        %v1201 = vmul.f32 %v1200, %v1122
        %v1202 = vmul.f32 %v1200, %v1123
        %1205 = vrot.lane.b32.xlu0 %v1201, 122
        %v1206 = vpop.permute.xlu0 %1205
        %1207 = vrot.lane.b32.xlu0 %v1202, 122
        %v1208 = vpop.permute.xlu0 %1207
        %v1211 = vadd.f32 %v1197, %v1206
        %v1212 = vadd.f32 %v1198, %v1208
        %s1213 = sld [smem:[#allocation2 + $0x46]]
        %v1214 = vld [vmem:[%s937 + $0x3] sm:$0xff]
        %v1215 = vld [vmem:[%s937 + $0xb] sm:$0xff]
        %v1216 = vstv %s1213
        %v1217 = vmul.f32 %v1216, %v1214
        %v1218 = vmul.f32 %v1216, %v1215
        %v1219 = vadd.f32 %v1211, %v1217
        %v1220 = vadd.f32 %v1212, %v1218
        %s1221 = sld [smem:[#allocation2 + $0x47]]
        %v1222 = vstv %s1221
        %v1223 = vmul.f32 %v1222, %v1214
        %v1224 = vmul.f32 %v1222, %v1215
        %1227 = vrot.lane.b32.xlu0 %v1223, 127
        %v1228 = vpop.permute.xlu0 %1227
        %1229 = vrot.lane.b32.xlu0 %v1224, 127
        %v1230 = vpop.permute.xlu0 %1229
        %v1233 = vadd.f32 %v1219, %v1228
        %v1234 = vadd.f32 %v1220, %v1230
        %s1235 = sld [smem:[#allocation2 + $0x48]]
        %v1236 = vstv %s1235
        %v1237 = vmul.f32 %v1236, %v1214
        %v1238 = vmul.f32 %v1236, %v1215
        %1241 = vrot.lane.b32.xlu0 %v1237, 126
        %v1242 = vpop.permute.xlu0 %1241
        %1243 = vrot.lane.b32.xlu0 %v1238, 126
        %v1244 = vpop.permute.xlu0 %1243
        %v1247 = vadd.f32 %v1233, %v1242
        %v1248 = vadd.f32 %v1234, %v1244
        %s1249 = sld [smem:[#allocation2 + $0x49]]
        %v1250 = vstv %s1249
        %v1251 = vmul.f32 %v1250, %v1214
        %v1252 = vmul.f32 %v1250, %v1215
        %1255 = vrot.lane.b32.xlu0 %v1251, 125
        %v1256 = vpop.permute.xlu0 %1255
        %1257 = vrot.lane.b32.xlu0 %v1252, 125
        %v1258 = vpop.permute.xlu0 %1257
        %v1261 = vadd.f32 %v1247, %v1256
        %v1262 = vadd.f32 %v1248, %v1258
        %s1263 = sld [smem:[#allocation2 + $0x4a]]
        %v1264 = vstv %s1263
        %v1265 = vmul.f32 %v1264, %v1214
        %v1266 = vmul.f32 %v1264, %v1215
        %1269 = vrot.lane.b32.xlu0 %v1265, 124
        %v1270 = vpop.permute.xlu0 %1269
        %1271 = vrot.lane.b32.xlu0 %v1266, 124
        %v1272 = vpop.permute.xlu0 %1271
        %v1275 = vadd.f32 %v1261, %v1270
        %v1276 = vadd.f32 %v1262, %v1272
        %s1277 = sld [smem:[#allocation2 + $0x4b]]
        %v1278 = vstv %s1277
        %v1279 = vmul.f32 %v1278, %v1214
        %v1280 = vmul.f32 %v1278, %v1215
        %1283 = vrot.lane.b32.xlu0 %v1279, 123
        %v1284 = vpop.permute.xlu0 %1283
        %1285 = vrot.lane.b32.xlu0 %v1280, 123
        %v1286 = vpop.permute.xlu0 %1285
        %v1289 = vadd.f32 %v1275, %v1284
        %v1290 = vadd.f32 %v1276, %v1286
        %s1291 = sld [smem:[#allocation2 + $0x4c]]
        %v1292 = vstv %s1291
        %v1293 = vmul.f32 %v1292, %v1214
        %v1294 = vmul.f32 %v1292, %v1215
        %1297 = vrot.lane.b32.xlu0 %v1293, 122
        %v1298 = vpop.permute.xlu0 %1297
        %1299 = vrot.lane.b32.xlu0 %v1294, 122
        %v1300 = vpop.permute.xlu0 %1299
        %v1303 = vadd.f32 %v1289, %v1298
        %v1304 = vadd.f32 %v1290, %v1300
        %s1305 = sld [smem:[#allocation2 + $0x4d]]
        %v1306 = vld [vmem:[%s937 + $0x4] sm:$0xff]
        %v1307 = vld [vmem:[%s937 + $0xc] sm:$0xff]
        %v1308 = vstv %s1305
        %v1309 = vmul.f32 %v1308, %v1306
        %v1310 = vmul.f32 %v1308, %v1307
        %v1311 = vadd.f32 %v1303, %v1309
        %v1312 = vadd.f32 %v1304, %v1310
        %s1313 = sld [smem:[#allocation2 + $0x4e]]
        %v1314 = vstv %s1313
        %v1315 = vmul.f32 %v1314, %v1306
        %v1316 = vmul.f32 %v1314, %v1307
        %1319 = vrot.lane.b32.xlu0 %v1315, 127
        %v1320 = vpop.permute.xlu0 %1319
        %1321 = vrot.lane.b32.xlu0 %v1316, 127
        %v1322 = vpop.permute.xlu0 %1321
        %v1325 = vadd.f32 %v1311, %v1320
        %v1326 = vadd.f32 %v1312, %v1322
        %s1327 = sld [smem:[#allocation2 + $0x4f]]
        %v1328 = vstv %s1327
        %v1329 = vmul.f32 %v1328, %v1306
        %v1330 = vmul.f32 %v1328, %v1307
        %1333 = vrot.lane.b32.xlu0 %v1329, 126
        %v1334 = vpop.permute.xlu0 %1333
        %1335 = vrot.lane.b32.xlu0 %v1330, 126
        %v1336 = vpop.permute.xlu0 %1335
        %v1339 = vadd.f32 %v1325, %v1334
        %v1340 = vadd.f32 %v1326, %v1336
        %s1341 = sld [smem:[#allocation2 + $0x50]]
        %v1342 = vstv %s1341
        %v1343 = vmul.f32 %v1342, %v1306
        %v1344 = vmul.f32 %v1342, %v1307
        %1347 = vrot.lane.b32.xlu0 %v1343, 125
        %v1348 = vpop.permute.xlu0 %1347
        %1349 = vrot.lane.b32.xlu0 %v1344, 125
        %v1350 = vpop.permute.xlu0 %1349
        %v1353 = vadd.f32 %v1339, %v1348
        %v1354 = vadd.f32 %v1340, %v1350
        %s1355 = sld [smem:[#allocation2 + $0x51]]
        %v1356 = vstv %s1355
        %v1357 = vmul.f32 %v1356, %v1306
        %v1358 = vmul.f32 %v1356, %v1307
        %1361 = vrot.lane.b32.xlu0 %v1357, 124
        %v1362 = vpop.permute.xlu0 %1361
        %1363 = vrot.lane.b32.xlu0 %v1358, 124
        %v1364 = vpop.permute.xlu0 %1363
        %v1367 = vadd.f32 %v1353, %v1362
        %v1368 = vadd.f32 %v1354, %v1364
        %s1369 = sld [smem:[#allocation2 + $0x52]]
        %v1370 = vstv %s1369
        %v1371 = vmul.f32 %v1370, %v1306
        %v1372 = vmul.f32 %v1370, %v1307
        %1375 = vrot.lane.b32.xlu0 %v1371, 123
        %v1376 = vpop.permute.xlu0 %1375
        %1377 = vrot.lane.b32.xlu0 %v1372, 123
        %v1378 = vpop.permute.xlu0 %1377
        %v1381 = vadd.f32 %v1367, %v1376
        %v1382 = vadd.f32 %v1368, %v1378
        %s1383 = sld [smem:[#allocation2 + $0x53]]
        %v1384 = vstv %s1383
        %v1385 = vmul.f32 %v1384, %v1306
        %v1386 = vmul.f32 %v1384, %v1307
        %1389 = vrot.lane.b32.xlu0 %v1385, 122
        %v1390 = vpop.permute.xlu0 %1389
        %1391 = vrot.lane.b32.xlu0 %v1386, 122
        %v1392 = vpop.permute.xlu0 %1391
        %v1395 = vadd.f32 %v1381, %v1390
        %v1396 = vadd.f32 %v1382, %v1392
        %s1397 = sld [smem:[#allocation2 + $0x54]]
        %v1398 = vld [vmem:[%s937 + $0x5] sm:$0xff]
        %v1399 = vld [vmem:[%s937 + $0xd] sm:$0xff]
        %v1400 = vstv %s1397
        %v1401 = vmul.f32 %v1400, %v1398
        %v1402 = vmul.f32 %v1400, %v1399
        %v1403 = vadd.f32 %v1395, %v1401
        %v1404 = vadd.f32 %v1396, %v1402
        %s1405 = sld [smem:[#allocation2 + $0x55]]
        %v1406 = vstv %s1405
        %v1407 = vmul.f32 %v1406, %v1398
        %v1408 = vmul.f32 %v1406, %v1399
        %1411 = vrot.lane.b32.xlu0 %v1407, 127
        %v1412 = vpop.permute.xlu0 %1411
        %1413 = vrot.lane.b32.xlu0 %v1408, 127
        %v1414 = vpop.permute.xlu0 %1413
        %v1417 = vadd.f32 %v1403, %v1412
        %v1418 = vadd.f32 %v1404, %v1414
        %s1419 = sld [smem:[#allocation2 + $0x56]]
        %v1420 = vstv %s1419
        %v1421 = vmul.f32 %v1420, %v1398
        %v1422 = vmul.f32 %v1420, %v1399
        %1425 = vrot.lane.b32.xlu0 %v1421, 126
        %v1426 = vpop.permute.xlu0 %1425
        %1427 = vrot.lane.b32.xlu0 %v1422, 126
        %v1428 = vpop.permute.xlu0 %1427
        %v1431 = vadd.f32 %v1417, %v1426
        %v1432 = vadd.f32 %v1418, %v1428
        %s1433 = sld [smem:[#allocation2 + $0x57]]
        %v1434 = vstv %s1433
        %v1435 = vmul.f32 %v1434, %v1398
        %v1436 = vmul.f32 %v1434, %v1399
        %1439 = vrot.lane.b32.xlu0 %v1435, 125
        %v1440 = vpop.permute.xlu0 %1439
        %1441 = vrot.lane.b32.xlu0 %v1436, 125
        %v1442 = vpop.permute.xlu0 %1441
        %v1445 = vadd.f32 %v1431, %v1440
        %v1446 = vadd.f32 %v1432, %v1442
        %s1447 = sld [smem:[#allocation2 + $0x58]]
        %v1448 = vstv %s1447
        %v1449 = vmul.f32 %v1448, %v1398
        %v1450 = vmul.f32 %v1448, %v1399
        %1453 = vrot.lane.b32.xlu0 %v1449, 124
        %v1454 = vpop.permute.xlu0 %1453
        %1455 = vrot.lane.b32.xlu0 %v1450, 124
        %v1456 = vpop.permute.xlu0 %1455
        %v1459 = vadd.f32 %v1445, %v1454
        %v1460 = vadd.f32 %v1446, %v1456
        %s1461 = sld [smem:[#allocation2 + $0x59]]
        %v1462 = vstv %s1461
        %v1463 = vmul.f32 %v1462, %v1398
        %v1464 = vmul.f32 %v1462, %v1399
        %1467 = vrot.lane.b32.xlu0 %v1463, 123
        %v1468 = vpop.permute.xlu0 %1467
        %1469 = vrot.lane.b32.xlu0 %v1464, 123
        %v1470 = vpop.permute.xlu0 %1469
        %v1473 = vadd.f32 %v1459, %v1468
        %v1474 = vadd.f32 %v1460, %v1470
        %s1475 = sld [smem:[#allocation2 + $0x5a]]
        %v1476 = vstv %s1475
        %v1477 = vmul.f32 %v1476, %v1398
        %v1478 = vmul.f32 %v1476, %v1399
        %1481 = vrot.lane.b32.xlu0 %v1477, 122
        %v1482 = vpop.permute.xlu0 %1481
        %1483 = vrot.lane.b32.xlu0 %v1478, 122
        %v1484 = vpop.permute.xlu0 %1483
        %v1487 = vadd.f32 %v1473, %v1482
        %v1488 = vadd.f32 %v1474, %v1484
        %s1489 = sld [smem:[#allocation2 + $0x5b]]
        %v1490 = vld [vmem:[%s937 + $0x6] sm:$0xff]
        %v1491 = vld [vmem:[%s937 + $0xe] sm:$0xff]
        %v1492 = vstv %s1489
        %v1493 = vmul.f32 %v1492, %v1490
        %v1494 = vmul.f32 %v1492, %v1491
        %v1495 = vadd.f32 %v1487, %v1493
        %v1496 = vadd.f32 %v1488, %v1494
        %s1497 = sld [smem:[#allocation2 + $0x5c]]
        %v1498 = vstv %s1497
        %v1499 = vmul.f32 %v1498, %v1490
        %v1500 = vmul.f32 %v1498, %v1491
        %1503 = vrot.lane.b32.xlu0 %v1499, 127
        %v1504 = vpop.permute.xlu0 %1503
        %1505 = vrot.lane.b32.xlu0 %v1500, 127
        %v1506 = vpop.permute.xlu0 %1505
        %v1509 = vadd.f32 %v1495, %v1504
        %v1510 = vadd.f32 %v1496, %v1506
        %s1511 = sld [smem:[#allocation2 + $0x5d]]
        %v1512 = vstv %s1511
        %v1513 = vmul.f32 %v1512, %v1490
        %v1514 = vmul.f32 %v1512, %v1491
        %1517 = vrot.lane.b32.xlu0 %v1513, 126
        %v1518 = vpop.permute.xlu0 %1517
        %1519 = vrot.lane.b32.xlu0 %v1514, 126
        %v1520 = vpop.permute.xlu0 %1519
        %v1523 = vadd.f32 %v1509, %v1518
        %v1524 = vadd.f32 %v1510, %v1520
        %s1525 = sld [smem:[#allocation2 + $0x5e]]
        %v1526 = vstv %s1525
        %v1527 = vmul.f32 %v1526, %v1490
        %v1528 = vmul.f32 %v1526, %v1491
        %1531 = vrot.lane.b32.xlu0 %v1527, 125
        %v1532 = vpop.permute.xlu0 %1531
        %1533 = vrot.lane.b32.xlu0 %v1528, 125
        %v1534 = vpop.permute.xlu0 %1533
        %v1537 = vadd.f32 %v1523, %v1532
        %v1538 = vadd.f32 %v1524, %v1534
        %s1539 = sld [smem:[#allocation2 + $0x5f]]
        %v1540 = vstv %s1539
        %v1541 = vmul.f32 %v1540, %v1490
        %v1542 = vmul.f32 %v1540, %v1491
        %1545 = vrot.lane.b32.xlu0 %v1541, 124
        %v1546 = vpop.permute.xlu0 %1545
        %1547 = vrot.lane.b32.xlu0 %v1542, 124
        %v1548 = vpop.permute.xlu0 %1547
        %v1551 = vadd.f32 %v1537, %v1546
        %v1552 = vadd.f32 %v1538, %v1548
        %s1553 = sld [smem:[#allocation2 + $0x60]]
        %v1554 = vstv %s1553
        %v1555 = vmul.f32 %v1554, %v1490
        %v1556 = vmul.f32 %v1554, %v1491
        %1559 = vrot.lane.b32.xlu0 %v1555, 123
        %v1560 = vpop.permute.xlu0 %1559
        %1561 = vrot.lane.b32.xlu0 %v1556, 123
        %v1562 = vpop.permute.xlu0 %1561
        %v1565 = vadd.f32 %v1551, %v1560
        %v1566 = vadd.f32 %v1552, %v1562
        %s1567 = sld [smem:[#allocation2 + $0x61]]
        %v1568 = vstv %s1567
        %v1569 = vmul.f32 %v1568, %v1490
        %v1570 = vmul.f32 %v1568, %v1491
        %1573 = vrot.lane.b32.xlu0 %v1569, 122
        %v1574 = vpop.permute.xlu0 %1573
        %1575 = vrot.lane.b32.xlu0 %v1570, 122
        %v1576 = vpop.permute.xlu0 %1575
        %v1579 = vadd.f32 %v1565, %v1574
        %v1580 = vadd.f32 %v1566, %v1576
        %s1581 = sld [smem:[#allocation4]]
        %v1582 = vstv %s1581
        %v1583 = vmul.f32 %v1579, %v1582
        %v1584 = vmul.f32 %v1580, %v1582
        %s1585 = sld [smem:[#allocation4 + $0x1]]
        %v1586 = vstv %s1585
        %v1587 = vadd.f32 %v1583, %v1586
        %v1588 = vadd.f32 %v1584, %v1586
        %v1589 = vxor.u32 %v1587, 2147483648
        %v1590 = vxor.u32 %v1588, 2147483648
        %v1591 = vmul.f32 %v1589, 1.442695
        %v1592 = vpow.pop %v1591
        %v1593 = vmul.f32 %v1590, 1.442695
        %v1594 = vpow.pop %v1593
        %v1595 = vadd.f32 %v1592, 1.0
        %v1596 = vadd.f32 %v1594, 1.0
        %v1597 = vrcp.pop %v1595
        %v1598 = vmul.f32 1.0, %v1597
        %v1599 = vrcp.pop %v1596
        %v1600 = vmul.f32 1.0, %v1599
        %v1601 = vld [vmem:[%s281] sm:$0xff]
        %v1602 = vld [vmem:[%s281 + $0x8] sm:$0xff]
        %v1603 = vld [vmem:[%s281 + $0x10] sm:$0xff]
        %v1604 = vld [vmem:[%s281 + $0x18] sm:$0xff]
        %v1605 = vld [vmem:[%s281 + $0x20] sm:$0xff]
        %v1606 = vld [vmem:[%s281 + $0x28] sm:$0xff]
        %v1607 = vld [vmem:[%s281 + $0x30] sm:$0xff]
        %v1608 = vld [vmem:[%s281 + $0x38] sm:$0xff]
        %v1609 = vld [vmem:[%s281 + $0x40] sm:$0xff]
        %v1610 = vld [vmem:[%s281 + $0x48] sm:$0xff]
        %v1611 = vld [vmem:[%s281 + $0x50] sm:$0xff]
        %v1612 = vld [vmem:[%s281 + $0x58] sm:$0xff]
        %v1613 = vld [vmem:[%s281 + $0x60] sm:$0xff]
        %v1614 = vld [vmem:[%s281 + $0x68] sm:$0xff]
        %v1615 = vld [vmem:[%s281 + $0x70] sm:$0xff]
        %v1616 = vld [vmem:[%s281 + $0x78] sm:$0xff]
        %v1617 = vld [vmem:[%s281 + $0x80] sm:$0xff]
        %v1618 = vld [vmem:[%s281 + $0x88] sm:$0xff]
        %v1619 = vld [vmem:[%s281 + $0x90] sm:$0xff]
        %v1620 = vld [vmem:[%s281 + $0x98] sm:$0xff]
        %v1621 = vld [vmem:[%s281 + $0xa0] sm:$0xff]
        %v1622 = vld [vmem:[%s281 + $0xa8] sm:$0xff]
        %v1623 = vld [vmem:[%s281 + $0xb0] sm:$0xff]
        %v1624 = vld [vmem:[%s281 + $0xb8] sm:$0xff]
        %v1625 = vld [vmem:[%s281 + $0xc0] sm:$0xff]
        %v1626 = vld [vmem:[%s281 + $0xc8] sm:$0xff]
        %v1627 = vld [vmem:[%s281 + $0xd0] sm:$0xff]
        %v1628 = vld [vmem:[%s281 + $0xd8] sm:$0xff]
        %v1629 = vld [vmem:[%s281 + $0xe0] sm:$0xff]
        %v1630 = vld [vmem:[%s281 + $0xe8] sm:$0xff]
        %v1631 = vld [vmem:[%s281 + $0xf0] sm:$0xff]
        %v1632 = vld [vmem:[%s281 + $0xf8] sm:$0xff]
        %v1633 = vld [vmem:[%s281 + $0x100] sm:$0xff]
        %v1634 = vld [vmem:[%s281 + $0x108] sm:$0xff]
        %v1635 = vld [vmem:[%s281 + $0x110] sm:$0xff]
        %v1636 = vld [vmem:[%s281 + $0x118] sm:$0xff]
        %v1637 = vld [vmem:[%s281 + $0x120] sm:$0xff]
        %v1638 = vld [vmem:[%s281 + $0x128] sm:$0xff]
        %v1639 = vld [vmem:[%s281 + $0x130] sm:$0xff]
        %v1640 = vld [vmem:[%s281 + $0x138] sm:$0xff]
        %v1641 = vld [vmem:[%s281 + $0x140] sm:$0xff]
        %v1642 = vld [vmem:[%s281 + $0x148] sm:$0xff]
        %v1643 = vld [vmem:[%s281 + $0x150] sm:$0xff]
        %v1644 = vld [vmem:[%s281 + $0x158] sm:$0xff]
        %v1645 = vld [vmem:[%s281 + $0x160] sm:$0xff]
        %v1646 = vld [vmem:[%s281 + $0x168] sm:$0xff]
        %v1647 = vld [vmem:[%s281 + $0x170] sm:$0xff]
        %v1648 = vld [vmem:[%s281 + $0x178] sm:$0xff]
        %v1649 = vld [vmem:[%s281 + $0x180] sm:$0xff]
        %v1650 = vld [vmem:[%s281 + $0x188] sm:$0xff]
        %v1651 = vld [vmem:[%s281 + $0x190] sm:$0xff]
        %v1652 = vld [vmem:[%s281 + $0x198] sm:$0xff]
        %v1653 = vld [vmem:[%s281 + $0x1a0] sm:$0xff]
        %v1654 = vld [vmem:[%s281 + $0x1a8] sm:$0xff]
        %v1655 = vld [vmem:[%s281 + $0x1b0] sm:$0xff]
        %v1656 = vld [vmem:[%s281 + $0x1b8] sm:$0xff]
        %v1657 = vld [vmem:[%s281 + $0x1c0] sm:$0xff]
        %v1658 = vld [vmem:[%s281 + $0x1c8] sm:$0xff]
        %v1659 = vld [vmem:[%s281 + $0x1d0] sm:$0xff]
        %v1660 = vld [vmem:[%s281 + $0x1d8] sm:$0xff]
        %v1661 = vld [vmem:[%s281 + $0x1e0] sm:$0xff]
        %v1662 = vld [vmem:[%s281 + $0x1e8] sm:$0xff]
        %v1663 = vld [vmem:[%s281 + $0x1f0] sm:$0xff]
        %v1664 = vld [vmem:[%s281 + $0x1f8] sm:$0xff]
        %v1665 = vmul.f32 %v1601, %v1598
        %v1666 = vmul.f32 %v1602, %v1600
        %v1667 = vmul.f32 %v1603, %v1598
        %v1668 = vmul.f32 %v1604, %v1600
        %v1669 = vmul.f32 %v1605, %v1598
        %v1670 = vmul.f32 %v1606, %v1600
        %v1671 = vmul.f32 %v1607, %v1598
        %v1672 = vmul.f32 %v1608, %v1600
        %v1673 = vmul.f32 %v1609, %v1598
        %v1674 = vmul.f32 %v1610, %v1600
        %v1675 = vmul.f32 %v1611, %v1598
        %v1676 = vmul.f32 %v1612, %v1600
        %v1677 = vmul.f32 %v1613, %v1598
        %v1678 = vmul.f32 %v1614, %v1600
        %v1679 = vmul.f32 %v1615, %v1598
        %v1680 = vmul.f32 %v1616, %v1600
        %v1681 = vmul.f32 %v1617, %v1598
        %v1682 = vmul.f32 %v1618, %v1600
        %v1683 = vmul.f32 %v1619, %v1598
        %v1684 = vmul.f32 %v1620, %v1600
        %v1685 = vmul.f32 %v1621, %v1598
        %v1686 = vmul.f32 %v1622, %v1600
        %v1687 = vmul.f32 %v1623, %v1598
        %v1688 = vmul.f32 %v1624, %v1600
        %v1689 = vmul.f32 %v1625, %v1598
        %v1690 = vmul.f32 %v1626, %v1600
        %v1691 = vmul.f32 %v1627, %v1598
        %v1692 = vmul.f32 %v1628, %v1600
        %v1693 = vmul.f32 %v1629, %v1598
        %v1694 = vmul.f32 %v1630, %v1600
        %v1695 = vmul.f32 %v1631, %v1598
        %v1696 = vmul.f32 %v1632, %v1600
        %v1697 = vmul.f32 %v1633, %v1598
        %v1698 = vmul.f32 %v1634, %v1600
        %v1699 = vmul.f32 %v1635, %v1598
        %v1700 = vmul.f32 %v1636, %v1600
        %v1701 = vmul.f32 %v1637, %v1598
        %v1702 = vmul.f32 %v1638, %v1600
        %v1703 = vmul.f32 %v1639, %v1598
        %v1704 = vmul.f32 %v1640, %v1600
        %v1705 = vmul.f32 %v1641, %v1598
        %v1706 = vmul.f32 %v1642, %v1600
        %v1707 = vmul.f32 %v1643, %v1598
        %v1708 = vmul.f32 %v1644, %v1600
        %v1709 = vmul.f32 %v1645, %v1598
        %v1710 = vmul.f32 %v1646, %v1600
        %v1711 = vmul.f32 %v1647, %v1598
        %v1712 = vmul.f32 %v1648, %v1600
        %v1713 = vmul.f32 %v1649, %v1598
        %v1714 = vmul.f32 %v1650, %v1600
        %v1715 = vmul.f32 %v1651, %v1598
        %v1716 = vmul.f32 %v1652, %v1600
        %v1717 = vmul.f32 %v1653, %v1598
        %v1718 = vmul.f32 %v1654, %v1600
        %v1719 = vmul.f32 %v1655, %v1598
        %v1720 = vmul.f32 %v1656, %v1600
        %v1721 = vmul.f32 %v1657, %v1598
        %v1722 = vmul.f32 %v1658, %v1600
        %v1723 = vmul.f32 %v1659, %v1598
        %v1724 = vmul.f32 %v1660, %v1600
        %v1725 = vmul.f32 %v1661, %v1598
        %v1726 = vmul.f32 %v1662, %v1600
        %v1727 = vmul.f32 %v1663, %v1598
        %v1728 = vmul.f32 %v1664, %v1600
        %v1729 = vld [vmem:[%s286] sm:$0xff]
        %v1730 = vld [vmem:[%s286 + $0x8] sm:$0xff]
        %v1731 = vld [vmem:[%s286 + $0x10] sm:$0xff]
        %v1732 = vld [vmem:[%s286 + $0x18] sm:$0xff]
        %v1733 = vld [vmem:[%s286 + $0x20] sm:$0xff]
        %v1734 = vld [vmem:[%s286 + $0x28] sm:$0xff]
        %v1735 = vld [vmem:[%s286 + $0x30] sm:$0xff]
        %v1736 = vld [vmem:[%s286 + $0x38] sm:$0xff]
        %v1737 = vld [vmem:[%s286 + $0x40] sm:$0xff]
        %v1738 = vld [vmem:[%s286 + $0x48] sm:$0xff]
        %v1739 = vld [vmem:[%s286 + $0x50] sm:$0xff]
        %v1740 = vld [vmem:[%s286 + $0x58] sm:$0xff]
        %v1741 = vld [vmem:[%s286 + $0x60] sm:$0xff]
        %v1742 = vld [vmem:[%s286 + $0x68] sm:$0xff]
        %v1743 = vld [vmem:[%s286 + $0x70] sm:$0xff]
        %v1744 = vld [vmem:[%s286 + $0x78] sm:$0xff]
        %v1745 = vld [vmem:[%s286 + $0x80] sm:$0xff]
        %v1746 = vld [vmem:[%s286 + $0x88] sm:$0xff]
        %v1747 = vld [vmem:[%s286 + $0x90] sm:$0xff]
        %v1748 = vld [vmem:[%s286 + $0x98] sm:$0xff]
        %v1749 = vld [vmem:[%s286 + $0xa0] sm:$0xff]
        %v1750 = vld [vmem:[%s286 + $0xa8] sm:$0xff]
        %v1751 = vld [vmem:[%s286 + $0xb0] sm:$0xff]
        %v1752 = vld [vmem:[%s286 + $0xb8] sm:$0xff]
        %v1753 = vld [vmem:[%s286 + $0xc0] sm:$0xff]
        %v1754 = vld [vmem:[%s286 + $0xc8] sm:$0xff]
        %v1755 = vld [vmem:[%s286 + $0xd0] sm:$0xff]
        %v1756 = vld [vmem:[%s286 + $0xd8] sm:$0xff]
        %v1757 = vld [vmem:[%s286 + $0xe0] sm:$0xff]
        %v1758 = vld [vmem:[%s286 + $0xe8] sm:$0xff]
        %v1759 = vld [vmem:[%s286 + $0xf0] sm:$0xff]
        %v1760 = vld [vmem:[%s286 + $0xf8] sm:$0xff]
        %v1761 = vld [vmem:[%s286 + $0x100] sm:$0xff]
        %v1762 = vld [vmem:[%s286 + $0x108] sm:$0xff]
        %v1763 = vld [vmem:[%s286 + $0x110] sm:$0xff]
        %v1764 = vld [vmem:[%s286 + $0x118] sm:$0xff]
        %v1765 = vld [vmem:[%s286 + $0x120] sm:$0xff]
        %v1766 = vld [vmem:[%s286 + $0x128] sm:$0xff]
        %v1767 = vld [vmem:[%s286 + $0x130] sm:$0xff]
        %v1768 = vld [vmem:[%s286 + $0x138] sm:$0xff]
        %v1769 = vld [vmem:[%s286 + $0x140] sm:$0xff]
        %v1770 = vld [vmem:[%s286 + $0x148] sm:$0xff]
        %v1771 = vld [vmem:[%s286 + $0x150] sm:$0xff]
        %v1772 = vld [vmem:[%s286 + $0x158] sm:$0xff]
        %v1773 = vld [vmem:[%s286 + $0x160] sm:$0xff]
        %v1774 = vld [vmem:[%s286 + $0x168] sm:$0xff]
        %v1775 = vld [vmem:[%s286 + $0x170] sm:$0xff]
        %v1776 = vld [vmem:[%s286 + $0x178] sm:$0xff]
        %v1777 = vld [vmem:[%s286 + $0x180] sm:$0xff]
        %v1778 = vld [vmem:[%s286 + $0x188] sm:$0xff]
        %v1779 = vld [vmem:[%s286 + $0x190] sm:$0xff]
        %v1780 = vld [vmem:[%s286 + $0x198] sm:$0xff]
        %v1781 = vld [vmem:[%s286 + $0x1a0] sm:$0xff]
        %v1782 = vld [vmem:[%s286 + $0x1a8] sm:$0xff]
        %v1783 = vld [vmem:[%s286 + $0x1b0] sm:$0xff]
        %v1784 = vld [vmem:[%s286 + $0x1b8] sm:$0xff]
        %v1785 = vld [vmem:[%s286 + $0x1c0] sm:$0xff]
        %v1786 = vld [vmem:[%s286 + $0x1c8] sm:$0xff]
        %v1787 = vld [vmem:[%s286 + $0x1d0] sm:$0xff]
        %v1788 = vld [vmem:[%s286 + $0x1d8] sm:$0xff]
        %v1789 = vld [vmem:[%s286 + $0x1e0] sm:$0xff]
        %v1790 = vld [vmem:[%s286 + $0x1e8] sm:$0xff]
        %v1791 = vld [vmem:[%s286 + $0x1f0] sm:$0xff]
        %v1792 = vld [vmem:[%s286 + $0x1f8] sm:$0xff]
        %v1793 = vadd.f32 %v1729, %v1665
        %v1794 = vadd.f32 %v1730, %v1666
        %v1795 = vadd.f32 %v1731, %v1667
        %v1796 = vadd.f32 %v1732, %v1668
        %v1797 = vadd.f32 %v1733, %v1669
        %v1798 = vadd.f32 %v1734, %v1670
        %v1799 = vadd.f32 %v1735, %v1671
        %v1800 = vadd.f32 %v1736, %v1672
        %v1801 = vadd.f32 %v1737, %v1673
        %v1802 = vadd.f32 %v1738, %v1674
        %v1803 = vadd.f32 %v1739, %v1675
        %v1804 = vadd.f32 %v1740, %v1676
        %v1805 = vadd.f32 %v1741, %v1677
        %v1806 = vadd.f32 %v1742, %v1678
        %v1807 = vadd.f32 %v1743, %v1679
        %v1808 = vadd.f32 %v1744, %v1680
        %v1809 = vadd.f32 %v1745, %v1681
        %v1810 = vadd.f32 %v1746, %v1682
        %v1811 = vadd.f32 %v1747, %v1683
        %v1812 = vadd.f32 %v1748, %v1684
        %v1813 = vadd.f32 %v1749, %v1685
        %v1814 = vadd.f32 %v1750, %v1686
        %v1815 = vadd.f32 %v1751, %v1687
        %v1816 = vadd.f32 %v1752, %v1688
        %v1817 = vadd.f32 %v1753, %v1689
        %v1818 = vadd.f32 %v1754, %v1690
        %v1819 = vadd.f32 %v1755, %v1691
        %v1820 = vadd.f32 %v1756, %v1692
        %v1821 = vadd.f32 %v1757, %v1693
        %v1822 = vadd.f32 %v1758, %v1694
        %v1823 = vadd.f32 %v1759, %v1695
        %v1824 = vadd.f32 %v1760, %v1696
        %v1825 = vadd.f32 %v1761, %v1697
        %v1826 = vadd.f32 %v1762, %v1698
        %v1827 = vadd.f32 %v1763, %v1699
        %v1828 = vadd.f32 %v1764, %v1700
        %v1829 = vadd.f32 %v1765, %v1701
        %v1830 = vadd.f32 %v1766, %v1702
        %v1831 = vadd.f32 %v1767, %v1703
        %v1832 = vadd.f32 %v1768, %v1704
        %v1833 = vadd.f32 %v1769, %v1705
        %v1834 = vadd.f32 %v1770, %v1706
        %v1835 = vadd.f32 %v1771, %v1707
        %v1836 = vadd.f32 %v1772, %v1708
        %v1837 = vadd.f32 %v1773, %v1709
        %v1838 = vadd.f32 %v1774, %v1710
        %v1839 = vadd.f32 %v1775, %v1711
        %v1840 = vadd.f32 %v1776, %v1712
        %v1841 = vadd.f32 %v1777, %v1713
        %v1842 = vadd.f32 %v1778, %v1714
        %v1843 = vadd.f32 %v1779, %v1715
        %v1844 = vadd.f32 %v1780, %v1716
        %v1845 = vadd.f32 %v1781, %v1717
        %v1846 = vadd.f32 %v1782, %v1718
        %v1847 = vadd.f32 %v1783, %v1719
        %v1848 = vadd.f32 %v1784, %v1720
        %v1849 = vadd.f32 %v1785, %v1721
        %v1850 = vadd.f32 %v1786, %v1722
        %v1851 = vadd.f32 %v1787, %v1723
        %v1852 = vadd.f32 %v1788, %v1724
        %v1853 = vadd.f32 %v1789, %v1725
        %v1854 = vadd.f32 %v1790, %v1726
        %v1855 = vadd.f32 %v1791, %v1727
        %v1856 = vadd.f32 %v1792, %v1728
        %vm1857 = vcmask 130048
        %1858 = vst.msk [vmem:[%s291] sm:$0xff] %vm1857, %v1793
        %1859 = vst.msk [vmem:[%s291 + $0x8] sm:$0xff] %vm1857, %v1794
        %1860 = vst.msk [vmem:[%s291 + $0x10] sm:$0xff] %vm1857, %v1795
        %1861 = vst.msk [vmem:[%s291 + $0x18] sm:$0xff] %vm1857, %v1796
        %1862 = vst.msk [vmem:[%s291 + $0x20] sm:$0xff] %vm1857, %v1797
        %1863 = vst.msk [vmem:[%s291 + $0x28] sm:$0xff] %vm1857, %v1798
        %1864 = vst.msk [vmem:[%s291 + $0x30] sm:$0xff] %vm1857, %v1799
        %1865 = vst.msk [vmem:[%s291 + $0x38] sm:$0xff] %vm1857, %v1800
        %1866 = vst.msk [vmem:[%s291 + $0x40] sm:$0xff] %vm1857, %v1801
        %1867 = vst.msk [vmem:[%s291 + $0x48] sm:$0xff] %vm1857, %v1802
        %1868 = vst.msk [vmem:[%s291 + $0x50] sm:$0xff] %vm1857, %v1803
        %1869 = vst.msk [vmem:[%s291 + $0x58] sm:$0xff] %vm1857, %v1804
        %1870 = vst.msk [vmem:[%s291 + $0x60] sm:$0xff] %vm1857, %v1805
        %1871 = vst.msk [vmem:[%s291 + $0x68] sm:$0xff] %vm1857, %v1806
        %1872 = vst.msk [vmem:[%s291 + $0x70] sm:$0xff] %vm1857, %v1807
        %1873 = vst.msk [vmem:[%s291 + $0x78] sm:$0xff] %vm1857, %v1808
        %1874 = vst.msk [vmem:[%s291 + $0x80] sm:$0xff] %vm1857, %v1809
        %1875 = vst.msk [vmem:[%s291 + $0x88] sm:$0xff] %vm1857, %v1810
        %1876 = vst.msk [vmem:[%s291 + $0x90] sm:$0xff] %vm1857, %v1811
        %1877 = vst.msk [vmem:[%s291 + $0x98] sm:$0xff] %vm1857, %v1812
        %1878 = vst.msk [vmem:[%s291 + $0xa0] sm:$0xff] %vm1857, %v1813
        %1879 = vst.msk [vmem:[%s291 + $0xa8] sm:$0xff] %vm1857, %v1814
        %1880 = vst.msk [vmem:[%s291 + $0xb0] sm:$0xff] %vm1857, %v1815
        %1881 = vst.msk [vmem:[%s291 + $0xb8] sm:$0xff] %vm1857, %v1816
        %1882 = vst.msk [vmem:[%s291 + $0xc0] sm:$0xff] %vm1857, %v1817
        %1883 = vst.msk [vmem:[%s291 + $0xc8] sm:$0xff] %vm1857, %v1818
        %1884 = vst.msk [vmem:[%s291 + $0xd0] sm:$0xff] %vm1857, %v1819
        %1885 = vst.msk [vmem:[%s291 + $0xd8] sm:$0xff] %vm1857, %v1820
        %1886 = vst.msk [vmem:[%s291 + $0xe0] sm:$0xff] %vm1857, %v1821
        %1887 = vst.msk [vmem:[%s291 + $0xe8] sm:$0xff] %vm1857, %v1822
        %1888 = vst.msk [vmem:[%s291 + $0xf0] sm:$0xff] %vm1857, %v1823
        %1889 = vst.msk [vmem:[%s291 + $0xf8] sm:$0xff] %vm1857, %v1824
        %1890 = vst.msk [vmem:[%s291 + $0x100] sm:$0xff] %vm1857, %v1825
        %1891 = vst.msk [vmem:[%s291 + $0x108] sm:$0xff] %vm1857, %v1826
        %1892 = vst.msk [vmem:[%s291 + $0x110] sm:$0xff] %vm1857, %v1827
        %1893 = vst.msk [vmem:[%s291 + $0x118] sm:$0xff] %vm1857, %v1828
        %1894 = vst.msk [vmem:[%s291 + $0x120] sm:$0xff] %vm1857, %v1829
        %1895 = vst.msk [vmem:[%s291 + $0x128] sm:$0xff] %vm1857, %v1830
        %1896 = vst.msk [vmem:[%s291 + $0x130] sm:$0xff] %vm1857, %v1831
        %1897 = vst.msk [vmem:[%s291 + $0x138] sm:$0xff] %vm1857, %v1832
        %1898 = vst.msk [vmem:[%s291 + $0x140] sm:$0xff] %vm1857, %v1833
        %1899 = vst.msk [vmem:[%s291 + $0x148] sm:$0xff] %vm1857, %v1834
        %1900 = vst.msk [vmem:[%s291 + $0x150] sm:$0xff] %vm1857, %v1835
        %1901 = vst.msk [vmem:[%s291 + $0x158] sm:$0xff] %vm1857, %v1836
        %1902 = vst.msk [vmem:[%s291 + $0x160] sm:$0xff] %vm1857, %v1837
        %1903 = vst.msk [vmem:[%s291 + $0x168] sm:$0xff] %vm1857, %v1838
        %1904 = vst.msk [vmem:[%s291 + $0x170] sm:$0xff] %vm1857, %v1839
        %1905 = vst.msk [vmem:[%s291 + $0x178] sm:$0xff] %vm1857, %v1840
        %1906 = vst.msk [vmem:[%s291 + $0x180] sm:$0xff] %vm1857, %v1841
        %1907 = vst.msk [vmem:[%s291 + $0x188] sm:$0xff] %vm1857, %v1842
        %1908 = vst.msk [vmem:[%s291 + $0x190] sm:$0xff] %vm1857, %v1843
        %1909 = vst.msk [vmem:[%s291 + $0x198] sm:$0xff] %vm1857, %v1844
        %1910 = vst.msk [vmem:[%s291 + $0x1a0] sm:$0xff] %vm1857, %v1845
        %1911 = vst.msk [vmem:[%s291 + $0x1a8] sm:$0xff] %vm1857, %v1846
        %1912 = vst.msk [vmem:[%s291 + $0x1b0] sm:$0xff] %vm1857, %v1847
        %1913 = vst.msk [vmem:[%s291 + $0x1b8] sm:$0xff] %vm1857, %v1848
        %1914 = vst.msk [vmem:[%s291 + $0x1c0] sm:$0xff] %vm1857, %v1849
        %1915 = vst.msk [vmem:[%s291 + $0x1c8] sm:$0xff] %vm1857, %v1850
        %1916 = vst.msk [vmem:[%s291 + $0x1d0] sm:$0xff] %vm1857, %v1851
        %1917 = vst.msk [vmem:[%s291 + $0x1d8] sm:$0xff] %vm1857, %v1852
        %1918 = vst.msk [vmem:[%s291 + $0x1e0] sm:$0xff] %vm1857, %v1853
        %1919 = vst.msk [vmem:[%s291 + $0x1e8] sm:$0xff] %vm1857, %v1854
        %1920 = vst.msk [vmem:[%s291 + $0x1f0] sm:$0xff] %vm1857, %v1855
        %1921 = vst.msk [vmem:[%s291 + $0x1f8] sm:$0xff] %vm1857, %v1856
        %p1922 = scmp.lt.s32.totalorder %s18, 1
        %s1923 = scalar_select %p1922, %s18, 1
        %s1924 = smul.addr %s1923, 64
        %s1925 = smul.addr %s1924, 8
        %s1926 = scalar_lea.vmem %s5, %s1925
        // Predicated region
        $region49: #{c3_b_cbam_forward.8} parent=39 // pred_check
          %p1927 = pneg %p156
        $region50: #{c3_b_cbam_forward.8} parent=39 // pred_check_branch
          %1929 = sbr.rel (%p1927) target = $region52
        $region51: #{c3_b_cbam_forward.8} parent=39 // pred_region
          _
        $region52: #{c3_b_cbam_forward.8} parent=39 // pred_fallthru
          _
      $region40: #{c3_b_cbam_forward.8} parent=5 // pred_fallthru
        _
      %p1930 = scmp.le.s32.totalorder 2, %s13
      // Predicated region
      $region53: #{c3_b_cbam_forward.8} parent=5 // pred_check
        %p1931 = pneg %p1930
      $region54: #{c3_b_cbam_forward.8} parent=5 // pred_check_branch
        %1933 = sbr.rel (%p1931) target = $region56
      $region55: #{c3_b_cbam_forward.8} parent=5 // pred_region
        %s1934 = ssub.s32 %s13, 2
        // Predicated region
        $region57: #{c3_b_cbam_forward.8} parent=55 // pred_check
          %p1935 = pneg %p162
        $region58: #{c3_b_cbam_forward.8} parent=55 // pred_check_branch
          %1937 = sbr.rel (%p1935) target = $region60
        $region59: #{c3_b_cbam_forward.8} parent=55 // pred_region
          %p1938 = scmp.lt.s32.totalorder %s19, 1
          %s1939 = scalar_select %p1938, %s19, 1
          %s1940 = smul.addr %s1939, 64
          %s1941 = smul.addr %s1940, 8
          %s1942 = scalar_lea.vmem %s5, %s1941
        $region60: #{c3_b_cbam_forward.8} parent=55 // pred_fallthru
          _
      $region56: #{c3_b_cbam_forward.8} parent=5 // pred_fallthru
        _
    $region6: #{c3_b_cbam_forward.8} parent=1 // loop_footer
      %s17 = sadd.s32 1, %s13
    $region7: #{c3_b_cbam_forward.8} parent=1 // loop_footer_branch
      %12 = sbr.rel target = $region3
    $region8: #{c3_b_cbam_forward.8} parent=1 // loop_exit
      _
    %1943 = vsyncpa [#allocation3], 1
    %s1944 = scalar_lea.sflag [#allocation3], 1
    %1945 = vsyncpa %s1944, 1
    %1946 = vsyncpa [#allocation5], 1

</llo_original>
